<compile_context>
chip_gen: v7x
topology: tpu7x:2x2x1
jax: 0.10.0
libtpu: 0.0.40
codegen_flags: <defaults>
</compile_context>

<pallas_src>
import functools
import math

import jax
import jax.numpy as jnp
from jax.experimental import pallas as pl
from jax.experimental.pallas import tpu as pltpu

BN_EPS = 1e-5


# ----------------------------------------------------------------------------
# Pallas kernel: one im2col GEMM + fused epilogue (bias / residual / ReLU),
# optionally followed by the classifier head (avg-pool + FC) for the last conv.
# ----------------------------------------------------------------------------
def _conv_gemm_kernel(*refs, relu_cols, has_res, has_head):
    it = iter(refs)
    p_ref = next(it)            # (tm, KC)    bf16 patches
    w_ref = next(it)            # (KC, Co)    bf16 weights (BN-scale folded)
    b_ref = next(it)            # (1, Co)     f32 bias
    r_ref = next(it) if has_res else None     # (tm, Co) bf16 residual
    if has_head:
        pool_ref = next(it)     # (N, M)      f32 per-image average-pool matrix
        fcw_ref = next(it)      # (Co, ncls)  f32
        fcb_ref = next(it)      # (1, ncls)   f32
    o_ref = next(it)

    y = jnp.dot(p_ref[...], w_ref[...], preferred_element_type=jnp.float32)
    y = y + b_ref[...]
    if has_res:
        y = y + r_ref[...].astype(jnp.float32)

    cout = y.shape[-1]
    if relu_cols >= cout:
        y = jnp.maximum(y, 0.0)
    elif relu_cols > 0:
        # fused conv1 + downsample: ReLU only the conv1 half of the lanes.
        col = jax.lax.broadcasted_iota(jnp.int32, y.shape, 1)
        y = jnp.where(col < relu_cols, jnp.maximum(y, 0.0), y)

    if has_head:
        # AdaptiveAvgPool2d((1,1)) as a (N, M) matmul, then the FC layer.
        pooled = jnp.dot(pool_ref[...], y, preferred_element_type=jnp.float32)
        logits = jnp.dot(pooled, fcw_ref[...], preferred_element_type=jnp.float32)
        o_ref[...] = (logits + fcb_ref[...]).astype(o_ref.dtype)
    else:
        o_ref[...] = y.astype(o_ref.dtype)


def _pick_tm(m_pad, kc, cout, has_res):
    """Single grid step whenever the operands fit VMEM; tile M only as a fallback."""
    def tile_bytes(tm):
        b = tm * kc * 2 + kc * cout * 2 + tm * cout * 2   # patches + weight + out (bf16)
        if has_res:
            b += tm * cout * 2
        return 2 * b                                       # double-buffering headroom
    budget = 12 * 1024 * 1024   # conservative vs. 32 MiB default scoped VMEM (v7x)
    if tile_bytes(m_pad) <= budget:
        return m_pad
    for t in (512, 256, 128, 64, 32, 16, 8):
        if m_pad % t == 0 and tile_bytes(t) <= budget:
            return t
    return 8


def _pad_rows(a, m_pad):
    m = a.shape[0]
    if m_pad == m:
        return a
    return jnp.pad(a, ((0, m_pad - m), (0, 0)))


def fused_conv_gemm(patches, w, bias, residual=None, relu_cols=0, head=None):
    """patches: (M, K*Cin) bf16, w: (K*Cin, Cout) bf16 [BN folded] -> (M, Cout) bf16,
    or (N, num_classes) f32 logits when `head` is provided."""
    M, KC = patches.shape
    Cout = w.shape[-1]
    m_pad = ((M + 7) // 8) * 8                  # keep the (8,128) sublane constraint
    has_res = residual is not None
    has_head = head is not None
    tm = _pick_tm(m_pad, KC, Cout, has_res)
    grid_n = m_pad // tm
    assert not (has_head and grid_n != 1), "head fusion requires a single grid step"

    p = _pad_rows(patches, m_pad).astype(jnp.bfloat16)
    w_bf = w.astype(jnp.bfloat16)
    b2 = bias.reshape(1, Cout).astype(jnp.float32)

    in_specs = [
        pl.BlockSpec((tm, KC), lambda i: (i, 0)),        # patches tile
        pl.BlockSpec((KC, Cout), lambda i: (0, 0)),      # full weight, resident
        pl.BlockSpec((1, Cout), lambda i: (0, 0)),       # fused BN/conv bias
    ]
    args = [p, w_bf, b2]
    if has_res:
        in_specs.append(pl.BlockSpec((tm, Cout), lambda i: (i, 0)))
        args.append(_pad_rows(residual.astype(jnp.bfloat16), m_pad))
    if has_head:
        pool, fcw, fcb = head
        n, ncls = pool.shape[0], fcw.shape[-1]
        in_specs += [
            pl.BlockSpec((n, m_pad), lambda i: (0, 0)),
            pl.BlockSpec((Cout, ncls), lambda i: (0, 0)),
            pl.BlockSpec((1, ncls), lambda i: (0, 0)),
        ]
        args += [pool.astype(jnp.float32), fcw.astype(jnp.float32),
                 fcb.reshape(1, ncls).astype(jnp.float32)]
        out_shape = jax.ShapeDtypeStruct((n, ncls), jnp.float32)
        out_spec = pl.BlockSpec((n, ncls), lambda i: (0, 0))
    else:
        out_shape = jax.ShapeDtypeStruct((m_pad, Cout), jnp.bfloat16)
        out_spec = pl.BlockSpec((tm, Cout), lambda i: (i, 0))

    kernel = functools.partial(_conv_gemm_kernel, relu_cols=relu_cols,
                               has_res=has_res, has_head=has_head)
    out = pl.pallas_call(
        kernel,
        out_shape=out_shape,
        grid=(grid_n,),
        in_specs=in_specs,
        out_specs=out_spec,
        compiler_params=pltpu.CompilerParams(
            dimension_semantics=("parallel",)),
    )(*args)
    if not has_head and m_pad != M:
        out = out[:M]
    return out


# ----------------------------------------------------------------------------
# JAX glue: im2col (slicing / padding only, fused by jit; no compute)
# ----------------------------------------------------------------------------
def extract_patches(x, ksize, stride, pad):
    """x: (N, H, W, C) bf16 -> (M=N*Ho*Wo, K*C) with tap-major column ordering."""
    N, H, W, C = x.shape
    xp = jnp.pad(x, ((0, 0), (pad, pad), (pad, pad), (0, 0)))
    Ho = (H + 2 * pad - ksize) // stride + 1
    Wo = (W + 2 * pad - ksize) // stride + 1
    taps = []
    for dy in range(ksize):
        for dx in range(ksize):
            sl = xp[:, dy:dy + stride * Ho:stride, dx:dx + stride * Wo:stride, :]
            taps.append(sl.reshape(N * Ho * Wo, C))
    return jnp.concatenate(taps, axis=-1), (N, Ho, Wo)


def conv_block(x, conv, *, stride=1, relu_cols=0, residual=None, head=None):
    """Conv (bias-free) + folded affine + optional skip/ReLU (+ optional head)."""
    ksize = conv['k']
    pad = (ksize - 1) // 2
    patches, (N, Ho, Wo) = extract_patches(x, ksize, stride, pad)
    res = None
    if residual is not None:
        res = residual.reshape(N * Ho * Wo, residual.shape[-1])
    out = fused_conv_gemm(patches, conv['w'], conv['b'], residual=res,
                          relu_cols=relu_cols, head=head)
    if head is not None:
        return out
    return out.reshape(N, Ho, Wo, -1)


# ----------------------------------------------------------------------------
# Parameter construction (deterministic, mirrors ResNet.__init__ shapes)
# ----------------------------------------------------------------------------
def make_conv(key, ksize, cin, cout, *, bn=True, bias_key=None):
    # kaiming_normal_(mode='fan_out', nonlinearity='relu')
    fan_out = cout * ksize * ksize
    std = math.sqrt(2.0 / fan_out)
    w = std * jax.random.normal(key, (ksize * ksize, cin, cout), jnp.float32)
    if bn:
        # eval-mode BN at init: gamma=1, beta=0, mean=0, var=1 -> pure scale
        scale = 1.0 / math.sqrt(1.0 + BN_EPS)
        w = w * scale
        b = jnp.zeros((cout,), jnp.float32)
    else:
        # nn.Conv2d default bias init: U(-1/sqrt(fan_in), 1/sqrt(fan_in))
        bound = 1.0 / math.sqrt(cin * ksize * ksize)
        b = jax.random.uniform(bias_key, (cout,), jnp.float32, -bound, bound)
    return {'w': w.reshape(ksize * ksize * cin, cout), 'b': b, 'k': ksize}


def _to_bf16_conv(conv):
    return {'w': conv['w'].astype(jnp.bfloat16), 'b': conv['b'], 'k': conv['k']}


def init_params(key, num_classes=10, num_blocks=(3, 3, 3), c_hidden=(16, 32, 64)):
    keys = iter(jax.random.split(key, 256))
    params = {}
    c0 = c_hidden[0]
    params['in_conv'] = _to_bf16_conv(make_conv(next(keys), 3, 3, c0, bn=True))

    blocks = []
    for bi, bc in enumerate(num_blocks):
        for j in range(bc):
            subsample = (j == 0 and bi > 0)
            c_in = c_hidden[bi - 1] if subsample else c_hidden[bi]
            c_out = c_hidden[bi]
            p = {'subsample': subsample, 'c_out': c_out}
            conv1 = make_conv(next(keys), 3, c_in, c_out, bn=True)
            p['conv2'] = _to_bf16_conv(make_conv(next(keys), 3, c_out, c_out, bn=True))
            if subsample:
                # nn.Conv2d(c_in, c_out, kernel_size=1, stride=2) -- has bias.
                down = make_conv(next(keys), 1, c_in, c_out, bn=False,
                                 bias_key=next(keys))
                # Fold the 1x1 stride-2 downsample into conv1's GEMM: its weight
                # occupies only the center-tap (index 4) rows of the 3x3 layout,
                # concatenated along Cout -> one (9*Cin, 2*Cout) weight.
                wd = jnp.zeros((9 * c_in, c_out), jnp.float32)
                wd = wd.at[4 * c_in:5 * c_in].set(down['w'])
                p['conv1_down'] = _to_bf16_conv({
                    'w': jnp.concatenate([conv1['w'], wd], axis=1),
                    'b': jnp.concatenate([conv1['b'], down['b']]),
                    'k': 3,
                })
            else:
                p['conv1'] = _to_bf16_conv(conv1)
            blocks.append(p)
    params['blocks'] = blocks

    c_last = c_hidden[-1]
    bound = 1.0 / math.sqrt(c_last)
    params['fc_w'] = jax.random.uniform(next(keys), (c_last, num_classes),
                                        jnp.float32, -bound, bound)
    params['fc_b'] = jax.random.uniform(next(keys), (num_classes,),
                                        jnp.float32, -bound, bound)
    return params


# ----------------------------------------------------------------------------
# Forward pass (matches ResNet.forward with block_name='ResNetBlock')
# ----------------------------------------------------------------------------
def resnet_forward(params, x_nchw):
    x = jnp.transpose(x_nchw, (0, 2, 3, 1)).astype(jnp.bfloat16)  # NCHW -> NHWC

    # input_net: Conv3x3 -> BN -> ReLU   (BN folded into weights)
    c0 = params['in_conv']['w'].shape[-1]
    x = conv_block(x, params['in_conv'], stride=1, relu_cols=c0)

    blocks = params['blocks']
    nb = len(blocks)
    out = None
    for idx, p in enumerate(blocks):
        c_out = p['c_out']
        if p['subsample']:
            # conv1 (3x3, stride 2) and the 1x1 downsample share one GEMM; ReLU
            # is applied in-kernel only to the conv1 half of the output lanes.
            zr = conv_block(x, p['conv1_down'], stride=2, relu_cols=c_out)
            z = zr[..., :c_out]
            xr = zr[..., c_out:]
        else:
            z = conv_block(x, p['conv1'], stride=1, relu_cols=c_out)
            xr = x

        head = None
        if idx == nb - 1:
            # Fuse AdaptiveAvgPool2d((1,1)) + Flatten + Linear into this conv.
            N, Ho, Wo, _ = z.shape
            m = N * Ho * Wo
            m_pad = ((m + 7) // 8) * 8
            pool = jnp.repeat(jnp.eye(N, dtype=jnp.float32), Ho * Wo, axis=1)
            pool = pool / float(Ho * Wo)
            if m_pad != m:
                pool = jnp.pad(pool, ((0, 0), (0, m_pad - m)))
            head = (pool, params['fc_w'], params['fc_b'])

        # conv2 + BN2 + skip-add + final ReLU (+ head for the last block),
        # all fused in the GEMM epilogue.
        out = conv_block(z, p['conv2'], stride=1, relu_cols=c_out,
                         residual=xr, head=head)
        if head is None:
            x = out
    return out


if __name__ == "__main__":
    key = jax.random.PRNGKey(0)
    kp, kx = jax.random.split(key)
    params = init_params(kp, num_classes=10, num_blocks=(3, 3, 3),
                         c_hidden=(16, 32, 64))

    # small input consistent with the module: NCHW, 3 input channels
    x = jax.random.normal(kx, (2, 3, 16, 16), jnp.float32)

    fwd = jax.jit(functools.partial(resnet_forward, params))
    out = fwd(x)
    out = jax.block_until_ready(out)
    assert out.shape == (2, 10) and out.dtype == jnp.float32
    assert bool(jnp.all(jnp.isfinite(out)))
    print("KERNEL_OK")
</pallas_src>

<mosaic_0001>
module attributes {stable_mosaic.version = 11 : i64} {
  func.func @_conv_gemm_kernel(%arg0: i32, %arg1: memref<512x27xbf16, #tpu.memory_space<vmem>>, %arg2: memref<27x16xbf16, #tpu.memory_space<vmem>>, %arg3: memref<1x16xf32, #tpu.memory_space<vmem>>, %arg4: memref<512x16xbf16, #tpu.memory_space<vmem>>) attributes {dimension_semantics = [#tpu.dimension_semantics<parallel>], iteration_bounds = array<i64: 1>, scalar_prefetch = 0 : i64, scratch_operands = 0 : i64, tpu.core_type = #tpu.core_type<tc>, window_params = [{transform_indices = @transform_0, window_bounds = array<i64: 512, 27>}, {pipeline_mode = #tpu.pipeline_mode<synchronous>, transform_indices = @transform_1, window_bounds = array<i64: 27, 16>}, {pipeline_mode = #tpu.pipeline_mode<synchronous>, transform_indices = @transform_2, window_bounds = array<i64: 1, 16>}, {transform_indices = @transform_3, window_bounds = array<i64: 512, 16>}]} {
    %c0 = arith.constant 0 : index
    %c0_0 = arith.constant 0 : index
    %0 = vector.load %arg1[%c0, %c0_0] : memref<512x27xbf16, #tpu.memory_space<vmem>>, vector<512x27xbf16>
    %c0_1 = arith.constant 0 : index
    %c0_2 = arith.constant 0 : index
    %1 = vector.load %arg2[%c0_1, %c0_2] : memref<27x16xbf16, #tpu.memory_space<vmem>>, vector<27x16xbf16>
    %cst = arith.constant dense<0.000000e+00> : vector<512x16xf32>
    %2 = tpu.matmul %0, %1, %cst {dimension_numbers = #tpu.dot_dimension_numbers<[1], [0], [0], [1], [0, 0, 1, 1], [], []>} : vector<512x27xbf16>, vector<27x16xbf16>, vector<512x16xf32> -> vector<512x16xf32>
    %c0_3 = arith.constant 0 : index
    %c0_4 = arith.constant 0 : index
    %3 = vector.load %arg3[%c0_3, %c0_4] : memref<1x16xf32, #tpu.memory_space<vmem>>, vector<1x16xf32>
    %4 = vector.broadcast %3 : vector<1x16xf32> to vector<512x16xf32>
    %5 = arith.addf %2, %4 : vector<512x16xf32>
    %cst_5 = arith.constant 0.000000e+00 : f32
    %6 = vector.broadcast %cst_5 : f32 to vector<512x16xf32>
    %7 = arith.maximumf %5, %6 : vector<512x16xf32>
    %8 = arith.truncf %7 : vector<512x16xf32> to vector<512x16xbf16>
    %c0_6 = arith.constant 0 : index
    %c0_7 = arith.constant 0 : index
    %9 = vector.load %arg4[%c0_6, %c0_7] : memref<512x16xbf16, #tpu.memory_space<vmem>>, vector<512x16xbf16>
    tpu.vector_store %arg4[%c0_6, %c0_7], %8 {strides = array<i32>} : memref<512x16xbf16, #tpu.memory_space<vmem>>, vector<512x16xbf16>,
    return
  }
  func.func @transform_0(%arg0: i32) -> (i32, i32) {
    %c0_i32 = arith.constant 0 : i32
    %c0_i32_0 = arith.constant 0 : i32
    return %arg0, %c0_i32 : i32, i32
  }
  func.func @transform_1(%arg0: i32) -> (i32, i32) {
    %c0_i32 = arith.constant 0 : i32
    %c0_i32_0 = arith.constant 0 : i32
    %c0_i32_1 = arith.constant 0 : i32
    return %c0_i32, %c0_i32_0 : i32, i32
  }
  func.func @transform_2(%arg0: i32) -> (i32, i32) {
    %c0_i32 = arith.constant 0 : i32
    %c0_i32_0 = arith.constant 0 : i32
    %c0_i32_1 = arith.constant 0 : i32
    return %c0_i32, %c0_i32_0 : i32, i32
  }
  func.func @transform_3(%arg0: i32) -> (i32, i32) {
    %c0_i32 = arith.constant 0 : i32
    %c0_i32_0 = arith.constant 0 : i32
    return %arg0, %c0_i32 : i32, i32
  }
}

module attributes {stable_mosaic.version = 11 : i64} {
  func.func @_conv_gemm_kernel(%arg0: i32, %arg1: memref<512x144xbf16, #tpu.memory_space<vmem>>, %arg2: memref<144x16xbf16, #tpu.memory_space<vmem>>, %arg3: memref<1x16xf32, #tpu.memory_space<vmem>>, %arg4: memref<512x16xbf16, #tpu.memory_space<vmem>>) attributes {dimension_semantics = [#tpu.dimension_semantics<parallel>], iteration_bounds = array<i64: 1>, scalar_prefetch = 0 : i64, scratch_operands = 0 : i64, tpu.core_type = #tpu.core_type<tc>, window_params = [{transform_indices = @transform_0, window_bounds = array<i64: 512, 144>}, {pipeline_mode = #tpu.pipeline_mode<synchronous>, transform_indices = @transform_1, window_bounds = array<i64: 144, 16>}, {pipeline_mode = #tpu.pipeline_mode<synchronous>, transform_indices = @transform_2, window_bounds = array<i64: 1, 16>}, {transform_indices = @transform_3, window_bounds = array<i64: 512, 16>}]} {
    %c0 = arith.constant 0 : index
    %c0_0 = arith.constant 0 : index
    %0 = vector.load %arg1[%c0, %c0_0] : memref<512x144xbf16, #tpu.memory_space<vmem>>, vector<512x144xbf16>
    %c0_1 = arith.constant 0 : index
    %c0_2 = arith.constant 0 : index
    %1 = vector.load %arg2[%c0_1, %c0_2] : memref<144x16xbf16, #tpu.memory_space<vmem>>, vector<144x16xbf16>
    %cst = arith.constant dense<0.000000e+00> : vector<512x16xf32>
    %2 = tpu.matmul %0, %1, %cst {dimension_numbers = #tpu.dot_dimension_numbers<[1], [0], [0], [1], [0, 0, 1, 1], [], []>} : vector<512x144xbf16>, vector<144x16xbf16>, vector<512x16xf32> -> vector<512x16xf32>
    %c0_3 = arith.constant 0 : index
    %c0_4 = arith.constant 0 : index
    %3 = vector.load %arg3[%c0_3, %c0_4] : memref<1x16xf32, #tpu.memory_space<vmem>>, vector<1x16xf32>
    %4 = vector.broadcast %3 : vector<1x16xf32> to vector<512x16xf32>
    %5 = arith.addf %2, %4 : vector<512x16xf32>
    %cst_5 = arith.constant 0.000000e+00 : f32
    %6 = vector.broadcast %cst_5 : f32 to vector<512x16xf32>
    %7 = arith.maximumf %5, %6 : vector<512x16xf32>
    %8 = arith.truncf %7 : vector<512x16xf32> to vector<512x16xbf16>
    %c0_6 = arith.constant 0 : index
    %c0_7 = arith.constant 0 : index
    %9 = vector.load %arg4[%c0_6, %c0_7] : memref<512x16xbf16, #tpu.memory_space<vmem>>, vector<512x16xbf16>
    tpu.vector_store %arg4[%c0_6, %c0_7], %8 {strides = array<i32>} : memref<512x16xbf16, #tpu.memory_space<vmem>>, vector<512x16xbf16>,
    return
  }
  func.func @transform_0(%arg0: i32) -> (i32, i32) {
    %c0_i32 = arith.constant 0 : i32
    %c0_i32_0 = arith.constant 0 : i32
    return %arg0, %c0_i32 : i32, i32
  }
  func.func @transform_1(%arg0: i32) -> (i32, i32) {
    %c0_i32 = arith.constant 0 : i32
    %c0_i32_0 = arith.constant 0 : i32
    %c0_i32_1 = arith.constant 0 : i32
    return %c0_i32, %c0_i32_0 : i32, i32
  }
  func.func @transform_2(%arg0: i32) -> (i32, i32) {
    %c0_i32 = arith.constant 0 : i32
    %c0_i32_0 = arith.constant 0 : i32
    %c0_i32_1 = arith.constant 0 : i32
    return %c0_i32, %c0_i32_0 : i32, i32
  }
  func.func @transform_3(%arg0: i32) -> (i32, i32) {
    %c0_i32 = arith.constant 0 : i32
    %c0_i32_0 = arith.constant 0 : i32
    return %arg0, %c0_i32 : i32, i32
  }
}

module attributes {stable_mosaic.version = 11 : i64} {
  func.func @_conv_gemm_kernel(%arg0: i32, %arg1: memref<512x144xbf16, #tpu.memory_space<vmem>>, %arg2: memref<144x16xbf16, #tpu.memory_space<vmem>>, %arg3: memref<1x16xf32, #tpu.memory_space<vmem>>, %arg4: memref<512x16xbf16, #tpu.memory_space<vmem>>, %arg5: memref<512x16xbf16, #tpu.memory_space<vmem>>) attributes {dimension_semantics = [#tpu.dimension_semantics<parallel>], iteration_bounds = array<i64: 1>, scalar_prefetch = 0 : i64, scratch_operands = 0 : i64, tpu.core_type = #tpu.core_type<tc>, window_params = [{transform_indices = @transform_0, window_bounds = array<i64: 512, 144>}, {pipeline_mode = #tpu.pipeline_mode<synchronous>, transform_indices = @transform_1, window_bounds = array<i64: 144, 16>}, {pipeline_mode = #tpu.pipeline_mode<synchronous>, transform_indices = @transform_2, window_bounds = array<i64: 1, 16>}, {transform_indices = @transform_3, window_bounds = array<i64: 512, 16>}, {transform_indices = @transform_4, window_bounds = array<i64: 512, 16>}]} {
    %c0 = arith.constant 0 : index
    %c0_0 = arith.constant 0 : index
    %0 = vector.load %arg1[%c0, %c0_0] : memref<512x144xbf16, #tpu.memory_space<vmem>>, vector<512x144xbf16>
    %c0_1 = arith.constant 0 : index
    %c0_2 = arith.constant 0 : index
    %1 = vector.load %arg2[%c0_1, %c0_2] : memref<144x16xbf16, #tpu.memory_space<vmem>>, vector<144x16xbf16>
    %cst = arith.constant dense<0.000000e+00> : vector<512x16xf32>
    %2 = tpu.matmul %0, %1, %cst {dimension_numbers = #tpu.dot_dimension_numbers<[1], [0], [0], [1], [0, 0, 1, 1], [], []>} : vector<512x144xbf16>, vector<144x16xbf16>, vector<512x16xf32> -> vector<512x16xf32>
    %c0_3 = arith.constant 0 : index
    %c0_4 = arith.constant 0 : index
    %3 = vector.load %arg3[%c0_3, %c0_4] : memref<1x16xf32, #tpu.memory_space<vmem>>, vector<1x16xf32>
    %4 = vector.broadcast %3 : vector<1x16xf32> to vector<512x16xf32>
    %5 = arith.addf %2, %4 : vector<512x16xf32>
    %c0_5 = arith.constant 0 : index
    %c0_6 = arith.constant 0 : index
    %6 = vector.load %arg4[%c0_5, %c0_6] : memref<512x16xbf16, #tpu.memory_space<vmem>>, vector<512x16xbf16>
    %7 = arith.extf %6 : vector<512x16xbf16> to vector<512x16xf32>
    %8 = arith.addf %5, %7 : vector<512x16xf32>
    %cst_7 = arith.constant 0.000000e+00 : f32
    %9 = vector.broadcast %cst_7 : f32 to vector<512x16xf32>
    %10 = arith.maximumf %8, %9 : vector<512x16xf32>
    %11 = arith.truncf %10 : vector<512x16xf32> to vector<512x16xbf16>
    %c0_8 = arith.constant 0 : index
    %c0_9 = arith.constant 0 : index
    %12 = vector.load %arg5[%c0_8, %c0_9] : memref<512x16xbf16, #tpu.memory_space<vmem>>, vector<512x16xbf16>
    tpu.vector_store %arg5[%c0_8, %c0_9], %11 {strides = array<i32>} : memref<512x16xbf16, #tpu.memory_space<vmem>>, vector<512x16xbf16>,
    return
  }
  func.func @transform_0(%arg0: i32) -> (i32, i32) {
    %c0_i32 = arith.constant 0 : i32
    %c0_i32_0 = arith.constant 0 : i32
    return %arg0, %c0_i32 : i32, i32
  }
  func.func @transform_1(%arg0: i32) -> (i32, i32) {
    %c0_i32 = arith.constant 0 : i32
    %c0_i32_0 = arith.constant 0 : i32
    %c0_i32_1 = arith.constant 0 : i32
    return %c0_i32, %c0_i32_0 : i32, i32
  }
  func.func @transform_2(%arg0: i32) -> (i32, i32) {
    %c0_i32 = arith.constant 0 : i32
    %c0_i32_0 = arith.constant 0 : i32
    %c0_i32_1 = arith.constant 0 : i32
    return %c0_i32, %c0_i32_0 : i32, i32
  }
  func.func @transform_3(%arg0: i32) -> (i32, i32) {
    %c0_i32 = arith.constant 0 : i32
    %c0_i32_0 = arith.constant 0 : i32
    return %arg0, %c0_i32 : i32, i32
  }
  func.func @transform_4(%arg0: i32) -> (i32, i32) {
    %c0_i32 = arith.constant 0 : i32
    %c0_i32_0 = arith.constant 0 : i32
    return %arg0, %c0_i32 : i32, i32
  }
}

module attributes {stable_mosaic.version = 11 : i64} {
  func.func @_conv_gemm_kernel(%arg0: i32, %arg1: memref<128x144xbf16, #tpu.memory_space<vmem>>, %arg2: memref<144x64xbf16, #tpu.memory_space<vmem>>, %arg3: memref<1x64xf32, #tpu.memory_space<vmem>>, %arg4: memref<128x64xbf16, #tpu.memory_space<vmem>>) attributes {dimension_semantics = [#tpu.dimension_semantics<parallel>], iteration_bounds = array<i64: 1>, scalar_prefetch = 0 : i64, scratch_operands = 0 : i64, tpu.core_type = #tpu.core_type<tc>, window_params = [{transform_indices = @transform_0, window_bounds = array<i64: 128, 144>}, {pipeline_mode = #tpu.pipeline_mode<synchronous>, transform_indices = @transform_1, window_bounds = array<i64: 144, 64>}, {pipeline_mode = #tpu.pipeline_mode<synchronous>, transform_indices = @transform_2, window_bounds = array<i64: 1, 64>}, {transform_indices = @transform_3, window_bounds = array<i64: 128, 64>}]} {
    %c0 = arith.constant 0 : index
    %c0_0 = arith.constant 0 : index
    %0 = vector.load %arg1[%c0, %c0_0] : memref<128x144xbf16, #tpu.memory_space<vmem>>, vector<128x144xbf16>
    %c0_1 = arith.constant 0 : index
    %c0_2 = arith.constant 0 : index
    %1 = vector.load %arg2[%c0_1, %c0_2] : memref<144x64xbf16, #tpu.memory_space<vmem>>, vector<144x64xbf16>
    %cst = arith.constant dense<0.000000e+00> : vector<128x64xf32>
    %2 = tpu.matmul %0, %1, %cst {dimension_numbers = #tpu.dot_dimension_numbers<[1], [0], [0], [1], [0, 0, 1, 1], [], []>} : vector<128x144xbf16>, vector<144x64xbf16>, vector<128x64xf32> -> vector<128x64xf32>
    %c0_3 = arith.constant 0 : index
    %c0_4 = arith.constant 0 : index
    %3 = vector.load %arg3[%c0_3, %c0_4] : memref<1x64xf32, #tpu.memory_space<vmem>>, vector<1x64xf32>
    %4 = vector.broadcast %3 : vector<1x64xf32> to vector<128x64xf32>
    %5 = arith.addf %2, %4 : vector<128x64xf32>
    %6 = tpu.iota {dimensions = array<i32: 1>} : vector<128x64xi32>
    %c32_i32 = arith.constant 32 : i32
    %7 = vector.broadcast %c32_i32 : i32 to vector<128x64xi32>
    %8 = arith.cmpi slt, %6, %7 : vector<128x64xi32>
    %cst_5 = arith.constant 0.000000e+00 : f32
    %9 = vector.broadcast %cst_5 : f32 to vector<128x64xf32>
    %10 = arith.maximumf %5, %9 : vector<128x64xf32>
    %11 = arith.select %8, %10, %5 : vector<128x64xi1>, vector<128x64xf32>
    %12 = arith.truncf %11 : vector<128x64xf32> to vector<128x64xbf16>
    %c0_6 = arith.constant 0 : index
    %c0_7 = arith.constant 0 : index
    %13 = vector.load %arg4[%c0_6, %c0_7] : memref<128x64xbf16, #tpu.memory_space<vmem>>, vector<128x64xbf16>
    tpu.vector_store %arg4[%c0_6, %c0_7], %12 {strides = array<i32>} : memref<128x64xbf16, #tpu.memory_space<vmem>>, vector<128x64xbf16>,
    return
  }
  func.func @transform_0(%arg0: i32) -> (i32, i32) {
    %c0_i32 = arith.constant 0 : i32
    %c0_i32_0 = arith.constant 0 : i32
    return %arg0, %c0_i32 : i32, i32
  }
  func.func @transform_1(%arg0: i32) -> (i32, i32) {
    %c0_i32 = arith.constant 0 : i32
    %c0_i32_0 = arith.constant 0 : i32
    %c0_i32_1 = arith.constant 0 : i32
    return %c0_i32, %c0_i32_0 : i32, i32
  }
  func.func @transform_2(%arg0: i32) -> (i32, i32) {
    %c0_i32 = arith.constant 0 : i32
    %c0_i32_0 = arith.constant 0 : i32
    %c0_i32_1 = arith.constant 0 : i32
    return %c0_i32, %c0_i32_0 : i32, i32
  }
  func.func @transform_3(%arg0: i32) -> (i32, i32) {
    %c0_i32 = arith.constant 0 : i32
    %c0_i32_0 = arith.constant 0 : i32
    return %arg0, %c0_i32 : i32, i32
  }
}

module attributes {stable_mosaic.version = 11 : i64} {
  func.func @_conv_gemm_kernel(%arg0: i32, %arg1: memref<128x288xbf16, #tpu.memory_space<vmem>>, %arg2: memref<288x32xbf16, #tpu.memory_space<vmem>>, %arg3: memref<1x32xf32, #tpu.memory_space<vmem>>, %arg4: memref<128x32xbf16, #tpu.memory_space<vmem>>, %arg5: memref<128x32xbf16, #tpu.memory_space<vmem>>) attributes {dimension_semantics = [#tpu.dimension_semantics<parallel>], iteration_bounds = array<i64: 1>, scalar_prefetch = 0 : i64, scratch_operands = 0 : i64, tpu.core_type = #tpu.core_type<tc>, window_params = [{transform_indices = @transform_0, window_bounds = array<i64: 128, 288>}, {pipeline_mode = #tpu.pipeline_mode<synchronous>, transform_indices = @transform_1, window_bounds = array<i64: 288, 32>}, {pipeline_mode = #tpu.pipeline_mode<synchronous>, transform_indices = @transform_2, window_bounds = array<i64: 1, 32>}, {transform_indices = @transform_3, window_bounds = array<i64: 128, 32>}, {transform_indices = @transform_4, window_bounds = array<i64: 128, 32>}]} {
    %c0 = arith.constant 0 : index
    %c0_0 = arith.constant 0 : index
    %0 = vector.load %arg1[%c0, %c0_0] : memref<128x288xbf16, #tpu.memory_space<vmem>>, vector<128x288xbf16>
    %c0_1 = arith.constant 0 : index
    %c0_2 = arith.constant 0 : index
    %1 = vector.load %arg2[%c0_1, %c0_2] : memref<288x32xbf16, #tpu.memory_space<vmem>>, vector<288x32xbf16>
    %cst = arith.constant dense<0.000000e+00> : vector<128x32xf32>
    %2 = tpu.matmul %0, %1, %cst {dimension_numbers = #tpu.dot_dimension_numbers<[1], [0], [0], [1], [0, 0, 1, 1], [], []>} : vector<128x288xbf16>, vector<288x32xbf16>, vector<128x32xf32> -> vector<128x32xf32>
    %c0_3 = arith.constant 0 : index
    %c0_4 = arith.constant 0 : index
    %3 = vector.load %arg3[%c0_3, %c0_4] : memref<1x32xf32, #tpu.memory_space<vmem>>, vector<1x32xf32>
    %4 = vector.broadcast %3 : vector<1x32xf32> to vector<128x32xf32>
    %5 = arith.addf %2, %4 : vector<128x32xf32>
    %c0_5 = arith.constant 0 : index
    %c0_6 = arith.constant 0 : index
    %6 = vector.load %arg4[%c0_5, %c0_6] : memref<128x32xbf16, #tpu.memory_space<vmem>>, vector<128x32xbf16>
    %7 = arith.extf %6 : vector<128x32xbf16> to vector<128x32xf32>
    %8 = arith.addf %5, %7 : vector<128x32xf32>
    %cst_7 = arith.constant 0.000000e+00 : f32
    %9 = vector.broadcast %cst_7 : f32 to vector<128x32xf32>
    %10 = arith.maximumf %8, %9 : vector<128x32xf32>
    %11 = arith.truncf %10 : vector<128x32xf32> to vector<128x32xbf16>
    %c0_8 = arith.constant 0 : index
    %c0_9 = arith.constant 0 : index
    %12 = vector.load %arg5[%c0_8, %c0_9] : memref<128x32xbf16, #tpu.memory_space<vmem>>, vector<128x32xbf16>
    tpu.vector_store %arg5[%c0_8, %c0_9], %11 {strides = array<i32>} : memref<128x32xbf16, #tpu.memory_space<vmem>>, vector<128x32xbf16>,
    return
  }
  func.func @transform_0(%arg0: i32) -> (i32, i32) {
    %c0_i32 = arith.constant 0 : i32
    %c0_i32_0 = arith.constant 0 : i32
    return %arg0, %c0_i32 : i32, i32
  }
  func.func @transform_1(%arg0: i32) -> (i32, i32) {
    %c0_i32 = arith.constant 0 : i32
    %c0_i32_0 = arith.constant 0 : i32
    %c0_i32_1 = arith.constant 0 : i32
    return %c0_i32, %c0_i32_0 : i32, i32
  }
  func.func @transform_2(%arg0: i32) -> (i32, i32) {
    %c0_i32 = arith.constant 0 : i32
    %c0_i32_0 = arith.constant 0 : i32
    %c0_i32_1 = arith.constant 0 : i32
    return %c0_i32, %c0_i32_0 : i32, i32
  }
  func.func @transform_3(%arg0: i32) -> (i32, i32) {
    %c0_i32 = arith.constant 0 : i32
    %c0_i32_0 = arith.constant 0 : i32
    return %arg0, %c0_i32 : i32, i32
  }
  func.func @transform_4(%arg0: i32) -> (i32, i32) {
    %c0_i32 = arith.constant 0 : i32
    %c0_i32_0 = arith.constant 0 : i32
    return %arg0, %c0_i32 : i32, i32
  }
}

module attributes {stable_mosaic.version = 11 : i64} {
  func.func @_conv_gemm_kernel(%arg0: i32, %arg1: memref<128x288xbf16, #tpu.memory_space<vmem>>, %arg2: memref<288x32xbf16, #tpu.memory_space<vmem>>, %arg3: memref<1x32xf32, #tpu.memory_space<vmem>>, %arg4: memref<128x32xbf16, #tpu.memory_space<vmem>>) attributes {dimension_semantics = [#tpu.dimension_semantics<parallel>], iteration_bounds = array<i64: 1>, scalar_prefetch = 0 : i64, scratch_operands = 0 : i64, tpu.core_type = #tpu.core_type<tc>, window_params = [{transform_indices = @transform_0, window_bounds = array<i64: 128, 288>}, {pipeline_mode = #tpu.pipeline_mode<synchronous>, transform_indices = @transform_1, window_bounds = array<i64: 288, 32>}, {pipeline_mode = #tpu.pipeline_mode<synchronous>, transform_indices = @transform_2, window_bounds = array<i64: 1, 32>}, {transform_indices = @transform_3, window_bounds = array<i64: 128, 32>}]} {
    %c0 = arith.constant 0 : index
    %c0_0 = arith.constant 0 : index
    %0 = vector.load %arg1[%c0, %c0_0] : memref<128x288xbf16, #tpu.memory_space<vmem>>, vector<128x288xbf16>
    %c0_1 = arith.constant 0 : index
    %c0_2 = arith.constant 0 : index
    %1 = vector.load %arg2[%c0_1, %c0_2] : memref<288x32xbf16, #tpu.memory_space<vmem>>, vector<288x32xbf16>
    %cst = arith.constant dense<0.000000e+00> : vector<128x32xf32>
    %2 = tpu.matmul %0, %1, %cst {dimension_numbers = #tpu.dot_dimension_numbers<[1], [0], [0], [1], [0, 0, 1, 1], [], []>} : vector<128x288xbf16>, vector<288x32xbf16>, vector<128x32xf32> -> vector<128x32xf32>
    %c0_3 = arith.constant 0 : index
    %c0_4 = arith.constant 0 : index
    %3 = vector.load %arg3[%c0_3, %c0_4] : memref<1x32xf32, #tpu.memory_space<vmem>>, vector<1x32xf32>
    %4 = vector.broadcast %3 : vector<1x32xf32> to vector<128x32xf32>
    %5 = arith.addf %2, %4 : vector<128x32xf32>
    %cst_5 = arith.constant 0.000000e+00 : f32
    %6 = vector.broadcast %cst_5 : f32 to vector<128x32xf32>
    %7 = arith.maximumf %5, %6 : vector<128x32xf32>
    %8 = arith.truncf %7 : vector<128x32xf32> to vector<128x32xbf16>
    %c0_6 = arith.constant 0 : index
    %c0_7 = arith.constant 0 : index
    %9 = vector.load %arg4[%c0_6, %c0_7] : memref<128x32xbf16, #tpu.memory_space<vmem>>, vector<128x32xbf16>
    tpu.vector_store %arg4[%c0_6, %c0_7], %8 {strides = array<i32>} : memref<128x32xbf16, #tpu.memory_space<vmem>>, vector<128x32xbf16>,
    return
  }
  func.func @transform_0(%arg0: i32) -> (i32, i32) {
    %c0_i32 = arith.constant 0 : i32
    %c0_i32_0 = arith.constant 0 : i32
    return %arg0, %c0_i32 : i32, i32
  }
  func.func @transform_1(%arg0: i32) -> (i32, i32) {
    %c0_i32 = arith.constant 0 : i32
    %c0_i32_0 = arith.constant 0 : i32
    %c0_i32_1 = arith.constant 0 : i32
    return %c0_i32, %c0_i32_0 : i32, i32
  }
  func.func @transform_2(%arg0: i32) -> (i32, i32) {
    %c0_i32 = arith.constant 0 : i32
    %c0_i32_0 = arith.constant 0 : i32
    %c0_i32_1 = arith.constant 0 : i32
    return %c0_i32, %c0_i32_0 : i32, i32
  }
  func.func @transform_3(%arg0: i32) -> (i32, i32) {
    %c0_i32 = arith.constant 0 : i32
    %c0_i32_0 = arith.constant 0 : i32
    return %arg0, %c0_i32 : i32, i32
  }
}

module attributes {stable_mosaic.version = 11 : i64} {
  func.func @_conv_gemm_kernel(%arg0: i32, %arg1: memref<32x288xbf16, #tpu.memory_space<vmem>>, %arg2: memref<288x128xbf16, #tpu.memory_space<vmem>>, %arg3: memref<1x128xf32, #tpu.memory_space<vmem>>, %arg4: memref<32x128xbf16, #tpu.memory_space<vmem>>) attributes {dimension_semantics = [#tpu.dimension_semantics<parallel>], iteration_bounds = array<i64: 1>, scalar_prefetch = 0 : i64, scratch_operands = 0 : i64, tpu.core_type = #tpu.core_type<tc>, window_params = [{transform_indices = @transform_0, window_bounds = array<i64: 32, 288>}, {pipeline_mode = #tpu.pipeline_mode<synchronous>, transform_indices = @transform_1, window_bounds = array<i64: 288, 128>}, {pipeline_mode = #tpu.pipeline_mode<synchronous>, transform_indices = @transform_2, window_bounds = array<i64: 1, 128>}, {transform_indices = @transform_3, window_bounds = array<i64: 32, 128>}]} {
    %c0 = arith.constant 0 : index
    %c0_0 = arith.constant 0 : index
    %0 = vector.load %arg1[%c0, %c0_0] : memref<32x288xbf16, #tpu.memory_space<vmem>>, vector<32x288xbf16>
    %c0_1 = arith.constant 0 : index
    %c0_2 = arith.constant 0 : index
    %1 = vector.load %arg2[%c0_1, %c0_2] : memref<288x128xbf16, #tpu.memory_space<vmem>>, vector<288x128xbf16>
    %cst = arith.constant dense<0.000000e+00> : vector<32x128xf32>
    %2 = tpu.matmul %0, %1, %cst {dimension_numbers = #tpu.dot_dimension_numbers<[1], [0], [0], [1], [0, 0, 1, 1], [], []>} : vector<32x288xbf16>, vector<288x128xbf16>, vector<32x128xf32> -> vector<32x128xf32>
    %c0_3 = arith.constant 0 : index
    %c0_4 = arith.constant 0 : index
    %3 = vector.load %arg3[%c0_3, %c0_4] : memref<1x128xf32, #tpu.memory_space<vmem>>, vector<1x128xf32>
    %4 = vector.broadcast %3 : vector<1x128xf32> to vector<32x128xf32>
    %5 = arith.addf %2, %4 : vector<32x128xf32>
    %6 = tpu.iota {dimensions = array<i32: 1>} : vector<32x128xi32>
    %c64_i32 = arith.constant 64 : i32
    %7 = vector.broadcast %c64_i32 : i32 to vector<32x128xi32>
    %8 = arith.cmpi slt, %6, %7 : vector<32x128xi32>
    %cst_5 = arith.constant 0.000000e+00 : f32
    %9 = vector.broadcast %cst_5 : f32 to vector<32x128xf32>
    %10 = arith.maximumf %5, %9 : vector<32x128xf32>
    %11 = arith.select %8, %10, %5 : vector<32x128xi1>, vector<32x128xf32>
    %12 = arith.truncf %11 : vector<32x128xf32> to vector<32x128xbf16>
    %c0_6 = arith.constant 0 : index
    %c0_7 = arith.constant 0 : index
    %13 = vector.load %arg4[%c0_6, %c0_7] : memref<32x128xbf16, #tpu.memory_space<vmem>>, vector<32x128xbf16>
    tpu.vector_store %arg4[%c0_6, %c0_7], %12 {strides = array<i32>} : memref<32x128xbf16, #tpu.memory_space<vmem>>, vector<32x128xbf16>,
    return
  }
  func.func @transform_0(%arg0: i32) -> (i32, i32) {
    %c0_i32 = arith.constant 0 : i32
    %c0_i32_0 = arith.constant 0 : i32
    return %arg0, %c0_i32 : i32, i32
  }
  func.func @transform_1(%arg0: i32) -> (i32, i32) {
    %c0_i32 = arith.constant 0 : i32
    %c0_i32_0 = arith.constant 0 : i32
    %c0_i32_1 = arith.constant 0 : i32
    return %c0_i32, %c0_i32_0 : i32, i32
  }
  func.func @transform_2(%arg0: i32) -> (i32, i32) {
    %c0_i32 = arith.constant 0 : i32
    %c0_i32_0 = arith.constant 0 : i32
    %c0_i32_1 = arith.constant 0 : i32
    return %c0_i32, %c0_i32_0 : i32, i32
  }
  func.func @transform_3(%arg0: i32) -> (i32, i32) {
    %c0_i32 = arith.constant 0 : i32
    %c0_i32_0 = arith.constant 0 : i32
    return %arg0, %c0_i32 : i32, i32
  }
}

module attributes {stable_mosaic.version = 11 : i64} {
  func.func @_conv_gemm_kernel(%arg0: i32, %arg1: memref<32x576xbf16, #tpu.memory_space<vmem>>, %arg2: memref<576x64xbf16, #tpu.memory_space<vmem>>, %arg3: memref<1x64xf32, #tpu.memory_space<vmem>>, %arg4: memref<32x64xbf16, #tpu.memory_space<vmem>>) attributes {dimension_semantics = [#tpu.dimension_semantics<parallel>], iteration_bounds = array<i64: 1>, scalar_prefetch = 0 : i64, scratch_operands = 0 : i64, tpu.core_type = #tpu.core_type<tc>, window_params = [{transform_indices = @transform_0, window_bounds = array<i64: 32, 576>}, {pipeline_mode = #tpu.pipeline_mode<synchronous>, transform_indices = @transform_1, window_bounds = array<i64: 576, 64>}, {pipeline_mode = #tpu.pipeline_mode<synchronous>, transform_indices = @transform_2, window_bounds = array<i64: 1, 64>}, {transform_indices = @transform_3, window_bounds = array<i64: 32, 64>}]} {
    %c0 = arith.constant 0 : index
    %c0_0 = arith.constant 0 : index
    %0 = vector.load %arg1[%c0, %c0_0] : memref<32x576xbf16, #tpu.memory_space<vmem>>, vector<32x576xbf16>
    %c0_1 = arith.constant 0 : index
    %c0_2 = arith.constant 0 : index
    %1 = vector.load %arg2[%c0_1, %c0_2] : memref<576x64xbf16, #tpu.memory_space<vmem>>, vector<576x64xbf16>
    %cst = arith.constant dense<0.000000e+00> : vector<32x64xf32>
    %2 = tpu.matmul %0, %1, %cst {dimension_numbers = #tpu.dot_dimension_numbers<[1], [0], [0], [1], [0, 0, 1, 1], [], []>} : vector<32x576xbf16>, vector<576x64xbf16>, vector<32x64xf32> -> vector<32x64xf32>
    %c0_3 = arith.constant 0 : index
    %c0_4 = arith.constant 0 : index
    %3 = vector.load %arg3[%c0_3, %c0_4] : memref<1x64xf32, #tpu.memory_space<vmem>>, vector<1x64xf32>
    %4 = vector.broadcast %3 : vector<1x64xf32> to vector<32x64xf32>
    %5 = arith.addf %2, %4 : vector<32x64xf32>
    %cst_5 = arith.constant 0.000000e+00 : f32
    %6 = vector.broadcast %cst_5 : f32 to vector<32x64xf32>
    %7 = arith.maximumf %5, %6 : vector<32x64xf32>
    %8 = arith.truncf %7 : vector<32x64xf32> to vector<32x64xbf16>
    %c0_6 = arith.constant 0 : index
    %c0_7 = arith.constant 0 : index
    %9 = vector.load %arg4[%c0_6, %c0_7] : memref<32x64xbf16, #tpu.memory_space<vmem>>, vector<32x64xbf16>
    tpu.vector_store %arg4[%c0_6, %c0_7], %8 {strides = array<i32>} : memref<32x64xbf16, #tpu.memory_space<vmem>>, vector<32x64xbf16>,
    return
  }
  func.func @transform_0(%arg0: i32) -> (i32, i32) {
    %c0_i32 = arith.constant 0 : i32
    %c0_i32_0 = arith.constant 0 : i32
    return %arg0, %c0_i32 : i32, i32
  }
  func.func @transform_1(%arg0: i32) -> (i32, i32) {
    %c0_i32 = arith.constant 0 : i32
    %c0_i32_0 = arith.constant 0 : i32
    %c0_i32_1 = arith.constant 0 : i32
    return %c0_i32, %c0_i32_0 : i32, i32
  }
  func.func @transform_2(%arg0: i32) -> (i32, i32) {
    %c0_i32 = arith.constant 0 : i32
    %c0_i32_0 = arith.constant 0 : i32
    %c0_i32_1 = arith.constant 0 : i32
    return %c0_i32, %c0_i32_0 : i32, i32
  }
  func.func @transform_3(%arg0: i32) -> (i32, i32) {
    %c0_i32 = arith.constant 0 : i32
    %c0_i32_0 = arith.constant 0 : i32
    return %arg0, %c0_i32 : i32, i32
  }
}

module attributes {stable_mosaic.version = 11 : i64} {
  func.func @_conv_gemm_kernel(%arg0: i32, %arg1: memref<32x576xbf16, #tpu.memory_space<vmem>>, %arg2: memref<576x64xbf16, #tpu.memory_space<vmem>>, %arg3: memref<1x64xf32, #tpu.memory_space<vmem>>, %arg4: memref<32x64xbf16, #tpu.memory_space<vmem>>, %arg5: memref<32x64xbf16, #tpu.memory_space<vmem>>) attributes {dimension_semantics = [#tpu.dimension_semantics<parallel>], iteration_bounds = array<i64: 1>, scalar_prefetch = 0 : i64, scratch_operands = 0 : i64, tpu.core_type = #tpu.core_type<tc>, window_params = [{transform_indices = @transform_0, window_bounds = array<i64: 32, 576>}, {pipeline_mode = #tpu.pipeline_mode<synchronous>, transform_indices = @transform_1, window_bounds = array<i64: 576, 64>}, {pipeline_mode = #tpu.pipeline_mode<synchronous>, transform_indices = @transform_2, window_bounds = array<i64: 1, 64>}, {transform_indices = @transform_3, window_bounds = array<i64: 32, 64>}, {transform_indices = @transform_4, window_bounds = array<i64: 32, 64>}]} {
    %c0 = arith.constant 0 : index
    %c0_0 = arith.constant 0 : index
    %0 = vector.load %arg1[%c0, %c0_0] : memref<32x576xbf16, #tpu.memory_space<vmem>>, vector<32x576xbf16>
    %c0_1 = arith.constant 0 : index
    %c0_2 = arith.constant 0 : index
    %1 = vector.load %arg2[%c0_1, %c0_2] : memref<576x64xbf16, #tpu.memory_space<vmem>>, vector<576x64xbf16>
    %cst = arith.constant dense<0.000000e+00> : vector<32x64xf32>
    %2 = tpu.matmul %0, %1, %cst {dimension_numbers = #tpu.dot_dimension_numbers<[1], [0], [0], [1], [0, 0, 1, 1], [], []>} : vector<32x576xbf16>, vector<576x64xbf16>, vector<32x64xf32> -> vector<32x64xf32>
    %c0_3 = arith.constant 0 : index
    %c0_4 = arith.constant 0 : index
    %3 = vector.load %arg3[%c0_3, %c0_4] : memref<1x64xf32, #tpu.memory_space<vmem>>, vector<1x64xf32>
    %4 = vector.broadcast %3 : vector<1x64xf32> to vector<32x64xf32>
    %5 = arith.addf %2, %4 : vector<32x64xf32>
    %c0_5 = arith.constant 0 : index
    %c0_6 = arith.constant 0 : index
    %6 = vector.load %arg4[%c0_5, %c0_6] : memref<32x64xbf16, #tpu.memory_space<vmem>>, vector<32x64xbf16>
    %7 = arith.extf %6 : vector<32x64xbf16> to vector<32x64xf32>
    %8 = arith.addf %5, %7 : vector<32x64xf32>
    %cst_7 = arith.constant 0.000000e+00 : f32
    %9 = vector.broadcast %cst_7 : f32 to vector<32x64xf32>
    %10 = arith.maximumf %8, %9 : vector<32x64xf32>
    %11 = arith.truncf %10 : vector<32x64xf32> to vector<32x64xbf16>
    %c0_8 = arith.constant 0 : index
    %c0_9 = arith.constant 0 : index
    %12 = vector.load %arg5[%c0_8, %c0_9] : memref<32x64xbf16, #tpu.memory_space<vmem>>, vector<32x64xbf16>
    tpu.vector_store %arg5[%c0_8, %c0_9], %11 {strides = array<i32>} : memref<32x64xbf16, #tpu.memory_space<vmem>>, vector<32x64xbf16>,
    return
  }
  func.func @transform_0(%arg0: i32) -> (i32, i32) {
    %c0_i32 = arith.constant 0 : i32
    %c0_i32_0 = arith.constant 0 : i32
    return %arg0, %c0_i32 : i32, i32
  }
  func.func @transform_1(%arg0: i32) -> (i32, i32) {
    %c0_i32 = arith.constant 0 : i32
    %c0_i32_0 = arith.constant 0 : i32
    %c0_i32_1 = arith.constant 0 : i32
    return %c0_i32, %c0_i32_0 : i32, i32
  }
  func.func @transform_2(%arg0: i32) -> (i32, i32) {
    %c0_i32 = arith.constant 0 : i32
    %c0_i32_0 = arith.constant 0 : i32
    %c0_i32_1 = arith.constant 0 : i32
    return %c0_i32, %c0_i32_0 : i32, i32
  }
  func.func @transform_3(%arg0: i32) -> (i32, i32) {
    %c0_i32 = arith.constant 0 : i32
    %c0_i32_0 = arith.constant 0 : i32
    return %arg0, %c0_i32 : i32, i32
  }
  func.func @transform_4(%arg0: i32) -> (i32, i32) {
    %c0_i32 = arith.constant 0 : i32
    %c0_i32_0 = arith.constant 0 : i32
    return %arg0, %c0_i32 : i32, i32
  }
}

module attributes {stable_mosaic.version = 11 : i64} {
  func.func @_conv_gemm_kernel(%arg0: i32, %arg1: memref<32x576xbf16, #tpu.memory_space<vmem>>, %arg2: memref<576x64xbf16, #tpu.memory_space<vmem>>, %arg3: memref<1x64xf32, #tpu.memory_space<vmem>>, %arg4: memref<32x64xbf16, #tpu.memory_space<vmem>>, %arg5: memref<2x32xf32, #tpu.memory_space<vmem>>, %arg6: memref<64x10xf32, #tpu.memory_space<vmem>>, %arg7: memref<1x10xf32, #tpu.memory_space<vmem>>, %arg8: memref<2x10xf32, #tpu.memory_space<vmem>>) attributes {dimension_semantics = [#tpu.dimension_semantics<parallel>], iteration_bounds = array<i64: 1>, scalar_prefetch = 0 : i64, scratch_operands = 0 : i64, tpu.core_type = #tpu.core_type<tc>, window_params = [{transform_indices = @transform_0, window_bounds = array<i64: 32, 576>}, {pipeline_mode = #tpu.pipeline_mode<synchronous>, transform_indices = @transform_1, window_bounds = array<i64: 576, 64>}, {pipeline_mode = #tpu.pipeline_mode<synchronous>, transform_indices = @transform_2, window_bounds = array<i64: 1, 64>}, {transform_indices = @transform_3, window_bounds = array<i64: 32, 64>}, {pipeline_mode = #tpu.pipeline_mode<synchronous>, transform_indices = @transform_4, window_bounds = array<i64: 2, 32>}, {pipeline_mode = #tpu.pipeline_mode<synchronous>, transform_indices = @transform_5, window_bounds = array<i64: 64, 10>}, {pipeline_mode = #tpu.pipeline_mode<synchronous>, transform_indices = @transform_6, window_bounds = array<i64: 1, 10>}, {pipeline_mode = #tpu.pipeline_mode<synchronous>, transform_indices = @transform_7, window_bounds = array<i64: 2, 10>}]} {
    %c0 = arith.constant 0 : index
    %c0_0 = arith.constant 0 : index
    %0 = vector.load %arg1[%c0, %c0_0] : memref<32x576xbf16, #tpu.memory_space<vmem>>, vector<32x576xbf16>
    %c0_1 = arith.constant 0 : index
    %c0_2 = arith.constant 0 : index
    %1 = vector.load %arg2[%c0_1, %c0_2] : memref<576x64xbf16, #tpu.memory_space<vmem>>, vector<576x64xbf16>
    %cst = arith.constant dense<0.000000e+00> : vector<32x64xf32>
    %2 = tpu.matmul %0, %1, %cst {dimension_numbers = #tpu.dot_dimension_numbers<[1], [0], [0], [1], [0, 0, 1, 1], [], []>} : vector<32x576xbf16>, vector<576x64xbf16>, vector<32x64xf32> -> vector<32x64xf32>
    %c0_3 = arith.constant 0 : index
    %c0_4 = arith.constant 0 : index
    %3 = vector.load %arg3[%c0_3, %c0_4] : memref<1x64xf32, #tpu.memory_space<vmem>>, vector<1x64xf32>
    %4 = vector.broadcast %3 : vector<1x64xf32> to vector<32x64xf32>
    %5 = arith.addf %2, %4 : vector<32x64xf32>
    %c0_5 = arith.constant 0 : index
    %c0_6 = arith.constant 0 : index
    %6 = vector.load %arg4[%c0_5, %c0_6] : memref<32x64xbf16, #tpu.memory_space<vmem>>, vector<32x64xbf16>
    %7 = arith.extf %6 : vector<32x64xbf16> to vector<32x64xf32>
    %8 = arith.addf %5, %7 : vector<32x64xf32>
    %cst_7 = arith.constant 0.000000e+00 : f32
    %9 = vector.broadcast %cst_7 : f32 to vector<32x64xf32>
    %10 = arith.maximumf %8, %9 : vector<32x64xf32>
    %c0_8 = arith.constant 0 : index
    %c0_9 = arith.constant 0 : index
    %11 = vector.load %arg5[%c0_8, %c0_9] : memref<2x32xf32, #tpu.memory_space<vmem>>, vector<2x32xf32>
    %cst_10 = arith.constant dense<0.000000e+00> : vector<2x64xf32>
    %12 = tpu.matmul %11, %10, %cst_10 {dimension_numbers = #tpu.dot_dimension_numbers<[1], [0], [0], [1], [0, 0, 1, 1], [], []>} : vector<2x32xf32>, vector<32x64xf32>, vector<2x64xf32> -> vector<2x64xf32>
    %c0_11 = arith.constant 0 : index
    %c0_12 = arith.constant 0 : index
    %13 = vector.load %arg6[%c0_11, %c0_12] : memref<64x10xf32, #tpu.memory_space<vmem>>, vector<64x10xf32>
    %cst_13 = arith.constant dense<0.000000e+00> : vector<2x10xf32>
    %14 = tpu.matmul %12, %13, %cst_13 {dimension_numbers = #tpu.dot_dimension_numbers<[1], [0], [0], [1], [0, 0, 1, 1], [], []>} : vector<2x64xf32>, vector<64x10xf32>, vector<2x10xf32> -> vector<2x10xf32>
    %c0_14 = arith.constant 0 : index
    %c0_15 = arith.constant 0 : index
    %15 = vector.load %arg7[%c0_14, %c0_15] : memref<1x10xf32, #tpu.memory_space<vmem>>, vector<1x10xf32>
    %16 = vector.broadcast %15 : vector<1x10xf32> to vector<2x10xf32>
    %17 = arith.addf %14, %16 : vector<2x10xf32>
    %c0_16 = arith.constant 0 : index
    %c0_17 = arith.constant 0 : index
    %18 = vector.load %arg8[%c0_16, %c0_17] : memref<2x10xf32, #tpu.memory_space<vmem>>, vector<2x10xf32>
    tpu.vector_store %arg8[%c0_16, %c0_17], %17 {strides = array<i32>} : memref<2x10xf32, #tpu.memory_space<vmem>>, vector<2x10xf32>,
    return
  }
  func.func @transform_0(%arg0: i32) -> (i32, i32) {
    %c0_i32 = arith.constant 0 : i32
    %c0_i32_0 = arith.constant 0 : i32
    return %arg0, %c0_i32 : i32, i32
  }
  func.func @transform_1(%arg0: i32) -> (i32, i32) {
    %c0_i32 = arith.constant 0 : i32
    %c0_i32_0 = arith.constant 0 : i32
    %c0_i32_1 = arith.constant 0 : i32
    return %c0_i32, %c0_i32_0 : i32, i32
  }
  func.func @transform_2(%arg0: i32) -> (i32, i32) {
    %c0_i32 = arith.constant 0 : i32
    %c0_i32_0 = arith.constant 0 : i32
    %c0_i32_1 = arith.constant 0 : i32
    return %c0_i32, %c0_i32_0 : i32, i32
  }
  func.func @transform_3(%arg0: i32) -> (i32, i32) {
    %c0_i32 = arith.constant 0 : i32
    %c0_i32_0 = arith.constant 0 : i32
    return %arg0, %c0_i32 : i32, i32
  }
  func.func @transform_4(%arg0: i32) -> (i32, i32) {
    %c0_i32 = arith.constant 0 : i32
    %c0_i32_0 = arith.constant 0 : i32
    %c0_i32_1 = arith.constant 0 : i32
    return %c0_i32, %c0_i32_0 : i32, i32
  }
  func.func @transform_5(%arg0: i32) -> (i32, i32) {
    %c0_i32 = arith.constant 0 : i32
    %c0_i32_0 = arith.constant 0 : i32
    %c0_i32_1 = arith.constant 0 : i32
    return %c0_i32, %c0_i32_0 : i32, i32
  }
  func.func @transform_6(%arg0: i32) -> (i32, i32) {
    %c0_i32 = arith.constant 0 : i32
    %c0_i32_0 = arith.constant 0 : i32
    %c0_i32_1 = arith.constant 0 : i32
    return %c0_i32, %c0_i32_0 : i32, i32
  }
  func.func @transform_7(%arg0: i32) -> (i32, i32) {
    %c0_i32 = arith.constant 0 : i32
    %c0_i32_0 = arith.constant 0 : i32
    %c0_i32_1 = arith.constant 0 : i32
    return %c0_i32, %c0_i32_0 : i32, i32
  }
}

</mosaic_0001>

<llo_original>
// kernel: resnet_forward.19
$region0: #{resnet_forward.19}
  #allocation0 [shape = 'u32[]', space=smem, size = 0x4, offset = 0x4, fixed_abs, tag = 'smem constant byte address 0x4 - core index']
  #allocation1 [shape = 'u32[144,128]{1,0:T(1,128)}', space=vmem, size = 0x12000, scoped, tag = 'internal scratch']
  %s0 = inlined_call_operand.vmem [shape: bf16[512,27], index: 0, kind: input, shape index: {}]
  %s1 = inlined_call_operand.vmem [shape: bf16[27,16], index: 1, kind: input, shape index: {}]
  %s2 = inlined_call_operand.vmem [shape: f32[1,16], index: 2, kind: input, shape index: {}]
  %s3 = inlined_call_operand.vmem [shape: bf16[512,16], index: 3, kind: output, shape index: {}]
  %s4 = sld [smem:[#allocation0]]
  $region22: #{resnet_forward.19} parent=0
    _
  %s6 = ssub.s32 1, %s4
  %s7 = scalar_select 0, %s6, %s4
  // Predicated region
  $region2: #{resnet_forward.19} parent=0 // pred_check
    _
  $region3: #{resnet_forward.19} parent=0 // pred_check_branch
    %9 = sbr.rel (0) target = $region5
  $region4: #{resnet_forward.19} parent=0 // pred_region
    _
  $region5: #{resnet_forward.19} parent=0 // pred_fallthru
    _
  // Predicated region
  $region6: #{resnet_forward.19} parent=0 // pred_check
    _
  $region7: #{resnet_forward.19} parent=0 // pred_check_branch
    %11 = sbr.rel (0) target = $region9
  $region8: #{resnet_forward.19} parent=0 // pred_region
    _
  $region9: #{resnet_forward.19} parent=0 // pred_fallthru
    _
  // Predicated region
  $region10: #{resnet_forward.19} parent=0 // pred_check
    _
  $region11: #{resnet_forward.19} parent=0 // pred_check_branch
    %13 = sbr.rel (0) target = $region13
  $region12: #{resnet_forward.19} parent=0 // pred_region
    _
  $region13: #{resnet_forward.19} parent=0 // pred_fallthru
    _
  %v15 = vld [vmem:[%s0] sm:$0xf]
  %v16 = vld [vmem:[%s0 + $0x4] sm:$0xf]
  %v17 = vld [vmem:[%s0 + $0x8] sm:$0xf]
  %v18 = vld [vmem:[%s0 + $0xc] sm:$0xf]
  %v19 = vld [vmem:[%s0 + $0x10] sm:$0xf]
  %v20 = vld [vmem:[%s0 + $0x14] sm:$0xf]
  %v21 = vld [vmem:[%s0 + $0x18] sm:$0xf]
  %v22 = vld [vmem:[%s0 + $0x1c] sm:$0xf]
  %v23 = vld [vmem:[%s0 + $0x20] sm:$0xf]
  %v24 = vld [vmem:[%s0 + $0x24] sm:$0xf]
  %v25 = vld [vmem:[%s0 + $0x28] sm:$0xf]
  %v26 = vld [vmem:[%s0 + $0x2c] sm:$0xf]
  %v27 = vld [vmem:[%s0 + $0x30] sm:$0xf]
  %v28 = vld [vmem:[%s0 + $0x34] sm:$0xf]
  %v29 = vld [vmem:[%s0 + $0x38] sm:$0xf]
  %v30 = vld [vmem:[%s0 + $0x3c] sm:$0xf]
  %v31 = vld [vmem:[%s0 + $0x40] sm:$0xf]
  %v32 = vld [vmem:[%s0 + $0x44] sm:$0xf]
  %v33 = vld [vmem:[%s0 + $0x48] sm:$0xf]
  %v34 = vld [vmem:[%s0 + $0x4c] sm:$0xf]
  %v35 = vld [vmem:[%s0 + $0x50] sm:$0xf]
  %v36 = vld [vmem:[%s0 + $0x54] sm:$0xf]
  %v37 = vld [vmem:[%s0 + $0x58] sm:$0xf]
  %v38 = vld [vmem:[%s0 + $0x5c] sm:$0xf]
  %v39 = vld [vmem:[%s0 + $0x60] sm:$0xf]
  %v40 = vld [vmem:[%s0 + $0x64] sm:$0xf]
  %v41 = vld [vmem:[%s0 + $0x68] sm:$0xf]
  %v42 = vld [vmem:[%s0 + $0x6c] sm:$0xf]
  %v43 = vld [vmem:[%s0 + $0x70] sm:$0xf]
  %v44 = vld [vmem:[%s0 + $0x74] sm:$0xf]
  %v45 = vld [vmem:[%s0 + $0x78] sm:$0xf]
  %v46 = vld [vmem:[%s0 + $0x7c] sm:$0xf]
  %v47 = vld [vmem:[%s0 + $0x80] sm:$0xf]
  %v48 = vld [vmem:[%s0 + $0x84] sm:$0xf]
  %v49 = vld [vmem:[%s0 + $0x88] sm:$0xf]
  %v50 = vld [vmem:[%s0 + $0x8c] sm:$0xf]
  %v51 = vld [vmem:[%s0 + $0x90] sm:$0xf]
  %v52 = vld [vmem:[%s0 + $0x94] sm:$0xf]
  %v53 = vld [vmem:[%s0 + $0x98] sm:$0xf]
  %v54 = vld [vmem:[%s0 + $0x9c] sm:$0xf]
  %v55 = vld [vmem:[%s0 + $0xa0] sm:$0xf]
  %v56 = vld [vmem:[%s0 + $0xa4] sm:$0xf]
  %v57 = vld [vmem:[%s0 + $0xa8] sm:$0xf]
  %v58 = vld [vmem:[%s0 + $0xac] sm:$0xf]
  %v59 = vld [vmem:[%s0 + $0xb0] sm:$0xf]
  %v60 = vld [vmem:[%s0 + $0xb4] sm:$0xf]
  %v61 = vld [vmem:[%s0 + $0xb8] sm:$0xf]
  %v62 = vld [vmem:[%s0 + $0xbc] sm:$0xf]
  %v63 = vld [vmem:[%s0 + $0xc0] sm:$0xf]
  %v64 = vld [vmem:[%s0 + $0xc4] sm:$0xf]
  %v65 = vld [vmem:[%s0 + $0xc8] sm:$0xf]
  %v66 = vld [vmem:[%s0 + $0xcc] sm:$0xf]
  %v67 = vld [vmem:[%s0 + $0xd0] sm:$0xf]
  %v68 = vld [vmem:[%s0 + $0xd4] sm:$0xf]
  %v69 = vld [vmem:[%s0 + $0xd8] sm:$0xf]
  %v70 = vld [vmem:[%s0 + $0xdc] sm:$0xf]
  %v71 = vld [vmem:[%s0 + $0xe0] sm:$0xf]
  %v72 = vld [vmem:[%s0 + $0xe4] sm:$0xf]
  %v73 = vld [vmem:[%s0 + $0xe8] sm:$0xf]
  %v74 = vld [vmem:[%s0 + $0xec] sm:$0xf]
  %v75 = vld [vmem:[%s0 + $0xf0] sm:$0xf]
  %v76 = vld [vmem:[%s0 + $0xf4] sm:$0xf]
  %v77 = vld [vmem:[%s0 + $0xf8] sm:$0xf]
  %v78 = vld [vmem:[%s0 + $0xfc] sm:$0xf]
  %v79 = vld [vmem:[%s1] sm:$0xf]
  %v80 = vld [vmem:[%s1 + $0x4] sm:$0xf]
  %v81 = vld [vmem:[%s1 + $0x8] sm:$0xf]
  %v82 = vld [vmem:[%s1 + $0xc] sm:$0x3]
  %v83 = vld [vmem:[%s2] sm:$0x1]
  %v85 = vlaneseq
  %v86 = vshrl.u32 %v85, 7
  %v87 = vsub.s32 0, %v86
  %v88 = vrot.slane %v83, %v87
  %v154 = vunpack.c.l.b16 %v15
  %v155 = vunpack.c.l.b16 %v16
  %v156 = vunpack.c.l.b16 %v17
  %v157 = vunpack.c.l.b16 %v18
  %v158 = vunpack.c.l.b16 %v19
  %v159 = vunpack.c.l.b16 %v20
  %v160 = vunpack.c.l.b16 %v21
  %v161 = vunpack.c.l.b16 %v22
  %v162 = vunpack.c.l.b16 %v23
  %v163 = vunpack.c.l.b16 %v24
  %v164 = vunpack.c.l.b16 %v25
  %v165 = vunpack.c.l.b16 %v26
  %v166 = vunpack.c.l.b16 %v27
  %v167 = vunpack.c.l.b16 %v28
  %v168 = vunpack.c.l.b16 %v29
  %v169 = vunpack.c.l.b16 %v30
  %v170 = vunpack.c.l.b16 %v31
  %v171 = vunpack.c.l.b16 %v32
  %v172 = vunpack.c.l.b16 %v33
  %v173 = vunpack.c.l.b16 %v34
  %v174 = vunpack.c.l.b16 %v35
  %v175 = vunpack.c.l.b16 %v36
  %v176 = vunpack.c.l.b16 %v37
  %v177 = vunpack.c.l.b16 %v38
  %v178 = vunpack.c.l.b16 %v39
  %v179 = vunpack.c.l.b16 %v40
  %v180 = vunpack.c.l.b16 %v41
  %v181 = vunpack.c.l.b16 %v42
  %v182 = vunpack.c.l.b16 %v43
  %v183 = vunpack.c.l.b16 %v44
  %v184 = vunpack.c.l.b16 %v45
  %v185 = vunpack.c.l.b16 %v46
  %v186 = vunpack.c.l.b16 %v47
  %v187 = vunpack.c.l.b16 %v48
  %v188 = vunpack.c.l.b16 %v49
  %v189 = vunpack.c.l.b16 %v50
  %v190 = vunpack.c.l.b16 %v51
  %v191 = vunpack.c.l.b16 %v52
  %v192 = vunpack.c.l.b16 %v53
  %v193 = vunpack.c.l.b16 %v54
  %v194 = vunpack.c.l.b16 %v55
  %v195 = vunpack.c.l.b16 %v56
  %v196 = vunpack.c.l.b16 %v57
  %v197 = vunpack.c.l.b16 %v58
  %v198 = vunpack.c.l.b16 %v59
  %v199 = vunpack.c.l.b16 %v60
  %v200 = vunpack.c.l.b16 %v61
  %v201 = vunpack.c.l.b16 %v62
  %v202 = vunpack.c.l.b16 %v63
  %v203 = vunpack.c.l.b16 %v64
  %v204 = vunpack.c.l.b16 %v65
  %v205 = vunpack.c.l.b16 %v66
  %v206 = vunpack.c.l.b16 %v67
  %v207 = vunpack.c.l.b16 %v68
  %v208 = vunpack.c.l.b16 %v69
  %v209 = vunpack.c.l.b16 %v70
  %v210 = vunpack.c.l.b16 %v71
  %v211 = vunpack.c.l.b16 %v72
  %v212 = vunpack.c.l.b16 %v73
  %v213 = vunpack.c.l.b16 %v74
  %v214 = vunpack.c.l.b16 %v75
  %v215 = vunpack.c.l.b16 %v76
  %v216 = vunpack.c.l.b16 %v77
  %v217 = vunpack.c.l.b16 %v78
  %v218 = vpack.c.b16 %v155, %v154
  %v219 = vpack.c.b16 %v157, %v156
  %v220 = vpack.c.b16 %v159, %v158
  %v221 = vpack.c.b16 %v161, %v160
  %v222 = vpack.c.b16 %v163, %v162
  %v223 = vpack.c.b16 %v165, %v164
  %v224 = vpack.c.b16 %v167, %v166
  %v225 = vpack.c.b16 %v169, %v168
  %v226 = vpack.c.b16 %v171, %v170
  %v227 = vpack.c.b16 %v173, %v172
  %v228 = vpack.c.b16 %v175, %v174
  %v229 = vpack.c.b16 %v177, %v176
  %v230 = vpack.c.b16 %v179, %v178
  %v231 = vpack.c.b16 %v181, %v180
  %v232 = vpack.c.b16 %v183, %v182
  %v233 = vpack.c.b16 %v185, %v184
  %v234 = vpack.c.b16 %v187, %v186
  %v235 = vpack.c.b16 %v189, %v188
  %v236 = vpack.c.b16 %v191, %v190
  %v237 = vpack.c.b16 %v193, %v192
  %v238 = vpack.c.b16 %v195, %v194
  %v239 = vpack.c.b16 %v197, %v196
  %v240 = vpack.c.b16 %v199, %v198
  %v241 = vpack.c.b16 %v201, %v200
  %v242 = vpack.c.b16 %v203, %v202
  %v243 = vpack.c.b16 %v205, %v204
  %v244 = vpack.c.b16 %v207, %v206
  %v245 = vpack.c.b16 %v209, %v208
  %v246 = vpack.c.b16 %v211, %v210
  %v247 = vpack.c.b16 %v213, %v212
  %v248 = vpack.c.b16 %v215, %v214
  %v249 = vpack.c.b16 %v217, %v216
  %v254 = vunpack.c.l.b16 %v79
  %v255 = vunpack.c.l.b16 %v80
  %v256 = vunpack.c.l.b16 %v81
  %v257 = vunpack.c.l.b16 %v82
  %v258 = vpack.c.b16 %v255, %v254
  %v259 = vpack.c.b16 %v257, %v256
  %vm261 = vcmask 220160
  %v263 = vsel %vm261, %v218, 0
  %v266 = vsel %vm261, %v219, 0
  %v269 = vsel %vm261, %v220, 0
  %v272 = vsel %vm261, %v221, 0
  %v275 = vsel %vm261, %v222, 0
  %v278 = vsel %vm261, %v223, 0
  %v281 = vsel %vm261, %v224, 0
  %v284 = vsel %vm261, %v225, 0
  %v287 = vsel %vm261, %v226, 0
  %v290 = vsel %vm261, %v227, 0
  %v293 = vsel %vm261, %v228, 0
  %v296 = vsel %vm261, %v229, 0
  %v299 = vsel %vm261, %v230, 0
  %v302 = vsel %vm261, %v231, 0
  %v305 = vsel %vm261, %v232, 0
  %v308 = vsel %vm261, %v233, 0
  %v311 = vsel %vm261, %v234, 0
  %v314 = vsel %vm261, %v235, 0
  %v317 = vsel %vm261, %v236, 0
  %v320 = vsel %vm261, %v237, 0
  %v323 = vsel %vm261, %v238, 0
  %v326 = vsel %vm261, %v239, 0
  %v329 = vsel %vm261, %v240, 0
  %v332 = vsel %vm261, %v241, 0
  %v335 = vsel %vm261, %v242, 0
  %v338 = vsel %vm261, %v243, 0
  %v341 = vsel %vm261, %v244, 0
  %v344 = vsel %vm261, %v245, 0
  %v347 = vsel %vm261, %v246, 0
  %v350 = vsel %vm261, %v247, 0
  %v353 = vsel %vm261, %v248, 0
  %v356 = vsel %vm261, %v249, 0
  %vm358 = vcmask 1044480
  %vm359 = vcmask 1045504
  %v360 = vsel %vm358, 4294967295, 65535
  %v361 = vsel %vm359, %v360, 0
  %v363 = vand.u32 %v259, %v361
  %365 = vmatprep.subr.bf16.mxu0 0
  %366 = vmatpush1.bf16.msra.mxu0 %v258
  %367 = vmatprep.subr.bf16.mxu0 0
  %368 = vmatpush1.bf16.msra.mxu0 %v363
  %369 = vmatprep.subr.bf16.mxu0 0
  %370 = vmatpush1.bf16.msra.mxu0 0
  %371 = vmatprep.subr.bf16.mxu0 0
  %372 = vmatpush1.bf16.msra.mxu0 0
  %373 = vmatprep.subr.bf16.mxu0 0
  %374 = vmatpush1.bf16.msra.mxu0 0
  %375 = vmatprep.subr.bf16.mxu0 0
  %376 = vmatpush1.bf16.msra.mxu0 0
  %377 = vmatprep.subr.bf16.mxu0 0
  %378 = vmatpush1.bf16.msra.mxu0 0
  %379 = vmatprep.subr.bf16.mxu0 0
  %380 = vmatpush1.bf16.msra.mxu0 0
  %381 = vmatprep.subr.bf16.mxu0 0
  %382 = vmatpush1.bf16.msra.mxu0 0
  %383 = vmatprep.subr.bf16.mxu0 0
  %384 = vmatpush1.bf16.msra.mxu0 0
  %385 = vmatprep.subr.bf16.mxu0 0
  %386 = vmatpush1.bf16.msra.mxu0 0
  %387 = vmatprep.subr.bf16.mxu0 0
  %388 = vmatpush1.bf16.msra.mxu0 0
  %389 = vmatprep.subr.bf16.mxu0 0
  %390 = vmatpush1.bf16.msra.mxu0 0
  %391 = vmatprep.subr.bf16.mxu0 0
  %392 = vmatpush1.bf16.msra.mxu0 0
  %393 = vmatprep.subr.bf16.mxu0 0
  %394 = vmatpush1.bf16.msra.mxu0 0
  %395 = vmatprep.subr.bf16.mxu0 0
  %396 = vmatpush1.bf16.msra.mxu0 0
  %397 = vmatprep.mubr.bf16.mxu0 0
  %398 = vmatmul.mubr.bf16.gmra.mrb[0].mxu0 %v263
  %v399 = vpop.f32.mrb[0].mxu0
  %v400 = vadd.f32 %v88, %v399
  %v401 = vpop.f32.mrb[0].mxu0
  %v402 = vpop.f32.mrb[0].mxu0
  %v403 = vadd.f32 %v88, %v402
  %v404 = vpop.f32.mrb[0].mxu0
  %405 = vmatprep.mubr.bf16.mxu0 0
  %406 = vmatmul.mubr.bf16.gmra.mrb[0].mxu0 %v266
  %v407 = vpop.f32.mrb[0].mxu0
  %v408 = vadd.f32 %v88, %v407
  %v409 = vpop.f32.mrb[0].mxu0
  %v410 = vpop.f32.mrb[0].mxu0
  %v411 = vadd.f32 %v88, %v410
  %v412 = vpop.f32.mrb[0].mxu0
  %413 = vmatprep.mubr.bf16.mxu0 0
  %414 = vmatmul.mubr.bf16.gmra.mrb[0].mxu0 %v269
  %v415 = vpop.f32.mrb[0].mxu0
  %v416 = vadd.f32 %v88, %v415
  %v417 = vpop.f32.mrb[0].mxu0
  %v418 = vpop.f32.mrb[0].mxu0
  %v419 = vadd.f32 %v88, %v418
  %v420 = vpop.f32.mrb[0].mxu0
  %421 = vmatprep.mubr.bf16.mxu0 0
  %422 = vmatmul.mubr.bf16.gmra.mrb[0].mxu0 %v272
  %v423 = vpop.f32.mrb[0].mxu0
  %v424 = vadd.f32 %v88, %v423
  %v425 = vpop.f32.mrb[0].mxu0
  %v426 = vpop.f32.mrb[0].mxu0
  %v427 = vadd.f32 %v88, %v426
  %v428 = vpop.f32.mrb[0].mxu0
  %429 = vmatprep.mubr.bf16.mxu0 0
  %430 = vmatmul.mubr.bf16.gmra.mrb[0].mxu0 %v275
  %v431 = vpop.f32.mrb[0].mxu0
  %v432 = vadd.f32 %v88, %v431
  %v433 = vpop.f32.mrb[0].mxu0
  %v434 = vpop.f32.mrb[0].mxu0
  %v435 = vadd.f32 %v88, %v434
  %v436 = vpop.f32.mrb[0].mxu0
  %437 = vmatprep.mubr.bf16.mxu0 0
  %438 = vmatmul.mubr.bf16.gmra.mrb[0].mxu0 %v278
  %v439 = vpop.f32.mrb[0].mxu0
  %v440 = vadd.f32 %v88, %v439
  %v441 = vpop.f32.mrb[0].mxu0
  %v442 = vpop.f32.mrb[0].mxu0
  %v443 = vadd.f32 %v88, %v442
  %v444 = vpop.f32.mrb[0].mxu0
  %445 = vmatprep.mubr.bf16.mxu0 0
  %446 = vmatmul.mubr.bf16.gmra.mrb[0].mxu0 %v281
  %v447 = vpop.f32.mrb[0].mxu0
  %v448 = vadd.f32 %v88, %v447
  %v449 = vpop.f32.mrb[0].mxu0
  %v450 = vpop.f32.mrb[0].mxu0
  %v451 = vadd.f32 %v88, %v450
  %v452 = vpop.f32.mrb[0].mxu0
  %453 = vmatprep.mubr.bf16.mxu0 0
  %454 = vmatmul.mubr.bf16.gmra.mrb[0].mxu0 %v284
  %v455 = vpop.f32.mrb[0].mxu0
  %v456 = vadd.f32 %v88, %v455
  %v457 = vpop.f32.mrb[0].mxu0
  %v458 = vpop.f32.mrb[0].mxu0
  %v459 = vadd.f32 %v88, %v458
  %v460 = vpop.f32.mrb[0].mxu0
  %461 = vmatprep.mubr.bf16.mxu0 0
  %462 = vmatmul.mubr.bf16.gmra.mrb[0].mxu0 %v287
  %v463 = vpop.f32.mrb[0].mxu0
  %v464 = vadd.f32 %v88, %v463
  %v465 = vpop.f32.mrb[0].mxu0
  %v466 = vpop.f32.mrb[0].mxu0
  %v467 = vadd.f32 %v88, %v466
  %v468 = vpop.f32.mrb[0].mxu0
  %469 = vmatprep.mubr.bf16.mxu0 0
  %470 = vmatmul.mubr.bf16.gmra.mrb[0].mxu0 %v290
  %v471 = vpop.f32.mrb[0].mxu0
  %v472 = vadd.f32 %v88, %v471
  %v473 = vpop.f32.mrb[0].mxu0
  %v474 = vpop.f32.mrb[0].mxu0
  %v475 = vadd.f32 %v88, %v474
  %v476 = vpop.f32.mrb[0].mxu0
  %477 = vmatprep.mubr.bf16.mxu0 0
  %478 = vmatmul.mubr.bf16.gmra.mrb[0].mxu0 %v293
  %v479 = vpop.f32.mrb[0].mxu0
  %v480 = vadd.f32 %v88, %v479
  %v481 = vpop.f32.mrb[0].mxu0
  %v482 = vpop.f32.mrb[0].mxu0
  %v483 = vadd.f32 %v88, %v482
  %v484 = vpop.f32.mrb[0].mxu0
  %485 = vmatprep.mubr.bf16.mxu0 0
  %486 = vmatmul.mubr.bf16.gmra.mrb[0].mxu0 %v296
  %v487 = vpop.f32.mrb[0].mxu0
  %v488 = vadd.f32 %v88, %v487
  %v489 = vpop.f32.mrb[0].mxu0
  %v490 = vpop.f32.mrb[0].mxu0
  %v491 = vadd.f32 %v88, %v490
  %v492 = vpop.f32.mrb[0].mxu0
  %493 = vmatprep.mubr.bf16.mxu0 0
  %494 = vmatmul.mubr.bf16.gmra.mrb[0].mxu0 %v299
  %v495 = vpop.f32.mrb[0].mxu0
  %v496 = vadd.f32 %v88, %v495
  %v497 = vpop.f32.mrb[0].mxu0
  %v498 = vpop.f32.mrb[0].mxu0
  %v499 = vadd.f32 %v88, %v498
  %v500 = vpop.f32.mrb[0].mxu0
  %501 = vmatprep.mubr.bf16.mxu0 0
  %502 = vmatmul.mubr.bf16.gmra.mrb[0].mxu0 %v302
  %v503 = vpop.f32.mrb[0].mxu0
  %v504 = vadd.f32 %v88, %v503
  %v505 = vpop.f32.mrb[0].mxu0
  %v506 = vpop.f32.mrb[0].mxu0
  %v507 = vadd.f32 %v88, %v506
  %v508 = vpop.f32.mrb[0].mxu0
  %509 = vmatprep.mubr.bf16.mxu0 0
  %510 = vmatmul.mubr.bf16.gmra.mrb[0].mxu0 %v305
  %v511 = vpop.f32.mrb[0].mxu0
  %v512 = vadd.f32 %v88, %v511
  %v513 = vpop.f32.mrb[0].mxu0
  %v514 = vpop.f32.mrb[0].mxu0
  %v515 = vadd.f32 %v88, %v514
  %v516 = vpop.f32.mrb[0].mxu0
  %517 = vmatprep.mubr.bf16.mxu0 0
  %518 = vmatmul.mubr.bf16.gmra.mrb[0].mxu0 %v308
  %v519 = vpop.f32.mrb[0].mxu0
  %v520 = vadd.f32 %v88, %v519
  %v521 = vpop.f32.mrb[0].mxu0
  %v522 = vpop.f32.mrb[0].mxu0
  %v523 = vadd.f32 %v88, %v522
  %v524 = vpop.f32.mrb[0].mxu0
  %525 = vmatprep.mubr.bf16.mxu0 0
  %526 = vmatmul.mubr.bf16.gmra.mrb[0].mxu0 %v311
  %v527 = vpop.f32.mrb[0].mxu0
  %v528 = vadd.f32 %v88, %v527
  %v529 = vpop.f32.mrb[0].mxu0
  %v530 = vpop.f32.mrb[0].mxu0
  %v531 = vadd.f32 %v88, %v530
  %v532 = vpop.f32.mrb[0].mxu0
  %533 = vmatprep.mubr.bf16.mxu0 0
  %534 = vmatmul.mubr.bf16.gmra.mrb[0].mxu0 %v314
  %v535 = vpop.f32.mrb[0].mxu0
  %v536 = vadd.f32 %v88, %v535
  %v537 = vpop.f32.mrb[0].mxu0
  %v538 = vpop.f32.mrb[0].mxu0
  %v539 = vadd.f32 %v88, %v538
  %v540 = vpop.f32.mrb[0].mxu0
  %541 = vmatprep.mubr.bf16.mxu0 0
  %542 = vmatmul.mubr.bf16.gmra.mrb[0].mxu0 %v317
  %v543 = vpop.f32.mrb[0].mxu0
  %v544 = vadd.f32 %v88, %v543
  %v545 = vpop.f32.mrb[0].mxu0
  %v546 = vpop.f32.mrb[0].mxu0
  %v547 = vadd.f32 %v88, %v546
  %v548 = vpop.f32.mrb[0].mxu0
  %549 = vmatprep.mubr.bf16.mxu0 0
  %550 = vmatmul.mubr.bf16.gmra.mrb[0].mxu0 %v320
  %v551 = vpop.f32.mrb[0].mxu0
  %v552 = vadd.f32 %v88, %v551
  %v553 = vpop.f32.mrb[0].mxu0
  %v554 = vpop.f32.mrb[0].mxu0
  %v555 = vadd.f32 %v88, %v554
  %v556 = vpop.f32.mrb[0].mxu0
  %557 = vmatprep.mubr.bf16.mxu0 0
  %558 = vmatmul.mubr.bf16.gmra.mrb[0].mxu0 %v323
  %v559 = vpop.f32.mrb[0].mxu0
  %v560 = vadd.f32 %v88, %v559
  %v561 = vpop.f32.mrb[0].mxu0
  %v562 = vpop.f32.mrb[0].mxu0
  %v563 = vadd.f32 %v88, %v562
  %v564 = vpop.f32.mrb[0].mxu0
  %565 = vmatprep.mubr.bf16.mxu0 0
  %566 = vmatmul.mubr.bf16.gmra.mrb[0].mxu0 %v326
  %v567 = vpop.f32.mrb[0].mxu0
  %v568 = vadd.f32 %v88, %v567
  %v569 = vpop.f32.mrb[0].mxu0
  %v570 = vpop.f32.mrb[0].mxu0
  %v571 = vadd.f32 %v88, %v570
  %v572 = vpop.f32.mrb[0].mxu0
  %573 = vmatprep.mubr.bf16.mxu0 0
  %574 = vmatmul.mubr.bf16.gmra.mrb[0].mxu0 %v329
  %v575 = vpop.f32.mrb[0].mxu0
  %v576 = vadd.f32 %v88, %v575
  %v577 = vpop.f32.mrb[0].mxu0
  %v578 = vpop.f32.mrb[0].mxu0
  %v579 = vadd.f32 %v88, %v578
  %v580 = vpop.f32.mrb[0].mxu0
  %581 = vmatprep.mubr.bf16.mxu0 0
  %582 = vmatmul.mubr.bf16.gmra.mrb[0].mxu0 %v332
  %v583 = vpop.f32.mrb[0].mxu0
  %v584 = vadd.f32 %v88, %v583
  %v585 = vpop.f32.mrb[0].mxu0
  %v586 = vpop.f32.mrb[0].mxu0
  %v587 = vadd.f32 %v88, %v586
  %v588 = vpop.f32.mrb[0].mxu0
  %589 = vmatprep.mubr.bf16.mxu0 0
  %590 = vmatmul.mubr.bf16.gmra.mrb[0].mxu0 %v335
  %v591 = vpop.f32.mrb[0].mxu0
  %v592 = vadd.f32 %v88, %v591
  %v593 = vpop.f32.mrb[0].mxu0
  %v594 = vpop.f32.mrb[0].mxu0
  %v595 = vadd.f32 %v88, %v594
  %v596 = vpop.f32.mrb[0].mxu0
  %597 = vmatprep.mubr.bf16.mxu0 0
  %598 = vmatmul.mubr.bf16.gmra.mrb[0].mxu0 %v338
  %v599 = vpop.f32.mrb[0].mxu0
  %v600 = vadd.f32 %v88, %v599
  %v601 = vpop.f32.mrb[0].mxu0
  %v602 = vpop.f32.mrb[0].mxu0
  %v603 = vadd.f32 %v88, %v602
  %v604 = vpop.f32.mrb[0].mxu0
  %605 = vmatprep.mubr.bf16.mxu0 0
  %606 = vmatmul.mubr.bf16.gmra.mrb[0].mxu0 %v341
  %v607 = vpop.f32.mrb[0].mxu0
  %v608 = vadd.f32 %v88, %v607
  %v609 = vpop.f32.mrb[0].mxu0
  %v610 = vpop.f32.mrb[0].mxu0
  %v611 = vadd.f32 %v88, %v610
  %v612 = vpop.f32.mrb[0].mxu0
  %613 = vmatprep.mubr.bf16.mxu0 0
  %614 = vmatmul.mubr.bf16.gmra.mrb[0].mxu0 %v344
  %v615 = vpop.f32.mrb[0].mxu0
  %v616 = vadd.f32 %v88, %v615
  %v617 = vpop.f32.mrb[0].mxu0
  %v618 = vpop.f32.mrb[0].mxu0
  %v619 = vadd.f32 %v88, %v618
  %v620 = vpop.f32.mrb[0].mxu0
  %621 = vmatprep.mubr.bf16.mxu0 0
  %622 = vmatmul.mubr.bf16.gmra.mrb[0].mxu0 %v347
  %v623 = vpop.f32.mrb[0].mxu0
  %v624 = vadd.f32 %v88, %v623
  %v625 = vpop.f32.mrb[0].mxu0
  %v626 = vpop.f32.mrb[0].mxu0
  %v627 = vadd.f32 %v88, %v626
  %v628 = vpop.f32.mrb[0].mxu0
  %629 = vmatprep.mubr.bf16.mxu0 0
  %630 = vmatmul.mubr.bf16.gmra.mrb[0].mxu0 %v350
  %v631 = vpop.f32.mrb[0].mxu0
  %v632 = vadd.f32 %v88, %v631
  %v633 = vpop.f32.mrb[0].mxu0
  %v634 = vpop.f32.mrb[0].mxu0
  %v635 = vadd.f32 %v88, %v634
  %v636 = vpop.f32.mrb[0].mxu0
  %637 = vmatprep.mubr.bf16.mxu0 0
  %638 = vmatmul.mubr.bf16.gmra.mrb[0].mxu0 %v353
  %v639 = vpop.f32.mrb[0].mxu0
  %v640 = vadd.f32 %v88, %v639
  %v641 = vpop.f32.mrb[0].mxu0
  %v642 = vpop.f32.mrb[0].mxu0
  %v643 = vadd.f32 %v88, %v642
  %v644 = vpop.f32.mrb[0].mxu0
  %645 = vmatprep.mubr.bf16.mxu0 0
  %646 = vmatmul.mubr.bf16.gmra.mrb[0].mxu0 %v356
  %v647 = vpop.f32.mrb[0].mxu0
  %v648 = vadd.f32 %v88, %v647
  %v649 = vpop.f32.mrb[0].mxu0
  %v650 = vpop.f32.mrb[0].mxu0
  %v651 = vadd.f32 %v88, %v650
  %v652 = vpop.f32.mrb[0].mxu0
  %653 = vdwg.mxu0
  %v654 = vmax.f32 %v400, 0.0
  %v655 = vmax.f32 %v403, 0.0
  %v656 = vmax.f32 %v408, 0.0
  %v657 = vmax.f32 %v411, 0.0
  %v658 = vmax.f32 %v416, 0.0
  %v659 = vmax.f32 %v419, 0.0
  %v660 = vmax.f32 %v424, 0.0
  %v661 = vmax.f32 %v427, 0.0
  %v662 = vmax.f32 %v432, 0.0
  %v663 = vmax.f32 %v435, 0.0
  %v664 = vmax.f32 %v440, 0.0
  %v665 = vmax.f32 %v443, 0.0
  %v666 = vmax.f32 %v448, 0.0
  %v667 = vmax.f32 %v451, 0.0
  %v668 = vmax.f32 %v456, 0.0
  %v669 = vmax.f32 %v459, 0.0
  %v670 = vmax.f32 %v464, 0.0
  %v671 = vmax.f32 %v467, 0.0
  %v672 = vmax.f32 %v472, 0.0
  %v673 = vmax.f32 %v475, 0.0
  %v674 = vmax.f32 %v480, 0.0
  %v675 = vmax.f32 %v483, 0.0
  %v676 = vmax.f32 %v488, 0.0
  %v677 = vmax.f32 %v491, 0.0
  %v678 = vmax.f32 %v496, 0.0
  %v679 = vmax.f32 %v499, 0.0
  %v680 = vmax.f32 %v504, 0.0
  %v681 = vmax.f32 %v507, 0.0
  %v682 = vmax.f32 %v512, 0.0
  %v683 = vmax.f32 %v515, 0.0
  %v684 = vmax.f32 %v520, 0.0
  %v685 = vmax.f32 %v523, 0.0
  %v686 = vmax.f32 %v528, 0.0
  %v687 = vmax.f32 %v531, 0.0
  %v688 = vmax.f32 %v536, 0.0
  %v689 = vmax.f32 %v539, 0.0
  %v690 = vmax.f32 %v544, 0.0
  %v691 = vmax.f32 %v547, 0.0
  %v692 = vmax.f32 %v552, 0.0
  %v693 = vmax.f32 %v555, 0.0
  %v694 = vmax.f32 %v560, 0.0
  %v695 = vmax.f32 %v563, 0.0
  %v696 = vmax.f32 %v568, 0.0
  %v697 = vmax.f32 %v571, 0.0
  %v698 = vmax.f32 %v576, 0.0
  %v699 = vmax.f32 %v579, 0.0
  %v700 = vmax.f32 %v584, 0.0
  %v701 = vmax.f32 %v587, 0.0
  %v702 = vmax.f32 %v592, 0.0
  %v703 = vmax.f32 %v595, 0.0
  %v704 = vmax.f32 %v600, 0.0
  %v705 = vmax.f32 %v603, 0.0
  %v706 = vmax.f32 %v608, 0.0
  %v707 = vmax.f32 %v611, 0.0
  %v708 = vmax.f32 %v616, 0.0
  %v709 = vmax.f32 %v619, 0.0
  %v710 = vmax.f32 %v624, 0.0
  %v711 = vmax.f32 %v627, 0.0
  %v712 = vmax.f32 %v632, 0.0
  %v713 = vmax.f32 %v635, 0.0
  %v714 = vmax.f32 %v640, 0.0
  %v715 = vmax.f32 %v643, 0.0
  %v716 = vmax.f32 %v648, 0.0
  %v717 = vmax.f32 %v651, 0.0
  %v718 = vpack.c.bf16 %v655, %v654
  %v719 = vpack.c.bf16 %v657, %v656
  %v720 = vpack.c.bf16 %v659, %v658
  %v721 = vpack.c.bf16 %v661, %v660
  %v722 = vpack.c.bf16 %v663, %v662
  %v723 = vpack.c.bf16 %v665, %v664
  %v724 = vpack.c.bf16 %v667, %v666
  %v725 = vpack.c.bf16 %v669, %v668
  %v726 = vpack.c.bf16 %v671, %v670
  %v727 = vpack.c.bf16 %v673, %v672
  %v728 = vpack.c.bf16 %v675, %v674
  %v729 = vpack.c.bf16 %v677, %v676
  %v730 = vpack.c.bf16 %v679, %v678
  %v731 = vpack.c.bf16 %v681, %v680
  %v732 = vpack.c.bf16 %v683, %v682
  %v733 = vpack.c.bf16 %v685, %v684
  %v734 = vpack.c.bf16 %v687, %v686
  %v735 = vpack.c.bf16 %v689, %v688
  %v736 = vpack.c.bf16 %v691, %v690
  %v737 = vpack.c.bf16 %v693, %v692
  %v738 = vpack.c.bf16 %v695, %v694
  %v739 = vpack.c.bf16 %v697, %v696
  %v740 = vpack.c.bf16 %v699, %v698
  %v741 = vpack.c.bf16 %v701, %v700
  %v742 = vpack.c.bf16 %v703, %v702
  %v743 = vpack.c.bf16 %v705, %v704
  %v744 = vpack.c.bf16 %v707, %v706
  %v745 = vpack.c.bf16 %v709, %v708
  %v746 = vpack.c.bf16 %v711, %v710
  %v747 = vpack.c.bf16 %v713, %v712
  %v748 = vpack.c.bf16 %v715, %v714
  %v749 = vpack.c.bf16 %v717, %v716
  %v782 = vunpack.c.l.b16 %v718
  %v783 = vunpack.c.h.b16 %v718
  %v784 = vunpack.c.l.b16 %v719
  %v785 = vunpack.c.h.b16 %v719
  %v786 = vunpack.c.l.b16 %v720
  %v787 = vunpack.c.h.b16 %v720
  %v788 = vunpack.c.l.b16 %v721
  %v789 = vunpack.c.h.b16 %v721
  %v790 = vunpack.c.l.b16 %v722
  %v791 = vunpack.c.h.b16 %v722
  %v792 = vunpack.c.l.b16 %v723
  %v793 = vunpack.c.h.b16 %v723
  %v794 = vunpack.c.l.b16 %v724
  %v795 = vunpack.c.h.b16 %v724
  %v796 = vunpack.c.l.b16 %v725
  %v797 = vunpack.c.h.b16 %v725
  %v798 = vunpack.c.l.b16 %v726
  %v799 = vunpack.c.h.b16 %v726
  %v800 = vunpack.c.l.b16 %v727
  %v801 = vunpack.c.h.b16 %v727
  %v802 = vunpack.c.l.b16 %v728
  %v803 = vunpack.c.h.b16 %v728
  %v804 = vunpack.c.l.b16 %v729
  %v805 = vunpack.c.h.b16 %v729
  %v806 = vunpack.c.l.b16 %v730
  %v807 = vunpack.c.h.b16 %v730
  %v808 = vunpack.c.l.b16 %v731
  %v809 = vunpack.c.h.b16 %v731
  %v810 = vunpack.c.l.b16 %v732
  %v811 = vunpack.c.h.b16 %v732
  %v812 = vunpack.c.l.b16 %v733
  %v813 = vunpack.c.h.b16 %v733
  %v814 = vunpack.c.l.b16 %v734
  %v815 = vunpack.c.h.b16 %v734
  %v816 = vunpack.c.l.b16 %v735
  %v817 = vunpack.c.h.b16 %v735
  %v818 = vunpack.c.l.b16 %v736
  %v819 = vunpack.c.h.b16 %v736
  %v820 = vunpack.c.l.b16 %v737
  %v821 = vunpack.c.h.b16 %v737
  %v822 = vunpack.c.l.b16 %v738
  %v823 = vunpack.c.h.b16 %v738
  %v824 = vunpack.c.l.b16 %v739
  %v825 = vunpack.c.h.b16 %v739
  %v826 = vunpack.c.l.b16 %v740
  %v827 = vunpack.c.h.b16 %v740
  %v828 = vunpack.c.l.b16 %v741
  %v829 = vunpack.c.h.b16 %v741
  %v830 = vunpack.c.l.b16 %v742
  %v831 = vunpack.c.h.b16 %v742
  %v832 = vunpack.c.l.b16 %v743
  %v833 = vunpack.c.h.b16 %v743
  %v834 = vunpack.c.l.b16 %v744
  %v835 = vunpack.c.h.b16 %v744
  %v836 = vunpack.c.l.b16 %v745
  %v837 = vunpack.c.h.b16 %v745
  %v838 = vunpack.c.l.b16 %v746
  %v839 = vunpack.c.h.b16 %v746
  %v840 = vunpack.c.l.b16 %v747
  %v841 = vunpack.c.h.b16 %v747
  %v842 = vunpack.c.l.b16 %v748
  %v843 = vunpack.c.h.b16 %v748
  %v844 = vunpack.c.l.b16 %v749
  %v845 = vunpack.c.h.b16 %v749
  %v846 = vpack.c.b16 %v782, %v782
  %v847 = vpack.c.b16 %v783, %v783
  %v848 = vpack.c.b16 %v784, %v784
  %v849 = vpack.c.b16 %v785, %v785
  %v850 = vpack.c.b16 %v786, %v786
  %v851 = vpack.c.b16 %v787, %v787
  %v852 = vpack.c.b16 %v788, %v788
  %v853 = vpack.c.b16 %v789, %v789
  %v854 = vpack.c.b16 %v790, %v790
  %v855 = vpack.c.b16 %v791, %v791
  %v856 = vpack.c.b16 %v792, %v792
  %v857 = vpack.c.b16 %v793, %v793
  %v858 = vpack.c.b16 %v794, %v794
  %v859 = vpack.c.b16 %v795, %v795
  %v860 = vpack.c.b16 %v796, %v796
  %v861 = vpack.c.b16 %v797, %v797
  %v862 = vpack.c.b16 %v798, %v798
  %v863 = vpack.c.b16 %v799, %v799
  %v864 = vpack.c.b16 %v800, %v800
  %v865 = vpack.c.b16 %v801, %v801
  %v866 = vpack.c.b16 %v802, %v802
  %v867 = vpack.c.b16 %v803, %v803
  %v868 = vpack.c.b16 %v804, %v804
  %v869 = vpack.c.b16 %v805, %v805
  %v870 = vpack.c.b16 %v806, %v806
  %v871 = vpack.c.b16 %v807, %v807
  %v872 = vpack.c.b16 %v808, %v808
  %v873 = vpack.c.b16 %v809, %v809
  %v874 = vpack.c.b16 %v810, %v810
  %v875 = vpack.c.b16 %v811, %v811
  %v876 = vpack.c.b16 %v812, %v812
  %v877 = vpack.c.b16 %v813, %v813
  %v878 = vpack.c.b16 %v814, %v814
  %v879 = vpack.c.b16 %v815, %v815
  %v880 = vpack.c.b16 %v816, %v816
  %v881 = vpack.c.b16 %v817, %v817
  %v882 = vpack.c.b16 %v818, %v818
  %v883 = vpack.c.b16 %v819, %v819
  %v884 = vpack.c.b16 %v820, %v820
  %v885 = vpack.c.b16 %v821, %v821
  %v886 = vpack.c.b16 %v822, %v822
  %v887 = vpack.c.b16 %v823, %v823
  %v888 = vpack.c.b16 %v824, %v824
  %v889 = vpack.c.b16 %v825, %v825
  %v890 = vpack.c.b16 %v826, %v826
  %v891 = vpack.c.b16 %v827, %v827
  %v892 = vpack.c.b16 %v828, %v828
  %v893 = vpack.c.b16 %v829, %v829
  %v894 = vpack.c.b16 %v830, %v830
  %v895 = vpack.c.b16 %v831, %v831
  %v896 = vpack.c.b16 %v832, %v832
  %v897 = vpack.c.b16 %v833, %v833
  %v898 = vpack.c.b16 %v834, %v834
  %v899 = vpack.c.b16 %v835, %v835
  %v900 = vpack.c.b16 %v836, %v836
  %v901 = vpack.c.b16 %v837, %v837
  %v902 = vpack.c.b16 %v838, %v838
  %v903 = vpack.c.b16 %v839, %v839
  %v904 = vpack.c.b16 %v840, %v840
  %v905 = vpack.c.b16 %v841, %v841
  %v906 = vpack.c.b16 %v842, %v842
  %v907 = vpack.c.b16 %v843, %v843
  %v908 = vpack.c.b16 %v844, %v844
  %v909 = vpack.c.b16 %v845, %v845
  %vm974 = vcmask 125952
  %975 = vst.msk [vmem:[%s3] sm:$0xf] %vm974, %v846
  %976 = vst.msk [vmem:[%s3 + $0x4] sm:$0xf] %vm974, %v847
  %977 = vst.msk [vmem:[%s3 + $0x8] sm:$0xf] %vm974, %v848
  %978 = vst.msk [vmem:[%s3 + $0xc] sm:$0xf] %vm974, %v849
  %979 = vst.msk [vmem:[%s3 + $0x10] sm:$0xf] %vm974, %v850
  %980 = vst.msk [vmem:[%s3 + $0x14] sm:$0xf] %vm974, %v851
  %981 = vst.msk [vmem:[%s3 + $0x18] sm:$0xf] %vm974, %v852
  %982 = vst.msk [vmem:[%s3 + $0x1c] sm:$0xf] %vm974, %v853
  %983 = vst.msk [vmem:[%s3 + $0x20] sm:$0xf] %vm974, %v854
  %984 = vst.msk [vmem:[%s3 + $0x24] sm:$0xf] %vm974, %v855
  %985 = vst.msk [vmem:[%s3 + $0x28] sm:$0xf] %vm974, %v856
  %986 = vst.msk [vmem:[%s3 + $0x2c] sm:$0xf] %vm974, %v857
  %987 = vst.msk [vmem:[%s3 + $0x30] sm:$0xf] %vm974, %v858
  %988 = vst.msk [vmem:[%s3 + $0x34] sm:$0xf] %vm974, %v859
  %989 = vst.msk [vmem:[%s3 + $0x38] sm:$0xf] %vm974, %v860
  %990 = vst.msk [vmem:[%s3 + $0x3c] sm:$0xf] %vm974, %v861
  %991 = vst.msk [vmem:[%s3 + $0x40] sm:$0xf] %vm974, %v862
  %992 = vst.msk [vmem:[%s3 + $0x44] sm:$0xf] %vm974, %v863
  %993 = vst.msk [vmem:[%s3 + $0x48] sm:$0xf] %vm974, %v864
  %994 = vst.msk [vmem:[%s3 + $0x4c] sm:$0xf] %vm974, %v865
  %995 = vst.msk [vmem:[%s3 + $0x50] sm:$0xf] %vm974, %v866
  %996 = vst.msk [vmem:[%s3 + $0x54] sm:$0xf] %vm974, %v867
  %997 = vst.msk [vmem:[%s3 + $0x58] sm:$0xf] %vm974, %v868
  %998 = vst.msk [vmem:[%s3 + $0x5c] sm:$0xf] %vm974, %v869
  %999 = vst.msk [vmem:[%s3 + $0x60] sm:$0xf] %vm974, %v870
  %1000 = vst.msk [vmem:[%s3 + $0x64] sm:$0xf] %vm974, %v871
  %1001 = vst.msk [vmem:[%s3 + $0x68] sm:$0xf] %vm974, %v872
  %1002 = vst.msk [vmem:[%s3 + $0x6c] sm:$0xf] %vm974, %v873
  %1003 = vst.msk [vmem:[%s3 + $0x70] sm:$0xf] %vm974, %v874
  %1004 = vst.msk [vmem:[%s3 + $0x74] sm:$0xf] %vm974, %v875
  %1005 = vst.msk [vmem:[%s3 + $0x78] sm:$0xf] %vm974, %v876
  %1006 = vst.msk [vmem:[%s3 + $0x7c] sm:$0xf] %vm974, %v877
  %1007 = vst.msk [vmem:[%s3 + $0x80] sm:$0xf] %vm974, %v878
  %1008 = vst.msk [vmem:[%s3 + $0x84] sm:$0xf] %vm974, %v879
  %1009 = vst.msk [vmem:[%s3 + $0x88] sm:$0xf] %vm974, %v880
  %1010 = vst.msk [vmem:[%s3 + $0x8c] sm:$0xf] %vm974, %v881
  %1011 = vst.msk [vmem:[%s3 + $0x90] sm:$0xf] %vm974, %v882
  %1012 = vst.msk [vmem:[%s3 + $0x94] sm:$0xf] %vm974, %v883
  %1013 = vst.msk [vmem:[%s3 + $0x98] sm:$0xf] %vm974, %v884
  %1014 = vst.msk [vmem:[%s3 + $0x9c] sm:$0xf] %vm974, %v885
  %1015 = vst.msk [vmem:[%s3 + $0xa0] sm:$0xf] %vm974, %v886
  %1016 = vst.msk [vmem:[%s3 + $0xa4] sm:$0xf] %vm974, %v887
  %1017 = vst.msk [vmem:[%s3 + $0xa8] sm:$0xf] %vm974, %v888
  %1018 = vst.msk [vmem:[%s3 + $0xac] sm:$0xf] %vm974, %v889
  %1019 = vst.msk [vmem:[%s3 + $0xb0] sm:$0xf] %vm974, %v890
  %1020 = vst.msk [vmem:[%s3 + $0xb4] sm:$0xf] %vm974, %v891
  %1021 = vst.msk [vmem:[%s3 + $0xb8] sm:$0xf] %vm974, %v892
  %1022 = vst.msk [vmem:[%s3 + $0xbc] sm:$0xf] %vm974, %v893
  %1023 = vst.msk [vmem:[%s3 + $0xc0] sm:$0xf] %vm974, %v894
  %1024 = vst.msk [vmem:[%s3 + $0xc4] sm:$0xf] %vm974, %v895
  %1025 = vst.msk [vmem:[%s3 + $0xc8] sm:$0xf] %vm974, %v896
  %1026 = vst.msk [vmem:[%s3 + $0xcc] sm:$0xf] %vm974, %v897
  %1027 = vst.msk [vmem:[%s3 + $0xd0] sm:$0xf] %vm974, %v898
  %1028 = vst.msk [vmem:[%s3 + $0xd4] sm:$0xf] %vm974, %v899
  %1029 = vst.msk [vmem:[%s3 + $0xd8] sm:$0xf] %vm974, %v900
  %1030 = vst.msk [vmem:[%s3 + $0xdc] sm:$0xf] %vm974, %v901
  %1031 = vst.msk [vmem:[%s3 + $0xe0] sm:$0xf] %vm974, %v902
  %1032 = vst.msk [vmem:[%s3 + $0xe4] sm:$0xf] %vm974, %v903
  %1033 = vst.msk [vmem:[%s3 + $0xe8] sm:$0xf] %vm974, %v904
  %1034 = vst.msk [vmem:[%s3 + $0xec] sm:$0xf] %vm974, %v905
  %1035 = vst.msk [vmem:[%s3 + $0xf0] sm:$0xf] %vm974, %v906
  %1036 = vst.msk [vmem:[%s3 + $0xf4] sm:$0xf] %vm974, %v907
  %1037 = vst.msk [vmem:[%s3 + $0xf8] sm:$0xf] %vm974, %v908
  %1038 = vst.msk [vmem:[%s3 + $0xfc] sm:$0xf] %vm974, %v909
  // Predicated region
  $region14: #{resnet_forward.19} parent=0 // pred_check
    _
  $region15: #{resnet_forward.19} parent=0 // pred_check_branch
    %1040 = sbr.rel (0) target = $region17
  $region16: #{resnet_forward.19} parent=0 // pred_region
    _
  $region17: #{resnet_forward.19} parent=0 // pred_fallthru
    _
  // Predicated region
  $region18: #{resnet_forward.19} parent=0 // pred_check
    _
  $region19: #{resnet_forward.19} parent=0 // pred_check_branch
    %1042 = sbr.rel (0) target = $region21
  $region20: #{resnet_forward.19} parent=0 // pred_region
    _
  $region21: #{resnet_forward.19} parent=0 // pred_fallthru
    _

// kernel: resnet_forward.20
$region0: #{resnet_forward.20}
  #allocation0 [shape = 'u32[]', space=smem, size = 0x4, offset = 0x4, fixed_abs, tag = 'smem constant byte address 0x4 - core index']
  #allocation1 [shape = 'u32[144,128]{1,0:T(1,128)}', space=vmem, size = 0x12000, scoped, tag = 'internal scratch']
  %s0 = inlined_call_operand.vmem [shape: bf16[512,144], index: 0, kind: input, shape index: {}]
  %s1 = inlined_call_operand.vmem [shape: bf16[144,16], index: 1, kind: input, shape index: {}]
  %s2 = inlined_call_operand.vmem [shape: f32[1,16], index: 2, kind: input, shape index: {}]
  %s3 = inlined_call_operand.vmem [shape: bf16[512,16], index: 3, kind: output, shape index: {}]
  %s4 = sld [smem:[#allocation0]]
  $region22: #{resnet_forward.20} parent=0
    _
  %s6 = ssub.s32 1, %s4
  %s7 = scalar_select 0, %s6, %s4
  // Predicated region
  $region2: #{resnet_forward.20} parent=0 // pred_check
    _
  $region3: #{resnet_forward.20} parent=0 // pred_check_branch
    %9 = sbr.rel (0) target = $region5
  $region4: #{resnet_forward.20} parent=0 // pred_region
    _
  $region5: #{resnet_forward.20} parent=0 // pred_fallthru
    _
  // Predicated region
  $region6: #{resnet_forward.20} parent=0 // pred_check
    _
  $region7: #{resnet_forward.20} parent=0 // pred_check_branch
    %11 = sbr.rel (0) target = $region9
  $region8: #{resnet_forward.20} parent=0 // pred_region
    _
  $region9: #{resnet_forward.20} parent=0 // pred_fallthru
    _
  // Predicated region
  $region10: #{resnet_forward.20} parent=0 // pred_check
    _
  $region11: #{resnet_forward.20} parent=0 // pred_check_branch
    %13 = sbr.rel (0) target = $region13
  $region12: #{resnet_forward.20} parent=0 // pred_region
    _
  $region13: #{resnet_forward.20} parent=0 // pred_fallthru
    _
  %v15 = vld [vmem:[%s0] sm:$0xff]
  %v16 = vld [vmem:[%s0 + $0x8] sm:$0xff]
  %v17 = vld [vmem:[%s0 + $0x10] sm:$0xff]
  %v18 = vld [vmem:[%s0 + $0x18] sm:$0xff]
  %v19 = vld [vmem:[%s0 + $0x20] sm:$0xff]
  %v20 = vld [vmem:[%s0 + $0x28] sm:$0xff]
  %v21 = vld [vmem:[%s0 + $0x30] sm:$0xff]
  %v22 = vld [vmem:[%s0 + $0x38] sm:$0xff]
  %v23 = vld [vmem:[%s0 + $0x40] sm:$0xff]
  %v24 = vld [vmem:[%s0 + $0x48] sm:$0xff]
  %v25 = vld [vmem:[%s0 + $0x50] sm:$0xff]
  %v26 = vld [vmem:[%s0 + $0x58] sm:$0xff]
  %v27 = vld [vmem:[%s0 + $0x60] sm:$0xff]
  %v28 = vld [vmem:[%s0 + $0x68] sm:$0xff]
  %v29 = vld [vmem:[%s0 + $0x70] sm:$0xff]
  %v30 = vld [vmem:[%s0 + $0x78] sm:$0xff]
  %v31 = vld [vmem:[%s0 + $0x80] sm:$0xff]
  %v32 = vld [vmem:[%s0 + $0x88] sm:$0xff]
  %v33 = vld [vmem:[%s0 + $0x90] sm:$0xff]
  %v34 = vld [vmem:[%s0 + $0x98] sm:$0xff]
  %v35 = vld [vmem:[%s0 + $0xa0] sm:$0xff]
  %v36 = vld [vmem:[%s0 + $0xa8] sm:$0xff]
  %v37 = vld [vmem:[%s0 + $0xb0] sm:$0xff]
  %v38 = vld [vmem:[%s0 + $0xb8] sm:$0xff]
  %v39 = vld [vmem:[%s0 + $0xc0] sm:$0xff]
  %v40 = vld [vmem:[%s0 + $0xc8] sm:$0xff]
  %v41 = vld [vmem:[%s0 + $0xd0] sm:$0xff]
  %v42 = vld [vmem:[%s0 + $0xd8] sm:$0xff]
  %v43 = vld [vmem:[%s0 + $0xe0] sm:$0xff]
  %v44 = vld [vmem:[%s0 + $0xe8] sm:$0xff]
  %v45 = vld [vmem:[%s0 + $0xf0] sm:$0xff]
  %v46 = vld [vmem:[%s0 + $0xf8] sm:$0xff]
  %v47 = vld [vmem:[%s0 + $0x100] sm:$0xff]
  %v48 = vld [vmem:[%s0 + $0x108] sm:$0xff]
  %v49 = vld [vmem:[%s0 + $0x110] sm:$0xff]
  %v50 = vld [vmem:[%s0 + $0x118] sm:$0xff]
  %v51 = vld [vmem:[%s0 + $0x120] sm:$0xff]
  %v52 = vld [vmem:[%s0 + $0x128] sm:$0xff]
  %v53 = vld [vmem:[%s0 + $0x130] sm:$0xff]
  %v54 = vld [vmem:[%s0 + $0x138] sm:$0xff]
  %v55 = vld [vmem:[%s0 + $0x140] sm:$0xff]
  %v56 = vld [vmem:[%s0 + $0x148] sm:$0xff]
  %v57 = vld [vmem:[%s0 + $0x150] sm:$0xff]
  %v58 = vld [vmem:[%s0 + $0x158] sm:$0xff]
  %v59 = vld [vmem:[%s0 + $0x160] sm:$0xff]
  %v60 = vld [vmem:[%s0 + $0x168] sm:$0xff]
  %v61 = vld [vmem:[%s0 + $0x170] sm:$0xff]
  %v62 = vld [vmem:[%s0 + $0x178] sm:$0xff]
  %v63 = vld [vmem:[%s0 + $0x180] sm:$0xff]
  %v64 = vld [vmem:[%s0 + $0x188] sm:$0xff]
  %v65 = vld [vmem:[%s0 + $0x190] sm:$0xff]
  %v66 = vld [vmem:[%s0 + $0x198] sm:$0xff]
  %v67 = vld [vmem:[%s0 + $0x1a0] sm:$0xff]
  %v68 = vld [vmem:[%s0 + $0x1a8] sm:$0xff]
  %v69 = vld [vmem:[%s0 + $0x1b0] sm:$0xff]
  %v70 = vld [vmem:[%s0 + $0x1b8] sm:$0xff]
  %v71 = vld [vmem:[%s0 + $0x1c0] sm:$0xff]
  %v72 = vld [vmem:[%s0 + $0x1c8] sm:$0xff]
  %v73 = vld [vmem:[%s0 + $0x1d0] sm:$0xff]
  %v74 = vld [vmem:[%s0 + $0x1d8] sm:$0xff]
  %v75 = vld [vmem:[%s0 + $0x1e0] sm:$0xff]
  %v76 = vld [vmem:[%s0 + $0x1e8] sm:$0xff]
  %v77 = vld [vmem:[%s0 + $0x1f0] sm:$0xff]
  %v78 = vld [vmem:[%s0 + $0x1f8] sm:$0xff]
  %v79 = vld [vmem:[%s1] sm:$0xf]
  %v80 = vld [vmem:[%s1 + $0x4] sm:$0xf]
  %v81 = vld [vmem:[%s1 + $0x8] sm:$0xf]
  %v82 = vld [vmem:[%s1 + $0xc] sm:$0xf]
  %v83 = vld [vmem:[%s1 + $0x10] sm:$0xf]
  %v84 = vld [vmem:[%s1 + $0x14] sm:$0xf]
  %v85 = vld [vmem:[%s1 + $0x18] sm:$0xf]
  %v86 = vld [vmem:[%s1 + $0x1c] sm:$0xf]
  %v87 = vld [vmem:[%s1 + $0x20] sm:$0xf]
  %v88 = vld [vmem:[%s1 + $0x24] sm:$0xf]
  %v89 = vld [vmem:[%s1 + $0x28] sm:$0xf]
  %v90 = vld [vmem:[%s1 + $0x2c] sm:$0xf]
  %v91 = vld [vmem:[%s1 + $0x30] sm:$0xf]
  %v92 = vld [vmem:[%s1 + $0x34] sm:$0xf]
  %v93 = vld [vmem:[%s1 + $0x38] sm:$0xf]
  %v94 = vld [vmem:[%s1 + $0x3c] sm:$0xf]
  %v95 = vld [vmem:[%s1 + $0x40] sm:$0xf]
  %v96 = vld [vmem:[%s1 + $0x44] sm:$0xf]
  %v97 = vld [vmem:[%s2] sm:$0x1]
  %v99 = vlaneseq
  %v100 = vshrl.u32 %v99, 7
  %v101 = vsub.s32 0, %v100
  %v102 = vrot.slane %v97, %v101
  %v168 = vunpack.c.l.b16 %v15
  %v169 = vunpack.c.h.b16 %v15
  %v170 = vunpack.c.l.b16 %v16
  %v171 = vunpack.c.h.b16 %v16
  %v172 = vunpack.c.l.b16 %v17
  %v173 = vunpack.c.h.b16 %v17
  %v174 = vunpack.c.l.b16 %v18
  %v175 = vunpack.c.h.b16 %v18
  %v176 = vunpack.c.l.b16 %v19
  %v177 = vunpack.c.h.b16 %v19
  %v178 = vunpack.c.l.b16 %v20
  %v179 = vunpack.c.h.b16 %v20
  %v180 = vunpack.c.l.b16 %v21
  %v181 = vunpack.c.h.b16 %v21
  %v182 = vunpack.c.l.b16 %v22
  %v183 = vunpack.c.h.b16 %v22
  %v184 = vunpack.c.l.b16 %v23
  %v185 = vunpack.c.h.b16 %v23
  %v186 = vunpack.c.l.b16 %v24
  %v187 = vunpack.c.h.b16 %v24
  %v188 = vunpack.c.l.b16 %v25
  %v189 = vunpack.c.h.b16 %v25
  %v190 = vunpack.c.l.b16 %v26
  %v191 = vunpack.c.h.b16 %v26
  %v192 = vunpack.c.l.b16 %v27
  %v193 = vunpack.c.h.b16 %v27
  %v194 = vunpack.c.l.b16 %v28
  %v195 = vunpack.c.h.b16 %v28
  %v196 = vunpack.c.l.b16 %v29
  %v197 = vunpack.c.h.b16 %v29
  %v198 = vunpack.c.l.b16 %v30
  %v199 = vunpack.c.h.b16 %v30
  %v200 = vunpack.c.l.b16 %v31
  %v201 = vunpack.c.h.b16 %v31
  %v202 = vunpack.c.l.b16 %v32
  %v203 = vunpack.c.h.b16 %v32
  %v204 = vunpack.c.l.b16 %v33
  %v205 = vunpack.c.h.b16 %v33
  %v206 = vunpack.c.l.b16 %v34
  %v207 = vunpack.c.h.b16 %v34
  %v208 = vunpack.c.l.b16 %v35
  %v209 = vunpack.c.h.b16 %v35
  %v210 = vunpack.c.l.b16 %v36
  %v211 = vunpack.c.h.b16 %v36
  %v212 = vunpack.c.l.b16 %v37
  %v213 = vunpack.c.h.b16 %v37
  %v214 = vunpack.c.l.b16 %v38
  %v215 = vunpack.c.h.b16 %v38
  %v216 = vunpack.c.l.b16 %v39
  %v217 = vunpack.c.h.b16 %v39
  %v218 = vunpack.c.l.b16 %v40
  %v219 = vunpack.c.h.b16 %v40
  %v220 = vunpack.c.l.b16 %v41
  %v221 = vunpack.c.h.b16 %v41
  %v222 = vunpack.c.l.b16 %v42
  %v223 = vunpack.c.h.b16 %v42
  %v224 = vunpack.c.l.b16 %v43
  %v225 = vunpack.c.h.b16 %v43
  %v226 = vunpack.c.l.b16 %v44
  %v227 = vunpack.c.h.b16 %v44
  %v228 = vunpack.c.l.b16 %v45
  %v229 = vunpack.c.h.b16 %v45
  %v230 = vunpack.c.l.b16 %v46
  %v231 = vunpack.c.h.b16 %v46
  %v232 = vunpack.c.l.b16 %v47
  %v233 = vunpack.c.h.b16 %v47
  %v234 = vunpack.c.l.b16 %v48
  %v235 = vunpack.c.h.b16 %v48
  %v236 = vunpack.c.l.b16 %v49
  %v237 = vunpack.c.h.b16 %v49
  %v238 = vunpack.c.l.b16 %v50
  %v239 = vunpack.c.h.b16 %v50
  %v240 = vunpack.c.l.b16 %v51
  %v241 = vunpack.c.h.b16 %v51
  %v242 = vunpack.c.l.b16 %v52
  %v243 = vunpack.c.h.b16 %v52
  %v244 = vunpack.c.l.b16 %v53
  %v245 = vunpack.c.h.b16 %v53
  %v246 = vunpack.c.l.b16 %v54
  %v247 = vunpack.c.h.b16 %v54
  %v248 = vunpack.c.l.b16 %v55
  %v249 = vunpack.c.h.b16 %v55
  %v250 = vunpack.c.l.b16 %v56
  %v251 = vunpack.c.h.b16 %v56
  %v252 = vunpack.c.l.b16 %v57
  %v253 = vunpack.c.h.b16 %v57
  %v254 = vunpack.c.l.b16 %v58
  %v255 = vunpack.c.h.b16 %v58
  %v256 = vunpack.c.l.b16 %v59
  %v257 = vunpack.c.h.b16 %v59
  %v258 = vunpack.c.l.b16 %v60
  %v259 = vunpack.c.h.b16 %v60
  %v260 = vunpack.c.l.b16 %v61
  %v261 = vunpack.c.h.b16 %v61
  %v262 = vunpack.c.l.b16 %v62
  %v263 = vunpack.c.h.b16 %v62
  %v264 = vunpack.c.l.b16 %v63
  %v265 = vunpack.c.h.b16 %v63
  %v266 = vunpack.c.l.b16 %v64
  %v267 = vunpack.c.h.b16 %v64
  %v268 = vunpack.c.l.b16 %v65
  %v269 = vunpack.c.h.b16 %v65
  %v270 = vunpack.c.l.b16 %v66
  %v271 = vunpack.c.h.b16 %v66
  %v272 = vunpack.c.l.b16 %v67
  %v273 = vunpack.c.h.b16 %v67
  %v274 = vunpack.c.l.b16 %v68
  %v275 = vunpack.c.h.b16 %v68
  %v276 = vunpack.c.l.b16 %v69
  %v277 = vunpack.c.h.b16 %v69
  %v278 = vunpack.c.l.b16 %v70
  %v279 = vunpack.c.h.b16 %v70
  %v280 = vunpack.c.l.b16 %v71
  %v281 = vunpack.c.h.b16 %v71
  %v282 = vunpack.c.l.b16 %v72
  %v283 = vunpack.c.h.b16 %v72
  %v284 = vunpack.c.l.b16 %v73
  %v285 = vunpack.c.h.b16 %v73
  %v286 = vunpack.c.l.b16 %v74
  %v287 = vunpack.c.h.b16 %v74
  %v288 = vunpack.c.l.b16 %v75
  %v289 = vunpack.c.h.b16 %v75
  %v290 = vunpack.c.l.b16 %v76
  %v291 = vunpack.c.h.b16 %v76
  %v292 = vunpack.c.l.b16 %v77
  %v293 = vunpack.c.h.b16 %v77
  %v294 = vunpack.c.l.b16 %v78
  %v295 = vunpack.c.h.b16 %v78
  %v296 = vpack.c.b16 %v170, %v168
  %v297 = vpack.c.b16 %v171, %v169
  %v298 = vpack.c.b16 %v174, %v172
  %v299 = vpack.c.b16 %v175, %v173
  %v300 = vpack.c.b16 %v178, %v176
  %v301 = vpack.c.b16 %v179, %v177
  %v302 = vpack.c.b16 %v182, %v180
  %v303 = vpack.c.b16 %v183, %v181
  %v304 = vpack.c.b16 %v186, %v184
  %v305 = vpack.c.b16 %v187, %v185
  %v306 = vpack.c.b16 %v190, %v188
  %v307 = vpack.c.b16 %v191, %v189
  %v308 = vpack.c.b16 %v194, %v192
  %v309 = vpack.c.b16 %v195, %v193
  %v310 = vpack.c.b16 %v198, %v196
  %v311 = vpack.c.b16 %v199, %v197
  %v312 = vpack.c.b16 %v202, %v200
  %v313 = vpack.c.b16 %v203, %v201
  %v314 = vpack.c.b16 %v206, %v204
  %v315 = vpack.c.b16 %v207, %v205
  %v316 = vpack.c.b16 %v210, %v208
  %v317 = vpack.c.b16 %v211, %v209
  %v318 = vpack.c.b16 %v214, %v212
  %v319 = vpack.c.b16 %v215, %v213
  %v320 = vpack.c.b16 %v218, %v216
  %v321 = vpack.c.b16 %v219, %v217
  %v322 = vpack.c.b16 %v222, %v220
  %v323 = vpack.c.b16 %v223, %v221
  %v324 = vpack.c.b16 %v226, %v224
  %v325 = vpack.c.b16 %v227, %v225
  %v326 = vpack.c.b16 %v230, %v228
  %v327 = vpack.c.b16 %v231, %v229
  %v328 = vpack.c.b16 %v234, %v232
  %v329 = vpack.c.b16 %v235, %v233
  %v330 = vpack.c.b16 %v238, %v236
  %v331 = vpack.c.b16 %v239, %v237
  %v332 = vpack.c.b16 %v242, %v240
  %v333 = vpack.c.b16 %v243, %v241
  %v334 = vpack.c.b16 %v246, %v244
  %v335 = vpack.c.b16 %v247, %v245
  %v336 = vpack.c.b16 %v250, %v248
  %v337 = vpack.c.b16 %v251, %v249
  %v338 = vpack.c.b16 %v254, %v252
  %v339 = vpack.c.b16 %v255, %v253
  %v340 = vpack.c.b16 %v258, %v256
  %v341 = vpack.c.b16 %v259, %v257
  %v342 = vpack.c.b16 %v262, %v260
  %v343 = vpack.c.b16 %v263, %v261
  %v344 = vpack.c.b16 %v266, %v264
  %v345 = vpack.c.b16 %v267, %v265
  %v346 = vpack.c.b16 %v270, %v268
  %v347 = vpack.c.b16 %v271, %v269
  %v348 = vpack.c.b16 %v274, %v272
  %v349 = vpack.c.b16 %v275, %v273
  %v350 = vpack.c.b16 %v278, %v276
  %v351 = vpack.c.b16 %v279, %v277
  %v352 = vpack.c.b16 %v282, %v280
  %v353 = vpack.c.b16 %v283, %v281
  %v354 = vpack.c.b16 %v286, %v284
  %v355 = vpack.c.b16 %v287, %v285
  %v356 = vpack.c.b16 %v290, %v288
  %v357 = vpack.c.b16 %v291, %v289
  %v358 = vpack.c.b16 %v294, %v292
  %v359 = vpack.c.b16 %v295, %v293
  %v410 = vunpack.c.l.b16 %v79
  %v411 = vunpack.c.l.b16 %v80
  %v412 = vunpack.c.l.b16 %v81
  %v413 = vunpack.c.l.b16 %v82
  %v414 = vunpack.c.l.b16 %v83
  %v415 = vunpack.c.l.b16 %v84
  %v416 = vunpack.c.l.b16 %v85
  %v417 = vunpack.c.l.b16 %v86
  %v418 = vunpack.c.l.b16 %v87
  %v419 = vunpack.c.l.b16 %v88
  %v420 = vunpack.c.l.b16 %v89
  %v421 = vunpack.c.l.b16 %v90
  %v422 = vunpack.c.l.b16 %v91
  %v423 = vunpack.c.l.b16 %v92
  %v424 = vunpack.c.l.b16 %v93
  %v425 = vunpack.c.l.b16 %v94
  %v426 = vunpack.c.l.b16 %v95
  %v427 = vunpack.c.l.b16 %v96
  %v428 = vpack.c.b16 %v411, %v410
  %v429 = vpack.c.b16 %v413, %v412
  %v430 = vpack.c.b16 %v415, %v414
  %v431 = vpack.c.b16 %v417, %v416
  %v432 = vpack.c.b16 %v419, %v418
  %v433 = vpack.c.b16 %v421, %v420
  %v434 = vpack.c.b16 %v423, %v422
  %v435 = vpack.c.b16 %v425, %v424
  %v436 = vpack.c.b16 %v427, %v426
  %vm446 = vcmask 130048
  %v448 = vsel %vm446, %v297, 0
  %v451 = vsel %vm446, %v299, 0
  %v454 = vsel %vm446, %v301, 0
  %v457 = vsel %vm446, %v303, 0
  %v460 = vsel %vm446, %v305, 0
  %v463 = vsel %vm446, %v307, 0
  %v466 = vsel %vm446, %v309, 0
  %v469 = vsel %vm446, %v311, 0
  %v472 = vsel %vm446, %v313, 0
  %v475 = vsel %vm446, %v315, 0
  %v478 = vsel %vm446, %v317, 0
  %v481 = vsel %vm446, %v319, 0
  %v484 = vsel %vm446, %v321, 0
  %v487 = vsel %vm446, %v323, 0
  %v490 = vsel %vm446, %v325, 0
  %v493 = vsel %vm446, %v327, 0
  %v496 = vsel %vm446, %v329, 0
  %v499 = vsel %vm446, %v331, 0
  %v502 = vsel %vm446, %v333, 0
  %v505 = vsel %vm446, %v335, 0
  %v508 = vsel %vm446, %v337, 0
  %v511 = vsel %vm446, %v339, 0
  %v514 = vsel %vm446, %v341, 0
  %v517 = vsel %vm446, %v343, 0
  %v520 = vsel %vm446, %v345, 0
  %v523 = vsel %vm446, %v347, 0
  %v526 = vsel %vm446, %v349, 0
  %v529 = vsel %vm446, %v351, 0
  %v532 = vsel %vm446, %v353, 0
  %v535 = vsel %vm446, %v355, 0
  %v538 = vsel %vm446, %v357, 0
  %v541 = vsel %vm446, %v359, 0
  %543 = vmatprep.subr.bf16.mxu0 0
  %544 = vmatpush1.bf16.msra.mxu0 %v428
  %545 = vmatprep.subr.bf16.mxu0 0
  %546 = vmatpush1.bf16.msra.mxu0 %v429
  %547 = vmatprep.subr.bf16.mxu0 0
  %548 = vmatpush1.bf16.msra.mxu0 %v430
  %549 = vmatprep.subr.bf16.mxu0 0
  %550 = vmatpush1.bf16.msra.mxu0 %v431
  %551 = vmatprep.subr.bf16.mxu0 0
  %552 = vmatpush1.bf16.msra.mxu0 %v432
  %553 = vmatprep.subr.bf16.mxu0 0
  %554 = vmatpush1.bf16.msra.mxu0 %v433
  %555 = vmatprep.subr.bf16.mxu0 0
  %556 = vmatpush1.bf16.msra.mxu0 %v434
  %557 = vmatprep.subr.bf16.mxu0 0
  %558 = vmatpush1.bf16.msra.mxu0 %v435
  %559 = vmatprep.subr.bf16.mxu0 0
  %560 = vmatpush1.bf16.msra.mxu0 %v436
  %561 = vmatprep.subr.bf16.mxu0 0
  %562 = vmatpush1.bf16.msra.mxu0 0
  %563 = vmatprep.subr.bf16.mxu0 0
  %564 = vmatpush1.bf16.msra.mxu0 0
  %565 = vmatprep.subr.bf16.mxu0 0
  %566 = vmatpush1.bf16.msra.mxu0 0
  %567 = vmatprep.subr.bf16.mxu0 0
  %568 = vmatpush1.bf16.msra.mxu0 0
  %569 = vmatprep.subr.bf16.mxu0 0
  %570 = vmatpush1.bf16.msra.mxu0 0
  %571 = vmatprep.subr.bf16.mxu0 0
  %572 = vmatpush1.bf16.msra.mxu0 0
  %573 = vmatprep.subr.bf16.mxu0 0
  %574 = vmatpush1.bf16.msra.mxu0 0
  %575 = vmatprep.mubr.bf16.mxu0 %v448
  %576 = vmatmul.mubr.bf16.gmra.mrb[0].mxu0 %v296
  %v577 = vpop.f32.mrb[0].mxu0
  %v578 = vadd.f32 %v102, %v577
  %v579 = vpop.f32.mrb[0].mxu0
  %v580 = vpop.f32.mrb[0].mxu0
  %v581 = vadd.f32 %v102, %v580
  %v582 = vpop.f32.mrb[0].mxu0
  %583 = vmatprep.mubr.bf16.mxu0 %v451
  %584 = vmatmul.mubr.bf16.gmra.mrb[0].mxu0 %v298
  %v585 = vpop.f32.mrb[0].mxu0
  %v586 = vadd.f32 %v102, %v585
  %v587 = vpop.f32.mrb[0].mxu0
  %v588 = vpop.f32.mrb[0].mxu0
  %v589 = vadd.f32 %v102, %v588
  %v590 = vpop.f32.mrb[0].mxu0
  %591 = vmatprep.mubr.bf16.mxu0 %v454
  %592 = vmatmul.mubr.bf16.gmra.mrb[0].mxu0 %v300
  %v593 = vpop.f32.mrb[0].mxu0
  %v594 = vadd.f32 %v102, %v593
  %v595 = vpop.f32.mrb[0].mxu0
  %v596 = vpop.f32.mrb[0].mxu0
  %v597 = vadd.f32 %v102, %v596
  %v598 = vpop.f32.mrb[0].mxu0
  %599 = vmatprep.mubr.bf16.mxu0 %v457
  %600 = vmatmul.mubr.bf16.gmra.mrb[0].mxu0 %v302
  %v601 = vpop.f32.mrb[0].mxu0
  %v602 = vadd.f32 %v102, %v601
  %v603 = vpop.f32.mrb[0].mxu0
  %v604 = vpop.f32.mrb[0].mxu0
  %v605 = vadd.f32 %v102, %v604
  %v606 = vpop.f32.mrb[0].mxu0
  %607 = vmatprep.mubr.bf16.mxu0 %v460
  %608 = vmatmul.mubr.bf16.gmra.mrb[0].mxu0 %v304
  %v609 = vpop.f32.mrb[0].mxu0
  %v610 = vadd.f32 %v102, %v609
  %v611 = vpop.f32.mrb[0].mxu0
  %v612 = vpop.f32.mrb[0].mxu0
  %v613 = vadd.f32 %v102, %v612
  %v614 = vpop.f32.mrb[0].mxu0
  %615 = vmatprep.mubr.bf16.mxu0 %v463
  %616 = vmatmul.mubr.bf16.gmra.mrb[0].mxu0 %v306
  %v617 = vpop.f32.mrb[0].mxu0
  %v618 = vadd.f32 %v102, %v617
  %v619 = vpop.f32.mrb[0].mxu0
  %v620 = vpop.f32.mrb[0].mxu0
  %v621 = vadd.f32 %v102, %v620
  %v622 = vpop.f32.mrb[0].mxu0
  %623 = vmatprep.mubr.bf16.mxu0 %v466
  %624 = vmatmul.mubr.bf16.gmra.mrb[0].mxu0 %v308
  %v625 = vpop.f32.mrb[0].mxu0
  %v626 = vadd.f32 %v102, %v625
  %v627 = vpop.f32.mrb[0].mxu0
  %v628 = vpop.f32.mrb[0].mxu0
  %v629 = vadd.f32 %v102, %v628
  %v630 = vpop.f32.mrb[0].mxu0
  %631 = vmatprep.mubr.bf16.mxu0 %v469
  %632 = vmatmul.mubr.bf16.gmra.mrb[0].mxu0 %v310
  %v633 = vpop.f32.mrb[0].mxu0
  %v634 = vadd.f32 %v102, %v633
  %v635 = vpop.f32.mrb[0].mxu0
  %v636 = vpop.f32.mrb[0].mxu0
  %v637 = vadd.f32 %v102, %v636
  %v638 = vpop.f32.mrb[0].mxu0
  %639 = vmatprep.mubr.bf16.mxu0 %v472
  %640 = vmatmul.mubr.bf16.gmra.mrb[0].mxu0 %v312
  %v641 = vpop.f32.mrb[0].mxu0
  %v642 = vadd.f32 %v102, %v641
  %v643 = vpop.f32.mrb[0].mxu0
  %v644 = vpop.f32.mrb[0].mxu0
  %v645 = vadd.f32 %v102, %v644
  %v646 = vpop.f32.mrb[0].mxu0
  %647 = vmatprep.mubr.bf16.mxu0 %v475
  %648 = vmatmul.mubr.bf16.gmra.mrb[0].mxu0 %v314
  %v649 = vpop.f32.mrb[0].mxu0
  %v650 = vadd.f32 %v102, %v649
  %v651 = vpop.f32.mrb[0].mxu0
  %v652 = vpop.f32.mrb[0].mxu0
  %v653 = vadd.f32 %v102, %v652
  %v654 = vpop.f32.mrb[0].mxu0
  %655 = vmatprep.mubr.bf16.mxu0 %v478
  %656 = vmatmul.mubr.bf16.gmra.mrb[0].mxu0 %v316
  %v657 = vpop.f32.mrb[0].mxu0
  %v658 = vadd.f32 %v102, %v657
  %v659 = vpop.f32.mrb[0].mxu0
  %v660 = vpop.f32.mrb[0].mxu0
  %v661 = vadd.f32 %v102, %v660
  %v662 = vpop.f32.mrb[0].mxu0
  %663 = vmatprep.mubr.bf16.mxu0 %v481
  %664 = vmatmul.mubr.bf16.gmra.mrb[0].mxu0 %v318
  %v665 = vpop.f32.mrb[0].mxu0
  %v666 = vadd.f32 %v102, %v665
  %v667 = vpop.f32.mrb[0].mxu0
  %v668 = vpop.f32.mrb[0].mxu0
  %v669 = vadd.f32 %v102, %v668
  %v670 = vpop.f32.mrb[0].mxu0
  %671 = vmatprep.mubr.bf16.mxu0 %v484
  %672 = vmatmul.mubr.bf16.gmra.mrb[0].mxu0 %v320
  %v673 = vpop.f32.mrb[0].mxu0
  %v674 = vadd.f32 %v102, %v673
  %v675 = vpop.f32.mrb[0].mxu0
  %v676 = vpop.f32.mrb[0].mxu0
  %v677 = vadd.f32 %v102, %v676
  %v678 = vpop.f32.mrb[0].mxu0
  %679 = vmatprep.mubr.bf16.mxu0 %v487
  %680 = vmatmul.mubr.bf16.gmra.mrb[0].mxu0 %v322
  %v681 = vpop.f32.mrb[0].mxu0
  %v682 = vadd.f32 %v102, %v681
  %v683 = vpop.f32.mrb[0].mxu0
  %v684 = vpop.f32.mrb[0].mxu0
  %v685 = vadd.f32 %v102, %v684
  %v686 = vpop.f32.mrb[0].mxu0
  %687 = vmatprep.mubr.bf16.mxu0 %v490
  %688 = vmatmul.mubr.bf16.gmra.mrb[0].mxu0 %v324
  %v689 = vpop.f32.mrb[0].mxu0
  %v690 = vadd.f32 %v102, %v689
  %v691 = vpop.f32.mrb[0].mxu0
  %v692 = vpop.f32.mrb[0].mxu0
  %v693 = vadd.f32 %v102, %v692
  %v694 = vpop.f32.mrb[0].mxu0
  %695 = vmatprep.mubr.bf16.mxu0 %v493
  %696 = vmatmul.mubr.bf16.gmra.mrb[0].mxu0 %v326
  %v697 = vpop.f32.mrb[0].mxu0
  %v698 = vadd.f32 %v102, %v697
  %v699 = vpop.f32.mrb[0].mxu0
  %v700 = vpop.f32.mrb[0].mxu0
  %v701 = vadd.f32 %v102, %v700
  %v702 = vpop.f32.mrb[0].mxu0
  %703 = vmatprep.mubr.bf16.mxu0 %v496
  %704 = vmatmul.mubr.bf16.gmra.mrb[0].mxu0 %v328
  %v705 = vpop.f32.mrb[0].mxu0
  %v706 = vadd.f32 %v102, %v705
  %v707 = vpop.f32.mrb[0].mxu0
  %v708 = vpop.f32.mrb[0].mxu0
  %v709 = vadd.f32 %v102, %v708
  %v710 = vpop.f32.mrb[0].mxu0
  %711 = vmatprep.mubr.bf16.mxu0 %v499
  %712 = vmatmul.mubr.bf16.gmra.mrb[0].mxu0 %v330
  %v713 = vpop.f32.mrb[0].mxu0
  %v714 = vadd.f32 %v102, %v713
  %v715 = vpop.f32.mrb[0].mxu0
  %v716 = vpop.f32.mrb[0].mxu0
  %v717 = vadd.f32 %v102, %v716
  %v718 = vpop.f32.mrb[0].mxu0
  %719 = vmatprep.mubr.bf16.mxu0 %v502
  %720 = vmatmul.mubr.bf16.gmra.mrb[0].mxu0 %v332
  %v721 = vpop.f32.mrb[0].mxu0
  %v722 = vadd.f32 %v102, %v721
  %v723 = vpop.f32.mrb[0].mxu0
  %v724 = vpop.f32.mrb[0].mxu0
  %v725 = vadd.f32 %v102, %v724
  %v726 = vpop.f32.mrb[0].mxu0
  %727 = vmatprep.mubr.bf16.mxu0 %v505
  %728 = vmatmul.mubr.bf16.gmra.mrb[0].mxu0 %v334
  %v729 = vpop.f32.mrb[0].mxu0
  %v730 = vadd.f32 %v102, %v729
  %v731 = vpop.f32.mrb[0].mxu0
  %v732 = vpop.f32.mrb[0].mxu0
  %v733 = vadd.f32 %v102, %v732
  %v734 = vpop.f32.mrb[0].mxu0
  %735 = vmatprep.mubr.bf16.mxu0 %v508
  %736 = vmatmul.mubr.bf16.gmra.mrb[0].mxu0 %v336
  %v737 = vpop.f32.mrb[0].mxu0
  %v738 = vadd.f32 %v102, %v737
  %v739 = vpop.f32.mrb[0].mxu0
  %v740 = vpop.f32.mrb[0].mxu0
  %v741 = vadd.f32 %v102, %v740
  %v742 = vpop.f32.mrb[0].mxu0
  %743 = vmatprep.mubr.bf16.mxu0 %v511
  %744 = vmatmul.mubr.bf16.gmra.mrb[0].mxu0 %v338
  %v745 = vpop.f32.mrb[0].mxu0
  %v746 = vadd.f32 %v102, %v745
  %v747 = vpop.f32.mrb[0].mxu0
  %v748 = vpop.f32.mrb[0].mxu0
  %v749 = vadd.f32 %v102, %v748
  %v750 = vpop.f32.mrb[0].mxu0
  %751 = vmatprep.mubr.bf16.mxu0 %v514
  %752 = vmatmul.mubr.bf16.gmra.mrb[0].mxu0 %v340
  %v753 = vpop.f32.mrb[0].mxu0
  %v754 = vadd.f32 %v102, %v753
  %v755 = vpop.f32.mrb[0].mxu0
  %v756 = vpop.f32.mrb[0].mxu0
  %v757 = vadd.f32 %v102, %v756
  %v758 = vpop.f32.mrb[0].mxu0
  %759 = vmatprep.mubr.bf16.mxu0 %v517
  %760 = vmatmul.mubr.bf16.gmra.mrb[0].mxu0 %v342
  %v761 = vpop.f32.mrb[0].mxu0
  %v762 = vadd.f32 %v102, %v761
  %v763 = vpop.f32.mrb[0].mxu0
  %v764 = vpop.f32.mrb[0].mxu0
  %v765 = vadd.f32 %v102, %v764
  %v766 = vpop.f32.mrb[0].mxu0
  %767 = vmatprep.mubr.bf16.mxu0 %v520
  %768 = vmatmul.mubr.bf16.gmra.mrb[0].mxu0 %v344
  %v769 = vpop.f32.mrb[0].mxu0
  %v770 = vadd.f32 %v102, %v769
  %v771 = vpop.f32.mrb[0].mxu0
  %v772 = vpop.f32.mrb[0].mxu0
  %v773 = vadd.f32 %v102, %v772
  %v774 = vpop.f32.mrb[0].mxu0
  %775 = vmatprep.mubr.bf16.mxu0 %v523
  %776 = vmatmul.mubr.bf16.gmra.mrb[0].mxu0 %v346
  %v777 = vpop.f32.mrb[0].mxu0
  %v778 = vadd.f32 %v102, %v777
  %v779 = vpop.f32.mrb[0].mxu0
  %v780 = vpop.f32.mrb[0].mxu0
  %v781 = vadd.f32 %v102, %v780
  %v782 = vpop.f32.mrb[0].mxu0
  %783 = vmatprep.mubr.bf16.mxu0 %v526
  %784 = vmatmul.mubr.bf16.gmra.mrb[0].mxu0 %v348
  %v785 = vpop.f32.mrb[0].mxu0
  %v786 = vadd.f32 %v102, %v785
  %v787 = vpop.f32.mrb[0].mxu0
  %v788 = vpop.f32.mrb[0].mxu0
  %v789 = vadd.f32 %v102, %v788
  %v790 = vpop.f32.mrb[0].mxu0
  %791 = vmatprep.mubr.bf16.mxu0 %v529
  %792 = vmatmul.mubr.bf16.gmra.mrb[0].mxu0 %v350
  %v793 = vpop.f32.mrb[0].mxu0
  %v794 = vadd.f32 %v102, %v793
  %v795 = vpop.f32.mrb[0].mxu0
  %v796 = vpop.f32.mrb[0].mxu0
  %v797 = vadd.f32 %v102, %v796
  %v798 = vpop.f32.mrb[0].mxu0
  %799 = vmatprep.mubr.bf16.mxu0 %v532
  %800 = vmatmul.mubr.bf16.gmra.mrb[0].mxu0 %v352
  %v801 = vpop.f32.mrb[0].mxu0
  %v802 = vadd.f32 %v102, %v801
  %v803 = vpop.f32.mrb[0].mxu0
  %v804 = vpop.f32.mrb[0].mxu0
  %v805 = vadd.f32 %v102, %v804
  %v806 = vpop.f32.mrb[0].mxu0
  %807 = vmatprep.mubr.bf16.mxu0 %v535
  %808 = vmatmul.mubr.bf16.gmra.mrb[0].mxu0 %v354
  %v809 = vpop.f32.mrb[0].mxu0
  %v810 = vadd.f32 %v102, %v809
  %v811 = vpop.f32.mrb[0].mxu0
  %v812 = vpop.f32.mrb[0].mxu0
  %v813 = vadd.f32 %v102, %v812
  %v814 = vpop.f32.mrb[0].mxu0
  %815 = vmatprep.mubr.bf16.mxu0 %v538
  %816 = vmatmul.mubr.bf16.gmra.mrb[0].mxu0 %v356
  %v817 = vpop.f32.mrb[0].mxu0
  %v818 = vadd.f32 %v102, %v817
  %v819 = vpop.f32.mrb[0].mxu0
  %v820 = vpop.f32.mrb[0].mxu0
  %v821 = vadd.f32 %v102, %v820
  %v822 = vpop.f32.mrb[0].mxu0
  %823 = vmatprep.mubr.bf16.mxu0 %v541
  %824 = vmatmul.mubr.bf16.gmra.mrb[0].mxu0 %v358
  %v825 = vpop.f32.mrb[0].mxu0
  %v826 = vadd.f32 %v102, %v825
  %v827 = vpop.f32.mrb[0].mxu0
  %v828 = vpop.f32.mrb[0].mxu0
  %v829 = vadd.f32 %v102, %v828
  %v830 = vpop.f32.mrb[0].mxu0
  %831 = vdwg.mxu0
  %v832 = vmax.f32 %v578, 0.0
  %v833 = vmax.f32 %v581, 0.0
  %v834 = vmax.f32 %v586, 0.0
  %v835 = vmax.f32 %v589, 0.0
  %v836 = vmax.f32 %v594, 0.0
  %v837 = vmax.f32 %v597, 0.0
  %v838 = vmax.f32 %v602, 0.0
  %v839 = vmax.f32 %v605, 0.0
  %v840 = vmax.f32 %v610, 0.0
  %v841 = vmax.f32 %v613, 0.0
  %v842 = vmax.f32 %v618, 0.0
  %v843 = vmax.f32 %v621, 0.0
  %v844 = vmax.f32 %v626, 0.0
  %v845 = vmax.f32 %v629, 0.0
  %v846 = vmax.f32 %v634, 0.0
  %v847 = vmax.f32 %v637, 0.0
  %v848 = vmax.f32 %v642, 0.0
  %v849 = vmax.f32 %v645, 0.0
  %v850 = vmax.f32 %v650, 0.0
  %v851 = vmax.f32 %v653, 0.0
  %v852 = vmax.f32 %v658, 0.0
  %v853 = vmax.f32 %v661, 0.0
  %v854 = vmax.f32 %v666, 0.0
  %v855 = vmax.f32 %v669, 0.0
  %v856 = vmax.f32 %v674, 0.0
  %v857 = vmax.f32 %v677, 0.0
  %v858 = vmax.f32 %v682, 0.0
  %v859 = vmax.f32 %v685, 0.0
  %v860 = vmax.f32 %v690, 0.0
  %v861 = vmax.f32 %v693, 0.0
  %v862 = vmax.f32 %v698, 0.0
  %v863 = vmax.f32 %v701, 0.0
  %v864 = vmax.f32 %v706, 0.0
  %v865 = vmax.f32 %v709, 0.0
  %v866 = vmax.f32 %v714, 0.0
  %v867 = vmax.f32 %v717, 0.0
  %v868 = vmax.f32 %v722, 0.0
  %v869 = vmax.f32 %v725, 0.0
  %v870 = vmax.f32 %v730, 0.0
  %v871 = vmax.f32 %v733, 0.0
  %v872 = vmax.f32 %v738, 0.0
  %v873 = vmax.f32 %v741, 0.0
  %v874 = vmax.f32 %v746, 0.0
  %v875 = vmax.f32 %v749, 0.0
  %v876 = vmax.f32 %v754, 0.0
  %v877 = vmax.f32 %v757, 0.0
  %v878 = vmax.f32 %v762, 0.0
  %v879 = vmax.f32 %v765, 0.0
  %v880 = vmax.f32 %v770, 0.0
  %v881 = vmax.f32 %v773, 0.0
  %v882 = vmax.f32 %v778, 0.0
  %v883 = vmax.f32 %v781, 0.0
  %v884 = vmax.f32 %v786, 0.0
  %v885 = vmax.f32 %v789, 0.0
  %v886 = vmax.f32 %v794, 0.0
  %v887 = vmax.f32 %v797, 0.0
  %v888 = vmax.f32 %v802, 0.0
  %v889 = vmax.f32 %v805, 0.0
  %v890 = vmax.f32 %v810, 0.0
  %v891 = vmax.f32 %v813, 0.0
  %v892 = vmax.f32 %v818, 0.0
  %v893 = vmax.f32 %v821, 0.0
  %v894 = vmax.f32 %v826, 0.0
  %v895 = vmax.f32 %v829, 0.0
  %v896 = vpack.c.bf16 %v833, %v832
  %v897 = vpack.c.bf16 %v835, %v834
  %v898 = vpack.c.bf16 %v837, %v836
  %v899 = vpack.c.bf16 %v839, %v838
  %v900 = vpack.c.bf16 %v841, %v840
  %v901 = vpack.c.bf16 %v843, %v842
  %v902 = vpack.c.bf16 %v845, %v844
  %v903 = vpack.c.bf16 %v847, %v846
  %v904 = vpack.c.bf16 %v849, %v848
  %v905 = vpack.c.bf16 %v851, %v850
  %v906 = vpack.c.bf16 %v853, %v852
  %v907 = vpack.c.bf16 %v855, %v854
  %v908 = vpack.c.bf16 %v857, %v856
  %v909 = vpack.c.bf16 %v859, %v858
  %v910 = vpack.c.bf16 %v861, %v860
  %v911 = vpack.c.bf16 %v863, %v862
  %v912 = vpack.c.bf16 %v865, %v864
  %v913 = vpack.c.bf16 %v867, %v866
  %v914 = vpack.c.bf16 %v869, %v868
  %v915 = vpack.c.bf16 %v871, %v870
  %v916 = vpack.c.bf16 %v873, %v872
  %v917 = vpack.c.bf16 %v875, %v874
  %v918 = vpack.c.bf16 %v877, %v876
  %v919 = vpack.c.bf16 %v879, %v878
  %v920 = vpack.c.bf16 %v881, %v880
  %v921 = vpack.c.bf16 %v883, %v882
  %v922 = vpack.c.bf16 %v885, %v884
  %v923 = vpack.c.bf16 %v887, %v886
  %v924 = vpack.c.bf16 %v889, %v888
  %v925 = vpack.c.bf16 %v891, %v890
  %v926 = vpack.c.bf16 %v893, %v892
  %v927 = vpack.c.bf16 %v895, %v894
  %v960 = vunpack.c.l.b16 %v896
  %v961 = vunpack.c.h.b16 %v896
  %v962 = vunpack.c.l.b16 %v897
  %v963 = vunpack.c.h.b16 %v897
  %v964 = vunpack.c.l.b16 %v898
  %v965 = vunpack.c.h.b16 %v898
  %v966 = vunpack.c.l.b16 %v899
  %v967 = vunpack.c.h.b16 %v899
  %v968 = vunpack.c.l.b16 %v900
  %v969 = vunpack.c.h.b16 %v900
  %v970 = vunpack.c.l.b16 %v901
  %v971 = vunpack.c.h.b16 %v901
  %v972 = vunpack.c.l.b16 %v902
  %v973 = vunpack.c.h.b16 %v902
  %v974 = vunpack.c.l.b16 %v903
  %v975 = vunpack.c.h.b16 %v903
  %v976 = vunpack.c.l.b16 %v904
  %v977 = vunpack.c.h.b16 %v904
  %v978 = vunpack.c.l.b16 %v905
  %v979 = vunpack.c.h.b16 %v905
  %v980 = vunpack.c.l.b16 %v906
  %v981 = vunpack.c.h.b16 %v906
  %v982 = vunpack.c.l.b16 %v907
  %v983 = vunpack.c.h.b16 %v907
  %v984 = vunpack.c.l.b16 %v908
  %v985 = vunpack.c.h.b16 %v908
  %v986 = vunpack.c.l.b16 %v909
  %v987 = vunpack.c.h.b16 %v909
  %v988 = vunpack.c.l.b16 %v910
  %v989 = vunpack.c.h.b16 %v910
  %v990 = vunpack.c.l.b16 %v911
  %v991 = vunpack.c.h.b16 %v911
  %v992 = vunpack.c.l.b16 %v912
  %v993 = vunpack.c.h.b16 %v912
  %v994 = vunpack.c.l.b16 %v913
  %v995 = vunpack.c.h.b16 %v913
  %v996 = vunpack.c.l.b16 %v914
  %v997 = vunpack.c.h.b16 %v914
  %v998 = vunpack.c.l.b16 %v915
  %v999 = vunpack.c.h.b16 %v915
  %v1000 = vunpack.c.l.b16 %v916
  %v1001 = vunpack.c.h.b16 %v916
  %v1002 = vunpack.c.l.b16 %v917
  %v1003 = vunpack.c.h.b16 %v917
  %v1004 = vunpack.c.l.b16 %v918
  %v1005 = vunpack.c.h.b16 %v918
  %v1006 = vunpack.c.l.b16 %v919
  %v1007 = vunpack.c.h.b16 %v919
  %v1008 = vunpack.c.l.b16 %v920
  %v1009 = vunpack.c.h.b16 %v920
  %v1010 = vunpack.c.l.b16 %v921
  %v1011 = vunpack.c.h.b16 %v921
  %v1012 = vunpack.c.l.b16 %v922
  %v1013 = vunpack.c.h.b16 %v922
  %v1014 = vunpack.c.l.b16 %v923
  %v1015 = vunpack.c.h.b16 %v923
  %v1016 = vunpack.c.l.b16 %v924
  %v1017 = vunpack.c.h.b16 %v924
  %v1018 = vunpack.c.l.b16 %v925
  %v1019 = vunpack.c.h.b16 %v925
  %v1020 = vunpack.c.l.b16 %v926
  %v1021 = vunpack.c.h.b16 %v926
  %v1022 = vunpack.c.l.b16 %v927
  %v1023 = vunpack.c.h.b16 %v927
  %v1024 = vpack.c.b16 %v960, %v960
  %v1025 = vpack.c.b16 %v961, %v961
  %v1026 = vpack.c.b16 %v962, %v962
  %v1027 = vpack.c.b16 %v963, %v963
  %v1028 = vpack.c.b16 %v964, %v964
  %v1029 = vpack.c.b16 %v965, %v965
  %v1030 = vpack.c.b16 %v966, %v966
  %v1031 = vpack.c.b16 %v967, %v967
  %v1032 = vpack.c.b16 %v968, %v968
  %v1033 = vpack.c.b16 %v969, %v969
  %v1034 = vpack.c.b16 %v970, %v970
  %v1035 = vpack.c.b16 %v971, %v971
  %v1036 = vpack.c.b16 %v972, %v972
  %v1037 = vpack.c.b16 %v973, %v973
  %v1038 = vpack.c.b16 %v974, %v974
  %v1039 = vpack.c.b16 %v975, %v975
  %v1040 = vpack.c.b16 %v976, %v976
  %v1041 = vpack.c.b16 %v977, %v977
  %v1042 = vpack.c.b16 %v978, %v978
  %v1043 = vpack.c.b16 %v979, %v979
  %v1044 = vpack.c.b16 %v980, %v980
  %v1045 = vpack.c.b16 %v981, %v981
  %v1046 = vpack.c.b16 %v982, %v982
  %v1047 = vpack.c.b16 %v983, %v983
  %v1048 = vpack.c.b16 %v984, %v984
  %v1049 = vpack.c.b16 %v985, %v985
  %v1050 = vpack.c.b16 %v986, %v986
  %v1051 = vpack.c.b16 %v987, %v987
  %v1052 = vpack.c.b16 %v988, %v988
  %v1053 = vpack.c.b16 %v989, %v989
  %v1054 = vpack.c.b16 %v990, %v990
  %v1055 = vpack.c.b16 %v991, %v991
  %v1056 = vpack.c.b16 %v992, %v992
  %v1057 = vpack.c.b16 %v993, %v993
  %v1058 = vpack.c.b16 %v994, %v994
  %v1059 = vpack.c.b16 %v995, %v995
  %v1060 = vpack.c.b16 %v996, %v996
  %v1061 = vpack.c.b16 %v997, %v997
  %v1062 = vpack.c.b16 %v998, %v998
  %v1063 = vpack.c.b16 %v999, %v999
  %v1064 = vpack.c.b16 %v1000, %v1000
  %v1065 = vpack.c.b16 %v1001, %v1001
  %v1066 = vpack.c.b16 %v1002, %v1002
  %v1067 = vpack.c.b16 %v1003, %v1003
  %v1068 = vpack.c.b16 %v1004, %v1004
  %v1069 = vpack.c.b16 %v1005, %v1005
  %v1070 = vpack.c.b16 %v1006, %v1006
  %v1071 = vpack.c.b16 %v1007, %v1007
  %v1072 = vpack.c.b16 %v1008, %v1008
  %v1073 = vpack.c.b16 %v1009, %v1009
  %v1074 = vpack.c.b16 %v1010, %v1010
  %v1075 = vpack.c.b16 %v1011, %v1011
  %v1076 = vpack.c.b16 %v1012, %v1012
  %v1077 = vpack.c.b16 %v1013, %v1013
  %v1078 = vpack.c.b16 %v1014, %v1014
  %v1079 = vpack.c.b16 %v1015, %v1015
  %v1080 = vpack.c.b16 %v1016, %v1016
  %v1081 = vpack.c.b16 %v1017, %v1017
  %v1082 = vpack.c.b16 %v1018, %v1018
  %v1083 = vpack.c.b16 %v1019, %v1019
  %v1084 = vpack.c.b16 %v1020, %v1020
  %v1085 = vpack.c.b16 %v1021, %v1021
  %v1086 = vpack.c.b16 %v1022, %v1022
  %v1087 = vpack.c.b16 %v1023, %v1023
  %vm1152 = vcmask 125952
  %1153 = vst.msk [vmem:[%s3] sm:$0xf] %vm1152, %v1024
  %1154 = vst.msk [vmem:[%s3 + $0x4] sm:$0xf] %vm1152, %v1025
  %1155 = vst.msk [vmem:[%s3 + $0x8] sm:$0xf] %vm1152, %v1026
  %1156 = vst.msk [vmem:[%s3 + $0xc] sm:$0xf] %vm1152, %v1027
  %1157 = vst.msk [vmem:[%s3 + $0x10] sm:$0xf] %vm1152, %v1028
  %1158 = vst.msk [vmem:[%s3 + $0x14] sm:$0xf] %vm1152, %v1029
  %1159 = vst.msk [vmem:[%s3 + $0x18] sm:$0xf] %vm1152, %v1030
  %1160 = vst.msk [vmem:[%s3 + $0x1c] sm:$0xf] %vm1152, %v1031
  %1161 = vst.msk [vmem:[%s3 + $0x20] sm:$0xf] %vm1152, %v1032
  %1162 = vst.msk [vmem:[%s3 + $0x24] sm:$0xf] %vm1152, %v1033
  %1163 = vst.msk [vmem:[%s3 + $0x28] sm:$0xf] %vm1152, %v1034
  %1164 = vst.msk [vmem:[%s3 + $0x2c] sm:$0xf] %vm1152, %v1035
  %1165 = vst.msk [vmem:[%s3 + $0x30] sm:$0xf] %vm1152, %v1036
  %1166 = vst.msk [vmem:[%s3 + $0x34] sm:$0xf] %vm1152, %v1037
  %1167 = vst.msk [vmem:[%s3 + $0x38] sm:$0xf] %vm1152, %v1038
  %1168 = vst.msk [vmem:[%s3 + $0x3c] sm:$0xf] %vm1152, %v1039
  %1169 = vst.msk [vmem:[%s3 + $0x40] sm:$0xf] %vm1152, %v1040
  %1170 = vst.msk [vmem:[%s3 + $0x44] sm:$0xf] %vm1152, %v1041
  %1171 = vst.msk [vmem:[%s3 + $0x48] sm:$0xf] %vm1152, %v1042
  %1172 = vst.msk [vmem:[%s3 + $0x4c] sm:$0xf] %vm1152, %v1043
  %1173 = vst.msk [vmem:[%s3 + $0x50] sm:$0xf] %vm1152, %v1044
  %1174 = vst.msk [vmem:[%s3 + $0x54] sm:$0xf] %vm1152, %v1045
  %1175 = vst.msk [vmem:[%s3 + $0x58] sm:$0xf] %vm1152, %v1046
  %1176 = vst.msk [vmem:[%s3 + $0x5c] sm:$0xf] %vm1152, %v1047
  %1177 = vst.msk [vmem:[%s3 + $0x60] sm:$0xf] %vm1152, %v1048
  %1178 = vst.msk [vmem:[%s3 + $0x64] sm:$0xf] %vm1152, %v1049
  %1179 = vst.msk [vmem:[%s3 + $0x68] sm:$0xf] %vm1152, %v1050
  %1180 = vst.msk [vmem:[%s3 + $0x6c] sm:$0xf] %vm1152, %v1051
  %1181 = vst.msk [vmem:[%s3 + $0x70] sm:$0xf] %vm1152, %v1052
  %1182 = vst.msk [vmem:[%s3 + $0x74] sm:$0xf] %vm1152, %v1053
  %1183 = vst.msk [vmem:[%s3 + $0x78] sm:$0xf] %vm1152, %v1054
  %1184 = vst.msk [vmem:[%s3 + $0x7c] sm:$0xf] %vm1152, %v1055
  %1185 = vst.msk [vmem:[%s3 + $0x80] sm:$0xf] %vm1152, %v1056
  %1186 = vst.msk [vmem:[%s3 + $0x84] sm:$0xf] %vm1152, %v1057
  %1187 = vst.msk [vmem:[%s3 + $0x88] sm:$0xf] %vm1152, %v1058
  %1188 = vst.msk [vmem:[%s3 + $0x8c] sm:$0xf] %vm1152, %v1059
  %1189 = vst.msk [vmem:[%s3 + $0x90] sm:$0xf] %vm1152, %v1060
  %1190 = vst.msk [vmem:[%s3 + $0x94] sm:$0xf] %vm1152, %v1061
  %1191 = vst.msk [vmem:[%s3 + $0x98] sm:$0xf] %vm1152, %v1062
  %1192 = vst.msk [vmem:[%s3 + $0x9c] sm:$0xf] %vm1152, %v1063
  %1193 = vst.msk [vmem:[%s3 + $0xa0] sm:$0xf] %vm1152, %v1064
  %1194 = vst.msk [vmem:[%s3 + $0xa4] sm:$0xf] %vm1152, %v1065
  %1195 = vst.msk [vmem:[%s3 + $0xa8] sm:$0xf] %vm1152, %v1066
  %1196 = vst.msk [vmem:[%s3 + $0xac] sm:$0xf] %vm1152, %v1067
  %1197 = vst.msk [vmem:[%s3 + $0xb0] sm:$0xf] %vm1152, %v1068
  %1198 = vst.msk [vmem:[%s3 + $0xb4] sm:$0xf] %vm1152, %v1069
  %1199 = vst.msk [vmem:[%s3 + $0xb8] sm:$0xf] %vm1152, %v1070
  %1200 = vst.msk [vmem:[%s3 + $0xbc] sm:$0xf] %vm1152, %v1071
  %1201 = vst.msk [vmem:[%s3 + $0xc0] sm:$0xf] %vm1152, %v1072
  %1202 = vst.msk [vmem:[%s3 + $0xc4] sm:$0xf] %vm1152, %v1073
  %1203 = vst.msk [vmem:[%s3 + $0xc8] sm:$0xf] %vm1152, %v1074
  %1204 = vst.msk [vmem:[%s3 + $0xcc] sm:$0xf] %vm1152, %v1075
  %1205 = vst.msk [vmem:[%s3 + $0xd0] sm:$0xf] %vm1152, %v1076
  %1206 = vst.msk [vmem:[%s3 + $0xd4] sm:$0xf] %vm1152, %v1077
  %1207 = vst.msk [vmem:[%s3 + $0xd8] sm:$0xf] %vm1152, %v1078
  %1208 = vst.msk [vmem:[%s3 + $0xdc] sm:$0xf] %vm1152, %v1079
  %1209 = vst.msk [vmem:[%s3 + $0xe0] sm:$0xf] %vm1152, %v1080
  %1210 = vst.msk [vmem:[%s3 + $0xe4] sm:$0xf] %vm1152, %v1081
  %1211 = vst.msk [vmem:[%s3 + $0xe8] sm:$0xf] %vm1152, %v1082
  %1212 = vst.msk [vmem:[%s3 + $0xec] sm:$0xf] %vm1152, %v1083
  %1213 = vst.msk [vmem:[%s3 + $0xf0] sm:$0xf] %vm1152, %v1084
  %1214 = vst.msk [vmem:[%s3 + $0xf4] sm:$0xf] %vm1152, %v1085
  %1215 = vst.msk [vmem:[%s3 + $0xf8] sm:$0xf] %vm1152, %v1086
  %1216 = vst.msk [vmem:[%s3 + $0xfc] sm:$0xf] %vm1152, %v1087
  // Predicated region
  $region14: #{resnet_forward.20} parent=0 // pred_check
    _
  $region15: #{resnet_forward.20} parent=0 // pred_check_branch
    %1218 = sbr.rel (0) target = $region17
  $region16: #{resnet_forward.20} parent=0 // pred_region
    _
  $region17: #{resnet_forward.20} parent=0 // pred_fallthru
    _
  // Predicated region
  $region18: #{resnet_forward.20} parent=0 // pred_check
    _
  $region19: #{resnet_forward.20} parent=0 // pred_check_branch
    %1220 = sbr.rel (0) target = $region21
  $region20: #{resnet_forward.20} parent=0 // pred_region
    _
  $region21: #{resnet_forward.20} parent=0 // pred_fallthru
    _

// kernel: resnet_forward.21
$region0: #{resnet_forward.21}
  #allocation0 [shape = 'u32[]', space=smem, size = 0x4, offset = 0x4, fixed_abs, tag = 'smem constant byte address 0x4 - core index']
  #allocation1 [shape = 'u32[144,128]{1,0:T(1,128)}', space=vmem, size = 0x12000, scoped, tag = 'internal scratch']
  %s0 = inlined_call_operand.vmem [shape: bf16[512,144], index: 0, kind: input, shape index: {}]
  %s1 = inlined_call_operand.vmem [shape: bf16[144,16], index: 1, kind: input, shape index: {}]
  %s2 = inlined_call_operand.vmem [shape: f32[1,16], index: 2, kind: input, shape index: {}]
  %s3 = inlined_call_operand.vmem [shape: bf16[512,16], index: 3, kind: input, shape index: {}]
  %s4 = inlined_call_operand.vmem [shape: bf16[512,16], index: 4, kind: output, shape index: {}]
  %s5 = sld [smem:[#allocation0]]
  $region26: #{resnet_forward.21} parent=0
    _
  %s7 = ssub.s32 1, %s5
  %s8 = scalar_select 0, %s7, %s5
  // Predicated region
  $region2: #{resnet_forward.21} parent=0 // pred_check
    _
  $region3: #{resnet_forward.21} parent=0 // pred_check_branch
    %10 = sbr.rel (0) target = $region5
  $region4: #{resnet_forward.21} parent=0 // pred_region
    _
  $region5: #{resnet_forward.21} parent=0 // pred_fallthru
    _
  // Predicated region
  $region6: #{resnet_forward.21} parent=0 // pred_check
    _
  $region7: #{resnet_forward.21} parent=0 // pred_check_branch
    %12 = sbr.rel (0) target = $region9
  $region8: #{resnet_forward.21} parent=0 // pred_region
    _
  $region9: #{resnet_forward.21} parent=0 // pred_fallthru
    _
  // Predicated region
  $region10: #{resnet_forward.21} parent=0 // pred_check
    _
  $region11: #{resnet_forward.21} parent=0 // pred_check_branch
    %14 = sbr.rel (0) target = $region13
  $region12: #{resnet_forward.21} parent=0 // pred_region
    _
  $region13: #{resnet_forward.21} parent=0 // pred_fallthru
    _
  // Predicated region
  $region14: #{resnet_forward.21} parent=0 // pred_check
    _
  $region15: #{resnet_forward.21} parent=0 // pred_check_branch
    %16 = sbr.rel (0) target = $region17
  $region16: #{resnet_forward.21} parent=0 // pred_region
    _
  $region17: #{resnet_forward.21} parent=0 // pred_fallthru
    _
  %v18 = vld [vmem:[%s0] sm:$0xff]
  %v19 = vld [vmem:[%s0 + $0x8] sm:$0xff]
  %v20 = vld [vmem:[%s0 + $0x10] sm:$0xff]
  %v21 = vld [vmem:[%s0 + $0x18] sm:$0xff]
  %v22 = vld [vmem:[%s0 + $0x20] sm:$0xff]
  %v23 = vld [vmem:[%s0 + $0x28] sm:$0xff]
  %v24 = vld [vmem:[%s0 + $0x30] sm:$0xff]
  %v25 = vld [vmem:[%s0 + $0x38] sm:$0xff]
  %v26 = vld [vmem:[%s0 + $0x40] sm:$0xff]
  %v27 = vld [vmem:[%s0 + $0x48] sm:$0xff]
  %v28 = vld [vmem:[%s0 + $0x50] sm:$0xff]
  %v29 = vld [vmem:[%s0 + $0x58] sm:$0xff]
  %v30 = vld [vmem:[%s0 + $0x60] sm:$0xff]
  %v31 = vld [vmem:[%s0 + $0x68] sm:$0xff]
  %v32 = vld [vmem:[%s0 + $0x70] sm:$0xff]
  %v33 = vld [vmem:[%s0 + $0x78] sm:$0xff]
  %v34 = vld [vmem:[%s0 + $0x80] sm:$0xff]
  %v35 = vld [vmem:[%s0 + $0x88] sm:$0xff]
  %v36 = vld [vmem:[%s0 + $0x90] sm:$0xff]
  %v37 = vld [vmem:[%s0 + $0x98] sm:$0xff]
  %v38 = vld [vmem:[%s0 + $0xa0] sm:$0xff]
  %v39 = vld [vmem:[%s0 + $0xa8] sm:$0xff]
  %v40 = vld [vmem:[%s0 + $0xb0] sm:$0xff]
  %v41 = vld [vmem:[%s0 + $0xb8] sm:$0xff]
  %v42 = vld [vmem:[%s0 + $0xc0] sm:$0xff]
  %v43 = vld [vmem:[%s0 + $0xc8] sm:$0xff]
  %v44 = vld [vmem:[%s0 + $0xd0] sm:$0xff]
  %v45 = vld [vmem:[%s0 + $0xd8] sm:$0xff]
  %v46 = vld [vmem:[%s0 + $0xe0] sm:$0xff]
  %v47 = vld [vmem:[%s0 + $0xe8] sm:$0xff]
  %v48 = vld [vmem:[%s0 + $0xf0] sm:$0xff]
  %v49 = vld [vmem:[%s0 + $0xf8] sm:$0xff]
  %v50 = vld [vmem:[%s0 + $0x100] sm:$0xff]
  %v51 = vld [vmem:[%s0 + $0x108] sm:$0xff]
  %v52 = vld [vmem:[%s0 + $0x110] sm:$0xff]
  %v53 = vld [vmem:[%s0 + $0x118] sm:$0xff]
  %v54 = vld [vmem:[%s0 + $0x120] sm:$0xff]
  %v55 = vld [vmem:[%s0 + $0x128] sm:$0xff]
  %v56 = vld [vmem:[%s0 + $0x130] sm:$0xff]
  %v57 = vld [vmem:[%s0 + $0x138] sm:$0xff]
  %v58 = vld [vmem:[%s0 + $0x140] sm:$0xff]
  %v59 = vld [vmem:[%s0 + $0x148] sm:$0xff]
  %v60 = vld [vmem:[%s0 + $0x150] sm:$0xff]
  %v61 = vld [vmem:[%s0 + $0x158] sm:$0xff]
  %v62 = vld [vmem:[%s0 + $0x160] sm:$0xff]
  %v63 = vld [vmem:[%s0 + $0x168] sm:$0xff]
  %v64 = vld [vmem:[%s0 + $0x170] sm:$0xff]
  %v65 = vld [vmem:[%s0 + $0x178] sm:$0xff]
  %v66 = vld [vmem:[%s0 + $0x180] sm:$0xff]
  %v67 = vld [vmem:[%s0 + $0x188] sm:$0xff]
  %v68 = vld [vmem:[%s0 + $0x190] sm:$0xff]
  %v69 = vld [vmem:[%s0 + $0x198] sm:$0xff]
  %v70 = vld [vmem:[%s0 + $0x1a0] sm:$0xff]
  %v71 = vld [vmem:[%s0 + $0x1a8] sm:$0xff]
  %v72 = vld [vmem:[%s0 + $0x1b0] sm:$0xff]
  %v73 = vld [vmem:[%s0 + $0x1b8] sm:$0xff]
  %v74 = vld [vmem:[%s0 + $0x1c0] sm:$0xff]
  %v75 = vld [vmem:[%s0 + $0x1c8] sm:$0xff]
  %v76 = vld [vmem:[%s0 + $0x1d0] sm:$0xff]
  %v77 = vld [vmem:[%s0 + $0x1d8] sm:$0xff]
  %v78 = vld [vmem:[%s0 + $0x1e0] sm:$0xff]
  %v79 = vld [vmem:[%s0 + $0x1e8] sm:$0xff]
  %v80 = vld [vmem:[%s0 + $0x1f0] sm:$0xff]
  %v81 = vld [vmem:[%s0 + $0x1f8] sm:$0xff]
  %v82 = vld [vmem:[%s1] sm:$0xf]
  %v83 = vld [vmem:[%s1 + $0x4] sm:$0xf]
  %v84 = vld [vmem:[%s1 + $0x8] sm:$0xf]
  %v85 = vld [vmem:[%s1 + $0xc] sm:$0xf]
  %v86 = vld [vmem:[%s1 + $0x10] sm:$0xf]
  %v87 = vld [vmem:[%s1 + $0x14] sm:$0xf]
  %v88 = vld [vmem:[%s1 + $0x18] sm:$0xf]
  %v89 = vld [vmem:[%s1 + $0x1c] sm:$0xf]
  %v90 = vld [vmem:[%s1 + $0x20] sm:$0xf]
  %v91 = vld [vmem:[%s1 + $0x24] sm:$0xf]
  %v92 = vld [vmem:[%s1 + $0x28] sm:$0xf]
  %v93 = vld [vmem:[%s1 + $0x2c] sm:$0xf]
  %v94 = vld [vmem:[%s1 + $0x30] sm:$0xf]
  %v95 = vld [vmem:[%s1 + $0x34] sm:$0xf]
  %v96 = vld [vmem:[%s1 + $0x38] sm:$0xf]
  %v97 = vld [vmem:[%s1 + $0x3c] sm:$0xf]
  %v98 = vld [vmem:[%s1 + $0x40] sm:$0xf]
  %v99 = vld [vmem:[%s1 + $0x44] sm:$0xf]
  %v100 = vld [vmem:[%s2] sm:$0x1]
  %v102 = vlaneseq
  %v103 = vshrl.u32 %v102, 7
  %v104 = vsub.s32 0, %v103
  %v105 = vrot.slane %v100, %v104
  %v171 = vunpack.c.l.b16 %v18
  %v172 = vunpack.c.h.b16 %v18
  %v173 = vunpack.c.l.b16 %v19
  %v174 = vunpack.c.h.b16 %v19
  %v175 = vunpack.c.l.b16 %v20
  %v176 = vunpack.c.h.b16 %v20
  %v177 = vunpack.c.l.b16 %v21
  %v178 = vunpack.c.h.b16 %v21
  %v179 = vunpack.c.l.b16 %v22
  %v180 = vunpack.c.h.b16 %v22
  %v181 = vunpack.c.l.b16 %v23
  %v182 = vunpack.c.h.b16 %v23
  %v183 = vunpack.c.l.b16 %v24
  %v184 = vunpack.c.h.b16 %v24
  %v185 = vunpack.c.l.b16 %v25
  %v186 = vunpack.c.h.b16 %v25
  %v187 = vunpack.c.l.b16 %v26
  %v188 = vunpack.c.h.b16 %v26
  %v189 = vunpack.c.l.b16 %v27
  %v190 = vunpack.c.h.b16 %v27
  %v191 = vunpack.c.l.b16 %v28
  %v192 = vunpack.c.h.b16 %v28
  %v193 = vunpack.c.l.b16 %v29
  %v194 = vunpack.c.h.b16 %v29
  %v195 = vunpack.c.l.b16 %v30
  %v196 = vunpack.c.h.b16 %v30
  %v197 = vunpack.c.l.b16 %v31
  %v198 = vunpack.c.h.b16 %v31
  %v199 = vunpack.c.l.b16 %v32
  %v200 = vunpack.c.h.b16 %v32
  %v201 = vunpack.c.l.b16 %v33
  %v202 = vunpack.c.h.b16 %v33
  %v203 = vunpack.c.l.b16 %v34
  %v204 = vunpack.c.h.b16 %v34
  %v205 = vunpack.c.l.b16 %v35
  %v206 = vunpack.c.h.b16 %v35
  %v207 = vunpack.c.l.b16 %v36
  %v208 = vunpack.c.h.b16 %v36
  %v209 = vunpack.c.l.b16 %v37
  %v210 = vunpack.c.h.b16 %v37
  %v211 = vunpack.c.l.b16 %v38
  %v212 = vunpack.c.h.b16 %v38
  %v213 = vunpack.c.l.b16 %v39
  %v214 = vunpack.c.h.b16 %v39
  %v215 = vunpack.c.l.b16 %v40
  %v216 = vunpack.c.h.b16 %v40
  %v217 = vunpack.c.l.b16 %v41
  %v218 = vunpack.c.h.b16 %v41
  %v219 = vunpack.c.l.b16 %v42
  %v220 = vunpack.c.h.b16 %v42
  %v221 = vunpack.c.l.b16 %v43
  %v222 = vunpack.c.h.b16 %v43
  %v223 = vunpack.c.l.b16 %v44
  %v224 = vunpack.c.h.b16 %v44
  %v225 = vunpack.c.l.b16 %v45
  %v226 = vunpack.c.h.b16 %v45
  %v227 = vunpack.c.l.b16 %v46
  %v228 = vunpack.c.h.b16 %v46
  %v229 = vunpack.c.l.b16 %v47
  %v230 = vunpack.c.h.b16 %v47
  %v231 = vunpack.c.l.b16 %v48
  %v232 = vunpack.c.h.b16 %v48
  %v233 = vunpack.c.l.b16 %v49
  %v234 = vunpack.c.h.b16 %v49
  %v235 = vunpack.c.l.b16 %v50
  %v236 = vunpack.c.h.b16 %v50
  %v237 = vunpack.c.l.b16 %v51
  %v238 = vunpack.c.h.b16 %v51
  %v239 = vunpack.c.l.b16 %v52
  %v240 = vunpack.c.h.b16 %v52
  %v241 = vunpack.c.l.b16 %v53
  %v242 = vunpack.c.h.b16 %v53
  %v243 = vunpack.c.l.b16 %v54
  %v244 = vunpack.c.h.b16 %v54
  %v245 = vunpack.c.l.b16 %v55
  %v246 = vunpack.c.h.b16 %v55
  %v247 = vunpack.c.l.b16 %v56
  %v248 = vunpack.c.h.b16 %v56
  %v249 = vunpack.c.l.b16 %v57
  %v250 = vunpack.c.h.b16 %v57
  %v251 = vunpack.c.l.b16 %v58
  %v252 = vunpack.c.h.b16 %v58
  %v253 = vunpack.c.l.b16 %v59
  %v254 = vunpack.c.h.b16 %v59
  %v255 = vunpack.c.l.b16 %v60
  %v256 = vunpack.c.h.b16 %v60
  %v257 = vunpack.c.l.b16 %v61
  %v258 = vunpack.c.h.b16 %v61
  %v259 = vunpack.c.l.b16 %v62
  %v260 = vunpack.c.h.b16 %v62
  %v261 = vunpack.c.l.b16 %v63
  %v262 = vunpack.c.h.b16 %v63
  %v263 = vunpack.c.l.b16 %v64
  %v264 = vunpack.c.h.b16 %v64
  %v265 = vunpack.c.l.b16 %v65
  %v266 = vunpack.c.h.b16 %v65
  %v267 = vunpack.c.l.b16 %v66
  %v268 = vunpack.c.h.b16 %v66
  %v269 = vunpack.c.l.b16 %v67
  %v270 = vunpack.c.h.b16 %v67
  %v271 = vunpack.c.l.b16 %v68
  %v272 = vunpack.c.h.b16 %v68
  %v273 = vunpack.c.l.b16 %v69
  %v274 = vunpack.c.h.b16 %v69
  %v275 = vunpack.c.l.b16 %v70
  %v276 = vunpack.c.h.b16 %v70
  %v277 = vunpack.c.l.b16 %v71
  %v278 = vunpack.c.h.b16 %v71
  %v279 = vunpack.c.l.b16 %v72
  %v280 = vunpack.c.h.b16 %v72
  %v281 = vunpack.c.l.b16 %v73
  %v282 = vunpack.c.h.b16 %v73
  %v283 = vunpack.c.l.b16 %v74
  %v284 = vunpack.c.h.b16 %v74
  %v285 = vunpack.c.l.b16 %v75
  %v286 = vunpack.c.h.b16 %v75
  %v287 = vunpack.c.l.b16 %v76
  %v288 = vunpack.c.h.b16 %v76
  %v289 = vunpack.c.l.b16 %v77
  %v290 = vunpack.c.h.b16 %v77
  %v291 = vunpack.c.l.b16 %v78
  %v292 = vunpack.c.h.b16 %v78
  %v293 = vunpack.c.l.b16 %v79
  %v294 = vunpack.c.h.b16 %v79
  %v295 = vunpack.c.l.b16 %v80
  %v296 = vunpack.c.h.b16 %v80
  %v297 = vunpack.c.l.b16 %v81
  %v298 = vunpack.c.h.b16 %v81
  %v299 = vpack.c.b16 %v173, %v171
  %v300 = vpack.c.b16 %v174, %v172
  %v301 = vpack.c.b16 %v177, %v175
  %v302 = vpack.c.b16 %v178, %v176
  %v303 = vpack.c.b16 %v181, %v179
  %v304 = vpack.c.b16 %v182, %v180
  %v305 = vpack.c.b16 %v185, %v183
  %v306 = vpack.c.b16 %v186, %v184
  %v307 = vpack.c.b16 %v189, %v187
  %v308 = vpack.c.b16 %v190, %v188
  %v309 = vpack.c.b16 %v193, %v191
  %v310 = vpack.c.b16 %v194, %v192
  %v311 = vpack.c.b16 %v197, %v195
  %v312 = vpack.c.b16 %v198, %v196
  %v313 = vpack.c.b16 %v201, %v199
  %v314 = vpack.c.b16 %v202, %v200
  %v315 = vpack.c.b16 %v205, %v203
  %v316 = vpack.c.b16 %v206, %v204
  %v317 = vpack.c.b16 %v209, %v207
  %v318 = vpack.c.b16 %v210, %v208
  %v319 = vpack.c.b16 %v213, %v211
  %v320 = vpack.c.b16 %v214, %v212
  %v321 = vpack.c.b16 %v217, %v215
  %v322 = vpack.c.b16 %v218, %v216
  %v323 = vpack.c.b16 %v221, %v219
  %v324 = vpack.c.b16 %v222, %v220
  %v325 = vpack.c.b16 %v225, %v223
  %v326 = vpack.c.b16 %v226, %v224
  %v327 = vpack.c.b16 %v229, %v227
  %v328 = vpack.c.b16 %v230, %v228
  %v329 = vpack.c.b16 %v233, %v231
  %v330 = vpack.c.b16 %v234, %v232
  %v331 = vpack.c.b16 %v237, %v235
  %v332 = vpack.c.b16 %v238, %v236
  %v333 = vpack.c.b16 %v241, %v239
  %v334 = vpack.c.b16 %v242, %v240
  %v335 = vpack.c.b16 %v245, %v243
  %v336 = vpack.c.b16 %v246, %v244
  %v337 = vpack.c.b16 %v249, %v247
  %v338 = vpack.c.b16 %v250, %v248
  %v339 = vpack.c.b16 %v253, %v251
  %v340 = vpack.c.b16 %v254, %v252
  %v341 = vpack.c.b16 %v257, %v255
  %v342 = vpack.c.b16 %v258, %v256
  %v343 = vpack.c.b16 %v261, %v259
  %v344 = vpack.c.b16 %v262, %v260
  %v345 = vpack.c.b16 %v265, %v263
  %v346 = vpack.c.b16 %v266, %v264
  %v347 = vpack.c.b16 %v269, %v267
  %v348 = vpack.c.b16 %v270, %v268
  %v349 = vpack.c.b16 %v273, %v271
  %v350 = vpack.c.b16 %v274, %v272
  %v351 = vpack.c.b16 %v277, %v275
  %v352 = vpack.c.b16 %v278, %v276
  %v353 = vpack.c.b16 %v281, %v279
  %v354 = vpack.c.b16 %v282, %v280
  %v355 = vpack.c.b16 %v285, %v283
  %v356 = vpack.c.b16 %v286, %v284
  %v357 = vpack.c.b16 %v289, %v287
  %v358 = vpack.c.b16 %v290, %v288
  %v359 = vpack.c.b16 %v293, %v291
  %v360 = vpack.c.b16 %v294, %v292
  %v361 = vpack.c.b16 %v297, %v295
  %v362 = vpack.c.b16 %v298, %v296
  %v413 = vunpack.c.l.b16 %v82
  %v414 = vunpack.c.l.b16 %v83
  %v415 = vunpack.c.l.b16 %v84
  %v416 = vunpack.c.l.b16 %v85
  %v417 = vunpack.c.l.b16 %v86
  %v418 = vunpack.c.l.b16 %v87
  %v419 = vunpack.c.l.b16 %v88
  %v420 = vunpack.c.l.b16 %v89
  %v421 = vunpack.c.l.b16 %v90
  %v422 = vunpack.c.l.b16 %v91
  %v423 = vunpack.c.l.b16 %v92
  %v424 = vunpack.c.l.b16 %v93
  %v425 = vunpack.c.l.b16 %v94
  %v426 = vunpack.c.l.b16 %v95
  %v427 = vunpack.c.l.b16 %v96
  %v428 = vunpack.c.l.b16 %v97
  %v429 = vunpack.c.l.b16 %v98
  %v430 = vunpack.c.l.b16 %v99
  %v431 = vpack.c.b16 %v414, %v413
  %v432 = vpack.c.b16 %v416, %v415
  %v433 = vpack.c.b16 %v418, %v417
  %v434 = vpack.c.b16 %v420, %v419
  %v435 = vpack.c.b16 %v422, %v421
  %v436 = vpack.c.b16 %v424, %v423
  %v437 = vpack.c.b16 %v426, %v425
  %v438 = vpack.c.b16 %v428, %v427
  %v439 = vpack.c.b16 %v430, %v429
  %vm449 = vcmask 130048
  %v451 = vsel %vm449, %v300, 0
  %v454 = vsel %vm449, %v302, 0
  %v457 = vsel %vm449, %v304, 0
  %v460 = vsel %vm449, %v306, 0
  %v463 = vsel %vm449, %v308, 0
  %v466 = vsel %vm449, %v310, 0
  %v469 = vsel %vm449, %v312, 0
  %v472 = vsel %vm449, %v314, 0
  %v475 = vsel %vm449, %v316, 0
  %v478 = vsel %vm449, %v318, 0
  %v481 = vsel %vm449, %v320, 0
  %v484 = vsel %vm449, %v322, 0
  %v487 = vsel %vm449, %v324, 0
  %v490 = vsel %vm449, %v326, 0
  %v493 = vsel %vm449, %v328, 0
  %v496 = vsel %vm449, %v330, 0
  %v499 = vsel %vm449, %v332, 0
  %v502 = vsel %vm449, %v334, 0
  %v505 = vsel %vm449, %v336, 0
  %v508 = vsel %vm449, %v338, 0
  %v511 = vsel %vm449, %v340, 0
  %v514 = vsel %vm449, %v342, 0
  %v517 = vsel %vm449, %v344, 0
  %v520 = vsel %vm449, %v346, 0
  %v523 = vsel %vm449, %v348, 0
  %v526 = vsel %vm449, %v350, 0
  %v529 = vsel %vm449, %v352, 0
  %v532 = vsel %vm449, %v354, 0
  %v535 = vsel %vm449, %v356, 0
  %v538 = vsel %vm449, %v358, 0
  %v541 = vsel %vm449, %v360, 0
  %v544 = vsel %vm449, %v362, 0
  %546 = vmatprep.subr.bf16.mxu0 0
  %547 = vmatpush1.bf16.msra.mxu0 %v431
  %548 = vmatprep.subr.bf16.mxu0 0
  %549 = vmatpush1.bf16.msra.mxu0 %v432
  %550 = vmatprep.subr.bf16.mxu0 0
  %551 = vmatpush1.bf16.msra.mxu0 %v433
  %552 = vmatprep.subr.bf16.mxu0 0
  %553 = vmatpush1.bf16.msra.mxu0 %v434
  %554 = vmatprep.subr.bf16.mxu0 0
  %555 = vmatpush1.bf16.msra.mxu0 %v435
  %556 = vmatprep.subr.bf16.mxu0 0
  %557 = vmatpush1.bf16.msra.mxu0 %v436
  %558 = vmatprep.subr.bf16.mxu0 0
  %559 = vmatpush1.bf16.msra.mxu0 %v437
  %560 = vmatprep.subr.bf16.mxu0 0
  %561 = vmatpush1.bf16.msra.mxu0 %v438
  %562 = vmatprep.subr.bf16.mxu0 0
  %563 = vmatpush1.bf16.msra.mxu0 %v439
  %564 = vmatprep.subr.bf16.mxu0 0
  %565 = vmatpush1.bf16.msra.mxu0 0
  %566 = vmatprep.subr.bf16.mxu0 0
  %567 = vmatpush1.bf16.msra.mxu0 0
  %568 = vmatprep.subr.bf16.mxu0 0
  %569 = vmatpush1.bf16.msra.mxu0 0
  %570 = vmatprep.subr.bf16.mxu0 0
  %571 = vmatpush1.bf16.msra.mxu0 0
  %572 = vmatprep.subr.bf16.mxu0 0
  %573 = vmatpush1.bf16.msra.mxu0 0
  %574 = vmatprep.subr.bf16.mxu0 0
  %575 = vmatpush1.bf16.msra.mxu0 0
  %576 = vmatprep.subr.bf16.mxu0 0
  %577 = vmatpush1.bf16.msra.mxu0 0
  %578 = vmatprep.mubr.bf16.mxu0 %v451
  %579 = vmatmul.mubr.bf16.gmra.mrb[0].mxu0 %v299
  %v580 = vpop.f32.mrb[0].mxu0
  %v581 = vadd.f32 %v105, %v580
  %v582 = vpop.f32.mrb[0].mxu0
  %v583 = vpop.f32.mrb[0].mxu0
  %v584 = vadd.f32 %v105, %v583
  %v585 = vpop.f32.mrb[0].mxu0
  %586 = vmatprep.mubr.bf16.mxu0 %v454
  %587 = vmatmul.mubr.bf16.gmra.mrb[0].mxu0 %v301
  %v588 = vpop.f32.mrb[0].mxu0
  %v589 = vadd.f32 %v105, %v588
  %v590 = vpop.f32.mrb[0].mxu0
  %v591 = vpop.f32.mrb[0].mxu0
  %v592 = vadd.f32 %v105, %v591
  %v593 = vpop.f32.mrb[0].mxu0
  %594 = vmatprep.mubr.bf16.mxu0 %v457
  %595 = vmatmul.mubr.bf16.gmra.mrb[0].mxu0 %v303
  %v596 = vpop.f32.mrb[0].mxu0
  %v597 = vadd.f32 %v105, %v596
  %v598 = vpop.f32.mrb[0].mxu0
  %v599 = vpop.f32.mrb[0].mxu0
  %v600 = vadd.f32 %v105, %v599
  %v601 = vpop.f32.mrb[0].mxu0
  %602 = vmatprep.mubr.bf16.mxu0 %v460
  %603 = vmatmul.mubr.bf16.gmra.mrb[0].mxu0 %v305
  %v604 = vpop.f32.mrb[0].mxu0
  %v605 = vadd.f32 %v105, %v604
  %v606 = vpop.f32.mrb[0].mxu0
  %v607 = vpop.f32.mrb[0].mxu0
  %v608 = vadd.f32 %v105, %v607
  %v609 = vpop.f32.mrb[0].mxu0
  %610 = vmatprep.mubr.bf16.mxu0 %v463
  %611 = vmatmul.mubr.bf16.gmra.mrb[0].mxu0 %v307
  %v612 = vpop.f32.mrb[0].mxu0
  %v613 = vadd.f32 %v105, %v612
  %v614 = vpop.f32.mrb[0].mxu0
  %v615 = vpop.f32.mrb[0].mxu0
  %v616 = vadd.f32 %v105, %v615
  %v617 = vpop.f32.mrb[0].mxu0
  %618 = vmatprep.mubr.bf16.mxu0 %v466
  %619 = vmatmul.mubr.bf16.gmra.mrb[0].mxu0 %v309
  %v620 = vpop.f32.mrb[0].mxu0
  %v621 = vadd.f32 %v105, %v620
  %v622 = vpop.f32.mrb[0].mxu0
  %v623 = vpop.f32.mrb[0].mxu0
  %v624 = vadd.f32 %v105, %v623
  %v625 = vpop.f32.mrb[0].mxu0
  %626 = vmatprep.mubr.bf16.mxu0 %v469
  %627 = vmatmul.mubr.bf16.gmra.mrb[0].mxu0 %v311
  %v628 = vpop.f32.mrb[0].mxu0
  %v629 = vadd.f32 %v105, %v628
  %v630 = vpop.f32.mrb[0].mxu0
  %v631 = vpop.f32.mrb[0].mxu0
  %v632 = vadd.f32 %v105, %v631
  %v633 = vpop.f32.mrb[0].mxu0
  %634 = vmatprep.mubr.bf16.mxu0 %v472
  %635 = vmatmul.mubr.bf16.gmra.mrb[0].mxu0 %v313
  %v636 = vpop.f32.mrb[0].mxu0
  %v637 = vadd.f32 %v105, %v636
  %v638 = vpop.f32.mrb[0].mxu0
  %v639 = vpop.f32.mrb[0].mxu0
  %v640 = vadd.f32 %v105, %v639
  %v641 = vpop.f32.mrb[0].mxu0
  %642 = vmatprep.mubr.bf16.mxu0 %v475
  %643 = vmatmul.mubr.bf16.gmra.mrb[0].mxu0 %v315
  %v644 = vpop.f32.mrb[0].mxu0
  %v645 = vadd.f32 %v105, %v644
  %v646 = vpop.f32.mrb[0].mxu0
  %v647 = vpop.f32.mrb[0].mxu0
  %v648 = vadd.f32 %v105, %v647
  %v649 = vpop.f32.mrb[0].mxu0
  %650 = vmatprep.mubr.bf16.mxu0 %v478
  %651 = vmatmul.mubr.bf16.gmra.mrb[0].mxu0 %v317
  %v652 = vpop.f32.mrb[0].mxu0
  %v653 = vadd.f32 %v105, %v652
  %v654 = vpop.f32.mrb[0].mxu0
  %v655 = vpop.f32.mrb[0].mxu0
  %v656 = vadd.f32 %v105, %v655
  %v657 = vpop.f32.mrb[0].mxu0
  %658 = vmatprep.mubr.bf16.mxu0 %v481
  %659 = vmatmul.mubr.bf16.gmra.mrb[0].mxu0 %v319
  %v660 = vpop.f32.mrb[0].mxu0
  %v661 = vadd.f32 %v105, %v660
  %v662 = vpop.f32.mrb[0].mxu0
  %v663 = vpop.f32.mrb[0].mxu0
  %v664 = vadd.f32 %v105, %v663
  %v665 = vpop.f32.mrb[0].mxu0
  %666 = vmatprep.mubr.bf16.mxu0 %v484
  %667 = vmatmul.mubr.bf16.gmra.mrb[0].mxu0 %v321
  %v668 = vpop.f32.mrb[0].mxu0
  %v669 = vadd.f32 %v105, %v668
  %v670 = vpop.f32.mrb[0].mxu0
  %v671 = vpop.f32.mrb[0].mxu0
  %v672 = vadd.f32 %v105, %v671
  %v673 = vpop.f32.mrb[0].mxu0
  %674 = vmatprep.mubr.bf16.mxu0 %v487
  %675 = vmatmul.mubr.bf16.gmra.mrb[0].mxu0 %v323
  %v676 = vpop.f32.mrb[0].mxu0
  %v677 = vadd.f32 %v105, %v676
  %v678 = vpop.f32.mrb[0].mxu0
  %v679 = vpop.f32.mrb[0].mxu0
  %v680 = vadd.f32 %v105, %v679
  %v681 = vpop.f32.mrb[0].mxu0
  %682 = vmatprep.mubr.bf16.mxu0 %v490
  %683 = vmatmul.mubr.bf16.gmra.mrb[0].mxu0 %v325
  %v684 = vpop.f32.mrb[0].mxu0
  %v685 = vadd.f32 %v105, %v684
  %v686 = vpop.f32.mrb[0].mxu0
  %v687 = vpop.f32.mrb[0].mxu0
  %v688 = vadd.f32 %v105, %v687
  %v689 = vpop.f32.mrb[0].mxu0
  %690 = vmatprep.mubr.bf16.mxu0 %v493
  %691 = vmatmul.mubr.bf16.gmra.mrb[0].mxu0 %v327
  %v692 = vpop.f32.mrb[0].mxu0
  %v693 = vadd.f32 %v105, %v692
  %v694 = vpop.f32.mrb[0].mxu0
  %v695 = vpop.f32.mrb[0].mxu0
  %v696 = vadd.f32 %v105, %v695
  %v697 = vpop.f32.mrb[0].mxu0
  %698 = vmatprep.mubr.bf16.mxu0 %v496
  %699 = vmatmul.mubr.bf16.gmra.mrb[0].mxu0 %v329
  %v700 = vpop.f32.mrb[0].mxu0
  %v701 = vadd.f32 %v105, %v700
  %v702 = vpop.f32.mrb[0].mxu0
  %v703 = vpop.f32.mrb[0].mxu0
  %v704 = vadd.f32 %v105, %v703
  %v705 = vpop.f32.mrb[0].mxu0
  %706 = vmatprep.mubr.bf16.mxu0 %v499
  %707 = vmatmul.mubr.bf16.gmra.mrb[0].mxu0 %v331
  %v708 = vpop.f32.mrb[0].mxu0
  %v709 = vadd.f32 %v105, %v708
  %v710 = vpop.f32.mrb[0].mxu0
  %v711 = vpop.f32.mrb[0].mxu0
  %v712 = vadd.f32 %v105, %v711
  %v713 = vpop.f32.mrb[0].mxu0
  %714 = vmatprep.mubr.bf16.mxu0 %v502
  %715 = vmatmul.mubr.bf16.gmra.mrb[0].mxu0 %v333
  %v716 = vpop.f32.mrb[0].mxu0
  %v717 = vadd.f32 %v105, %v716
  %v718 = vpop.f32.mrb[0].mxu0
  %v719 = vpop.f32.mrb[0].mxu0
  %v720 = vadd.f32 %v105, %v719
  %v721 = vpop.f32.mrb[0].mxu0
  %722 = vmatprep.mubr.bf16.mxu0 %v505
  %723 = vmatmul.mubr.bf16.gmra.mrb[0].mxu0 %v335
  %v724 = vpop.f32.mrb[0].mxu0
  %v725 = vadd.f32 %v105, %v724
  %v726 = vpop.f32.mrb[0].mxu0
  %v727 = vpop.f32.mrb[0].mxu0
  %v728 = vadd.f32 %v105, %v727
  %v729 = vpop.f32.mrb[0].mxu0
  %730 = vmatprep.mubr.bf16.mxu0 %v508
  %731 = vmatmul.mubr.bf16.gmra.mrb[0].mxu0 %v337
  %v732 = vpop.f32.mrb[0].mxu0
  %v733 = vadd.f32 %v105, %v732
  %v734 = vpop.f32.mrb[0].mxu0
  %v735 = vpop.f32.mrb[0].mxu0
  %v736 = vadd.f32 %v105, %v735
  %v737 = vpop.f32.mrb[0].mxu0
  %738 = vmatprep.mubr.bf16.mxu0 %v511
  %739 = vmatmul.mubr.bf16.gmra.mrb[0].mxu0 %v339
  %v740 = vpop.f32.mrb[0].mxu0
  %v741 = vadd.f32 %v105, %v740
  %v742 = vpop.f32.mrb[0].mxu0
  %v743 = vpop.f32.mrb[0].mxu0
  %v744 = vadd.f32 %v105, %v743
  %v745 = vpop.f32.mrb[0].mxu0
  %746 = vmatprep.mubr.bf16.mxu0 %v514
  %747 = vmatmul.mubr.bf16.gmra.mrb[0].mxu0 %v341
  %v748 = vpop.f32.mrb[0].mxu0
  %v749 = vadd.f32 %v105, %v748
  %v750 = vpop.f32.mrb[0].mxu0
  %v751 = vpop.f32.mrb[0].mxu0
  %v752 = vadd.f32 %v105, %v751
  %v753 = vpop.f32.mrb[0].mxu0
  %754 = vmatprep.mubr.bf16.mxu0 %v517
  %755 = vmatmul.mubr.bf16.gmra.mrb[0].mxu0 %v343
  %v756 = vpop.f32.mrb[0].mxu0
  %v757 = vadd.f32 %v105, %v756
  %v758 = vpop.f32.mrb[0].mxu0
  %v759 = vpop.f32.mrb[0].mxu0
  %v760 = vadd.f32 %v105, %v759
  %v761 = vpop.f32.mrb[0].mxu0
  %762 = vmatprep.mubr.bf16.mxu0 %v520
  %763 = vmatmul.mubr.bf16.gmra.mrb[0].mxu0 %v345
  %v764 = vpop.f32.mrb[0].mxu0
  %v765 = vadd.f32 %v105, %v764
  %v766 = vpop.f32.mrb[0].mxu0
  %v767 = vpop.f32.mrb[0].mxu0
  %v768 = vadd.f32 %v105, %v767
  %v769 = vpop.f32.mrb[0].mxu0
  %770 = vmatprep.mubr.bf16.mxu0 %v523
  %771 = vmatmul.mubr.bf16.gmra.mrb[0].mxu0 %v347
  %v772 = vpop.f32.mrb[0].mxu0
  %v773 = vadd.f32 %v105, %v772
  %v774 = vpop.f32.mrb[0].mxu0
  %v775 = vpop.f32.mrb[0].mxu0
  %v776 = vadd.f32 %v105, %v775
  %v777 = vpop.f32.mrb[0].mxu0
  %778 = vmatprep.mubr.bf16.mxu0 %v526
  %779 = vmatmul.mubr.bf16.gmra.mrb[0].mxu0 %v349
  %v780 = vpop.f32.mrb[0].mxu0
  %v781 = vadd.f32 %v105, %v780
  %v782 = vpop.f32.mrb[0].mxu0
  %v783 = vpop.f32.mrb[0].mxu0
  %v784 = vadd.f32 %v105, %v783
  %v785 = vpop.f32.mrb[0].mxu0
  %786 = vmatprep.mubr.bf16.mxu0 %v529
  %787 = vmatmul.mubr.bf16.gmra.mrb[0].mxu0 %v351
  %v788 = vpop.f32.mrb[0].mxu0
  %v789 = vadd.f32 %v105, %v788
  %v790 = vpop.f32.mrb[0].mxu0
  %v791 = vpop.f32.mrb[0].mxu0
  %v792 = vadd.f32 %v105, %v791
  %v793 = vpop.f32.mrb[0].mxu0
  %794 = vmatprep.mubr.bf16.mxu0 %v532
  %795 = vmatmul.mubr.bf16.gmra.mrb[0].mxu0 %v353
  %v796 = vpop.f32.mrb[0].mxu0
  %v797 = vadd.f32 %v105, %v796
  %v798 = vpop.f32.mrb[0].mxu0
  %v799 = vpop.f32.mrb[0].mxu0
  %v800 = vadd.f32 %v105, %v799
  %v801 = vpop.f32.mrb[0].mxu0
  %802 = vmatprep.mubr.bf16.mxu0 %v535
  %803 = vmatmul.mubr.bf16.gmra.mrb[0].mxu0 %v355
  %v804 = vpop.f32.mrb[0].mxu0
  %v805 = vadd.f32 %v105, %v804
  %v806 = vpop.f32.mrb[0].mxu0
  %v807 = vpop.f32.mrb[0].mxu0
  %v808 = vadd.f32 %v105, %v807
  %v809 = vpop.f32.mrb[0].mxu0
  %810 = vmatprep.mubr.bf16.mxu0 %v538
  %811 = vmatmul.mubr.bf16.gmra.mrb[0].mxu0 %v357
  %v812 = vpop.f32.mrb[0].mxu0
  %v813 = vadd.f32 %v105, %v812
  %v814 = vpop.f32.mrb[0].mxu0
  %v815 = vpop.f32.mrb[0].mxu0
  %v816 = vadd.f32 %v105, %v815
  %v817 = vpop.f32.mrb[0].mxu0
  %818 = vmatprep.mubr.bf16.mxu0 %v541
  %819 = vmatmul.mubr.bf16.gmra.mrb[0].mxu0 %v359
  %v820 = vpop.f32.mrb[0].mxu0
  %v821 = vadd.f32 %v105, %v820
  %v822 = vpop.f32.mrb[0].mxu0
  %v823 = vpop.f32.mrb[0].mxu0
  %v824 = vadd.f32 %v105, %v823
  %v825 = vpop.f32.mrb[0].mxu0
  %826 = vmatprep.mubr.bf16.mxu0 %v544
  %827 = vmatmul.mubr.bf16.gmra.mrb[0].mxu0 %v361
  %v828 = vpop.f32.mrb[0].mxu0
  %v829 = vadd.f32 %v105, %v828
  %v830 = vpop.f32.mrb[0].mxu0
  %v831 = vpop.f32.mrb[0].mxu0
  %v832 = vadd.f32 %v105, %v831
  %v833 = vpop.f32.mrb[0].mxu0
  %834 = vdwg.mxu0
  %v835 = vld [vmem:[%s3] sm:$0xf]
  %v836 = vld [vmem:[%s3 + $0x4] sm:$0xf]
  %v837 = vld [vmem:[%s3 + $0x8] sm:$0xf]
  %v838 = vld [vmem:[%s3 + $0xc] sm:$0xf]
  %v839 = vld [vmem:[%s3 + $0x10] sm:$0xf]
  %v840 = vld [vmem:[%s3 + $0x14] sm:$0xf]
  %v841 = vld [vmem:[%s3 + $0x18] sm:$0xf]
  %v842 = vld [vmem:[%s3 + $0x1c] sm:$0xf]
  %v843 = vld [vmem:[%s3 + $0x20] sm:$0xf]
  %v844 = vld [vmem:[%s3 + $0x24] sm:$0xf]
  %v845 = vld [vmem:[%s3 + $0x28] sm:$0xf]
  %v846 = vld [vmem:[%s3 + $0x2c] sm:$0xf]
  %v847 = vld [vmem:[%s3 + $0x30] sm:$0xf]
  %v848 = vld [vmem:[%s3 + $0x34] sm:$0xf]
  %v849 = vld [vmem:[%s3 + $0x38] sm:$0xf]
  %v850 = vld [vmem:[%s3 + $0x3c] sm:$0xf]
  %v851 = vld [vmem:[%s3 + $0x40] sm:$0xf]
  %v852 = vld [vmem:[%s3 + $0x44] sm:$0xf]
  %v853 = vld [vmem:[%s3 + $0x48] sm:$0xf]
  %v854 = vld [vmem:[%s3 + $0x4c] sm:$0xf]
  %v855 = vld [vmem:[%s3 + $0x50] sm:$0xf]
  %v856 = vld [vmem:[%s3 + $0x54] sm:$0xf]
  %v857 = vld [vmem:[%s3 + $0x58] sm:$0xf]
  %v858 = vld [vmem:[%s3 + $0x5c] sm:$0xf]
  %v859 = vld [vmem:[%s3 + $0x60] sm:$0xf]
  %v860 = vld [vmem:[%s3 + $0x64] sm:$0xf]
  %v861 = vld [vmem:[%s3 + $0x68] sm:$0xf]
  %v862 = vld [vmem:[%s3 + $0x6c] sm:$0xf]
  %v863 = vld [vmem:[%s3 + $0x70] sm:$0xf]
  %v864 = vld [vmem:[%s3 + $0x74] sm:$0xf]
  %v865 = vld [vmem:[%s3 + $0x78] sm:$0xf]
  %v866 = vld [vmem:[%s3 + $0x7c] sm:$0xf]
  %v867 = vld [vmem:[%s3 + $0x80] sm:$0xf]
  %v868 = vld [vmem:[%s3 + $0x84] sm:$0xf]
  %v869 = vld [vmem:[%s3 + $0x88] sm:$0xf]
  %v870 = vld [vmem:[%s3 + $0x8c] sm:$0xf]
  %v871 = vld [vmem:[%s3 + $0x90] sm:$0xf]
  %v872 = vld [vmem:[%s3 + $0x94] sm:$0xf]
  %v873 = vld [vmem:[%s3 + $0x98] sm:$0xf]
  %v874 = vld [vmem:[%s3 + $0x9c] sm:$0xf]
  %v875 = vld [vmem:[%s3 + $0xa0] sm:$0xf]
  %v876 = vld [vmem:[%s3 + $0xa4] sm:$0xf]
  %v877 = vld [vmem:[%s3 + $0xa8] sm:$0xf]
  %v878 = vld [vmem:[%s3 + $0xac] sm:$0xf]
  %v879 = vld [vmem:[%s3 + $0xb0] sm:$0xf]
  %v880 = vld [vmem:[%s3 + $0xb4] sm:$0xf]
  %v881 = vld [vmem:[%s3 + $0xb8] sm:$0xf]
  %v882 = vld [vmem:[%s3 + $0xbc] sm:$0xf]
  %v883 = vld [vmem:[%s3 + $0xc0] sm:$0xf]
  %v884 = vld [vmem:[%s3 + $0xc4] sm:$0xf]
  %v885 = vld [vmem:[%s3 + $0xc8] sm:$0xf]
  %v886 = vld [vmem:[%s3 + $0xcc] sm:$0xf]
  %v887 = vld [vmem:[%s3 + $0xd0] sm:$0xf]
  %v888 = vld [vmem:[%s3 + $0xd4] sm:$0xf]
  %v889 = vld [vmem:[%s3 + $0xd8] sm:$0xf]
  %v890 = vld [vmem:[%s3 + $0xdc] sm:$0xf]
  %v891 = vld [vmem:[%s3 + $0xe0] sm:$0xf]
  %v892 = vld [vmem:[%s3 + $0xe4] sm:$0xf]
  %v893 = vld [vmem:[%s3 + $0xe8] sm:$0xf]
  %v894 = vld [vmem:[%s3 + $0xec] sm:$0xf]
  %v895 = vld [vmem:[%s3 + $0xf0] sm:$0xf]
  %v896 = vld [vmem:[%s3 + $0xf4] sm:$0xf]
  %v897 = vld [vmem:[%s3 + $0xf8] sm:$0xf]
  %v898 = vld [vmem:[%s3 + $0xfc] sm:$0xf]
  %v899 = vunpack.c.l.bf16 %v835
  %v900 = vunpack.c.l.bf16 %v836
  %v901 = vunpack.c.l.bf16 %v837
  %v902 = vunpack.c.l.bf16 %v838
  %v903 = vunpack.c.l.bf16 %v839
  %v904 = vunpack.c.l.bf16 %v840
  %v905 = vunpack.c.l.bf16 %v841
  %v906 = vunpack.c.l.bf16 %v842
  %v907 = vunpack.c.l.bf16 %v843
  %v908 = vunpack.c.l.bf16 %v844
  %v909 = vunpack.c.l.bf16 %v845
  %v910 = vunpack.c.l.bf16 %v846
  %v911 = vunpack.c.l.bf16 %v847
  %v912 = vunpack.c.l.bf16 %v848
  %v913 = vunpack.c.l.bf16 %v849
  %v914 = vunpack.c.l.bf16 %v850
  %v915 = vunpack.c.l.bf16 %v851
  %v916 = vunpack.c.l.bf16 %v852
  %v917 = vunpack.c.l.bf16 %v853
  %v918 = vunpack.c.l.bf16 %v854
  %v919 = vunpack.c.l.bf16 %v855
  %v920 = vunpack.c.l.bf16 %v856
  %v921 = vunpack.c.l.bf16 %v857
  %v922 = vunpack.c.l.bf16 %v858
  %v923 = vunpack.c.l.bf16 %v859
  %v924 = vunpack.c.l.bf16 %v860
  %v925 = vunpack.c.l.bf16 %v861
  %v926 = vunpack.c.l.bf16 %v862
  %v927 = vunpack.c.l.bf16 %v863
  %v928 = vunpack.c.l.bf16 %v864
  %v929 = vunpack.c.l.bf16 %v865
  %v930 = vunpack.c.l.bf16 %v866
  %v931 = vunpack.c.l.bf16 %v867
  %v932 = vunpack.c.l.bf16 %v868
  %v933 = vunpack.c.l.bf16 %v869
  %v934 = vunpack.c.l.bf16 %v870
  %v935 = vunpack.c.l.bf16 %v871
  %v936 = vunpack.c.l.bf16 %v872
  %v937 = vunpack.c.l.bf16 %v873
  %v938 = vunpack.c.l.bf16 %v874
  %v939 = vunpack.c.l.bf16 %v875
  %v940 = vunpack.c.l.bf16 %v876
  %v941 = vunpack.c.l.bf16 %v877
  %v942 = vunpack.c.l.bf16 %v878
  %v943 = vunpack.c.l.bf16 %v879
  %v944 = vunpack.c.l.bf16 %v880
  %v945 = vunpack.c.l.bf16 %v881
  %v946 = vunpack.c.l.bf16 %v882
  %v947 = vunpack.c.l.bf16 %v883
  %v948 = vunpack.c.l.bf16 %v884
  %v949 = vunpack.c.l.bf16 %v885
  %v950 = vunpack.c.l.bf16 %v886
  %v951 = vunpack.c.l.bf16 %v887
  %v952 = vunpack.c.l.bf16 %v888
  %v953 = vunpack.c.l.bf16 %v889
  %v954 = vunpack.c.l.bf16 %v890
  %v955 = vunpack.c.l.bf16 %v891
  %v956 = vunpack.c.l.bf16 %v892
  %v957 = vunpack.c.l.bf16 %v893
  %v958 = vunpack.c.l.bf16 %v894
  %v959 = vunpack.c.l.bf16 %v895
  %v960 = vunpack.c.l.bf16 %v896
  %v961 = vunpack.c.l.bf16 %v897
  %v962 = vunpack.c.l.bf16 %v898
  %v963 = vadd.f32 %v581, %v899
  %v964 = vadd.f32 %v584, %v900
  %v965 = vadd.f32 %v589, %v901
  %v966 = vadd.f32 %v592, %v902
  %v967 = vadd.f32 %v597, %v903
  %v968 = vadd.f32 %v600, %v904
  %v969 = vadd.f32 %v605, %v905
  %v970 = vadd.f32 %v608, %v906
  %v971 = vadd.f32 %v613, %v907
  %v972 = vadd.f32 %v616, %v908
  %v973 = vadd.f32 %v621, %v909
  %v974 = vadd.f32 %v624, %v910
  %v975 = vadd.f32 %v629, %v911
  %v976 = vadd.f32 %v632, %v912
  %v977 = vadd.f32 %v637, %v913
  %v978 = vadd.f32 %v640, %v914
  %v979 = vadd.f32 %v645, %v915
  %v980 = vadd.f32 %v648, %v916
  %v981 = vadd.f32 %v653, %v917
  %v982 = vadd.f32 %v656, %v918
  %v983 = vadd.f32 %v661, %v919
  %v984 = vadd.f32 %v664, %v920
  %v985 = vadd.f32 %v669, %v921
  %v986 = vadd.f32 %v672, %v922
  %v987 = vadd.f32 %v677, %v923
  %v988 = vadd.f32 %v680, %v924
  %v989 = vadd.f32 %v685, %v925
  %v990 = vadd.f32 %v688, %v926
  %v991 = vadd.f32 %v693, %v927
  %v992 = vadd.f32 %v696, %v928
  %v993 = vadd.f32 %v701, %v929
  %v994 = vadd.f32 %v704, %v930
  %v995 = vadd.f32 %v709, %v931
  %v996 = vadd.f32 %v712, %v932
  %v997 = vadd.f32 %v717, %v933
  %v998 = vadd.f32 %v720, %v934
  %v999 = vadd.f32 %v725, %v935
  %v1000 = vadd.f32 %v728, %v936
  %v1001 = vadd.f32 %v733, %v937
  %v1002 = vadd.f32 %v736, %v938
  %v1003 = vadd.f32 %v741, %v939
  %v1004 = vadd.f32 %v744, %v940
  %v1005 = vadd.f32 %v749, %v941
  %v1006 = vadd.f32 %v752, %v942
  %v1007 = vadd.f32 %v757, %v943
  %v1008 = vadd.f32 %v760, %v944
  %v1009 = vadd.f32 %v765, %v945
  %v1010 = vadd.f32 %v768, %v946
  %v1011 = vadd.f32 %v773, %v947
  %v1012 = vadd.f32 %v776, %v948
  %v1013 = vadd.f32 %v781, %v949
  %v1014 = vadd.f32 %v784, %v950
  %v1015 = vadd.f32 %v789, %v951
  %v1016 = vadd.f32 %v792, %v952
  %v1017 = vadd.f32 %v797, %v953
  %v1018 = vadd.f32 %v800, %v954
  %v1019 = vadd.f32 %v805, %v955
  %v1020 = vadd.f32 %v808, %v956
  %v1021 = vadd.f32 %v813, %v957
  %v1022 = vadd.f32 %v816, %v958
  %v1023 = vadd.f32 %v821, %v959
  %v1024 = vadd.f32 %v824, %v960
  %v1025 = vadd.f32 %v829, %v961
  %v1026 = vadd.f32 %v832, %v962
  %v1027 = vmax.f32 %v963, 0.0
  %v1028 = vmax.f32 %v964, 0.0
  %v1029 = vmax.f32 %v965, 0.0
  %v1030 = vmax.f32 %v966, 0.0
  %v1031 = vmax.f32 %v967, 0.0
  %v1032 = vmax.f32 %v968, 0.0
  %v1033 = vmax.f32 %v969, 0.0
  %v1034 = vmax.f32 %v970, 0.0
  %v1035 = vmax.f32 %v971, 0.0
  %v1036 = vmax.f32 %v972, 0.0
  %v1037 = vmax.f32 %v973, 0.0
  %v1038 = vmax.f32 %v974, 0.0
  %v1039 = vmax.f32 %v975, 0.0
  %v1040 = vmax.f32 %v976, 0.0
  %v1041 = vmax.f32 %v977, 0.0
  %v1042 = vmax.f32 %v978, 0.0
  %v1043 = vmax.f32 %v979, 0.0
  %v1044 = vmax.f32 %v980, 0.0
  %v1045 = vmax.f32 %v981, 0.0
  %v1046 = vmax.f32 %v982, 0.0
  %v1047 = vmax.f32 %v983, 0.0
  %v1048 = vmax.f32 %v984, 0.0
  %v1049 = vmax.f32 %v985, 0.0
  %v1050 = vmax.f32 %v986, 0.0
  %v1051 = vmax.f32 %v987, 0.0
  %v1052 = vmax.f32 %v988, 0.0
  %v1053 = vmax.f32 %v989, 0.0
  %v1054 = vmax.f32 %v990, 0.0
  %v1055 = vmax.f32 %v991, 0.0
  %v1056 = vmax.f32 %v992, 0.0
  %v1057 = vmax.f32 %v993, 0.0
  %v1058 = vmax.f32 %v994, 0.0
  %v1059 = vmax.f32 %v995, 0.0
  %v1060 = vmax.f32 %v996, 0.0
  %v1061 = vmax.f32 %v997, 0.0
  %v1062 = vmax.f32 %v998, 0.0
  %v1063 = vmax.f32 %v999, 0.0
  %v1064 = vmax.f32 %v1000, 0.0
  %v1065 = vmax.f32 %v1001, 0.0
  %v1066 = vmax.f32 %v1002, 0.0
  %v1067 = vmax.f32 %v1003, 0.0
  %v1068 = vmax.f32 %v1004, 0.0
  %v1069 = vmax.f32 %v1005, 0.0
  %v1070 = vmax.f32 %v1006, 0.0
  %v1071 = vmax.f32 %v1007, 0.0
  %v1072 = vmax.f32 %v1008, 0.0
  %v1073 = vmax.f32 %v1009, 0.0
  %v1074 = vmax.f32 %v1010, 0.0
  %v1075 = vmax.f32 %v1011, 0.0
  %v1076 = vmax.f32 %v1012, 0.0
  %v1077 = vmax.f32 %v1013, 0.0
  %v1078 = vmax.f32 %v1014, 0.0
  %v1079 = vmax.f32 %v1015, 0.0
  %v1080 = vmax.f32 %v1016, 0.0
  %v1081 = vmax.f32 %v1017, 0.0
  %v1082 = vmax.f32 %v1018, 0.0
  %v1083 = vmax.f32 %v1019, 0.0
  %v1084 = vmax.f32 %v1020, 0.0
  %v1085 = vmax.f32 %v1021, 0.0
  %v1086 = vmax.f32 %v1022, 0.0
  %v1087 = vmax.f32 %v1023, 0.0
  %v1088 = vmax.f32 %v1024, 0.0
  %v1089 = vmax.f32 %v1025, 0.0
  %v1090 = vmax.f32 %v1026, 0.0
  %v1091 = vpack.c.bf16 %v1028, %v1027
  %v1092 = vpack.c.bf16 %v1030, %v1029
  %v1093 = vpack.c.bf16 %v1032, %v1031
  %v1094 = vpack.c.bf16 %v1034, %v1033
  %v1095 = vpack.c.bf16 %v1036, %v1035
  %v1096 = vpack.c.bf16 %v1038, %v1037
  %v1097 = vpack.c.bf16 %v1040, %v1039
  %v1098 = vpack.c.bf16 %v1042, %v1041
  %v1099 = vpack.c.bf16 %v1044, %v1043
  %v1100 = vpack.c.bf16 %v1046, %v1045
  %v1101 = vpack.c.bf16 %v1048, %v1047
  %v1102 = vpack.c.bf16 %v1050, %v1049
  %v1103 = vpack.c.bf16 %v1052, %v1051
  %v1104 = vpack.c.bf16 %v1054, %v1053
  %v1105 = vpack.c.bf16 %v1056, %v1055
  %v1106 = vpack.c.bf16 %v1058, %v1057
  %v1107 = vpack.c.bf16 %v1060, %v1059
  %v1108 = vpack.c.bf16 %v1062, %v1061
  %v1109 = vpack.c.bf16 %v1064, %v1063
  %v1110 = vpack.c.bf16 %v1066, %v1065
  %v1111 = vpack.c.bf16 %v1068, %v1067
  %v1112 = vpack.c.bf16 %v1070, %v1069
  %v1113 = vpack.c.bf16 %v1072, %v1071
  %v1114 = vpack.c.bf16 %v1074, %v1073
  %v1115 = vpack.c.bf16 %v1076, %v1075
  %v1116 = vpack.c.bf16 %v1078, %v1077
  %v1117 = vpack.c.bf16 %v1080, %v1079
  %v1118 = vpack.c.bf16 %v1082, %v1081
  %v1119 = vpack.c.bf16 %v1084, %v1083
  %v1120 = vpack.c.bf16 %v1086, %v1085
  %v1121 = vpack.c.bf16 %v1088, %v1087
  %v1122 = vpack.c.bf16 %v1090, %v1089
  %v1155 = vunpack.c.l.b16 %v1091
  %v1156 = vunpack.c.h.b16 %v1091
  %v1157 = vunpack.c.l.b16 %v1092
  %v1158 = vunpack.c.h.b16 %v1092
  %v1159 = vunpack.c.l.b16 %v1093
  %v1160 = vunpack.c.h.b16 %v1093
  %v1161 = vunpack.c.l.b16 %v1094
  %v1162 = vunpack.c.h.b16 %v1094
  %v1163 = vunpack.c.l.b16 %v1095
  %v1164 = vunpack.c.h.b16 %v1095
  %v1165 = vunpack.c.l.b16 %v1096
  %v1166 = vunpack.c.h.b16 %v1096
  %v1167 = vunpack.c.l.b16 %v1097
  %v1168 = vunpack.c.h.b16 %v1097
  %v1169 = vunpack.c.l.b16 %v1098
  %v1170 = vunpack.c.h.b16 %v1098
  %v1171 = vunpack.c.l.b16 %v1099
  %v1172 = vunpack.c.h.b16 %v1099
  %v1173 = vunpack.c.l.b16 %v1100
  %v1174 = vunpack.c.h.b16 %v1100
  %v1175 = vunpack.c.l.b16 %v1101
  %v1176 = vunpack.c.h.b16 %v1101
  %v1177 = vunpack.c.l.b16 %v1102
  %v1178 = vunpack.c.h.b16 %v1102
  %v1179 = vunpack.c.l.b16 %v1103
  %v1180 = vunpack.c.h.b16 %v1103
  %v1181 = vunpack.c.l.b16 %v1104
  %v1182 = vunpack.c.h.b16 %v1104
  %v1183 = vunpack.c.l.b16 %v1105
  %v1184 = vunpack.c.h.b16 %v1105
  %v1185 = vunpack.c.l.b16 %v1106
  %v1186 = vunpack.c.h.b16 %v1106
  %v1187 = vunpack.c.l.b16 %v1107
  %v1188 = vunpack.c.h.b16 %v1107
  %v1189 = vunpack.c.l.b16 %v1108
  %v1190 = vunpack.c.h.b16 %v1108
  %v1191 = vunpack.c.l.b16 %v1109
  %v1192 = vunpack.c.h.b16 %v1109
  %v1193 = vunpack.c.l.b16 %v1110
  %v1194 = vunpack.c.h.b16 %v1110
  %v1195 = vunpack.c.l.b16 %v1111
  %v1196 = vunpack.c.h.b16 %v1111
  %v1197 = vunpack.c.l.b16 %v1112
  %v1198 = vunpack.c.h.b16 %v1112
  %v1199 = vunpack.c.l.b16 %v1113
  %v1200 = vunpack.c.h.b16 %v1113
  %v1201 = vunpack.c.l.b16 %v1114
  %v1202 = vunpack.c.h.b16 %v1114
  %v1203 = vunpack.c.l.b16 %v1115
  %v1204 = vunpack.c.h.b16 %v1115
  %v1205 = vunpack.c.l.b16 %v1116
  %v1206 = vunpack.c.h.b16 %v1116
  %v1207 = vunpack.c.l.b16 %v1117
  %v1208 = vunpack.c.h.b16 %v1117
  %v1209 = vunpack.c.l.b16 %v1118
  %v1210 = vunpack.c.h.b16 %v1118
  %v1211 = vunpack.c.l.b16 %v1119
  %v1212 = vunpack.c.h.b16 %v1119
  %v1213 = vunpack.c.l.b16 %v1120
  %v1214 = vunpack.c.h.b16 %v1120
  %v1215 = vunpack.c.l.b16 %v1121
  %v1216 = vunpack.c.h.b16 %v1121
  %v1217 = vunpack.c.l.b16 %v1122
  %v1218 = vunpack.c.h.b16 %v1122
  %v1219 = vpack.c.b16 %v1155, %v1155
  %v1220 = vpack.c.b16 %v1156, %v1156
  %v1221 = vpack.c.b16 %v1157, %v1157
  %v1222 = vpack.c.b16 %v1158, %v1158
  %v1223 = vpack.c.b16 %v1159, %v1159
  %v1224 = vpack.c.b16 %v1160, %v1160
  %v1225 = vpack.c.b16 %v1161, %v1161
  %v1226 = vpack.c.b16 %v1162, %v1162
  %v1227 = vpack.c.b16 %v1163, %v1163
  %v1228 = vpack.c.b16 %v1164, %v1164
  %v1229 = vpack.c.b16 %v1165, %v1165
  %v1230 = vpack.c.b16 %v1166, %v1166
  %v1231 = vpack.c.b16 %v1167, %v1167
  %v1232 = vpack.c.b16 %v1168, %v1168
  %v1233 = vpack.c.b16 %v1169, %v1169
  %v1234 = vpack.c.b16 %v1170, %v1170
  %v1235 = vpack.c.b16 %v1171, %v1171
  %v1236 = vpack.c.b16 %v1172, %v1172
  %v1237 = vpack.c.b16 %v1173, %v1173
  %v1238 = vpack.c.b16 %v1174, %v1174
  %v1239 = vpack.c.b16 %v1175, %v1175
  %v1240 = vpack.c.b16 %v1176, %v1176
  %v1241 = vpack.c.b16 %v1177, %v1177
  %v1242 = vpack.c.b16 %v1178, %v1178
  %v1243 = vpack.c.b16 %v1179, %v1179
  %v1244 = vpack.c.b16 %v1180, %v1180
  %v1245 = vpack.c.b16 %v1181, %v1181
  %v1246 = vpack.c.b16 %v1182, %v1182
  %v1247 = vpack.c.b16 %v1183, %v1183
  %v1248 = vpack.c.b16 %v1184, %v1184
  %v1249 = vpack.c.b16 %v1185, %v1185
  %v1250 = vpack.c.b16 %v1186, %v1186
  %v1251 = vpack.c.b16 %v1187, %v1187
  %v1252 = vpack.c.b16 %v1188, %v1188
  %v1253 = vpack.c.b16 %v1189, %v1189
  %v1254 = vpack.c.b16 %v1190, %v1190
  %v1255 = vpack.c.b16 %v1191, %v1191
  %v1256 = vpack.c.b16 %v1192, %v1192
  %v1257 = vpack.c.b16 %v1193, %v1193
  %v1258 = vpack.c.b16 %v1194, %v1194
  %v1259 = vpack.c.b16 %v1195, %v1195
  %v1260 = vpack.c.b16 %v1196, %v1196
  %v1261 = vpack.c.b16 %v1197, %v1197
  %v1262 = vpack.c.b16 %v1198, %v1198
  %v1263 = vpack.c.b16 %v1199, %v1199
  %v1264 = vpack.c.b16 %v1200, %v1200
  %v1265 = vpack.c.b16 %v1201, %v1201
  %v1266 = vpack.c.b16 %v1202, %v1202
  %v1267 = vpack.c.b16 %v1203, %v1203
  %v1268 = vpack.c.b16 %v1204, %v1204
  %v1269 = vpack.c.b16 %v1205, %v1205
  %v1270 = vpack.c.b16 %v1206, %v1206
  %v1271 = vpack.c.b16 %v1207, %v1207
  %v1272 = vpack.c.b16 %v1208, %v1208
  %v1273 = vpack.c.b16 %v1209, %v1209
  %v1274 = vpack.c.b16 %v1210, %v1210
  %v1275 = vpack.c.b16 %v1211, %v1211
  %v1276 = vpack.c.b16 %v1212, %v1212
  %v1277 = vpack.c.b16 %v1213, %v1213
  %v1278 = vpack.c.b16 %v1214, %v1214
  %v1279 = vpack.c.b16 %v1215, %v1215
  %v1280 = vpack.c.b16 %v1216, %v1216
  %v1281 = vpack.c.b16 %v1217, %v1217
  %v1282 = vpack.c.b16 %v1218, %v1218
  %vm1347 = vcmask 125952
  %1348 = vst.msk [vmem:[%s4] sm:$0xf] %vm1347, %v1219
  %1349 = vst.msk [vmem:[%s4 + $0x4] sm:$0xf] %vm1347, %v1220
  %1350 = vst.msk [vmem:[%s4 + $0x8] sm:$0xf] %vm1347, %v1221
  %1351 = vst.msk [vmem:[%s4 + $0xc] sm:$0xf] %vm1347, %v1222
  %1352 = vst.msk [vmem:[%s4 + $0x10] sm:$0xf] %vm1347, %v1223
  %1353 = vst.msk [vmem:[%s4 + $0x14] sm:$0xf] %vm1347, %v1224
  %1354 = vst.msk [vmem:[%s4 + $0x18] sm:$0xf] %vm1347, %v1225
  %1355 = vst.msk [vmem:[%s4 + $0x1c] sm:$0xf] %vm1347, %v1226
  %1356 = vst.msk [vmem:[%s4 + $0x20] sm:$0xf] %vm1347, %v1227
  %1357 = vst.msk [vmem:[%s4 + $0x24] sm:$0xf] %vm1347, %v1228
  %1358 = vst.msk [vmem:[%s4 + $0x28] sm:$0xf] %vm1347, %v1229
  %1359 = vst.msk [vmem:[%s4 + $0x2c] sm:$0xf] %vm1347, %v1230
  %1360 = vst.msk [vmem:[%s4 + $0x30] sm:$0xf] %vm1347, %v1231
  %1361 = vst.msk [vmem:[%s4 + $0x34] sm:$0xf] %vm1347, %v1232
  %1362 = vst.msk [vmem:[%s4 + $0x38] sm:$0xf] %vm1347, %v1233
  %1363 = vst.msk [vmem:[%s4 + $0x3c] sm:$0xf] %vm1347, %v1234
  %1364 = vst.msk [vmem:[%s4 + $0x40] sm:$0xf] %vm1347, %v1235
  %1365 = vst.msk [vmem:[%s4 + $0x44] sm:$0xf] %vm1347, %v1236
  %1366 = vst.msk [vmem:[%s4 + $0x48] sm:$0xf] %vm1347, %v1237
  %1367 = vst.msk [vmem:[%s4 + $0x4c] sm:$0xf] %vm1347, %v1238
  %1368 = vst.msk [vmem:[%s4 + $0x50] sm:$0xf] %vm1347, %v1239
  %1369 = vst.msk [vmem:[%s4 + $0x54] sm:$0xf] %vm1347, %v1240
  %1370 = vst.msk [vmem:[%s4 + $0x58] sm:$0xf] %vm1347, %v1241
  %1371 = vst.msk [vmem:[%s4 + $0x5c] sm:$0xf] %vm1347, %v1242
  %1372 = vst.msk [vmem:[%s4 + $0x60] sm:$0xf] %vm1347, %v1243
  %1373 = vst.msk [vmem:[%s4 + $0x64] sm:$0xf] %vm1347, %v1244
  %1374 = vst.msk [vmem:[%s4 + $0x68] sm:$0xf] %vm1347, %v1245
  %1375 = vst.msk [vmem:[%s4 + $0x6c] sm:$0xf] %vm1347, %v1246
  %1376 = vst.msk [vmem:[%s4 + $0x70] sm:$0xf] %vm1347, %v1247
  %1377 = vst.msk [vmem:[%s4 + $0x74] sm:$0xf] %vm1347, %v1248
  %1378 = vst.msk [vmem:[%s4 + $0x78] sm:$0xf] %vm1347, %v1249
  %1379 = vst.msk [vmem:[%s4 + $0x7c] sm:$0xf] %vm1347, %v1250
  %1380 = vst.msk [vmem:[%s4 + $0x80] sm:$0xf] %vm1347, %v1251
  %1381 = vst.msk [vmem:[%s4 + $0x84] sm:$0xf] %vm1347, %v1252
  %1382 = vst.msk [vmem:[%s4 + $0x88] sm:$0xf] %vm1347, %v1253
  %1383 = vst.msk [vmem:[%s4 + $0x8c] sm:$0xf] %vm1347, %v1254
  %1384 = vst.msk [vmem:[%s4 + $0x90] sm:$0xf] %vm1347, %v1255
  %1385 = vst.msk [vmem:[%s4 + $0x94] sm:$0xf] %vm1347, %v1256
  %1386 = vst.msk [vmem:[%s4 + $0x98] sm:$0xf] %vm1347, %v1257
  %1387 = vst.msk [vmem:[%s4 + $0x9c] sm:$0xf] %vm1347, %v1258
  %1388 = vst.msk [vmem:[%s4 + $0xa0] sm:$0xf] %vm1347, %v1259
  %1389 = vst.msk [vmem:[%s4 + $0xa4] sm:$0xf] %vm1347, %v1260
  %1390 = vst.msk [vmem:[%s4 + $0xa8] sm:$0xf] %vm1347, %v1261
  %1391 = vst.msk [vmem:[%s4 + $0xac] sm:$0xf] %vm1347, %v1262
  %1392 = vst.msk [vmem:[%s4 + $0xb0] sm:$0xf] %vm1347, %v1263
  %1393 = vst.msk [vmem:[%s4 + $0xb4] sm:$0xf] %vm1347, %v1264
  %1394 = vst.msk [vmem:[%s4 + $0xb8] sm:$0xf] %vm1347, %v1265
  %1395 = vst.msk [vmem:[%s4 + $0xbc] sm:$0xf] %vm1347, %v1266
  %1396 = vst.msk [vmem:[%s4 + $0xc0] sm:$0xf] %vm1347, %v1267
  %1397 = vst.msk [vmem:[%s4 + $0xc4] sm:$0xf] %vm1347, %v1268
  %1398 = vst.msk [vmem:[%s4 + $0xc8] sm:$0xf] %vm1347, %v1269
  %1399 = vst.msk [vmem:[%s4 + $0xcc] sm:$0xf] %vm1347, %v1270
  %1400 = vst.msk [vmem:[%s4 + $0xd0] sm:$0xf] %vm1347, %v1271
  %1401 = vst.msk [vmem:[%s4 + $0xd4] sm:$0xf] %vm1347, %v1272
  %1402 = vst.msk [vmem:[%s4 + $0xd8] sm:$0xf] %vm1347, %v1273
  %1403 = vst.msk [vmem:[%s4 + $0xdc] sm:$0xf] %vm1347, %v1274
  %1404 = vst.msk [vmem:[%s4 + $0xe0] sm:$0xf] %vm1347, %v1275
  %1405 = vst.msk [vmem:[%s4 + $0xe4] sm:$0xf] %vm1347, %v1276
  %1406 = vst.msk [vmem:[%s4 + $0xe8] sm:$0xf] %vm1347, %v1277
  %1407 = vst.msk [vmem:[%s4 + $0xec] sm:$0xf] %vm1347, %v1278
  %1408 = vst.msk [vmem:[%s4 + $0xf0] sm:$0xf] %vm1347, %v1279
  %1409 = vst.msk [vmem:[%s4 + $0xf4] sm:$0xf] %vm1347, %v1280
  %1410 = vst.msk [vmem:[%s4 + $0xf8] sm:$0xf] %vm1347, %v1281
  %1411 = vst.msk [vmem:[%s4 + $0xfc] sm:$0xf] %vm1347, %v1282
  // Predicated region
  $region18: #{resnet_forward.21} parent=0 // pred_check
    _
  $region19: #{resnet_forward.21} parent=0 // pred_check_branch
    %1413 = sbr.rel (0) target = $region21
  $region20: #{resnet_forward.21} parent=0 // pred_region
    _
  $region21: #{resnet_forward.21} parent=0 // pred_fallthru
    _
  // Predicated region
  $region22: #{resnet_forward.21} parent=0 // pred_check
    _
  $region23: #{resnet_forward.21} parent=0 // pred_check_branch
    %1415 = sbr.rel (0) target = $region25
  $region24: #{resnet_forward.21} parent=0 // pred_region
    _
  $region25: #{resnet_forward.21} parent=0 // pred_fallthru
    _

// kernel: resnet_forward.26
$region0: #{resnet_forward.26}
  #allocation0 [shape = 'u32[]', space=smem, size = 0x4, offset = 0x4, fixed_abs, tag = 'smem constant byte address 0x4 - core index']
  #allocation1 [shape = 'u32[144,128]{1,0:T(1,128)}', space=vmem, size = 0x12000, scoped, tag = 'internal scratch']
  %s0 = inlined_call_operand.vmem [shape: bf16[128,144], index: 0, kind: input, shape index: {}]
  %s1 = inlined_call_operand.vmem [shape: bf16[144,64], index: 1, kind: input, shape index: {}]
  %s2 = inlined_call_operand.vmem [shape: f32[1,64], index: 2, kind: input, shape index: {}]
  %s3 = inlined_call_operand.vmem [shape: bf16[128,64], index: 3, kind: output, shape index: {}]
  %s4 = sld [smem:[#allocation0]]
  $region22: #{resnet_forward.26} parent=0
    _
  %s6 = ssub.s32 1, %s4
  %s7 = scalar_select 0, %s6, %s4
  // Predicated region
  $region2: #{resnet_forward.26} parent=0 // pred_check
    _
  $region3: #{resnet_forward.26} parent=0 // pred_check_branch
    %9 = sbr.rel (0) target = $region5
  $region4: #{resnet_forward.26} parent=0 // pred_region
    _
  $region5: #{resnet_forward.26} parent=0 // pred_fallthru
    _
  // Predicated region
  $region6: #{resnet_forward.26} parent=0 // pred_check
    _
  $region7: #{resnet_forward.26} parent=0 // pred_check_branch
    %11 = sbr.rel (0) target = $region9
  $region8: #{resnet_forward.26} parent=0 // pred_region
    _
  $region9: #{resnet_forward.26} parent=0 // pred_fallthru
    _
  // Predicated region
  $region10: #{resnet_forward.26} parent=0 // pred_check
    _
  $region11: #{resnet_forward.26} parent=0 // pred_check_branch
    %13 = sbr.rel (0) target = $region13
  $region12: #{resnet_forward.26} parent=0 // pred_region
    _
  $region13: #{resnet_forward.26} parent=0 // pred_fallthru
    _
  %v15 = vld [vmem:[%s0] sm:$0xff]
  %v16 = vld [vmem:[%s0 + $0x8] sm:$0xff]
  %v17 = vld [vmem:[%s0 + $0x10] sm:$0xff]
  %v18 = vld [vmem:[%s0 + $0x18] sm:$0xff]
  %v19 = vld [vmem:[%s0 + $0x20] sm:$0xff]
  %v20 = vld [vmem:[%s0 + $0x28] sm:$0xff]
  %v21 = vld [vmem:[%s0 + $0x30] sm:$0xff]
  %v22 = vld [vmem:[%s0 + $0x38] sm:$0xff]
  %v23 = vld [vmem:[%s0 + $0x40] sm:$0xff]
  %v24 = vld [vmem:[%s0 + $0x48] sm:$0xff]
  %v25 = vld [vmem:[%s0 + $0x50] sm:$0xff]
  %v26 = vld [vmem:[%s0 + $0x58] sm:$0xff]
  %v27 = vld [vmem:[%s0 + $0x60] sm:$0xff]
  %v28 = vld [vmem:[%s0 + $0x68] sm:$0xff]
  %v29 = vld [vmem:[%s0 + $0x70] sm:$0xff]
  %v30 = vld [vmem:[%s0 + $0x78] sm:$0xff]
  %v31 = vld [vmem:[%s1] sm:$0xf]
  %v32 = vld [vmem:[%s1 + $0x4] sm:$0xf]
  %v33 = vld [vmem:[%s1 + $0x8] sm:$0xf]
  %v34 = vld [vmem:[%s1 + $0xc] sm:$0xf]
  %v35 = vld [vmem:[%s1 + $0x10] sm:$0xf]
  %v36 = vld [vmem:[%s1 + $0x14] sm:$0xf]
  %v37 = vld [vmem:[%s1 + $0x18] sm:$0xf]
  %v38 = vld [vmem:[%s1 + $0x1c] sm:$0xf]
  %v39 = vld [vmem:[%s1 + $0x20] sm:$0xf]
  %v40 = vld [vmem:[%s1 + $0x24] sm:$0xf]
  %v41 = vld [vmem:[%s1 + $0x28] sm:$0xf]
  %v42 = vld [vmem:[%s1 + $0x2c] sm:$0xf]
  %v43 = vld [vmem:[%s1 + $0x30] sm:$0xf]
  %v44 = vld [vmem:[%s1 + $0x34] sm:$0xf]
  %v45 = vld [vmem:[%s1 + $0x38] sm:$0xf]
  %v46 = vld [vmem:[%s1 + $0x3c] sm:$0xf]
  %v47 = vld [vmem:[%s1 + $0x40] sm:$0xf]
  %v48 = vld [vmem:[%s1 + $0x44] sm:$0xf]
  %v49 = vld [vmem:[%s2] sm:$0x1]
  %v51 = vlaneseq
  %v52 = vshrl.u32 %v51, 7
  %v53 = vsub.s32 0, %v52
  %v54 = vrot.slane %v49, %v53
  %v72 = vunpack.c.l.b16 %v15
  %v73 = vunpack.c.h.b16 %v15
  %v74 = vunpack.c.l.b16 %v16
  %v75 = vunpack.c.h.b16 %v16
  %v76 = vunpack.c.l.b16 %v17
  %v77 = vunpack.c.h.b16 %v17
  %v78 = vunpack.c.l.b16 %v18
  %v79 = vunpack.c.h.b16 %v18
  %v80 = vunpack.c.l.b16 %v19
  %v81 = vunpack.c.h.b16 %v19
  %v82 = vunpack.c.l.b16 %v20
  %v83 = vunpack.c.h.b16 %v20
  %v84 = vunpack.c.l.b16 %v21
  %v85 = vunpack.c.h.b16 %v21
  %v86 = vunpack.c.l.b16 %v22
  %v87 = vunpack.c.h.b16 %v22
  %v88 = vunpack.c.l.b16 %v23
  %v89 = vunpack.c.h.b16 %v23
  %v90 = vunpack.c.l.b16 %v24
  %v91 = vunpack.c.h.b16 %v24
  %v92 = vunpack.c.l.b16 %v25
  %v93 = vunpack.c.h.b16 %v25
  %v94 = vunpack.c.l.b16 %v26
  %v95 = vunpack.c.h.b16 %v26
  %v96 = vunpack.c.l.b16 %v27
  %v97 = vunpack.c.h.b16 %v27
  %v98 = vunpack.c.l.b16 %v28
  %v99 = vunpack.c.h.b16 %v28
  %v100 = vunpack.c.l.b16 %v29
  %v101 = vunpack.c.h.b16 %v29
  %v102 = vunpack.c.l.b16 %v30
  %v103 = vunpack.c.h.b16 %v30
  %v104 = vpack.c.b16 %v74, %v72
  %v105 = vpack.c.b16 %v75, %v73
  %v106 = vpack.c.b16 %v78, %v76
  %v107 = vpack.c.b16 %v79, %v77
  %v108 = vpack.c.b16 %v82, %v80
  %v109 = vpack.c.b16 %v83, %v81
  %v110 = vpack.c.b16 %v86, %v84
  %v111 = vpack.c.b16 %v87, %v85
  %v112 = vpack.c.b16 %v90, %v88
  %v113 = vpack.c.b16 %v91, %v89
  %v114 = vpack.c.b16 %v94, %v92
  %v115 = vpack.c.b16 %v95, %v93
  %v116 = vpack.c.b16 %v98, %v96
  %v117 = vpack.c.b16 %v99, %v97
  %v118 = vpack.c.b16 %v102, %v100
  %v119 = vpack.c.b16 %v103, %v101
  %v146 = vunpack.c.l.b16 %v31
  %v147 = vunpack.c.l.b16 %v32
  %v148 = vunpack.c.l.b16 %v33
  %v149 = vunpack.c.l.b16 %v34
  %v150 = vunpack.c.l.b16 %v35
  %v151 = vunpack.c.l.b16 %v36
  %v152 = vunpack.c.l.b16 %v37
  %v153 = vunpack.c.l.b16 %v38
  %v154 = vunpack.c.l.b16 %v39
  %v155 = vunpack.c.l.b16 %v40
  %v156 = vunpack.c.l.b16 %v41
  %v157 = vunpack.c.l.b16 %v42
  %v158 = vunpack.c.l.b16 %v43
  %v159 = vunpack.c.l.b16 %v44
  %v160 = vunpack.c.l.b16 %v45
  %v161 = vunpack.c.l.b16 %v46
  %v162 = vunpack.c.l.b16 %v47
  %v163 = vunpack.c.l.b16 %v48
  %v164 = vpack.c.b16 %v147, %v146
  %v165 = vpack.c.b16 %v149, %v148
  %v166 = vpack.c.b16 %v151, %v150
  %v167 = vpack.c.b16 %v153, %v152
  %v168 = vpack.c.b16 %v155, %v154
  %v169 = vpack.c.b16 %v157, %v156
  %v170 = vpack.c.b16 %v159, %v158
  %v171 = vpack.c.b16 %v161, %v160
  %v172 = vpack.c.b16 %v163, %v162
  %vm182 = vcmask 130048
  %v184 = vsel %vm182, %v105, 0
  %v187 = vsel %vm182, %v107, 0
  %v190 = vsel %vm182, %v109, 0
  %v193 = vsel %vm182, %v111, 0
  %v196 = vsel %vm182, %v113, 0
  %v199 = vsel %vm182, %v115, 0
  %v202 = vsel %vm182, %v117, 0
  %v205 = vsel %vm182, %v119, 0
  %207 = vmatprep.subr.bf16.mxu0 0
  %208 = vmatpush1.bf16.msra.mxu0 %v164
  %209 = vmatprep.subr.bf16.mxu0 0
  %210 = vmatpush1.bf16.msra.mxu0 %v165
  %211 = vmatprep.subr.bf16.mxu0 0
  %212 = vmatpush1.bf16.msra.mxu0 %v166
  %213 = vmatprep.subr.bf16.mxu0 0
  %214 = vmatpush1.bf16.msra.mxu0 %v167
  %215 = vmatprep.subr.bf16.mxu0 0
  %216 = vmatpush1.bf16.msra.mxu0 %v168
  %217 = vmatprep.subr.bf16.mxu0 0
  %218 = vmatpush1.bf16.msra.mxu0 %v169
  %219 = vmatprep.subr.bf16.mxu0 0
  %220 = vmatpush1.bf16.msra.mxu0 %v170
  %221 = vmatprep.subr.bf16.mxu0 0
  %222 = vmatpush1.bf16.msra.mxu0 %v171
  %223 = vmatprep.subr.bf16.mxu0 0
  %224 = vmatpush1.bf16.msra.mxu0 %v172
  %225 = vmatprep.subr.bf16.mxu0 0
  %226 = vmatpush1.bf16.msra.mxu0 0
  %227 = vmatprep.subr.bf16.mxu0 0
  %228 = vmatpush1.bf16.msra.mxu0 0
  %229 = vmatprep.subr.bf16.mxu0 0
  %230 = vmatpush1.bf16.msra.mxu0 0
  %231 = vmatprep.subr.bf16.mxu0 0
  %232 = vmatpush1.bf16.msra.mxu0 0
  %233 = vmatprep.subr.bf16.mxu0 0
  %234 = vmatpush1.bf16.msra.mxu0 0
  %235 = vmatprep.subr.bf16.mxu0 0
  %236 = vmatpush1.bf16.msra.mxu0 0
  %237 = vmatprep.subr.bf16.mxu0 0
  %238 = vmatpush1.bf16.msra.mxu0 0
  %239 = vmatprep.mubr.bf16.mxu0 %v184
  %240 = vmatmul.mubr.bf16.gmra.mrb[0].mxu0 %v104
  %v241 = vpop.f32.mrb[0].mxu0
  %v242 = vadd.f32 %v54, %v241
  %v243 = vpop.f32.mrb[0].mxu0
  %v244 = vpop.f32.mrb[0].mxu0
  %v245 = vadd.f32 %v54, %v244
  %v246 = vpop.f32.mrb[0].mxu0
  %247 = vmatprep.mubr.bf16.mxu0 %v187
  %248 = vmatmul.mubr.bf16.gmra.mrb[0].mxu0 %v106
  %v249 = vpop.f32.mrb[0].mxu0
  %v250 = vadd.f32 %v54, %v249
  %v251 = vpop.f32.mrb[0].mxu0
  %v252 = vpop.f32.mrb[0].mxu0
  %v253 = vadd.f32 %v54, %v252
  %v254 = vpop.f32.mrb[0].mxu0
  %255 = vmatprep.mubr.bf16.mxu0 %v190
  %256 = vmatmul.mubr.bf16.gmra.mrb[0].mxu0 %v108
  %v257 = vpop.f32.mrb[0].mxu0
  %v258 = vadd.f32 %v54, %v257
  %v259 = vpop.f32.mrb[0].mxu0
  %v260 = vpop.f32.mrb[0].mxu0
  %v261 = vadd.f32 %v54, %v260
  %v262 = vpop.f32.mrb[0].mxu0
  %263 = vmatprep.mubr.bf16.mxu0 %v193
  %264 = vmatmul.mubr.bf16.gmra.mrb[0].mxu0 %v110
  %v265 = vpop.f32.mrb[0].mxu0
  %v266 = vadd.f32 %v54, %v265
  %v267 = vpop.f32.mrb[0].mxu0
  %v268 = vpop.f32.mrb[0].mxu0
  %v269 = vadd.f32 %v54, %v268
  %v270 = vpop.f32.mrb[0].mxu0
  %271 = vmatprep.mubr.bf16.mxu0 %v196
  %272 = vmatmul.mubr.bf16.gmra.mrb[0].mxu0 %v112
  %v273 = vpop.f32.mrb[0].mxu0
  %v274 = vadd.f32 %v54, %v273
  %v275 = vpop.f32.mrb[0].mxu0
  %v276 = vpop.f32.mrb[0].mxu0
  %v277 = vadd.f32 %v54, %v276
  %v278 = vpop.f32.mrb[0].mxu0
  %279 = vmatprep.mubr.bf16.mxu0 %v199
  %280 = vmatmul.mubr.bf16.gmra.mrb[0].mxu0 %v114
  %v281 = vpop.f32.mrb[0].mxu0
  %v282 = vadd.f32 %v54, %v281
  %v283 = vpop.f32.mrb[0].mxu0
  %v284 = vpop.f32.mrb[0].mxu0
  %v285 = vadd.f32 %v54, %v284
  %v286 = vpop.f32.mrb[0].mxu0
  %287 = vmatprep.mubr.bf16.mxu0 %v202
  %288 = vmatmul.mubr.bf16.gmra.mrb[0].mxu0 %v116
  %v289 = vpop.f32.mrb[0].mxu0
  %v290 = vadd.f32 %v54, %v289
  %v291 = vpop.f32.mrb[0].mxu0
  %v292 = vpop.f32.mrb[0].mxu0
  %v293 = vadd.f32 %v54, %v292
  %v294 = vpop.f32.mrb[0].mxu0
  %295 = vmatprep.mubr.bf16.mxu0 %v205
  %296 = vmatmul.mubr.bf16.gmra.mrb[0].mxu0 %v118
  %v297 = vpop.f32.mrb[0].mxu0
  %v298 = vadd.f32 %v54, %v297
  %v299 = vpop.f32.mrb[0].mxu0
  %v300 = vpop.f32.mrb[0].mxu0
  %v301 = vadd.f32 %v54, %v300
  %v302 = vpop.f32.mrb[0].mxu0
  %303 = vdwg.mxu0
  %v304 = vlaneseq
  %v305 = vand.u32 %v304, 127
  %vm306 = vcmp.lt.s32.totalorder %v305, 32
  %v307 = vmax.f32 %v242, 0.0
  %v308 = vmax.f32 %v245, 0.0
  %v309 = vmax.f32 %v250, 0.0
  %v310 = vmax.f32 %v253, 0.0
  %v311 = vmax.f32 %v258, 0.0
  %v312 = vmax.f32 %v261, 0.0
  %v313 = vmax.f32 %v266, 0.0
  %v314 = vmax.f32 %v269, 0.0
  %v315 = vmax.f32 %v274, 0.0
  %v316 = vmax.f32 %v277, 0.0
  %v317 = vmax.f32 %v282, 0.0
  %v318 = vmax.f32 %v285, 0.0
  %v319 = vmax.f32 %v290, 0.0
  %v320 = vmax.f32 %v293, 0.0
  %v321 = vmax.f32 %v298, 0.0
  %v322 = vmax.f32 %v301, 0.0
  %v323 = vsel %vm306, %v307, %v242
  %v324 = vsel %vm306, %v308, %v245
  %v325 = vsel %vm306, %v309, %v250
  %v326 = vsel %vm306, %v310, %v253
  %v327 = vsel %vm306, %v311, %v258
  %v328 = vsel %vm306, %v312, %v261
  %v329 = vsel %vm306, %v313, %v266
  %v330 = vsel %vm306, %v314, %v269
  %v331 = vsel %vm306, %v315, %v274
  %v332 = vsel %vm306, %v316, %v277
  %v333 = vsel %vm306, %v317, %v282
  %v334 = vsel %vm306, %v318, %v285
  %v335 = vsel %vm306, %v319, %v290
  %v336 = vsel %vm306, %v320, %v293
  %v337 = vsel %vm306, %v321, %v298
  %v338 = vsel %vm306, %v322, %v301
  %v339 = vpack.c.bf16 %v324, %v323
  %v340 = vpack.c.bf16 %v326, %v325
  %v341 = vpack.c.bf16 %v328, %v327
  %v342 = vpack.c.bf16 %v330, %v329
  %v343 = vpack.c.bf16 %v332, %v331
  %v344 = vpack.c.bf16 %v334, %v333
  %v345 = vpack.c.bf16 %v336, %v335
  %v346 = vpack.c.bf16 %v338, %v337
  %v355 = vunpack.c.l.b16 %v339
  %v356 = vunpack.c.h.b16 %v339
  %v357 = vunpack.c.l.b16 %v340
  %v358 = vunpack.c.h.b16 %v340
  %v359 = vunpack.c.l.b16 %v341
  %v360 = vunpack.c.h.b16 %v341
  %v361 = vunpack.c.l.b16 %v342
  %v362 = vunpack.c.h.b16 %v342
  %v363 = vunpack.c.l.b16 %v343
  %v364 = vunpack.c.h.b16 %v343
  %v365 = vunpack.c.l.b16 %v344
  %v366 = vunpack.c.h.b16 %v344
  %v367 = vunpack.c.l.b16 %v345
  %v368 = vunpack.c.h.b16 %v345
  %v369 = vunpack.c.l.b16 %v346
  %v370 = vunpack.c.h.b16 %v346
  %v371 = vpack.c.b16 %v355, %v355
  %v372 = vpack.c.b16 %v356, %v356
  %v373 = vpack.c.b16 %v357, %v357
  %v374 = vpack.c.b16 %v358, %v358
  %v375 = vpack.c.b16 %v359, %v359
  %v376 = vpack.c.b16 %v360, %v360
  %v377 = vpack.c.b16 %v361, %v361
  %v378 = vpack.c.b16 %v362, %v362
  %v379 = vpack.c.b16 %v363, %v363
  %v380 = vpack.c.b16 %v364, %v364
  %v381 = vpack.c.b16 %v365, %v365
  %v382 = vpack.c.b16 %v366, %v366
  %v383 = vpack.c.b16 %v367, %v367
  %v384 = vpack.c.b16 %v368, %v368
  %v385 = vpack.c.b16 %v369, %v369
  %v386 = vpack.c.b16 %v370, %v370
  %vm403 = vcmask 519168
  %404 = vst.msk [vmem:[%s3] sm:$0xf] %vm403, %v371
  %405 = vst.msk [vmem:[%s3 + $0x4] sm:$0xf] %vm403, %v372
  %406 = vst.msk [vmem:[%s3 + $0x8] sm:$0xf] %vm403, %v373
  %407 = vst.msk [vmem:[%s3 + $0xc] sm:$0xf] %vm403, %v374
  %408 = vst.msk [vmem:[%s3 + $0x10] sm:$0xf] %vm403, %v375
  %409 = vst.msk [vmem:[%s3 + $0x14] sm:$0xf] %vm403, %v376
  %410 = vst.msk [vmem:[%s3 + $0x18] sm:$0xf] %vm403, %v377
  %411 = vst.msk [vmem:[%s3 + $0x1c] sm:$0xf] %vm403, %v378
  %412 = vst.msk [vmem:[%s3 + $0x20] sm:$0xf] %vm403, %v379
  %413 = vst.msk [vmem:[%s3 + $0x24] sm:$0xf] %vm403, %v380
  %414 = vst.msk [vmem:[%s3 + $0x28] sm:$0xf] %vm403, %v381
  %415 = vst.msk [vmem:[%s3 + $0x2c] sm:$0xf] %vm403, %v382
  %416 = vst.msk [vmem:[%s3 + $0x30] sm:$0xf] %vm403, %v383
  %417 = vst.msk [vmem:[%s3 + $0x34] sm:$0xf] %vm403, %v384
  %418 = vst.msk [vmem:[%s3 + $0x38] sm:$0xf] %vm403, %v385
  %419 = vst.msk [vmem:[%s3 + $0x3c] sm:$0xf] %vm403, %v386
  // Predicated region
  $region14: #{resnet_forward.26} parent=0 // pred_check
    _
  $region15: #{resnet_forward.26} parent=0 // pred_check_branch
    %421 = sbr.rel (0) target = $region17
  $region16: #{resnet_forward.26} parent=0 // pred_region
    _
  $region17: #{resnet_forward.26} parent=0 // pred_fallthru
    _
  // Predicated region
  $region18: #{resnet_forward.26} parent=0 // pred_check
    _
  $region19: #{resnet_forward.26} parent=0 // pred_check_branch
    %423 = sbr.rel (0) target = $region21
  $region20: #{resnet_forward.26} parent=0 // pred_region
    _
  $region21: #{resnet_forward.26} parent=0 // pred_fallthru
    _

// kernel: resnet_forward.27
$region0: #{resnet_forward.27}
  #allocation0 [shape = 'u32[]', space=smem, size = 0x4, offset = 0x4, fixed_abs, tag = 'smem constant byte address 0x4 - core index']
  #allocation1 [shape = 'u32[144,128]{1,0:T(1,128)}', space=vmem, size = 0x12000, scoped, tag = 'internal scratch']
  %s0 = inlined_call_operand.vmem [shape: bf16[128,288], index: 0, kind: input, shape index: {}]
  %s1 = inlined_call_operand.vmem [shape: bf16[288,32], index: 1, kind: input, shape index: {}]
  %s2 = inlined_call_operand.vmem [shape: f32[1,32], index: 2, kind: input, shape index: {}]
  %s3 = inlined_call_operand.vmem [shape: bf16[128,32], index: 3, kind: input, shape index: {}]
  %s4 = inlined_call_operand.vmem [shape: bf16[128,32], index: 4, kind: output, shape index: {}]
  %s5 = sld [smem:[#allocation0]]
  $region26: #{resnet_forward.27} parent=0
    _
  %s7 = ssub.s32 1, %s5
  %s8 = scalar_select 0, %s7, %s5
  // Predicated region
  $region2: #{resnet_forward.27} parent=0 // pred_check
    _
  $region3: #{resnet_forward.27} parent=0 // pred_check_branch
    %10 = sbr.rel (0) target = $region5
  $region4: #{resnet_forward.27} parent=0 // pred_region
    _
  $region5: #{resnet_forward.27} parent=0 // pred_fallthru
    _
  // Predicated region
  $region6: #{resnet_forward.27} parent=0 // pred_check
    _
  $region7: #{resnet_forward.27} parent=0 // pred_check_branch
    %12 = sbr.rel (0) target = $region9
  $region8: #{resnet_forward.27} parent=0 // pred_region
    _
  $region9: #{resnet_forward.27} parent=0 // pred_fallthru
    _
  // Predicated region
  $region10: #{resnet_forward.27} parent=0 // pred_check
    _
  $region11: #{resnet_forward.27} parent=0 // pred_check_branch
    %14 = sbr.rel (0) target = $region13
  $region12: #{resnet_forward.27} parent=0 // pred_region
    _
  $region13: #{resnet_forward.27} parent=0 // pred_fallthru
    _
  // Predicated region
  $region14: #{resnet_forward.27} parent=0 // pred_check
    _
  $region15: #{resnet_forward.27} parent=0 // pred_check_branch
    %16 = sbr.rel (0) target = $region17
  $region16: #{resnet_forward.27} parent=0 // pred_region
    _
  $region17: #{resnet_forward.27} parent=0 // pred_fallthru
    _
  %v18 = vld [vmem:[%s0] sm:$0xff]
  %v19 = vld [vmem:[%s0 + $0x8] sm:$0xf]
  %v20 = vld [vmem:[%s0 + $0xc] sm:$0xff]
  %v21 = vld [vmem:[%s0 + $0x14] sm:$0xf]
  %v22 = vld [vmem:[%s0 + $0x18] sm:$0xff]
  %v23 = vld [vmem:[%s0 + $0x20] sm:$0xf]
  %v24 = vld [vmem:[%s0 + $0x24] sm:$0xff]
  %v25 = vld [vmem:[%s0 + $0x2c] sm:$0xf]
  %v26 = vld [vmem:[%s0 + $0x30] sm:$0xff]
  %v27 = vld [vmem:[%s0 + $0x38] sm:$0xf]
  %v28 = vld [vmem:[%s0 + $0x3c] sm:$0xff]
  %v29 = vld [vmem:[%s0 + $0x44] sm:$0xf]
  %v30 = vld [vmem:[%s0 + $0x48] sm:$0xff]
  %v31 = vld [vmem:[%s0 + $0x50] sm:$0xf]
  %v32 = vld [vmem:[%s0 + $0x54] sm:$0xff]
  %v33 = vld [vmem:[%s0 + $0x5c] sm:$0xf]
  %v34 = vld [vmem:[%s0 + $0x60] sm:$0xff]
  %v35 = vld [vmem:[%s0 + $0x68] sm:$0xf]
  %v36 = vld [vmem:[%s0 + $0x6c] sm:$0xff]
  %v37 = vld [vmem:[%s0 + $0x74] sm:$0xf]
  %v38 = vld [vmem:[%s0 + $0x78] sm:$0xff]
  %v39 = vld [vmem:[%s0 + $0x80] sm:$0xf]
  %v40 = vld [vmem:[%s0 + $0x84] sm:$0xff]
  %v41 = vld [vmem:[%s0 + $0x8c] sm:$0xf]
  %v42 = vld [vmem:[%s0 + $0x90] sm:$0xff]
  %v43 = vld [vmem:[%s0 + $0x98] sm:$0xf]
  %v44 = vld [vmem:[%s0 + $0x9c] sm:$0xff]
  %v45 = vld [vmem:[%s0 + $0xa4] sm:$0xf]
  %v46 = vld [vmem:[%s0 + $0xa8] sm:$0xff]
  %v47 = vld [vmem:[%s0 + $0xb0] sm:$0xf]
  %v48 = vld [vmem:[%s0 + $0xb4] sm:$0xff]
  %v49 = vld [vmem:[%s0 + $0xbc] sm:$0xf]
  %v50 = vld [vmem:[%s1] sm:$0xf]
  %v51 = vld [vmem:[%s1 + $0x4] sm:$0xf]
  %v52 = vld [vmem:[%s1 + $0x8] sm:$0xf]
  %v53 = vld [vmem:[%s1 + $0xc] sm:$0xf]
  %v54 = vld [vmem:[%s1 + $0x10] sm:$0xf]
  %v55 = vld [vmem:[%s1 + $0x14] sm:$0xf]
  %v56 = vld [vmem:[%s1 + $0x18] sm:$0xf]
  %v57 = vld [vmem:[%s1 + $0x1c] sm:$0xf]
  %v58 = vld [vmem:[%s1 + $0x20] sm:$0xf]
  %v59 = vld [vmem:[%s1 + $0x24] sm:$0xf]
  %v60 = vld [vmem:[%s1 + $0x28] sm:$0xf]
  %v61 = vld [vmem:[%s1 + $0x2c] sm:$0xf]
  %v62 = vld [vmem:[%s1 + $0x30] sm:$0xf]
  %v63 = vld [vmem:[%s1 + $0x34] sm:$0xf]
  %v64 = vld [vmem:[%s1 + $0x38] sm:$0xf]
  %v65 = vld [vmem:[%s1 + $0x3c] sm:$0xf]
  %v66 = vld [vmem:[%s1 + $0x40] sm:$0xf]
  %v67 = vld [vmem:[%s1 + $0x44] sm:$0xf]
  %v68 = vld [vmem:[%s1 + $0x48] sm:$0xf]
  %v69 = vld [vmem:[%s1 + $0x4c] sm:$0xf]
  %v70 = vld [vmem:[%s1 + $0x50] sm:$0xf]
  %v71 = vld [vmem:[%s1 + $0x54] sm:$0xf]
  %v72 = vld [vmem:[%s1 + $0x58] sm:$0xf]
  %v73 = vld [vmem:[%s1 + $0x5c] sm:$0xf]
  %v74 = vld [vmem:[%s1 + $0x60] sm:$0xf]
  %v75 = vld [vmem:[%s1 + $0x64] sm:$0xf]
  %v76 = vld [vmem:[%s1 + $0x68] sm:$0xf]
  %v77 = vld [vmem:[%s1 + $0x6c] sm:$0xf]
  %v78 = vld [vmem:[%s1 + $0x70] sm:$0xf]
  %v79 = vld [vmem:[%s1 + $0x74] sm:$0xf]
  %v80 = vld [vmem:[%s1 + $0x78] sm:$0xf]
  %v81 = vld [vmem:[%s1 + $0x7c] sm:$0xf]
  %v82 = vld [vmem:[%s1 + $0x80] sm:$0xf]
  %v83 = vld [vmem:[%s1 + $0x84] sm:$0xf]
  %v84 = vld [vmem:[%s1 + $0x88] sm:$0xf]
  %v85 = vld [vmem:[%s1 + $0x8c] sm:$0xf]
  %v86 = vld [vmem:[%s2] sm:$0x1]
  %v88 = vlaneseq
  %v89 = vshrl.u32 %v88, 7
  %v90 = vsub.s32 0, %v89
  %v91 = vrot.slane %v86, %v90
  %v125 = vunpack.c.l.b16 %v18
  %v126 = vunpack.c.h.b16 %v18
  %v127 = vunpack.c.l.b16 %v19
  %v128 = vunpack.c.l.b16 %v20
  %v129 = vunpack.c.h.b16 %v20
  %v130 = vunpack.c.l.b16 %v21
  %v131 = vunpack.c.l.b16 %v22
  %v132 = vunpack.c.h.b16 %v22
  %v133 = vunpack.c.l.b16 %v23
  %v134 = vunpack.c.l.b16 %v24
  %v135 = vunpack.c.h.b16 %v24
  %v136 = vunpack.c.l.b16 %v25
  %v137 = vunpack.c.l.b16 %v26
  %v138 = vunpack.c.h.b16 %v26
  %v139 = vunpack.c.l.b16 %v27
  %v140 = vunpack.c.l.b16 %v28
  %v141 = vunpack.c.h.b16 %v28
  %v142 = vunpack.c.l.b16 %v29
  %v143 = vunpack.c.l.b16 %v30
  %v144 = vunpack.c.h.b16 %v30
  %v145 = vunpack.c.l.b16 %v31
  %v146 = vunpack.c.l.b16 %v32
  %v147 = vunpack.c.h.b16 %v32
  %v148 = vunpack.c.l.b16 %v33
  %v149 = vunpack.c.l.b16 %v34
  %v150 = vunpack.c.h.b16 %v34
  %v151 = vunpack.c.l.b16 %v35
  %v152 = vunpack.c.l.b16 %v36
  %v153 = vunpack.c.h.b16 %v36
  %v154 = vunpack.c.l.b16 %v37
  %v155 = vunpack.c.l.b16 %v38
  %v156 = vunpack.c.h.b16 %v38
  %v157 = vunpack.c.l.b16 %v39
  %v158 = vunpack.c.l.b16 %v40
  %v159 = vunpack.c.h.b16 %v40
  %v160 = vunpack.c.l.b16 %v41
  %v161 = vunpack.c.l.b16 %v42
  %v162 = vunpack.c.h.b16 %v42
  %v163 = vunpack.c.l.b16 %v43
  %v164 = vunpack.c.l.b16 %v44
  %v165 = vunpack.c.h.b16 %v44
  %v166 = vunpack.c.l.b16 %v45
  %v167 = vunpack.c.l.b16 %v46
  %v168 = vunpack.c.h.b16 %v46
  %v169 = vunpack.c.l.b16 %v47
  %v170 = vunpack.c.l.b16 %v48
  %v171 = vunpack.c.h.b16 %v48
  %v172 = vunpack.c.l.b16 %v49
  %v173 = vpack.c.b16 %v128, %v125
  %v174 = vpack.c.b16 %v129, %v126
  %v175 = vpack.c.b16 %v130, %v127
  %v176 = vpack.c.b16 %v134, %v131
  %v177 = vpack.c.b16 %v135, %v132
  %v178 = vpack.c.b16 %v136, %v133
  %v179 = vpack.c.b16 %v140, %v137
  %v180 = vpack.c.b16 %v141, %v138
  %v181 = vpack.c.b16 %v142, %v139
  %v182 = vpack.c.b16 %v146, %v143
  %v183 = vpack.c.b16 %v147, %v144
  %v184 = vpack.c.b16 %v148, %v145
  %v185 = vpack.c.b16 %v152, %v149
  %v186 = vpack.c.b16 %v153, %v150
  %v187 = vpack.c.b16 %v154, %v151
  %v188 = vpack.c.b16 %v158, %v155
  %v189 = vpack.c.b16 %v159, %v156
  %v190 = vpack.c.b16 %v160, %v157
  %v191 = vpack.c.b16 %v164, %v161
  %v192 = vpack.c.b16 %v165, %v162
  %v193 = vpack.c.b16 %v166, %v163
  %v194 = vpack.c.b16 %v170, %v167
  %v195 = vpack.c.b16 %v171, %v168
  %v196 = vpack.c.b16 %v172, %v169
  %v249 = vunpack.c.l.b16 %v50
  %v250 = vunpack.c.l.b16 %v51
  %v251 = vunpack.c.l.b16 %v52
  %v252 = vunpack.c.l.b16 %v53
  %v253 = vunpack.c.l.b16 %v54
  %v254 = vunpack.c.l.b16 %v55
  %v255 = vunpack.c.l.b16 %v56
  %v256 = vunpack.c.l.b16 %v57
  %v257 = vunpack.c.l.b16 %v58
  %v258 = vunpack.c.l.b16 %v59
  %v259 = vunpack.c.l.b16 %v60
  %v260 = vunpack.c.l.b16 %v61
  %v261 = vunpack.c.l.b16 %v62
  %v262 = vunpack.c.l.b16 %v63
  %v263 = vunpack.c.l.b16 %v64
  %v264 = vunpack.c.l.b16 %v65
  %v265 = vunpack.c.l.b16 %v66
  %v266 = vunpack.c.l.b16 %v67
  %v267 = vunpack.c.l.b16 %v68
  %v268 = vunpack.c.l.b16 %v69
  %v269 = vunpack.c.l.b16 %v70
  %v270 = vunpack.c.l.b16 %v71
  %v271 = vunpack.c.l.b16 %v72
  %v272 = vunpack.c.l.b16 %v73
  %v273 = vunpack.c.l.b16 %v74
  %v274 = vunpack.c.l.b16 %v75
  %v275 = vunpack.c.l.b16 %v76
  %v276 = vunpack.c.l.b16 %v77
  %v277 = vunpack.c.l.b16 %v78
  %v278 = vunpack.c.l.b16 %v79
  %v279 = vunpack.c.l.b16 %v80
  %v280 = vunpack.c.l.b16 %v81
  %v281 = vunpack.c.l.b16 %v82
  %v282 = vunpack.c.l.b16 %v83
  %v283 = vunpack.c.l.b16 %v84
  %v284 = vunpack.c.l.b16 %v85
  %v285 = vpack.c.b16 %v250, %v249
  %v286 = vpack.c.b16 %v252, %v251
  %v287 = vpack.c.b16 %v254, %v253
  %v288 = vpack.c.b16 %v256, %v255
  %v289 = vpack.c.b16 %v258, %v257
  %v290 = vpack.c.b16 %v260, %v259
  %v291 = vpack.c.b16 %v262, %v261
  %v292 = vpack.c.b16 %v264, %v263
  %v293 = vpack.c.b16 %v266, %v265
  %v294 = vpack.c.b16 %v268, %v267
  %v295 = vpack.c.b16 %v270, %v269
  %v296 = vpack.c.b16 %v272, %v271
  %v297 = vpack.c.b16 %v274, %v273
  %v298 = vpack.c.b16 %v276, %v275
  %v299 = vpack.c.b16 %v278, %v277
  %v300 = vpack.c.b16 %v280, %v279
  %v301 = vpack.c.b16 %v282, %v281
  %v302 = vpack.c.b16 %v284, %v283
  %vm321 = vcmask 261120
  %v323 = vsel %vm321, %v175, 0
  %v326 = vsel %vm321, %v178, 0
  %v329 = vsel %vm321, %v181, 0
  %v332 = vsel %vm321, %v184, 0
  %v335 = vsel %vm321, %v187, 0
  %v338 = vsel %vm321, %v190, 0
  %v341 = vsel %vm321, %v193, 0
  %v344 = vsel %vm321, %v196, 0
  %346 = vmatprep.subr.bf16.mxu0 0
  %347 = vmatpush1.bf16.msra.mxu0 %v285
  %348 = vmatprep.subr.bf16.mxu0 0
  %349 = vmatpush1.bf16.msra.mxu0 %v286
  %350 = vmatprep.subr.bf16.mxu0 0
  %351 = vmatpush1.bf16.msra.mxu0 %v287
  %352 = vmatprep.subr.bf16.mxu0 0
  %353 = vmatpush1.bf16.msra.mxu0 %v288
  %354 = vmatprep.subr.bf16.mxu0 0
  %355 = vmatpush1.bf16.msra.mxu0 %v289
  %356 = vmatprep.subr.bf16.mxu0 0
  %357 = vmatpush1.bf16.msra.mxu0 %v290
  %358 = vmatprep.subr.bf16.mxu0 0
  %359 = vmatpush1.bf16.msra.mxu0 %v291
  %360 = vmatprep.subr.bf16.mxu0 0
  %361 = vmatpush1.bf16.msra.mxu0 %v292
  %362 = vmatprep.subr.bf16.mxu0 0
  %363 = vmatpush1.bf16.msra.mxu0 %v293
  %364 = vmatprep.subr.bf16.mxu0 0
  %365 = vmatpush1.bf16.msra.mxu0 %v294
  %366 = vmatprep.subr.bf16.mxu0 0
  %367 = vmatpush1.bf16.msra.mxu0 %v295
  %368 = vmatprep.subr.bf16.mxu0 0
  %369 = vmatpush1.bf16.msra.mxu0 %v296
  %370 = vmatprep.subr.bf16.mxu0 0
  %371 = vmatpush1.bf16.msra.mxu0 %v297
  %372 = vmatprep.subr.bf16.mxu0 0
  %373 = vmatpush1.bf16.msra.mxu0 %v298
  %374 = vmatprep.subr.bf16.mxu0 0
  %375 = vmatpush1.bf16.msra.mxu0 %v299
  %376 = vmatprep.subr.bf16.mxu0 0
  %377 = vmatpush1.bf16.msra.mxu0 %v300
  %378 = vmatprep.mubr.bf16.mxu0 %v174
  %379 = vmatmul.mubr.bf16.gmra.mrb[0].mxu0 %v173
  %v380 = vpop.f32.mrb[0].mxu0
  %v381 = vadd.f32 %v91, %v380
  %v382 = vpop.f32.mrb[0].mxu0
  %v383 = vpop.f32.mrb[0].mxu0
  %v384 = vadd.f32 %v91, %v383
  %v385 = vpop.f32.mrb[0].mxu0
  %386 = vmatprep.mubr.bf16.mxu0 %v177
  %387 = vmatmul.mubr.bf16.gmra.mrb[0].mxu0 %v176
  %v388 = vpop.f32.mrb[0].mxu0
  %v389 = vadd.f32 %v91, %v388
  %v390 = vpop.f32.mrb[0].mxu0
  %v391 = vpop.f32.mrb[0].mxu0
  %v392 = vadd.f32 %v91, %v391
  %v393 = vpop.f32.mrb[0].mxu0
  %394 = vmatprep.mubr.bf16.mxu0 %v180
  %395 = vmatmul.mubr.bf16.gmra.mrb[0].mxu0 %v179
  %v396 = vpop.f32.mrb[0].mxu0
  %v397 = vadd.f32 %v91, %v396
  %v398 = vpop.f32.mrb[0].mxu0
  %v399 = vpop.f32.mrb[0].mxu0
  %v400 = vadd.f32 %v91, %v399
  %v401 = vpop.f32.mrb[0].mxu0
  %402 = vmatprep.mubr.bf16.mxu0 %v183
  %403 = vmatmul.mubr.bf16.gmra.mrb[0].mxu0 %v182
  %v404 = vpop.f32.mrb[0].mxu0
  %v405 = vadd.f32 %v91, %v404
  %v406 = vpop.f32.mrb[0].mxu0
  %v407 = vpop.f32.mrb[0].mxu0
  %v408 = vadd.f32 %v91, %v407
  %v409 = vpop.f32.mrb[0].mxu0
  %410 = vmatprep.mubr.bf16.mxu0 %v186
  %411 = vmatmul.mubr.bf16.gmra.mrb[0].mxu0 %v185
  %v412 = vpop.f32.mrb[0].mxu0
  %v413 = vadd.f32 %v91, %v412
  %v414 = vpop.f32.mrb[0].mxu0
  %v415 = vpop.f32.mrb[0].mxu0
  %v416 = vadd.f32 %v91, %v415
  %v417 = vpop.f32.mrb[0].mxu0
  %418 = vmatprep.mubr.bf16.mxu0 %v189
  %419 = vmatmul.mubr.bf16.gmra.mrb[0].mxu0 %v188
  %v420 = vpop.f32.mrb[0].mxu0
  %v421 = vadd.f32 %v91, %v420
  %v422 = vpop.f32.mrb[0].mxu0
  %v423 = vpop.f32.mrb[0].mxu0
  %v424 = vadd.f32 %v91, %v423
  %v425 = vpop.f32.mrb[0].mxu0
  %426 = vmatprep.mubr.bf16.mxu0 %v192
  %427 = vmatmul.mubr.bf16.gmra.mrb[0].mxu0 %v191
  %v428 = vpop.f32.mrb[0].mxu0
  %v429 = vadd.f32 %v91, %v428
  %v430 = vpop.f32.mrb[0].mxu0
  %v431 = vpop.f32.mrb[0].mxu0
  %v432 = vadd.f32 %v91, %v431
  %v433 = vpop.f32.mrb[0].mxu0
  %434 = vmatprep.mubr.bf16.mxu0 %v195
  %435 = vmatmul.mubr.bf16.gmra.mrb[0].mxu0 %v194
  %v436 = vpop.f32.mrb[0].mxu0
  %v437 = vadd.f32 %v91, %v436
  %v438 = vpop.f32.mrb[0].mxu0
  %v439 = vpop.f32.mrb[0].mxu0
  %v440 = vadd.f32 %v91, %v439
  %v441 = vpop.f32.mrb[0].mxu0
  %442 = vdwg.mxu0
  %443 = vmatprep.subr.bf16.mxu0 0
  %444 = vmatpush1.bf16.msra.mxu0 %v301
  %445 = vmatprep.subr.bf16.mxu0 0
  %446 = vmatpush1.bf16.msra.mxu0 %v302
  %447 = vmatprep.subr.bf16.mxu0 0
  %448 = vmatpush1.bf16.msra.mxu0 0
  %449 = vmatprep.subr.bf16.mxu0 0
  %450 = vmatpush1.bf16.msra.mxu0 0
  %451 = vmatprep.subr.bf16.mxu0 0
  %452 = vmatpush1.bf16.msra.mxu0 0
  %453 = vmatprep.subr.bf16.mxu0 0
  %454 = vmatpush1.bf16.msra.mxu0 0
  %455 = vmatprep.subr.bf16.mxu0 0
  %456 = vmatpush1.bf16.msra.mxu0 0
  %457 = vmatprep.subr.bf16.mxu0 0
  %458 = vmatpush1.bf16.msra.mxu0 0
  %459 = vmatprep.subr.bf16.mxu0 0
  %460 = vmatpush1.bf16.msra.mxu0 0
  %461 = vmatprep.subr.bf16.mxu0 0
  %462 = vmatpush1.bf16.msra.mxu0 0
  %463 = vmatprep.subr.bf16.mxu0 0
  %464 = vmatpush1.bf16.msra.mxu0 0
  %465 = vmatprep.subr.bf16.mxu0 0
  %466 = vmatpush1.bf16.msra.mxu0 0
  %467 = vmatprep.subr.bf16.mxu0 0
  %468 = vmatpush1.bf16.msra.mxu0 0
  %469 = vmatprep.subr.bf16.mxu0 0
  %470 = vmatpush1.bf16.msra.mxu0 0
  %471 = vmatprep.subr.bf16.mxu0 0
  %472 = vmatpush1.bf16.msra.mxu0 0
  %473 = vmatprep.subr.bf16.mxu0 0
  %474 = vmatpush1.bf16.msra.mxu0 0
  %475 = vmatprep.mubr.bf16.mxu0 0
  %476 = vmatmul.mubr.bf16.gmra.mrb[0].mxu0 %v323
  %v477 = vpop.f32.mrb[0].mxu0
  %v478 = vadd.f32 %v381, %v477
  %v479 = vpop.f32.mrb[0].mxu0
  %v480 = vpop.f32.mrb[0].mxu0
  %v481 = vadd.f32 %v384, %v480
  %v482 = vpop.f32.mrb[0].mxu0
  %483 = vmatprep.mubr.bf16.mxu0 0
  %484 = vmatmul.mubr.bf16.gmra.mrb[0].mxu0 %v326
  %v485 = vpop.f32.mrb[0].mxu0
  %v486 = vadd.f32 %v389, %v485
  %v487 = vpop.f32.mrb[0].mxu0
  %v488 = vpop.f32.mrb[0].mxu0
  %v489 = vadd.f32 %v392, %v488
  %v490 = vpop.f32.mrb[0].mxu0
  %491 = vmatprep.mubr.bf16.mxu0 0
  %492 = vmatmul.mubr.bf16.gmra.mrb[0].mxu0 %v329
  %v493 = vpop.f32.mrb[0].mxu0
  %v494 = vadd.f32 %v397, %v493
  %v495 = vpop.f32.mrb[0].mxu0
  %v496 = vpop.f32.mrb[0].mxu0
  %v497 = vadd.f32 %v400, %v496
  %v498 = vpop.f32.mrb[0].mxu0
  %499 = vmatprep.mubr.bf16.mxu0 0
  %500 = vmatmul.mubr.bf16.gmra.mrb[0].mxu0 %v332
  %v501 = vpop.f32.mrb[0].mxu0
  %v502 = vadd.f32 %v405, %v501
  %v503 = vpop.f32.mrb[0].mxu0
  %v504 = vpop.f32.mrb[0].mxu0
  %v505 = vadd.f32 %v408, %v504
  %v506 = vpop.f32.mrb[0].mxu0
  %507 = vmatprep.mubr.bf16.mxu0 0
  %508 = vmatmul.mubr.bf16.gmra.mrb[0].mxu0 %v335
  %v509 = vpop.f32.mrb[0].mxu0
  %v510 = vadd.f32 %v413, %v509
  %v511 = vpop.f32.mrb[0].mxu0
  %v512 = vpop.f32.mrb[0].mxu0
  %v513 = vadd.f32 %v416, %v512
  %v514 = vpop.f32.mrb[0].mxu0
  %515 = vmatprep.mubr.bf16.mxu0 0
  %516 = vmatmul.mubr.bf16.gmra.mrb[0].mxu0 %v338
  %v517 = vpop.f32.mrb[0].mxu0
  %v518 = vadd.f32 %v421, %v517
  %v519 = vpop.f32.mrb[0].mxu0
  %v520 = vpop.f32.mrb[0].mxu0
  %v521 = vadd.f32 %v424, %v520
  %v522 = vpop.f32.mrb[0].mxu0
  %523 = vmatprep.mubr.bf16.mxu0 0
  %524 = vmatmul.mubr.bf16.gmra.mrb[0].mxu0 %v341
  %v525 = vpop.f32.mrb[0].mxu0
  %v526 = vadd.f32 %v429, %v525
  %v527 = vpop.f32.mrb[0].mxu0
  %v528 = vpop.f32.mrb[0].mxu0
  %v529 = vadd.f32 %v432, %v528
  %v530 = vpop.f32.mrb[0].mxu0
  %531 = vmatprep.mubr.bf16.mxu0 0
  %532 = vmatmul.mubr.bf16.gmra.mrb[0].mxu0 %v344
  %v533 = vpop.f32.mrb[0].mxu0
  %v534 = vadd.f32 %v437, %v533
  %v535 = vpop.f32.mrb[0].mxu0
  %v536 = vpop.f32.mrb[0].mxu0
  %v537 = vadd.f32 %v440, %v536
  %v538 = vpop.f32.mrb[0].mxu0
  %539 = vdwg.mxu0
  %v540 = vld [vmem:[%s3] sm:$0xf]
  %v541 = vld [vmem:[%s3 + $0x4] sm:$0xf]
  %v542 = vld [vmem:[%s3 + $0x8] sm:$0xf]
  %v543 = vld [vmem:[%s3 + $0xc] sm:$0xf]
  %v544 = vld [vmem:[%s3 + $0x10] sm:$0xf]
  %v545 = vld [vmem:[%s3 + $0x14] sm:$0xf]
  %v546 = vld [vmem:[%s3 + $0x18] sm:$0xf]
  %v547 = vld [vmem:[%s3 + $0x1c] sm:$0xf]
  %v548 = vld [vmem:[%s3 + $0x20] sm:$0xf]
  %v549 = vld [vmem:[%s3 + $0x24] sm:$0xf]
  %v550 = vld [vmem:[%s3 + $0x28] sm:$0xf]
  %v551 = vld [vmem:[%s3 + $0x2c] sm:$0xf]
  %v552 = vld [vmem:[%s3 + $0x30] sm:$0xf]
  %v553 = vld [vmem:[%s3 + $0x34] sm:$0xf]
  %v554 = vld [vmem:[%s3 + $0x38] sm:$0xf]
  %v555 = vld [vmem:[%s3 + $0x3c] sm:$0xf]
  %v556 = vunpack.c.l.bf16 %v540
  %v557 = vunpack.c.l.bf16 %v541
  %v558 = vunpack.c.l.bf16 %v542
  %v559 = vunpack.c.l.bf16 %v543
  %v560 = vunpack.c.l.bf16 %v544
  %v561 = vunpack.c.l.bf16 %v545
  %v562 = vunpack.c.l.bf16 %v546
  %v563 = vunpack.c.l.bf16 %v547
  %v564 = vunpack.c.l.bf16 %v548
  %v565 = vunpack.c.l.bf16 %v549
  %v566 = vunpack.c.l.bf16 %v550
  %v567 = vunpack.c.l.bf16 %v551
  %v568 = vunpack.c.l.bf16 %v552
  %v569 = vunpack.c.l.bf16 %v553
  %v570 = vunpack.c.l.bf16 %v554
  %v571 = vunpack.c.l.bf16 %v555
  %v572 = vadd.f32 %v478, %v556
  %v573 = vadd.f32 %v481, %v557
  %v574 = vadd.f32 %v486, %v558
  %v575 = vadd.f32 %v489, %v559
  %v576 = vadd.f32 %v494, %v560
  %v577 = vadd.f32 %v497, %v561
  %v578 = vadd.f32 %v502, %v562
  %v579 = vadd.f32 %v505, %v563
  %v580 = vadd.f32 %v510, %v564
  %v581 = vadd.f32 %v513, %v565
  %v582 = vadd.f32 %v518, %v566
  %v583 = vadd.f32 %v521, %v567
  %v584 = vadd.f32 %v526, %v568
  %v585 = vadd.f32 %v529, %v569
  %v586 = vadd.f32 %v534, %v570
  %v587 = vadd.f32 %v537, %v571
  %v588 = vmax.f32 %v572, 0.0
  %v589 = vmax.f32 %v573, 0.0
  %v590 = vmax.f32 %v574, 0.0
  %v591 = vmax.f32 %v575, 0.0
  %v592 = vmax.f32 %v576, 0.0
  %v593 = vmax.f32 %v577, 0.0
  %v594 = vmax.f32 %v578, 0.0
  %v595 = vmax.f32 %v579, 0.0
  %v596 = vmax.f32 %v580, 0.0
  %v597 = vmax.f32 %v581, 0.0
  %v598 = vmax.f32 %v582, 0.0
  %v599 = vmax.f32 %v583, 0.0
  %v600 = vmax.f32 %v584, 0.0
  %v601 = vmax.f32 %v585, 0.0
  %v602 = vmax.f32 %v586, 0.0
  %v603 = vmax.f32 %v587, 0.0
  %v604 = vpack.c.bf16 %v589, %v588
  %v605 = vpack.c.bf16 %v591, %v590
  %v606 = vpack.c.bf16 %v593, %v592
  %v607 = vpack.c.bf16 %v595, %v594
  %v608 = vpack.c.bf16 %v597, %v596
  %v609 = vpack.c.bf16 %v599, %v598
  %v610 = vpack.c.bf16 %v601, %v600
  %v611 = vpack.c.bf16 %v603, %v602
  %v620 = vunpack.c.l.b16 %v604
  %v621 = vunpack.c.h.b16 %v604
  %v622 = vunpack.c.l.b16 %v605
  %v623 = vunpack.c.h.b16 %v605
  %v624 = vunpack.c.l.b16 %v606
  %v625 = vunpack.c.h.b16 %v606
  %v626 = vunpack.c.l.b16 %v607
  %v627 = vunpack.c.h.b16 %v607
  %v628 = vunpack.c.l.b16 %v608
  %v629 = vunpack.c.h.b16 %v608
  %v630 = vunpack.c.l.b16 %v609
  %v631 = vunpack.c.h.b16 %v609
  %v632 = vunpack.c.l.b16 %v610
  %v633 = vunpack.c.h.b16 %v610
  %v634 = vunpack.c.l.b16 %v611
  %v635 = vunpack.c.h.b16 %v611
  %v636 = vpack.c.b16 %v620, %v620
  %v637 = vpack.c.b16 %v621, %v621
  %v638 = vpack.c.b16 %v622, %v622
  %v639 = vpack.c.b16 %v623, %v623
  %v640 = vpack.c.b16 %v624, %v624
  %v641 = vpack.c.b16 %v625, %v625
  %v642 = vpack.c.b16 %v626, %v626
  %v643 = vpack.c.b16 %v627, %v627
  %v644 = vpack.c.b16 %v628, %v628
  %v645 = vpack.c.b16 %v629, %v629
  %v646 = vpack.c.b16 %v630, %v630
  %v647 = vpack.c.b16 %v631, %v631
  %v648 = vpack.c.b16 %v632, %v632
  %v649 = vpack.c.b16 %v633, %v633
  %v650 = vpack.c.b16 %v634, %v634
  %v651 = vpack.c.b16 %v635, %v635
  %vm668 = vcmask 257024
  %669 = vst.msk [vmem:[%s4] sm:$0xf] %vm668, %v636
  %670 = vst.msk [vmem:[%s4 + $0x4] sm:$0xf] %vm668, %v637
  %671 = vst.msk [vmem:[%s4 + $0x8] sm:$0xf] %vm668, %v638
  %672 = vst.msk [vmem:[%s4 + $0xc] sm:$0xf] %vm668, %v639
  %673 = vst.msk [vmem:[%s4 + $0x10] sm:$0xf] %vm668, %v640
  %674 = vst.msk [vmem:[%s4 + $0x14] sm:$0xf] %vm668, %v641
  %675 = vst.msk [vmem:[%s4 + $0x18] sm:$0xf] %vm668, %v642
  %676 = vst.msk [vmem:[%s4 + $0x1c] sm:$0xf] %vm668, %v643
  %677 = vst.msk [vmem:[%s4 + $0x20] sm:$0xf] %vm668, %v644
  %678 = vst.msk [vmem:[%s4 + $0x24] sm:$0xf] %vm668, %v645
  %679 = vst.msk [vmem:[%s4 + $0x28] sm:$0xf] %vm668, %v646
  %680 = vst.msk [vmem:[%s4 + $0x2c] sm:$0xf] %vm668, %v647
  %681 = vst.msk [vmem:[%s4 + $0x30] sm:$0xf] %vm668, %v648
  %682 = vst.msk [vmem:[%s4 + $0x34] sm:$0xf] %vm668, %v649
  %683 = vst.msk [vmem:[%s4 + $0x38] sm:$0xf] %vm668, %v650
  %684 = vst.msk [vmem:[%s4 + $0x3c] sm:$0xf] %vm668, %v651
  // Predicated region
  $region18: #{resnet_forward.27} parent=0 // pred_check
    _
  $region19: #{resnet_forward.27} parent=0 // pred_check_branch
    %686 = sbr.rel (0) target = $region21
  $region20: #{resnet_forward.27} parent=0 // pred_region
    _
  $region21: #{resnet_forward.27} parent=0 // pred_fallthru
    _
  // Predicated region
  $region22: #{resnet_forward.27} parent=0 // pred_check
    _
  $region23: #{resnet_forward.27} parent=0 // pred_check_branch
    %688 = sbr.rel (0) target = $region25
  $region24: #{resnet_forward.27} parent=0 // pred_region
    _
  $region25: #{resnet_forward.27} parent=0 // pred_fallthru
    _

// kernel: resnet_forward.28
$region0: #{resnet_forward.28}
  #allocation0 [shape = 'u32[]', space=smem, size = 0x4, offset = 0x4, fixed_abs, tag = 'smem constant byte address 0x4 - core index']
  #allocation1 [shape = 'u32[144,128]{1,0:T(1,128)}', space=vmem, size = 0x12000, scoped, tag = 'internal scratch']
  %s0 = inlined_call_operand.vmem [shape: bf16[128,288], index: 0, kind: input, shape index: {}]
  %s1 = inlined_call_operand.vmem [shape: bf16[288,32], index: 1, kind: input, shape index: {}]
  %s2 = inlined_call_operand.vmem [shape: f32[1,32], index: 2, kind: input, shape index: {}]
  %s3 = inlined_call_operand.vmem [shape: bf16[128,32], index: 3, kind: output, shape index: {}]
  %s4 = sld [smem:[#allocation0]]
  $region22: #{resnet_forward.28} parent=0
    _
  %s6 = ssub.s32 1, %s4
  %s7 = scalar_select 0, %s6, %s4
  // Predicated region
  $region2: #{resnet_forward.28} parent=0 // pred_check
    _
  $region3: #{resnet_forward.28} parent=0 // pred_check_branch
    %9 = sbr.rel (0) target = $region5
  $region4: #{resnet_forward.28} parent=0 // pred_region
    _
  $region5: #{resnet_forward.28} parent=0 // pred_fallthru
    _
  // Predicated region
  $region6: #{resnet_forward.28} parent=0 // pred_check
    _
  $region7: #{resnet_forward.28} parent=0 // pred_check_branch
    %11 = sbr.rel (0) target = $region9
  $region8: #{resnet_forward.28} parent=0 // pred_region
    _
  $region9: #{resnet_forward.28} parent=0 // pred_fallthru
    _
  // Predicated region
  $region10: #{resnet_forward.28} parent=0 // pred_check
    _
  $region11: #{resnet_forward.28} parent=0 // pred_check_branch
    %13 = sbr.rel (0) target = $region13
  $region12: #{resnet_forward.28} parent=0 // pred_region
    _
  $region13: #{resnet_forward.28} parent=0 // pred_fallthru
    _
  %v15 = vld [vmem:[%s0] sm:$0xff]
  %v16 = vld [vmem:[%s0 + $0x8] sm:$0xf]
  %v17 = vld [vmem:[%s0 + $0xc] sm:$0xff]
  %v18 = vld [vmem:[%s0 + $0x14] sm:$0xf]
  %v19 = vld [vmem:[%s0 + $0x18] sm:$0xff]
  %v20 = vld [vmem:[%s0 + $0x20] sm:$0xf]
  %v21 = vld [vmem:[%s0 + $0x24] sm:$0xff]
  %v22 = vld [vmem:[%s0 + $0x2c] sm:$0xf]
  %v23 = vld [vmem:[%s0 + $0x30] sm:$0xff]
  %v24 = vld [vmem:[%s0 + $0x38] sm:$0xf]
  %v25 = vld [vmem:[%s0 + $0x3c] sm:$0xff]
  %v26 = vld [vmem:[%s0 + $0x44] sm:$0xf]
  %v27 = vld [vmem:[%s0 + $0x48] sm:$0xff]
  %v28 = vld [vmem:[%s0 + $0x50] sm:$0xf]
  %v29 = vld [vmem:[%s0 + $0x54] sm:$0xff]
  %v30 = vld [vmem:[%s0 + $0x5c] sm:$0xf]
  %v31 = vld [vmem:[%s0 + $0x60] sm:$0xff]
  %v32 = vld [vmem:[%s0 + $0x68] sm:$0xf]
  %v33 = vld [vmem:[%s0 + $0x6c] sm:$0xff]
  %v34 = vld [vmem:[%s0 + $0x74] sm:$0xf]
  %v35 = vld [vmem:[%s0 + $0x78] sm:$0xff]
  %v36 = vld [vmem:[%s0 + $0x80] sm:$0xf]
  %v37 = vld [vmem:[%s0 + $0x84] sm:$0xff]
  %v38 = vld [vmem:[%s0 + $0x8c] sm:$0xf]
  %v39 = vld [vmem:[%s0 + $0x90] sm:$0xff]
  %v40 = vld [vmem:[%s0 + $0x98] sm:$0xf]
  %v41 = vld [vmem:[%s0 + $0x9c] sm:$0xff]
  %v42 = vld [vmem:[%s0 + $0xa4] sm:$0xf]
  %v43 = vld [vmem:[%s0 + $0xa8] sm:$0xff]
  %v44 = vld [vmem:[%s0 + $0xb0] sm:$0xf]
  %v45 = vld [vmem:[%s0 + $0xb4] sm:$0xff]
  %v46 = vld [vmem:[%s0 + $0xbc] sm:$0xf]
  %v47 = vld [vmem:[%s1] sm:$0xf]
  %v48 = vld [vmem:[%s1 + $0x4] sm:$0xf]
  %v49 = vld [vmem:[%s1 + $0x8] sm:$0xf]
  %v50 = vld [vmem:[%s1 + $0xc] sm:$0xf]
  %v51 = vld [vmem:[%s1 + $0x10] sm:$0xf]
  %v52 = vld [vmem:[%s1 + $0x14] sm:$0xf]
  %v53 = vld [vmem:[%s1 + $0x18] sm:$0xf]
  %v54 = vld [vmem:[%s1 + $0x1c] sm:$0xf]
  %v55 = vld [vmem:[%s1 + $0x20] sm:$0xf]
  %v56 = vld [vmem:[%s1 + $0x24] sm:$0xf]
  %v57 = vld [vmem:[%s1 + $0x28] sm:$0xf]
  %v58 = vld [vmem:[%s1 + $0x2c] sm:$0xf]
  %v59 = vld [vmem:[%s1 + $0x30] sm:$0xf]
  %v60 = vld [vmem:[%s1 + $0x34] sm:$0xf]
  %v61 = vld [vmem:[%s1 + $0x38] sm:$0xf]
  %v62 = vld [vmem:[%s1 + $0x3c] sm:$0xf]
  %v63 = vld [vmem:[%s1 + $0x40] sm:$0xf]
  %v64 = vld [vmem:[%s1 + $0x44] sm:$0xf]
  %v65 = vld [vmem:[%s1 + $0x48] sm:$0xf]
  %v66 = vld [vmem:[%s1 + $0x4c] sm:$0xf]
  %v67 = vld [vmem:[%s1 + $0x50] sm:$0xf]
  %v68 = vld [vmem:[%s1 + $0x54] sm:$0xf]
  %v69 = vld [vmem:[%s1 + $0x58] sm:$0xf]
  %v70 = vld [vmem:[%s1 + $0x5c] sm:$0xf]
  %v71 = vld [vmem:[%s1 + $0x60] sm:$0xf]
  %v72 = vld [vmem:[%s1 + $0x64] sm:$0xf]
  %v73 = vld [vmem:[%s1 + $0x68] sm:$0xf]
  %v74 = vld [vmem:[%s1 + $0x6c] sm:$0xf]
  %v75 = vld [vmem:[%s1 + $0x70] sm:$0xf]
  %v76 = vld [vmem:[%s1 + $0x74] sm:$0xf]
  %v77 = vld [vmem:[%s1 + $0x78] sm:$0xf]
  %v78 = vld [vmem:[%s1 + $0x7c] sm:$0xf]
  %v79 = vld [vmem:[%s1 + $0x80] sm:$0xf]
  %v80 = vld [vmem:[%s1 + $0x84] sm:$0xf]
  %v81 = vld [vmem:[%s1 + $0x88] sm:$0xf]
  %v82 = vld [vmem:[%s1 + $0x8c] sm:$0xf]
  %v83 = vld [vmem:[%s2] sm:$0x1]
  %v85 = vlaneseq
  %v86 = vshrl.u32 %v85, 7
  %v87 = vsub.s32 0, %v86
  %v88 = vrot.slane %v83, %v87
  %v122 = vunpack.c.l.b16 %v15
  %v123 = vunpack.c.h.b16 %v15
  %v124 = vunpack.c.l.b16 %v16
  %v125 = vunpack.c.l.b16 %v17
  %v126 = vunpack.c.h.b16 %v17
  %v127 = vunpack.c.l.b16 %v18
  %v128 = vunpack.c.l.b16 %v19
  %v129 = vunpack.c.h.b16 %v19
  %v130 = vunpack.c.l.b16 %v20
  %v131 = vunpack.c.l.b16 %v21
  %v132 = vunpack.c.h.b16 %v21
  %v133 = vunpack.c.l.b16 %v22
  %v134 = vunpack.c.l.b16 %v23
  %v135 = vunpack.c.h.b16 %v23
  %v136 = vunpack.c.l.b16 %v24
  %v137 = vunpack.c.l.b16 %v25
  %v138 = vunpack.c.h.b16 %v25
  %v139 = vunpack.c.l.b16 %v26
  %v140 = vunpack.c.l.b16 %v27
  %v141 = vunpack.c.h.b16 %v27
  %v142 = vunpack.c.l.b16 %v28
  %v143 = vunpack.c.l.b16 %v29
  %v144 = vunpack.c.h.b16 %v29
  %v145 = vunpack.c.l.b16 %v30
  %v146 = vunpack.c.l.b16 %v31
  %v147 = vunpack.c.h.b16 %v31
  %v148 = vunpack.c.l.b16 %v32
  %v149 = vunpack.c.l.b16 %v33
  %v150 = vunpack.c.h.b16 %v33
  %v151 = vunpack.c.l.b16 %v34
  %v152 = vunpack.c.l.b16 %v35
  %v153 = vunpack.c.h.b16 %v35
  %v154 = vunpack.c.l.b16 %v36
  %v155 = vunpack.c.l.b16 %v37
  %v156 = vunpack.c.h.b16 %v37
  %v157 = vunpack.c.l.b16 %v38
  %v158 = vunpack.c.l.b16 %v39
  %v159 = vunpack.c.h.b16 %v39
  %v160 = vunpack.c.l.b16 %v40
  %v161 = vunpack.c.l.b16 %v41
  %v162 = vunpack.c.h.b16 %v41
  %v163 = vunpack.c.l.b16 %v42
  %v164 = vunpack.c.l.b16 %v43
  %v165 = vunpack.c.h.b16 %v43
  %v166 = vunpack.c.l.b16 %v44
  %v167 = vunpack.c.l.b16 %v45
  %v168 = vunpack.c.h.b16 %v45
  %v169 = vunpack.c.l.b16 %v46
  %v170 = vpack.c.b16 %v125, %v122
  %v171 = vpack.c.b16 %v126, %v123
  %v172 = vpack.c.b16 %v127, %v124
  %v173 = vpack.c.b16 %v131, %v128
  %v174 = vpack.c.b16 %v132, %v129
  %v175 = vpack.c.b16 %v133, %v130
  %v176 = vpack.c.b16 %v137, %v134
  %v177 = vpack.c.b16 %v138, %v135
  %v178 = vpack.c.b16 %v139, %v136
  %v179 = vpack.c.b16 %v143, %v140
  %v180 = vpack.c.b16 %v144, %v141
  %v181 = vpack.c.b16 %v145, %v142
  %v182 = vpack.c.b16 %v149, %v146
  %v183 = vpack.c.b16 %v150, %v147
  %v184 = vpack.c.b16 %v151, %v148
  %v185 = vpack.c.b16 %v155, %v152
  %v186 = vpack.c.b16 %v156, %v153
  %v187 = vpack.c.b16 %v157, %v154
  %v188 = vpack.c.b16 %v161, %v158
  %v189 = vpack.c.b16 %v162, %v159
  %v190 = vpack.c.b16 %v163, %v160
  %v191 = vpack.c.b16 %v167, %v164
  %v192 = vpack.c.b16 %v168, %v165
  %v193 = vpack.c.b16 %v169, %v166
  %v246 = vunpack.c.l.b16 %v47
  %v247 = vunpack.c.l.b16 %v48
  %v248 = vunpack.c.l.b16 %v49
  %v249 = vunpack.c.l.b16 %v50
  %v250 = vunpack.c.l.b16 %v51
  %v251 = vunpack.c.l.b16 %v52
  %v252 = vunpack.c.l.b16 %v53
  %v253 = vunpack.c.l.b16 %v54
  %v254 = vunpack.c.l.b16 %v55
  %v255 = vunpack.c.l.b16 %v56
  %v256 = vunpack.c.l.b16 %v57
  %v257 = vunpack.c.l.b16 %v58
  %v258 = vunpack.c.l.b16 %v59
  %v259 = vunpack.c.l.b16 %v60
  %v260 = vunpack.c.l.b16 %v61
  %v261 = vunpack.c.l.b16 %v62
  %v262 = vunpack.c.l.b16 %v63
  %v263 = vunpack.c.l.b16 %v64
  %v264 = vunpack.c.l.b16 %v65
  %v265 = vunpack.c.l.b16 %v66
  %v266 = vunpack.c.l.b16 %v67
  %v267 = vunpack.c.l.b16 %v68
  %v268 = vunpack.c.l.b16 %v69
  %v269 = vunpack.c.l.b16 %v70
  %v270 = vunpack.c.l.b16 %v71
  %v271 = vunpack.c.l.b16 %v72
  %v272 = vunpack.c.l.b16 %v73
  %v273 = vunpack.c.l.b16 %v74
  %v274 = vunpack.c.l.b16 %v75
  %v275 = vunpack.c.l.b16 %v76
  %v276 = vunpack.c.l.b16 %v77
  %v277 = vunpack.c.l.b16 %v78
  %v278 = vunpack.c.l.b16 %v79
  %v279 = vunpack.c.l.b16 %v80
  %v280 = vunpack.c.l.b16 %v81
  %v281 = vunpack.c.l.b16 %v82
  %v282 = vpack.c.b16 %v247, %v246
  %v283 = vpack.c.b16 %v249, %v248
  %v284 = vpack.c.b16 %v251, %v250
  %v285 = vpack.c.b16 %v253, %v252
  %v286 = vpack.c.b16 %v255, %v254
  %v287 = vpack.c.b16 %v257, %v256
  %v288 = vpack.c.b16 %v259, %v258
  %v289 = vpack.c.b16 %v261, %v260
  %v290 = vpack.c.b16 %v263, %v262
  %v291 = vpack.c.b16 %v265, %v264
  %v292 = vpack.c.b16 %v267, %v266
  %v293 = vpack.c.b16 %v269, %v268
  %v294 = vpack.c.b16 %v271, %v270
  %v295 = vpack.c.b16 %v273, %v272
  %v296 = vpack.c.b16 %v275, %v274
  %v297 = vpack.c.b16 %v277, %v276
  %v298 = vpack.c.b16 %v279, %v278
  %v299 = vpack.c.b16 %v281, %v280
  %vm318 = vcmask 261120
  %v320 = vsel %vm318, %v172, 0
  %v323 = vsel %vm318, %v175, 0
  %v326 = vsel %vm318, %v178, 0
  %v329 = vsel %vm318, %v181, 0
  %v332 = vsel %vm318, %v184, 0
  %v335 = vsel %vm318, %v187, 0
  %v338 = vsel %vm318, %v190, 0
  %v341 = vsel %vm318, %v193, 0
  %343 = vmatprep.subr.bf16.mxu0 0
  %344 = vmatpush1.bf16.msra.mxu0 %v282
  %345 = vmatprep.subr.bf16.mxu0 0
  %346 = vmatpush1.bf16.msra.mxu0 %v283
  %347 = vmatprep.subr.bf16.mxu0 0
  %348 = vmatpush1.bf16.msra.mxu0 %v284
  %349 = vmatprep.subr.bf16.mxu0 0
  %350 = vmatpush1.bf16.msra.mxu0 %v285
  %351 = vmatprep.subr.bf16.mxu0 0
  %352 = vmatpush1.bf16.msra.mxu0 %v286
  %353 = vmatprep.subr.bf16.mxu0 0
  %354 = vmatpush1.bf16.msra.mxu0 %v287
  %355 = vmatprep.subr.bf16.mxu0 0
  %356 = vmatpush1.bf16.msra.mxu0 %v288
  %357 = vmatprep.subr.bf16.mxu0 0
  %358 = vmatpush1.bf16.msra.mxu0 %v289
  %359 = vmatprep.subr.bf16.mxu0 0
  %360 = vmatpush1.bf16.msra.mxu0 %v290
  %361 = vmatprep.subr.bf16.mxu0 0
  %362 = vmatpush1.bf16.msra.mxu0 %v291
  %363 = vmatprep.subr.bf16.mxu0 0
  %364 = vmatpush1.bf16.msra.mxu0 %v292
  %365 = vmatprep.subr.bf16.mxu0 0
  %366 = vmatpush1.bf16.msra.mxu0 %v293
  %367 = vmatprep.subr.bf16.mxu0 0
  %368 = vmatpush1.bf16.msra.mxu0 %v294
  %369 = vmatprep.subr.bf16.mxu0 0
  %370 = vmatpush1.bf16.msra.mxu0 %v295
  %371 = vmatprep.subr.bf16.mxu0 0
  %372 = vmatpush1.bf16.msra.mxu0 %v296
  %373 = vmatprep.subr.bf16.mxu0 0
  %374 = vmatpush1.bf16.msra.mxu0 %v297
  %375 = vmatprep.mubr.bf16.mxu0 %v171
  %376 = vmatmul.mubr.bf16.gmra.mrb[0].mxu0 %v170
  %v377 = vpop.f32.mrb[0].mxu0
  %v378 = vadd.f32 %v88, %v377
  %v379 = vpop.f32.mrb[0].mxu0
  %v380 = vpop.f32.mrb[0].mxu0
  %v381 = vadd.f32 %v88, %v380
  %v382 = vpop.f32.mrb[0].mxu0
  %383 = vmatprep.mubr.bf16.mxu0 %v174
  %384 = vmatmul.mubr.bf16.gmra.mrb[0].mxu0 %v173
  %v385 = vpop.f32.mrb[0].mxu0
  %v386 = vadd.f32 %v88, %v385
  %v387 = vpop.f32.mrb[0].mxu0
  %v388 = vpop.f32.mrb[0].mxu0
  %v389 = vadd.f32 %v88, %v388
  %v390 = vpop.f32.mrb[0].mxu0
  %391 = vmatprep.mubr.bf16.mxu0 %v177
  %392 = vmatmul.mubr.bf16.gmra.mrb[0].mxu0 %v176
  %v393 = vpop.f32.mrb[0].mxu0
  %v394 = vadd.f32 %v88, %v393
  %v395 = vpop.f32.mrb[0].mxu0
  %v396 = vpop.f32.mrb[0].mxu0
  %v397 = vadd.f32 %v88, %v396
  %v398 = vpop.f32.mrb[0].mxu0
  %399 = vmatprep.mubr.bf16.mxu0 %v180
  %400 = vmatmul.mubr.bf16.gmra.mrb[0].mxu0 %v179
  %v401 = vpop.f32.mrb[0].mxu0
  %v402 = vadd.f32 %v88, %v401
  %v403 = vpop.f32.mrb[0].mxu0
  %v404 = vpop.f32.mrb[0].mxu0
  %v405 = vadd.f32 %v88, %v404
  %v406 = vpop.f32.mrb[0].mxu0
  %407 = vmatprep.mubr.bf16.mxu0 %v183
  %408 = vmatmul.mubr.bf16.gmra.mrb[0].mxu0 %v182
  %v409 = vpop.f32.mrb[0].mxu0
  %v410 = vadd.f32 %v88, %v409
  %v411 = vpop.f32.mrb[0].mxu0
  %v412 = vpop.f32.mrb[0].mxu0
  %v413 = vadd.f32 %v88, %v412
  %v414 = vpop.f32.mrb[0].mxu0
  %415 = vmatprep.mubr.bf16.mxu0 %v186
  %416 = vmatmul.mubr.bf16.gmra.mrb[0].mxu0 %v185
  %v417 = vpop.f32.mrb[0].mxu0
  %v418 = vadd.f32 %v88, %v417
  %v419 = vpop.f32.mrb[0].mxu0
  %v420 = vpop.f32.mrb[0].mxu0
  %v421 = vadd.f32 %v88, %v420
  %v422 = vpop.f32.mrb[0].mxu0
  %423 = vmatprep.mubr.bf16.mxu0 %v189
  %424 = vmatmul.mubr.bf16.gmra.mrb[0].mxu0 %v188
  %v425 = vpop.f32.mrb[0].mxu0
  %v426 = vadd.f32 %v88, %v425
  %v427 = vpop.f32.mrb[0].mxu0
  %v428 = vpop.f32.mrb[0].mxu0
  %v429 = vadd.f32 %v88, %v428
  %v430 = vpop.f32.mrb[0].mxu0
  %431 = vmatprep.mubr.bf16.mxu0 %v192
  %432 = vmatmul.mubr.bf16.gmra.mrb[0].mxu0 %v191
  %v433 = vpop.f32.mrb[0].mxu0
  %v434 = vadd.f32 %v88, %v433
  %v435 = vpop.f32.mrb[0].mxu0
  %v436 = vpop.f32.mrb[0].mxu0
  %v437 = vadd.f32 %v88, %v436
  %v438 = vpop.f32.mrb[0].mxu0
  %439 = vdwg.mxu0
  %440 = vmatprep.subr.bf16.mxu0 0
  %441 = vmatpush1.bf16.msra.mxu0 %v298
  %442 = vmatprep.subr.bf16.mxu0 0
  %443 = vmatpush1.bf16.msra.mxu0 %v299
  %444 = vmatprep.subr.bf16.mxu0 0
  %445 = vmatpush1.bf16.msra.mxu0 0
  %446 = vmatprep.subr.bf16.mxu0 0
  %447 = vmatpush1.bf16.msra.mxu0 0
  %448 = vmatprep.subr.bf16.mxu0 0
  %449 = vmatpush1.bf16.msra.mxu0 0
  %450 = vmatprep.subr.bf16.mxu0 0
  %451 = vmatpush1.bf16.msra.mxu0 0
  %452 = vmatprep.subr.bf16.mxu0 0
  %453 = vmatpush1.bf16.msra.mxu0 0
  %454 = vmatprep.subr.bf16.mxu0 0
  %455 = vmatpush1.bf16.msra.mxu0 0
  %456 = vmatprep.subr.bf16.mxu0 0
  %457 = vmatpush1.bf16.msra.mxu0 0
  %458 = vmatprep.subr.bf16.mxu0 0
  %459 = vmatpush1.bf16.msra.mxu0 0
  %460 = vmatprep.subr.bf16.mxu0 0
  %461 = vmatpush1.bf16.msra.mxu0 0
  %462 = vmatprep.subr.bf16.mxu0 0
  %463 = vmatpush1.bf16.msra.mxu0 0
  %464 = vmatprep.subr.bf16.mxu0 0
  %465 = vmatpush1.bf16.msra.mxu0 0
  %466 = vmatprep.subr.bf16.mxu0 0
  %467 = vmatpush1.bf16.msra.mxu0 0
  %468 = vmatprep.subr.bf16.mxu0 0
  %469 = vmatpush1.bf16.msra.mxu0 0
  %470 = vmatprep.subr.bf16.mxu0 0
  %471 = vmatpush1.bf16.msra.mxu0 0
  %472 = vmatprep.mubr.bf16.mxu0 0
  %473 = vmatmul.mubr.bf16.gmra.mrb[0].mxu0 %v320
  %v474 = vpop.f32.mrb[0].mxu0
  %v475 = vadd.f32 %v378, %v474
  %v476 = vpop.f32.mrb[0].mxu0
  %v477 = vpop.f32.mrb[0].mxu0
  %v478 = vadd.f32 %v381, %v477
  %v479 = vpop.f32.mrb[0].mxu0
  %480 = vmatprep.mubr.bf16.mxu0 0
  %481 = vmatmul.mubr.bf16.gmra.mrb[0].mxu0 %v323
  %v482 = vpop.f32.mrb[0].mxu0
  %v483 = vadd.f32 %v386, %v482
  %v484 = vpop.f32.mrb[0].mxu0
  %v485 = vpop.f32.mrb[0].mxu0
  %v486 = vadd.f32 %v389, %v485
  %v487 = vpop.f32.mrb[0].mxu0
  %488 = vmatprep.mubr.bf16.mxu0 0
  %489 = vmatmul.mubr.bf16.gmra.mrb[0].mxu0 %v326
  %v490 = vpop.f32.mrb[0].mxu0
  %v491 = vadd.f32 %v394, %v490
  %v492 = vpop.f32.mrb[0].mxu0
  %v493 = vpop.f32.mrb[0].mxu0
  %v494 = vadd.f32 %v397, %v493
  %v495 = vpop.f32.mrb[0].mxu0
  %496 = vmatprep.mubr.bf16.mxu0 0
  %497 = vmatmul.mubr.bf16.gmra.mrb[0].mxu0 %v329
  %v498 = vpop.f32.mrb[0].mxu0
  %v499 = vadd.f32 %v402, %v498
  %v500 = vpop.f32.mrb[0].mxu0
  %v501 = vpop.f32.mrb[0].mxu0
  %v502 = vadd.f32 %v405, %v501
  %v503 = vpop.f32.mrb[0].mxu0
  %504 = vmatprep.mubr.bf16.mxu0 0
  %505 = vmatmul.mubr.bf16.gmra.mrb[0].mxu0 %v332
  %v506 = vpop.f32.mrb[0].mxu0
  %v507 = vadd.f32 %v410, %v506
  %v508 = vpop.f32.mrb[0].mxu0
  %v509 = vpop.f32.mrb[0].mxu0
  %v510 = vadd.f32 %v413, %v509
  %v511 = vpop.f32.mrb[0].mxu0
  %512 = vmatprep.mubr.bf16.mxu0 0
  %513 = vmatmul.mubr.bf16.gmra.mrb[0].mxu0 %v335
  %v514 = vpop.f32.mrb[0].mxu0
  %v515 = vadd.f32 %v418, %v514
  %v516 = vpop.f32.mrb[0].mxu0
  %v517 = vpop.f32.mrb[0].mxu0
  %v518 = vadd.f32 %v421, %v517
  %v519 = vpop.f32.mrb[0].mxu0
  %520 = vmatprep.mubr.bf16.mxu0 0
  %521 = vmatmul.mubr.bf16.gmra.mrb[0].mxu0 %v338
  %v522 = vpop.f32.mrb[0].mxu0
  %v523 = vadd.f32 %v426, %v522
  %v524 = vpop.f32.mrb[0].mxu0
  %v525 = vpop.f32.mrb[0].mxu0
  %v526 = vadd.f32 %v429, %v525
  %v527 = vpop.f32.mrb[0].mxu0
  %528 = vmatprep.mubr.bf16.mxu0 0
  %529 = vmatmul.mubr.bf16.gmra.mrb[0].mxu0 %v341
  %v530 = vpop.f32.mrb[0].mxu0
  %v531 = vadd.f32 %v434, %v530
  %v532 = vpop.f32.mrb[0].mxu0
  %v533 = vpop.f32.mrb[0].mxu0
  %v534 = vadd.f32 %v437, %v533
  %v535 = vpop.f32.mrb[0].mxu0
  %536 = vdwg.mxu0
  %v537 = vmax.f32 %v475, 0.0
  %v538 = vmax.f32 %v478, 0.0
  %v539 = vmax.f32 %v483, 0.0
  %v540 = vmax.f32 %v486, 0.0
  %v541 = vmax.f32 %v491, 0.0
  %v542 = vmax.f32 %v494, 0.0
  %v543 = vmax.f32 %v499, 0.0
  %v544 = vmax.f32 %v502, 0.0
  %v545 = vmax.f32 %v507, 0.0
  %v546 = vmax.f32 %v510, 0.0
  %v547 = vmax.f32 %v515, 0.0
  %v548 = vmax.f32 %v518, 0.0
  %v549 = vmax.f32 %v523, 0.0
  %v550 = vmax.f32 %v526, 0.0
  %v551 = vmax.f32 %v531, 0.0
  %v552 = vmax.f32 %v534, 0.0
  %v553 = vpack.c.bf16 %v538, %v537
  %v554 = vpack.c.bf16 %v540, %v539
  %v555 = vpack.c.bf16 %v542, %v541
  %v556 = vpack.c.bf16 %v544, %v543
  %v557 = vpack.c.bf16 %v546, %v545
  %v558 = vpack.c.bf16 %v548, %v547
  %v559 = vpack.c.bf16 %v550, %v549
  %v560 = vpack.c.bf16 %v552, %v551
  %v569 = vunpack.c.l.b16 %v553
  %v570 = vunpack.c.h.b16 %v553
  %v571 = vunpack.c.l.b16 %v554
  %v572 = vunpack.c.h.b16 %v554
  %v573 = vunpack.c.l.b16 %v555
  %v574 = vunpack.c.h.b16 %v555
  %v575 = vunpack.c.l.b16 %v556
  %v576 = vunpack.c.h.b16 %v556
  %v577 = vunpack.c.l.b16 %v557
  %v578 = vunpack.c.h.b16 %v557
  %v579 = vunpack.c.l.b16 %v558
  %v580 = vunpack.c.h.b16 %v558
  %v581 = vunpack.c.l.b16 %v559
  %v582 = vunpack.c.h.b16 %v559
  %v583 = vunpack.c.l.b16 %v560
  %v584 = vunpack.c.h.b16 %v560
  %v585 = vpack.c.b16 %v569, %v569
  %v586 = vpack.c.b16 %v570, %v570
  %v587 = vpack.c.b16 %v571, %v571
  %v588 = vpack.c.b16 %v572, %v572
  %v589 = vpack.c.b16 %v573, %v573
  %v590 = vpack.c.b16 %v574, %v574
  %v591 = vpack.c.b16 %v575, %v575
  %v592 = vpack.c.b16 %v576, %v576
  %v593 = vpack.c.b16 %v577, %v577
  %v594 = vpack.c.b16 %v578, %v578
  %v595 = vpack.c.b16 %v579, %v579
  %v596 = vpack.c.b16 %v580, %v580
  %v597 = vpack.c.b16 %v581, %v581
  %v598 = vpack.c.b16 %v582, %v582
  %v599 = vpack.c.b16 %v583, %v583
  %v600 = vpack.c.b16 %v584, %v584
  %vm617 = vcmask 257024
  %618 = vst.msk [vmem:[%s3] sm:$0xf] %vm617, %v585
  %619 = vst.msk [vmem:[%s3 + $0x4] sm:$0xf] %vm617, %v586
  %620 = vst.msk [vmem:[%s3 + $0x8] sm:$0xf] %vm617, %v587
  %621 = vst.msk [vmem:[%s3 + $0xc] sm:$0xf] %vm617, %v588
  %622 = vst.msk [vmem:[%s3 + $0x10] sm:$0xf] %vm617, %v589
  %623 = vst.msk [vmem:[%s3 + $0x14] sm:$0xf] %vm617, %v590
  %624 = vst.msk [vmem:[%s3 + $0x18] sm:$0xf] %vm617, %v591
  %625 = vst.msk [vmem:[%s3 + $0x1c] sm:$0xf] %vm617, %v592
  %626 = vst.msk [vmem:[%s3 + $0x20] sm:$0xf] %vm617, %v593
  %627 = vst.msk [vmem:[%s3 + $0x24] sm:$0xf] %vm617, %v594
  %628 = vst.msk [vmem:[%s3 + $0x28] sm:$0xf] %vm617, %v595
  %629 = vst.msk [vmem:[%s3 + $0x2c] sm:$0xf] %vm617, %v596
  %630 = vst.msk [vmem:[%s3 + $0x30] sm:$0xf] %vm617, %v597
  %631 = vst.msk [vmem:[%s3 + $0x34] sm:$0xf] %vm617, %v598
  %632 = vst.msk [vmem:[%s3 + $0x38] sm:$0xf] %vm617, %v599
  %633 = vst.msk [vmem:[%s3 + $0x3c] sm:$0xf] %vm617, %v600
  // Predicated region
  $region14: #{resnet_forward.28} parent=0 // pred_check
    _
  $region15: #{resnet_forward.28} parent=0 // pred_check_branch
    %635 = sbr.rel (0) target = $region17
  $region16: #{resnet_forward.28} parent=0 // pred_region
    _
  $region17: #{resnet_forward.28} parent=0 // pred_fallthru
    _
  // Predicated region
  $region18: #{resnet_forward.28} parent=0 // pred_check
    _
  $region19: #{resnet_forward.28} parent=0 // pred_check_branch
    %637 = sbr.rel (0) target = $region21
  $region20: #{resnet_forward.28} parent=0 // pred_region
    _
  $region21: #{resnet_forward.28} parent=0 // pred_fallthru
    _

// kernel: resnet_forward.32
$region0: #{resnet_forward.32}
  #allocation0 [shape = 'u32[]', space=smem, size = 0x4, offset = 0x4, fixed_abs, tag = 'smem constant byte address 0x4 - core index']
  #allocation1 [shape = 'u32[144,128]{1,0:T(1,128)}', space=vmem, size = 0x12000, scoped, tag = 'internal scratch']
  %s0 = inlined_call_operand.vmem [shape: bf16[32,288], index: 0, kind: input, shape index: {}]
  %s1 = inlined_call_operand.vmem [shape: bf16[288,128], index: 1, kind: input, shape index: {}]
  %s2 = inlined_call_operand.vmem [shape: f32[1,128], index: 2, kind: input, shape index: {}]
  %s3 = inlined_call_operand.vmem [shape: bf16[32,128], index: 3, kind: output, shape index: {}]
  %s4 = sld [smem:[#allocation0]]
  $region22: #{resnet_forward.32} parent=0
    _
  %s6 = ssub.s32 1, %s4
  %s7 = scalar_select 0, %s6, %s4
  // Predicated region
  $region2: #{resnet_forward.32} parent=0 // pred_check
    _
  $region3: #{resnet_forward.32} parent=0 // pred_check_branch
    %9 = sbr.rel (0) target = $region5
  $region4: #{resnet_forward.32} parent=0 // pred_region
    _
  $region5: #{resnet_forward.32} parent=0 // pred_fallthru
    _
  // Predicated region
  $region6: #{resnet_forward.32} parent=0 // pred_check
    _
  $region7: #{resnet_forward.32} parent=0 // pred_check_branch
    %11 = sbr.rel (0) target = $region9
  $region8: #{resnet_forward.32} parent=0 // pred_region
    _
  $region9: #{resnet_forward.32} parent=0 // pred_fallthru
    _
  // Predicated region
  $region10: #{resnet_forward.32} parent=0 // pred_check
    _
  $region11: #{resnet_forward.32} parent=0 // pred_check_branch
    %13 = sbr.rel (0) target = $region13
  $region12: #{resnet_forward.32} parent=0 // pred_region
    _
  $region13: #{resnet_forward.32} parent=0 // pred_fallthru
    _
  %v15 = vld [vmem:[%s0] sm:$0xff]
  %v16 = vld [vmem:[%s0 + $0x8] sm:$0xf]
  %v17 = vld [vmem:[%s0 + $0xc] sm:$0xff]
  %v18 = vld [vmem:[%s0 + $0x14] sm:$0xf]
  %v19 = vld [vmem:[%s0 + $0x18] sm:$0xff]
  %v20 = vld [vmem:[%s0 + $0x20] sm:$0xf]
  %v21 = vld [vmem:[%s0 + $0x24] sm:$0xff]
  %v22 = vld [vmem:[%s0 + $0x2c] sm:$0xf]
  %v23 = vld [vmem:[%s1] sm:$0xf]
  %v24 = vld [vmem:[%s1 + $0x4] sm:$0xf]
  %v25 = vld [vmem:[%s1 + $0x8] sm:$0xf]
  %v26 = vld [vmem:[%s1 + $0xc] sm:$0xf]
  %v27 = vld [vmem:[%s1 + $0x10] sm:$0xf]
  %v28 = vld [vmem:[%s1 + $0x14] sm:$0xf]
  %v29 = vld [vmem:[%s1 + $0x18] sm:$0xf]
  %v30 = vld [vmem:[%s1 + $0x1c] sm:$0xf]
  %v31 = vld [vmem:[%s1 + $0x20] sm:$0xf]
  %v32 = vld [vmem:[%s1 + $0x24] sm:$0xf]
  %v33 = vld [vmem:[%s1 + $0x28] sm:$0xf]
  %v34 = vld [vmem:[%s1 + $0x2c] sm:$0xf]
  %v35 = vld [vmem:[%s1 + $0x30] sm:$0xf]
  %v36 = vld [vmem:[%s1 + $0x34] sm:$0xf]
  %v37 = vld [vmem:[%s1 + $0x38] sm:$0xf]
  %v38 = vld [vmem:[%s1 + $0x3c] sm:$0xf]
  %v39 = vld [vmem:[%s1 + $0x40] sm:$0xf]
  %v40 = vld [vmem:[%s1 + $0x44] sm:$0xf]
  %v41 = vld [vmem:[%s1 + $0x48] sm:$0xf]
  %v42 = vld [vmem:[%s1 + $0x4c] sm:$0xf]
  %v43 = vld [vmem:[%s1 + $0x50] sm:$0xf]
  %v44 = vld [vmem:[%s1 + $0x54] sm:$0xf]
  %v45 = vld [vmem:[%s1 + $0x58] sm:$0xf]
  %v46 = vld [vmem:[%s1 + $0x5c] sm:$0xf]
  %v47 = vld [vmem:[%s1 + $0x60] sm:$0xf]
  %v48 = vld [vmem:[%s1 + $0x64] sm:$0xf]
  %v49 = vld [vmem:[%s1 + $0x68] sm:$0xf]
  %v50 = vld [vmem:[%s1 + $0x6c] sm:$0xf]
  %v51 = vld [vmem:[%s1 + $0x70] sm:$0xf]
  %v52 = vld [vmem:[%s1 + $0x74] sm:$0xf]
  %v53 = vld [vmem:[%s1 + $0x78] sm:$0xf]
  %v54 = vld [vmem:[%s1 + $0x7c] sm:$0xf]
  %v55 = vld [vmem:[%s1 + $0x80] sm:$0xf]
  %v56 = vld [vmem:[%s1 + $0x84] sm:$0xf]
  %v57 = vld [vmem:[%s1 + $0x88] sm:$0xf]
  %v58 = vld [vmem:[%s1 + $0x8c] sm:$0xf]
  %v59 = vld [vmem:[%s2] sm:$0x1]
  %v61 = vlaneseq
  %v62 = vshrl.u32 %v61, 7
  %v63 = vsub.s32 0, %v62
  %v64 = vrot.slane %v59, %v63
  %v74 = vunpack.c.l.b16 %v15
  %v75 = vunpack.c.h.b16 %v15
  %v76 = vunpack.c.l.b16 %v16
  %v77 = vunpack.c.l.b16 %v17
  %v78 = vunpack.c.h.b16 %v17
  %v79 = vunpack.c.l.b16 %v18
  %v80 = vunpack.c.l.b16 %v19
  %v81 = vunpack.c.h.b16 %v19
  %v82 = vunpack.c.l.b16 %v20
  %v83 = vunpack.c.l.b16 %v21
  %v84 = vunpack.c.h.b16 %v21
  %v85 = vunpack.c.l.b16 %v22
  %v86 = vpack.c.b16 %v77, %v74
  %v87 = vpack.c.b16 %v78, %v75
  %v88 = vpack.c.b16 %v79, %v76
  %v89 = vpack.c.b16 %v83, %v80
  %v90 = vpack.c.b16 %v84, %v81
  %v91 = vpack.c.b16 %v85, %v82
  %v132 = vunpack.c.l.b16 %v23
  %v133 = vunpack.c.l.b16 %v24
  %v134 = vunpack.c.l.b16 %v25
  %v135 = vunpack.c.l.b16 %v26
  %v136 = vunpack.c.l.b16 %v27
  %v137 = vunpack.c.l.b16 %v28
  %v138 = vunpack.c.l.b16 %v29
  %v139 = vunpack.c.l.b16 %v30
  %v140 = vunpack.c.l.b16 %v31
  %v141 = vunpack.c.l.b16 %v32
  %v142 = vunpack.c.l.b16 %v33
  %v143 = vunpack.c.l.b16 %v34
  %v144 = vunpack.c.l.b16 %v35
  %v145 = vunpack.c.l.b16 %v36
  %v146 = vunpack.c.l.b16 %v37
  %v147 = vunpack.c.l.b16 %v38
  %v148 = vunpack.c.l.b16 %v39
  %v149 = vunpack.c.l.b16 %v40
  %v150 = vunpack.c.l.b16 %v41
  %v151 = vunpack.c.l.b16 %v42
  %v152 = vunpack.c.l.b16 %v43
  %v153 = vunpack.c.l.b16 %v44
  %v154 = vunpack.c.l.b16 %v45
  %v155 = vunpack.c.l.b16 %v46
  %v156 = vunpack.c.l.b16 %v47
  %v157 = vunpack.c.l.b16 %v48
  %v158 = vunpack.c.l.b16 %v49
  %v159 = vunpack.c.l.b16 %v50
  %v160 = vunpack.c.l.b16 %v51
  %v161 = vunpack.c.l.b16 %v52
  %v162 = vunpack.c.l.b16 %v53
  %v163 = vunpack.c.l.b16 %v54
  %v164 = vunpack.c.l.b16 %v55
  %v165 = vunpack.c.l.b16 %v56
  %v166 = vunpack.c.l.b16 %v57
  %v167 = vunpack.c.l.b16 %v58
  %v168 = vpack.c.b16 %v133, %v132
  %v169 = vpack.c.b16 %v135, %v134
  %v170 = vpack.c.b16 %v137, %v136
  %v171 = vpack.c.b16 %v139, %v138
  %v172 = vpack.c.b16 %v141, %v140
  %v173 = vpack.c.b16 %v143, %v142
  %v174 = vpack.c.b16 %v145, %v144
  %v175 = vpack.c.b16 %v147, %v146
  %v176 = vpack.c.b16 %v149, %v148
  %v177 = vpack.c.b16 %v151, %v150
  %v178 = vpack.c.b16 %v153, %v152
  %v179 = vpack.c.b16 %v155, %v154
  %v180 = vpack.c.b16 %v157, %v156
  %v181 = vpack.c.b16 %v159, %v158
  %v182 = vpack.c.b16 %v161, %v160
  %v183 = vpack.c.b16 %v163, %v162
  %v184 = vpack.c.b16 %v165, %v164
  %v185 = vpack.c.b16 %v167, %v166
  %vm204 = vcmask 261120
  %v206 = vsel %vm204, %v88, 0
  %v209 = vsel %vm204, %v91, 0
  %211 = vmatprep.subr.bf16.mxu0 0
  %212 = vmatpush1.bf16.msra.mxu0 %v168
  %213 = vmatprep.subr.bf16.mxu0 0
  %214 = vmatpush1.bf16.msra.mxu0 %v169
  %215 = vmatprep.subr.bf16.mxu0 0
  %216 = vmatpush1.bf16.msra.mxu0 %v170
  %217 = vmatprep.subr.bf16.mxu0 0
  %218 = vmatpush1.bf16.msra.mxu0 %v171
  %219 = vmatprep.subr.bf16.mxu0 0
  %220 = vmatpush1.bf16.msra.mxu0 %v172
  %221 = vmatprep.subr.bf16.mxu0 0
  %222 = vmatpush1.bf16.msra.mxu0 %v173
  %223 = vmatprep.subr.bf16.mxu0 0
  %224 = vmatpush1.bf16.msra.mxu0 %v174
  %225 = vmatprep.subr.bf16.mxu0 0
  %226 = vmatpush1.bf16.msra.mxu0 %v175
  %227 = vmatprep.subr.bf16.mxu0 0
  %228 = vmatpush1.bf16.msra.mxu0 %v176
  %229 = vmatprep.subr.bf16.mxu0 0
  %230 = vmatpush1.bf16.msra.mxu0 %v177
  %231 = vmatprep.subr.bf16.mxu0 0
  %232 = vmatpush1.bf16.msra.mxu0 %v178
  %233 = vmatprep.subr.bf16.mxu0 0
  %234 = vmatpush1.bf16.msra.mxu0 %v179
  %235 = vmatprep.subr.bf16.mxu0 0
  %236 = vmatpush1.bf16.msra.mxu0 %v180
  %237 = vmatprep.subr.bf16.mxu0 0
  %238 = vmatpush1.bf16.msra.mxu0 %v181
  %239 = vmatprep.subr.bf16.mxu0 0
  %240 = vmatpush1.bf16.msra.mxu0 %v182
  %241 = vmatprep.subr.bf16.mxu0 0
  %242 = vmatpush1.bf16.msra.mxu0 %v183
  %243 = vmatprep.mubr.bf16.mxu0 %v87
  %244 = vmatmul.mubr.bf16.gmra.mrb[0].mxu0 %v86
  %v245 = vpop.f32.mrb[0].mxu0
  %v246 = vadd.f32 %v64, %v245
  %v247 = vpop.f32.mrb[0].mxu0
  %v248 = vpop.f32.mrb[0].mxu0
  %v249 = vadd.f32 %v64, %v248
  %v250 = vpop.f32.mrb[0].mxu0
  %251 = vmatprep.mubr.bf16.mxu0 %v90
  %252 = vmatmul.mubr.bf16.gmra.mrb[0].mxu0 %v89
  %v253 = vpop.f32.mrb[0].mxu0
  %v254 = vadd.f32 %v64, %v253
  %v255 = vpop.f32.mrb[0].mxu0
  %v256 = vpop.f32.mrb[0].mxu0
  %v257 = vadd.f32 %v64, %v256
  %v258 = vpop.f32.mrb[0].mxu0
  %259 = vdwg.mxu0
  %260 = vmatprep.subr.bf16.mxu0 0
  %261 = vmatpush1.bf16.msra.mxu0 %v184
  %262 = vmatprep.subr.bf16.mxu0 0
  %263 = vmatpush1.bf16.msra.mxu0 %v185
  %264 = vmatprep.subr.bf16.mxu0 0
  %265 = vmatpush1.bf16.msra.mxu0 0
  %266 = vmatprep.subr.bf16.mxu0 0
  %267 = vmatpush1.bf16.msra.mxu0 0
  %268 = vmatprep.subr.bf16.mxu0 0
  %269 = vmatpush1.bf16.msra.mxu0 0
  %270 = vmatprep.subr.bf16.mxu0 0
  %271 = vmatpush1.bf16.msra.mxu0 0
  %272 = vmatprep.subr.bf16.mxu0 0
  %273 = vmatpush1.bf16.msra.mxu0 0
  %274 = vmatprep.subr.bf16.mxu0 0
  %275 = vmatpush1.bf16.msra.mxu0 0
  %276 = vmatprep.subr.bf16.mxu0 0
  %277 = vmatpush1.bf16.msra.mxu0 0
  %278 = vmatprep.subr.bf16.mxu0 0
  %279 = vmatpush1.bf16.msra.mxu0 0
  %280 = vmatprep.subr.bf16.mxu0 0
  %281 = vmatpush1.bf16.msra.mxu0 0
  %282 = vmatprep.subr.bf16.mxu0 0
  %283 = vmatpush1.bf16.msra.mxu0 0
  %284 = vmatprep.subr.bf16.mxu0 0
  %285 = vmatpush1.bf16.msra.mxu0 0
  %286 = vmatprep.subr.bf16.mxu0 0
  %287 = vmatpush1.bf16.msra.mxu0 0
  %288 = vmatprep.subr.bf16.mxu0 0
  %289 = vmatpush1.bf16.msra.mxu0 0
  %290 = vmatprep.subr.bf16.mxu0 0
  %291 = vmatpush1.bf16.msra.mxu0 0
  %292 = vmatprep.mubr.bf16.mxu0 0
  %293 = vmatmul.mubr.bf16.gmra.mrb[0].mxu0 %v206
  %v294 = vpop.f32.mrb[0].mxu0
  %v295 = vadd.f32 %v246, %v294
  %v296 = vpop.f32.mrb[0].mxu0
  %v297 = vpop.f32.mrb[0].mxu0
  %v298 = vadd.f32 %v249, %v297
  %v299 = vpop.f32.mrb[0].mxu0
  %300 = vmatprep.mubr.bf16.mxu0 0
  %301 = vmatmul.mubr.bf16.gmra.mrb[0].mxu0 %v209
  %v302 = vpop.f32.mrb[0].mxu0
  %v303 = vadd.f32 %v254, %v302
  %v304 = vpop.f32.mrb[0].mxu0
  %v305 = vpop.f32.mrb[0].mxu0
  %v306 = vadd.f32 %v257, %v305
  %v307 = vpop.f32.mrb[0].mxu0
  %308 = vdwg.mxu0
  %v309 = vlaneseq
  %v310 = vand.u32 %v309, 127
  %vm311 = vcmp.lt.s32.totalorder %v310, 64
  %v312 = vmax.f32 %v295, 0.0
  %v313 = vmax.f32 %v298, 0.0
  %v314 = vmax.f32 %v303, 0.0
  %v315 = vmax.f32 %v306, 0.0
  %v316 = vsel %vm311, %v312, %v295
  %v317 = vsel %vm311, %v313, %v298
  %v318 = vsel %vm311, %v314, %v303
  %v319 = vsel %vm311, %v315, %v306
  %v320 = vpack.c.bf16 %v317, %v316
  %v321 = vpack.c.bf16 %v319, %v318
  %v324 = vunpack.c.l.b16 %v320
  %v325 = vunpack.c.h.b16 %v320
  %v326 = vunpack.c.l.b16 %v321
  %v327 = vunpack.c.h.b16 %v321
  %v328 = vpack.c.b16 %v324, %v324
  %v329 = vpack.c.b16 %v325, %v325
  %v330 = vpack.c.b16 %v326, %v326
  %v331 = vpack.c.b16 %v327, %v327
  %336 = vst [vmem:[%s3] sm:$0xf] %v328
  %337 = vst [vmem:[%s3 + $0x4] sm:$0xf] %v329
  %338 = vst [vmem:[%s3 + $0x8] sm:$0xf] %v330
  %339 = vst [vmem:[%s3 + $0xc] sm:$0xf] %v331
  // Predicated region
  $region14: #{resnet_forward.32} parent=0 // pred_check
    _
  $region15: #{resnet_forward.32} parent=0 // pred_check_branch
    %341 = sbr.rel (0) target = $region17
  $region16: #{resnet_forward.32} parent=0 // pred_region
    _
  $region17: #{resnet_forward.32} parent=0 // pred_fallthru
    _
  // Predicated region
  $region18: #{resnet_forward.32} parent=0 // pred_check
    _
  $region19: #{resnet_forward.32} parent=0 // pred_check_branch
    %343 = sbr.rel (0) target = $region21
  $region20: #{resnet_forward.32} parent=0 // pred_region
    _
  $region21: #{resnet_forward.32} parent=0 // pred_fallthru
    _

// kernel: resnet_forward.34
$region0: #{resnet_forward.34}
  #allocation0 [shape = 'u32[]', space=smem, size = 0x4, offset = 0x4, fixed_abs, tag = 'smem constant byte address 0x4 - core index']
  #allocation1 [shape = 'u32[144,128]{1,0:T(1,128)}', space=vmem, size = 0x12000, scoped, tag = 'internal scratch']
  %s0 = inlined_call_operand.vmem [shape: bf16[32,576], index: 0, kind: input, shape index: {}]
  %s1 = inlined_call_operand.vmem [shape: bf16[576,64], index: 1, kind: input, shape index: {}]
  %s2 = inlined_call_operand.vmem [shape: f32[1,64], index: 2, kind: input, shape index: {}]
  %s3 = inlined_call_operand.vmem [shape: bf16[32,64], index: 3, kind: output, shape index: {}]
  %s4 = sld [smem:[#allocation0]]
  $region22: #{resnet_forward.34} parent=0
    _
  %s6 = ssub.s32 1, %s4
  %s7 = scalar_select 0, %s6, %s4
  // Predicated region
  $region2: #{resnet_forward.34} parent=0 // pred_check
    _
  $region3: #{resnet_forward.34} parent=0 // pred_check_branch
    %9 = sbr.rel (0) target = $region5
  $region4: #{resnet_forward.34} parent=0 // pred_region
    _
  $region5: #{resnet_forward.34} parent=0 // pred_fallthru
    _
  // Predicated region
  $region6: #{resnet_forward.34} parent=0 // pred_check
    _
  $region7: #{resnet_forward.34} parent=0 // pred_check_branch
    %11 = sbr.rel (0) target = $region9
  $region8: #{resnet_forward.34} parent=0 // pred_region
    _
  $region9: #{resnet_forward.34} parent=0 // pred_fallthru
    _
  // Predicated region
  $region10: #{resnet_forward.34} parent=0 // pred_check
    _
  $region11: #{resnet_forward.34} parent=0 // pred_check_branch
    %13 = sbr.rel (0) target = $region13
  $region12: #{resnet_forward.34} parent=0 // pred_region
    _
  $region13: #{resnet_forward.34} parent=0 // pred_fallthru
    _
  %v15 = vld [vmem:[%s0] sm:$0xff]
  %v16 = vld [vmem:[%s0 + $0x8] sm:$0xff]
  %v17 = vld [vmem:[%s0 + $0x10] sm:$0xf]
  %v18 = vld [vmem:[%s0 + $0x14] sm:$0xff]
  %v19 = vld [vmem:[%s0 + $0x1c] sm:$0xff]
  %v20 = vld [vmem:[%s0 + $0x24] sm:$0xf]
  %v21 = vld [vmem:[%s0 + $0x28] sm:$0xff]
  %v22 = vld [vmem:[%s0 + $0x30] sm:$0xff]
  %v23 = vld [vmem:[%s0 + $0x38] sm:$0xf]
  %v24 = vld [vmem:[%s0 + $0x3c] sm:$0xff]
  %v25 = vld [vmem:[%s0 + $0x44] sm:$0xff]
  %v26 = vld [vmem:[%s0 + $0x4c] sm:$0xf]
  %v27 = vld [vmem:[%s1] sm:$0xf]
  %v28 = vld [vmem:[%s1 + $0x4] sm:$0xf]
  %v29 = vld [vmem:[%s1 + $0x8] sm:$0xf]
  %v30 = vld [vmem:[%s1 + $0xc] sm:$0xf]
  %v31 = vld [vmem:[%s1 + $0x10] sm:$0xf]
  %v32 = vld [vmem:[%s1 + $0x14] sm:$0xf]
  %v33 = vld [vmem:[%s1 + $0x18] sm:$0xf]
  %v34 = vld [vmem:[%s1 + $0x1c] sm:$0xf]
  %v35 = vld [vmem:[%s1 + $0x20] sm:$0xf]
  %v36 = vld [vmem:[%s1 + $0x24] sm:$0xf]
  %v37 = vld [vmem:[%s1 + $0x28] sm:$0xf]
  %v38 = vld [vmem:[%s1 + $0x2c] sm:$0xf]
  %v39 = vld [vmem:[%s1 + $0x30] sm:$0xf]
  %v40 = vld [vmem:[%s1 + $0x34] sm:$0xf]
  %v41 = vld [vmem:[%s1 + $0x38] sm:$0xf]
  %v42 = vld [vmem:[%s1 + $0x3c] sm:$0xf]
  %v43 = vld [vmem:[%s1 + $0x40] sm:$0xf]
  %v44 = vld [vmem:[%s1 + $0x44] sm:$0xf]
  %v45 = vld [vmem:[%s1 + $0x48] sm:$0xf]
  %v46 = vld [vmem:[%s1 + $0x4c] sm:$0xf]
  %v47 = vld [vmem:[%s1 + $0x50] sm:$0xf]
  %v48 = vld [vmem:[%s1 + $0x54] sm:$0xf]
  %v49 = vld [vmem:[%s1 + $0x58] sm:$0xf]
  %v50 = vld [vmem:[%s1 + $0x5c] sm:$0xf]
  %v51 = vld [vmem:[%s1 + $0x60] sm:$0xf]
  %v52 = vld [vmem:[%s1 + $0x64] sm:$0xf]
  %v53 = vld [vmem:[%s1 + $0x68] sm:$0xf]
  %v54 = vld [vmem:[%s1 + $0x6c] sm:$0xf]
  %v55 = vld [vmem:[%s1 + $0x70] sm:$0xf]
  %v56 = vld [vmem:[%s1 + $0x74] sm:$0xf]
  %v57 = vld [vmem:[%s1 + $0x78] sm:$0xf]
  %v58 = vld [vmem:[%s1 + $0x7c] sm:$0xf]
  %v59 = vld [vmem:[%s1 + $0x80] sm:$0xf]
  %v60 = vld [vmem:[%s1 + $0x84] sm:$0xf]
  %v61 = vld [vmem:[%s1 + $0x88] sm:$0xf]
  %v62 = vld [vmem:[%s1 + $0x8c] sm:$0xf]
  %v63 = vld [vmem:[%s1 + $0x90] sm:$0xf]
  %v64 = vld [vmem:[%s1 + $0x94] sm:$0xf]
  %v65 = vld [vmem:[%s1 + $0x98] sm:$0xf]
  %v66 = vld [vmem:[%s1 + $0x9c] sm:$0xf]
  %v67 = vld [vmem:[%s1 + $0xa0] sm:$0xf]
  %v68 = vld [vmem:[%s1 + $0xa4] sm:$0xf]
  %v69 = vld [vmem:[%s1 + $0xa8] sm:$0xf]
  %v70 = vld [vmem:[%s1 + $0xac] sm:$0xf]
  %v71 = vld [vmem:[%s1 + $0xb0] sm:$0xf]
  %v72 = vld [vmem:[%s1 + $0xb4] sm:$0xf]
  %v73 = vld [vmem:[%s1 + $0xb8] sm:$0xf]
  %v74 = vld [vmem:[%s1 + $0xbc] sm:$0xf]
  %v75 = vld [vmem:[%s1 + $0xc0] sm:$0xf]
  %v76 = vld [vmem:[%s1 + $0xc4] sm:$0xf]
  %v77 = vld [vmem:[%s1 + $0xc8] sm:$0xf]
  %v78 = vld [vmem:[%s1 + $0xcc] sm:$0xf]
  %v79 = vld [vmem:[%s1 + $0xd0] sm:$0xf]
  %v80 = vld [vmem:[%s1 + $0xd4] sm:$0xf]
  %v81 = vld [vmem:[%s1 + $0xd8] sm:$0xf]
  %v82 = vld [vmem:[%s1 + $0xdc] sm:$0xf]
  %v83 = vld [vmem:[%s1 + $0xe0] sm:$0xf]
  %v84 = vld [vmem:[%s1 + $0xe4] sm:$0xf]
  %v85 = vld [vmem:[%s1 + $0xe8] sm:$0xf]
  %v86 = vld [vmem:[%s1 + $0xec] sm:$0xf]
  %v87 = vld [vmem:[%s1 + $0xf0] sm:$0xf]
  %v88 = vld [vmem:[%s1 + $0xf4] sm:$0xf]
  %v89 = vld [vmem:[%s1 + $0xf8] sm:$0xf]
  %v90 = vld [vmem:[%s1 + $0xfc] sm:$0xf]
  %v91 = vld [vmem:[%s1 + $0x100] sm:$0xf]
  %v92 = vld [vmem:[%s1 + $0x104] sm:$0xf]
  %v93 = vld [vmem:[%s1 + $0x108] sm:$0xf]
  %v94 = vld [vmem:[%s1 + $0x10c] sm:$0xf]
  %v95 = vld [vmem:[%s1 + $0x110] sm:$0xf]
  %v96 = vld [vmem:[%s1 + $0x114] sm:$0xf]
  %v97 = vld [vmem:[%s1 + $0x118] sm:$0xf]
  %v98 = vld [vmem:[%s1 + $0x11c] sm:$0xf]
  %v99 = vld [vmem:[%s2] sm:$0x1]
  %v101 = vlaneseq
  %v102 = vshrl.u32 %v101, 7
  %v103 = vsub.s32 0, %v102
  %v104 = vrot.slane %v99, %v103
  %v118 = vunpack.c.l.b16 %v15
  %v119 = vunpack.c.h.b16 %v15
  %v120 = vunpack.c.l.b16 %v16
  %v121 = vunpack.c.h.b16 %v16
  %v122 = vunpack.c.l.b16 %v17
  %v123 = vunpack.c.l.b16 %v18
  %v124 = vunpack.c.h.b16 %v18
  %v125 = vunpack.c.l.b16 %v19
  %v126 = vunpack.c.h.b16 %v19
  %v127 = vunpack.c.l.b16 %v20
  %v128 = vunpack.c.l.b16 %v21
  %v129 = vunpack.c.h.b16 %v21
  %v130 = vunpack.c.l.b16 %v22
  %v131 = vunpack.c.h.b16 %v22
  %v132 = vunpack.c.l.b16 %v23
  %v133 = vunpack.c.l.b16 %v24
  %v134 = vunpack.c.h.b16 %v24
  %v135 = vunpack.c.l.b16 %v25
  %v136 = vunpack.c.h.b16 %v25
  %v137 = vunpack.c.l.b16 %v26
  %v138 = vpack.c.b16 %v123, %v118
  %v139 = vpack.c.b16 %v124, %v119
  %v140 = vpack.c.b16 %v125, %v120
  %v141 = vpack.c.b16 %v126, %v121
  %v142 = vpack.c.b16 %v127, %v122
  %v143 = vpack.c.b16 %v133, %v128
  %v144 = vpack.c.b16 %v134, %v129
  %v145 = vpack.c.b16 %v135, %v130
  %v146 = vpack.c.b16 %v136, %v131
  %v147 = vpack.c.b16 %v137, %v132
  %v228 = vunpack.c.l.b16 %v27
  %v229 = vunpack.c.l.b16 %v28
  %v230 = vunpack.c.l.b16 %v29
  %v231 = vunpack.c.l.b16 %v30
  %v232 = vunpack.c.l.b16 %v31
  %v233 = vunpack.c.l.b16 %v32
  %v234 = vunpack.c.l.b16 %v33
  %v235 = vunpack.c.l.b16 %v34
  %v236 = vunpack.c.l.b16 %v35
  %v237 = vunpack.c.l.b16 %v36
  %v238 = vunpack.c.l.b16 %v37
  %v239 = vunpack.c.l.b16 %v38
  %v240 = vunpack.c.l.b16 %v39
  %v241 = vunpack.c.l.b16 %v40
  %v242 = vunpack.c.l.b16 %v41
  %v243 = vunpack.c.l.b16 %v42
  %v244 = vunpack.c.l.b16 %v43
  %v245 = vunpack.c.l.b16 %v44
  %v246 = vunpack.c.l.b16 %v45
  %v247 = vunpack.c.l.b16 %v46
  %v248 = vunpack.c.l.b16 %v47
  %v249 = vunpack.c.l.b16 %v48
  %v250 = vunpack.c.l.b16 %v49
  %v251 = vunpack.c.l.b16 %v50
  %v252 = vunpack.c.l.b16 %v51
  %v253 = vunpack.c.l.b16 %v52
  %v254 = vunpack.c.l.b16 %v53
  %v255 = vunpack.c.l.b16 %v54
  %v256 = vunpack.c.l.b16 %v55
  %v257 = vunpack.c.l.b16 %v56
  %v258 = vunpack.c.l.b16 %v57
  %v259 = vunpack.c.l.b16 %v58
  %v260 = vunpack.c.l.b16 %v59
  %v261 = vunpack.c.l.b16 %v60
  %v262 = vunpack.c.l.b16 %v61
  %v263 = vunpack.c.l.b16 %v62
  %v264 = vunpack.c.l.b16 %v63
  %v265 = vunpack.c.l.b16 %v64
  %v266 = vunpack.c.l.b16 %v65
  %v267 = vunpack.c.l.b16 %v66
  %v268 = vunpack.c.l.b16 %v67
  %v269 = vunpack.c.l.b16 %v68
  %v270 = vunpack.c.l.b16 %v69
  %v271 = vunpack.c.l.b16 %v70
  %v272 = vunpack.c.l.b16 %v71
  %v273 = vunpack.c.l.b16 %v72
  %v274 = vunpack.c.l.b16 %v73
  %v275 = vunpack.c.l.b16 %v74
  %v276 = vunpack.c.l.b16 %v75
  %v277 = vunpack.c.l.b16 %v76
  %v278 = vunpack.c.l.b16 %v77
  %v279 = vunpack.c.l.b16 %v78
  %v280 = vunpack.c.l.b16 %v79
  %v281 = vunpack.c.l.b16 %v80
  %v282 = vunpack.c.l.b16 %v81
  %v283 = vunpack.c.l.b16 %v82
  %v284 = vunpack.c.l.b16 %v83
  %v285 = vunpack.c.l.b16 %v84
  %v286 = vunpack.c.l.b16 %v85
  %v287 = vunpack.c.l.b16 %v86
  %v288 = vunpack.c.l.b16 %v87
  %v289 = vunpack.c.l.b16 %v88
  %v290 = vunpack.c.l.b16 %v89
  %v291 = vunpack.c.l.b16 %v90
  %v292 = vunpack.c.l.b16 %v91
  %v293 = vunpack.c.l.b16 %v92
  %v294 = vunpack.c.l.b16 %v93
  %v295 = vunpack.c.l.b16 %v94
  %v296 = vunpack.c.l.b16 %v95
  %v297 = vunpack.c.l.b16 %v96
  %v298 = vunpack.c.l.b16 %v97
  %v299 = vunpack.c.l.b16 %v98
  %v300 = vpack.c.b16 %v229, %v228
  %v301 = vpack.c.b16 %v231, %v230
  %v302 = vpack.c.b16 %v233, %v232
  %v303 = vpack.c.b16 %v235, %v234
  %v304 = vpack.c.b16 %v237, %v236
  %v305 = vpack.c.b16 %v239, %v238
  %v306 = vpack.c.b16 %v241, %v240
  %v307 = vpack.c.b16 %v243, %v242
  %v308 = vpack.c.b16 %v245, %v244
  %v309 = vpack.c.b16 %v247, %v246
  %v310 = vpack.c.b16 %v249, %v248
  %v311 = vpack.c.b16 %v251, %v250
  %v312 = vpack.c.b16 %v253, %v252
  %v313 = vpack.c.b16 %v255, %v254
  %v314 = vpack.c.b16 %v257, %v256
  %v315 = vpack.c.b16 %v259, %v258
  %v316 = vpack.c.b16 %v261, %v260
  %v317 = vpack.c.b16 %v263, %v262
  %v318 = vpack.c.b16 %v265, %v264
  %v319 = vpack.c.b16 %v267, %v266
  %v320 = vpack.c.b16 %v269, %v268
  %v321 = vpack.c.b16 %v271, %v270
  %v322 = vpack.c.b16 %v273, %v272
  %v323 = vpack.c.b16 %v275, %v274
  %v324 = vpack.c.b16 %v277, %v276
  %v325 = vpack.c.b16 %v279, %v278
  %v326 = vpack.c.b16 %v281, %v280
  %v327 = vpack.c.b16 %v283, %v282
  %v328 = vpack.c.b16 %v285, %v284
  %v329 = vpack.c.b16 %v287, %v286
  %v330 = vpack.c.b16 %v289, %v288
  %v331 = vpack.c.b16 %v291, %v290
  %v332 = vpack.c.b16 %v293, %v292
  %v333 = vpack.c.b16 %v295, %v294
  %v334 = vpack.c.b16 %v297, %v296
  %v335 = vpack.c.b16 %v299, %v298
  %vm372 = vcmask 523264
  %v374 = vsel %vm372, %v142, 0
  %v377 = vsel %vm372, %v147, 0
  %379 = vmatprep.subr.bf16.mxu0 0
  %380 = vmatpush1.bf16.msra.mxu0 %v300
  %381 = vmatprep.subr.bf16.mxu0 0
  %382 = vmatpush1.bf16.msra.mxu0 %v301
  %383 = vmatprep.subr.bf16.mxu0 0
  %384 = vmatpush1.bf16.msra.mxu0 %v302
  %385 = vmatprep.subr.bf16.mxu0 0
  %386 = vmatpush1.bf16.msra.mxu0 %v303
  %387 = vmatprep.subr.bf16.mxu0 0
  %388 = vmatpush1.bf16.msra.mxu0 %v304
  %389 = vmatprep.subr.bf16.mxu0 0
  %390 = vmatpush1.bf16.msra.mxu0 %v305
  %391 = vmatprep.subr.bf16.mxu0 0
  %392 = vmatpush1.bf16.msra.mxu0 %v306
  %393 = vmatprep.subr.bf16.mxu0 0
  %394 = vmatpush1.bf16.msra.mxu0 %v307
  %395 = vmatprep.subr.bf16.mxu0 0
  %396 = vmatpush1.bf16.msra.mxu0 %v308
  %397 = vmatprep.subr.bf16.mxu0 0
  %398 = vmatpush1.bf16.msra.mxu0 %v309
  %399 = vmatprep.subr.bf16.mxu0 0
  %400 = vmatpush1.bf16.msra.mxu0 %v310
  %401 = vmatprep.subr.bf16.mxu0 0
  %402 = vmatpush1.bf16.msra.mxu0 %v311
  %403 = vmatprep.subr.bf16.mxu0 0
  %404 = vmatpush1.bf16.msra.mxu0 %v312
  %405 = vmatprep.subr.bf16.mxu0 0
  %406 = vmatpush1.bf16.msra.mxu0 %v313
  %407 = vmatprep.subr.bf16.mxu0 0
  %408 = vmatpush1.bf16.msra.mxu0 %v314
  %409 = vmatprep.subr.bf16.mxu0 0
  %410 = vmatpush1.bf16.msra.mxu0 %v315
  %411 = vmatprep.mubr.bf16.mxu0 %v139
  %412 = vmatmul.mubr.bf16.gmra.mrb[0].mxu0 %v138
  %v413 = vpop.f32.mrb[0].mxu0
  %v414 = vadd.f32 %v104, %v413
  %v415 = vpop.f32.mrb[0].mxu0
  %v416 = vpop.f32.mrb[0].mxu0
  %v417 = vadd.f32 %v104, %v416
  %v418 = vpop.f32.mrb[0].mxu0
  %419 = vmatprep.mubr.bf16.mxu0 %v144
  %420 = vmatmul.mubr.bf16.gmra.mrb[0].mxu0 %v143
  %v421 = vpop.f32.mrb[0].mxu0
  %v422 = vadd.f32 %v104, %v421
  %v423 = vpop.f32.mrb[0].mxu0
  %v424 = vpop.f32.mrb[0].mxu0
  %v425 = vadd.f32 %v104, %v424
  %v426 = vpop.f32.mrb[0].mxu0
  %427 = vdwg.mxu0
  %428 = vmatprep.subr.bf16.mxu0 0
  %429 = vmatpush1.bf16.msra.mxu0 %v316
  %430 = vmatprep.subr.bf16.mxu0 0
  %431 = vmatpush1.bf16.msra.mxu0 %v317
  %432 = vmatprep.subr.bf16.mxu0 0
  %433 = vmatpush1.bf16.msra.mxu0 %v318
  %434 = vmatprep.subr.bf16.mxu0 0
  %435 = vmatpush1.bf16.msra.mxu0 %v319
  %436 = vmatprep.subr.bf16.mxu0 0
  %437 = vmatpush1.bf16.msra.mxu0 %v320
  %438 = vmatprep.subr.bf16.mxu0 0
  %439 = vmatpush1.bf16.msra.mxu0 %v321
  %440 = vmatprep.subr.bf16.mxu0 0
  %441 = vmatpush1.bf16.msra.mxu0 %v322
  %442 = vmatprep.subr.bf16.mxu0 0
  %443 = vmatpush1.bf16.msra.mxu0 %v323
  %444 = vmatprep.subr.bf16.mxu0 0
  %445 = vmatpush1.bf16.msra.mxu0 %v324
  %446 = vmatprep.subr.bf16.mxu0 0
  %447 = vmatpush1.bf16.msra.mxu0 %v325
  %448 = vmatprep.subr.bf16.mxu0 0
  %449 = vmatpush1.bf16.msra.mxu0 %v326
  %450 = vmatprep.subr.bf16.mxu0 0
  %451 = vmatpush1.bf16.msra.mxu0 %v327
  %452 = vmatprep.subr.bf16.mxu0 0
  %453 = vmatpush1.bf16.msra.mxu0 %v328
  %454 = vmatprep.subr.bf16.mxu0 0
  %455 = vmatpush1.bf16.msra.mxu0 %v329
  %456 = vmatprep.subr.bf16.mxu0 0
  %457 = vmatpush1.bf16.msra.mxu0 %v330
  %458 = vmatprep.subr.bf16.mxu0 0
  %459 = vmatpush1.bf16.msra.mxu0 %v331
  %460 = vmatprep.mubr.bf16.mxu0 %v141
  %461 = vmatmul.mubr.bf16.gmra.mrb[0].mxu0 %v140
  %v462 = vpop.f32.mrb[0].mxu0
  %v463 = vadd.f32 %v414, %v462
  %v464 = vpop.f32.mrb[0].mxu0
  %v465 = vpop.f32.mrb[0].mxu0
  %v466 = vadd.f32 %v417, %v465
  %v467 = vpop.f32.mrb[0].mxu0
  %468 = vmatprep.mubr.bf16.mxu0 %v146
  %469 = vmatmul.mubr.bf16.gmra.mrb[0].mxu0 %v145
  %v470 = vpop.f32.mrb[0].mxu0
  %v471 = vadd.f32 %v422, %v470
  %v472 = vpop.f32.mrb[0].mxu0
  %v473 = vpop.f32.mrb[0].mxu0
  %v474 = vadd.f32 %v425, %v473
  %v475 = vpop.f32.mrb[0].mxu0
  %476 = vdwg.mxu0
  %477 = vmatprep.subr.bf16.mxu0 0
  %478 = vmatpush1.bf16.msra.mxu0 %v332
  %479 = vmatprep.subr.bf16.mxu0 0
  %480 = vmatpush1.bf16.msra.mxu0 %v333
  %481 = vmatprep.subr.bf16.mxu0 0
  %482 = vmatpush1.bf16.msra.mxu0 %v334
  %483 = vmatprep.subr.bf16.mxu0 0
  %484 = vmatpush1.bf16.msra.mxu0 %v335
  %485 = vmatprep.subr.bf16.mxu0 0
  %486 = vmatpush1.bf16.msra.mxu0 0
  %487 = vmatprep.subr.bf16.mxu0 0
  %488 = vmatpush1.bf16.msra.mxu0 0
  %489 = vmatprep.subr.bf16.mxu0 0
  %490 = vmatpush1.bf16.msra.mxu0 0
  %491 = vmatprep.subr.bf16.mxu0 0
  %492 = vmatpush1.bf16.msra.mxu0 0
  %493 = vmatprep.subr.bf16.mxu0 0
  %494 = vmatpush1.bf16.msra.mxu0 0
  %495 = vmatprep.subr.bf16.mxu0 0
  %496 = vmatpush1.bf16.msra.mxu0 0
  %497 = vmatprep.subr.bf16.mxu0 0
  %498 = vmatpush1.bf16.msra.mxu0 0
  %499 = vmatprep.subr.bf16.mxu0 0
  %500 = vmatpush1.bf16.msra.mxu0 0
  %501 = vmatprep.subr.bf16.mxu0 0
  %502 = vmatpush1.bf16.msra.mxu0 0
  %503 = vmatprep.subr.bf16.mxu0 0
  %504 = vmatpush1.bf16.msra.mxu0 0
  %505 = vmatprep.subr.bf16.mxu0 0
  %506 = vmatpush1.bf16.msra.mxu0 0
  %507 = vmatprep.subr.bf16.mxu0 0
  %508 = vmatpush1.bf16.msra.mxu0 0
  %509 = vmatprep.mubr.bf16.mxu0 0
  %510 = vmatmul.mubr.bf16.gmra.mrb[0].mxu0 %v374
  %v511 = vpop.f32.mrb[0].mxu0
  %v512 = vadd.f32 %v463, %v511
  %v513 = vpop.f32.mrb[0].mxu0
  %v514 = vpop.f32.mrb[0].mxu0
  %v515 = vadd.f32 %v466, %v514
  %v516 = vpop.f32.mrb[0].mxu0
  %517 = vmatprep.mubr.bf16.mxu0 0
  %518 = vmatmul.mubr.bf16.gmra.mrb[0].mxu0 %v377
  %v519 = vpop.f32.mrb[0].mxu0
  %v520 = vadd.f32 %v471, %v519
  %v521 = vpop.f32.mrb[0].mxu0
  %v522 = vpop.f32.mrb[0].mxu0
  %v523 = vadd.f32 %v474, %v522
  %v524 = vpop.f32.mrb[0].mxu0
  %525 = vdwg.mxu0
  %v526 = vmax.f32 %v512, 0.0
  %v527 = vmax.f32 %v515, 0.0
  %v528 = vmax.f32 %v520, 0.0
  %v529 = vmax.f32 %v523, 0.0
  %v530 = vpack.c.bf16 %v527, %v526
  %v531 = vpack.c.bf16 %v529, %v528
  %v534 = vunpack.c.l.b16 %v530
  %v535 = vunpack.c.h.b16 %v530
  %v536 = vunpack.c.l.b16 %v531
  %v537 = vunpack.c.h.b16 %v531
  %v538 = vpack.c.b16 %v534, %v534
  %v539 = vpack.c.b16 %v535, %v535
  %v540 = vpack.c.b16 %v536, %v536
  %v541 = vpack.c.b16 %v537, %v537
  %vm546 = vcmask 519168
  %547 = vst.msk [vmem:[%s3] sm:$0xf] %vm546, %v538
  %548 = vst.msk [vmem:[%s3 + $0x4] sm:$0xf] %vm546, %v539
  %549 = vst.msk [vmem:[%s3 + $0x8] sm:$0xf] %vm546, %v540
  %550 = vst.msk [vmem:[%s3 + $0xc] sm:$0xf] %vm546, %v541
  // Predicated region
  $region14: #{resnet_forward.34} parent=0 // pred_check
    _
  $region15: #{resnet_forward.34} parent=0 // pred_check_branch
    %552 = sbr.rel (0) target = $region17
  $region16: #{resnet_forward.34} parent=0 // pred_region
    _
  $region17: #{resnet_forward.34} parent=0 // pred_fallthru
    _
  // Predicated region
  $region18: #{resnet_forward.34} parent=0 // pred_check
    _
  $region19: #{resnet_forward.34} parent=0 // pred_check_branch
    %554 = sbr.rel (0) target = $region21
  $region20: #{resnet_forward.34} parent=0 // pred_region
    _
  $region21: #{resnet_forward.34} parent=0 // pred_fallthru
    _

// kernel: resnet_forward.33
$region0: #{resnet_forward.33}
  #allocation0 [shape = 'u32[]', space=smem, size = 0x4, offset = 0x4, fixed_abs, tag = 'smem constant byte address 0x4 - core index']
  #allocation1 [shape = 'u32[144,128]{1,0:T(1,128)}', space=vmem, size = 0x12000, scoped, tag = 'internal scratch']
  %s0 = inlined_call_operand.vmem [shape: bf16[32,576], index: 0, kind: input, shape index: {}]
  %s1 = inlined_call_operand.vmem [shape: bf16[576,64], index: 1, kind: input, shape index: {}]
  %s2 = inlined_call_operand.vmem [shape: f32[1,64], index: 2, kind: input, shape index: {}]
  %s3 = inlined_call_operand.vmem [shape: bf16[32,64], index: 3, kind: input, shape index: {}]
  %s4 = inlined_call_operand.vmem [shape: bf16[32,64], index: 4, kind: output, shape index: {}]
  %s5 = sld [smem:[#allocation0]]
  $region26: #{resnet_forward.33} parent=0
    _
  %s7 = ssub.s32 1, %s5
  %s8 = scalar_select 0, %s7, %s5
  // Predicated region
  $region2: #{resnet_forward.33} parent=0 // pred_check
    _
  $region3: #{resnet_forward.33} parent=0 // pred_check_branch
    %10 = sbr.rel (0) target = $region5
  $region4: #{resnet_forward.33} parent=0 // pred_region
    _
  $region5: #{resnet_forward.33} parent=0 // pred_fallthru
    _
  // Predicated region
  $region6: #{resnet_forward.33} parent=0 // pred_check
    _
  $region7: #{resnet_forward.33} parent=0 // pred_check_branch
    %12 = sbr.rel (0) target = $region9
  $region8: #{resnet_forward.33} parent=0 // pred_region
    _
  $region9: #{resnet_forward.33} parent=0 // pred_fallthru
    _
  // Predicated region
  $region10: #{resnet_forward.33} parent=0 // pred_check
    _
  $region11: #{resnet_forward.33} parent=0 // pred_check_branch
    %14 = sbr.rel (0) target = $region13
  $region12: #{resnet_forward.33} parent=0 // pred_region
    _
  $region13: #{resnet_forward.33} parent=0 // pred_fallthru
    _
  // Predicated region
  $region14: #{resnet_forward.33} parent=0 // pred_check
    _
  $region15: #{resnet_forward.33} parent=0 // pred_check_branch
    %16 = sbr.rel (0) target = $region17
  $region16: #{resnet_forward.33} parent=0 // pred_region
    _
  $region17: #{resnet_forward.33} parent=0 // pred_fallthru
    _
  %v18 = vld [vmem:[%s0] sm:$0xff]
  %v19 = vld [vmem:[%s0 + $0x8] sm:$0xff]
  %v20 = vld [vmem:[%s0 + $0x10] sm:$0xf]
  %v21 = vld [vmem:[%s0 + $0x14] sm:$0xff]
  %v22 = vld [vmem:[%s0 + $0x1c] sm:$0xff]
  %v23 = vld [vmem:[%s0 + $0x24] sm:$0xf]
  %v24 = vld [vmem:[%s0 + $0x28] sm:$0xff]
  %v25 = vld [vmem:[%s0 + $0x30] sm:$0xff]
  %v26 = vld [vmem:[%s0 + $0x38] sm:$0xf]
  %v27 = vld [vmem:[%s0 + $0x3c] sm:$0xff]
  %v28 = vld [vmem:[%s0 + $0x44] sm:$0xff]
  %v29 = vld [vmem:[%s0 + $0x4c] sm:$0xf]
  %v30 = vld [vmem:[%s1] sm:$0xf]
  %v31 = vld [vmem:[%s1 + $0x4] sm:$0xf]
  %v32 = vld [vmem:[%s1 + $0x8] sm:$0xf]
  %v33 = vld [vmem:[%s1 + $0xc] sm:$0xf]
  %v34 = vld [vmem:[%s1 + $0x10] sm:$0xf]
  %v35 = vld [vmem:[%s1 + $0x14] sm:$0xf]
  %v36 = vld [vmem:[%s1 + $0x18] sm:$0xf]
  %v37 = vld [vmem:[%s1 + $0x1c] sm:$0xf]
  %v38 = vld [vmem:[%s1 + $0x20] sm:$0xf]
  %v39 = vld [vmem:[%s1 + $0x24] sm:$0xf]
  %v40 = vld [vmem:[%s1 + $0x28] sm:$0xf]
  %v41 = vld [vmem:[%s1 + $0x2c] sm:$0xf]
  %v42 = vld [vmem:[%s1 + $0x30] sm:$0xf]
  %v43 = vld [vmem:[%s1 + $0x34] sm:$0xf]
  %v44 = vld [vmem:[%s1 + $0x38] sm:$0xf]
  %v45 = vld [vmem:[%s1 + $0x3c] sm:$0xf]
  %v46 = vld [vmem:[%s1 + $0x40] sm:$0xf]
  %v47 = vld [vmem:[%s1 + $0x44] sm:$0xf]
  %v48 = vld [vmem:[%s1 + $0x48] sm:$0xf]
  %v49 = vld [vmem:[%s1 + $0x4c] sm:$0xf]
  %v50 = vld [vmem:[%s1 + $0x50] sm:$0xf]
  %v51 = vld [vmem:[%s1 + $0x54] sm:$0xf]
  %v52 = vld [vmem:[%s1 + $0x58] sm:$0xf]
  %v53 = vld [vmem:[%s1 + $0x5c] sm:$0xf]
  %v54 = vld [vmem:[%s1 + $0x60] sm:$0xf]
  %v55 = vld [vmem:[%s1 + $0x64] sm:$0xf]
  %v56 = vld [vmem:[%s1 + $0x68] sm:$0xf]
  %v57 = vld [vmem:[%s1 + $0x6c] sm:$0xf]
  %v58 = vld [vmem:[%s1 + $0x70] sm:$0xf]
  %v59 = vld [vmem:[%s1 + $0x74] sm:$0xf]
  %v60 = vld [vmem:[%s1 + $0x78] sm:$0xf]
  %v61 = vld [vmem:[%s1 + $0x7c] sm:$0xf]
  %v62 = vld [vmem:[%s1 + $0x80] sm:$0xf]
  %v63 = vld [vmem:[%s1 + $0x84] sm:$0xf]
  %v64 = vld [vmem:[%s1 + $0x88] sm:$0xf]
  %v65 = vld [vmem:[%s1 + $0x8c] sm:$0xf]
  %v66 = vld [vmem:[%s1 + $0x90] sm:$0xf]
  %v67 = vld [vmem:[%s1 + $0x94] sm:$0xf]
  %v68 = vld [vmem:[%s1 + $0x98] sm:$0xf]
  %v69 = vld [vmem:[%s1 + $0x9c] sm:$0xf]
  %v70 = vld [vmem:[%s1 + $0xa0] sm:$0xf]
  %v71 = vld [vmem:[%s1 + $0xa4] sm:$0xf]
  %v72 = vld [vmem:[%s1 + $0xa8] sm:$0xf]
  %v73 = vld [vmem:[%s1 + $0xac] sm:$0xf]
  %v74 = vld [vmem:[%s1 + $0xb0] sm:$0xf]
  %v75 = vld [vmem:[%s1 + $0xb4] sm:$0xf]
  %v76 = vld [vmem:[%s1 + $0xb8] sm:$0xf]
  %v77 = vld [vmem:[%s1 + $0xbc] sm:$0xf]
  %v78 = vld [vmem:[%s1 + $0xc0] sm:$0xf]
  %v79 = vld [vmem:[%s1 + $0xc4] sm:$0xf]
  %v80 = vld [vmem:[%s1 + $0xc8] sm:$0xf]
  %v81 = vld [vmem:[%s1 + $0xcc] sm:$0xf]
  %v82 = vld [vmem:[%s1 + $0xd0] sm:$0xf]
  %v83 = vld [vmem:[%s1 + $0xd4] sm:$0xf]
  %v84 = vld [vmem:[%s1 + $0xd8] sm:$0xf]
  %v85 = vld [vmem:[%s1 + $0xdc] sm:$0xf]
  %v86 = vld [vmem:[%s1 + $0xe0] sm:$0xf]
  %v87 = vld [vmem:[%s1 + $0xe4] sm:$0xf]
  %v88 = vld [vmem:[%s1 + $0xe8] sm:$0xf]
  %v89 = vld [vmem:[%s1 + $0xec] sm:$0xf]
  %v90 = vld [vmem:[%s1 + $0xf0] sm:$0xf]
  %v91 = vld [vmem:[%s1 + $0xf4] sm:$0xf]
  %v92 = vld [vmem:[%s1 + $0xf8] sm:$0xf]
  %v93 = vld [vmem:[%s1 + $0xfc] sm:$0xf]
  %v94 = vld [vmem:[%s1 + $0x100] sm:$0xf]
  %v95 = vld [vmem:[%s1 + $0x104] sm:$0xf]
  %v96 = vld [vmem:[%s1 + $0x108] sm:$0xf]
  %v97 = vld [vmem:[%s1 + $0x10c] sm:$0xf]
  %v98 = vld [vmem:[%s1 + $0x110] sm:$0xf]
  %v99 = vld [vmem:[%s1 + $0x114] sm:$0xf]
  %v100 = vld [vmem:[%s1 + $0x118] sm:$0xf]
  %v101 = vld [vmem:[%s1 + $0x11c] sm:$0xf]
  %v102 = vld [vmem:[%s2] sm:$0x1]
  %v104 = vlaneseq
  %v105 = vshrl.u32 %v104, 7
  %v106 = vsub.s32 0, %v105
  %v107 = vrot.slane %v102, %v106
  %v121 = vunpack.c.l.b16 %v18
  %v122 = vunpack.c.h.b16 %v18
  %v123 = vunpack.c.l.b16 %v19
  %v124 = vunpack.c.h.b16 %v19
  %v125 = vunpack.c.l.b16 %v20
  %v126 = vunpack.c.l.b16 %v21
  %v127 = vunpack.c.h.b16 %v21
  %v128 = vunpack.c.l.b16 %v22
  %v129 = vunpack.c.h.b16 %v22
  %v130 = vunpack.c.l.b16 %v23
  %v131 = vunpack.c.l.b16 %v24
  %v132 = vunpack.c.h.b16 %v24
  %v133 = vunpack.c.l.b16 %v25
  %v134 = vunpack.c.h.b16 %v25
  %v135 = vunpack.c.l.b16 %v26
  %v136 = vunpack.c.l.b16 %v27
  %v137 = vunpack.c.h.b16 %v27
  %v138 = vunpack.c.l.b16 %v28
  %v139 = vunpack.c.h.b16 %v28
  %v140 = vunpack.c.l.b16 %v29
  %v141 = vpack.c.b16 %v126, %v121
  %v142 = vpack.c.b16 %v127, %v122
  %v143 = vpack.c.b16 %v128, %v123
  %v144 = vpack.c.b16 %v129, %v124
  %v145 = vpack.c.b16 %v130, %v125
  %v146 = vpack.c.b16 %v136, %v131
  %v147 = vpack.c.b16 %v137, %v132
  %v148 = vpack.c.b16 %v138, %v133
  %v149 = vpack.c.b16 %v139, %v134
  %v150 = vpack.c.b16 %v140, %v135
  %v231 = vunpack.c.l.b16 %v30
  %v232 = vunpack.c.l.b16 %v31
  %v233 = vunpack.c.l.b16 %v32
  %v234 = vunpack.c.l.b16 %v33
  %v235 = vunpack.c.l.b16 %v34
  %v236 = vunpack.c.l.b16 %v35
  %v237 = vunpack.c.l.b16 %v36
  %v238 = vunpack.c.l.b16 %v37
  %v239 = vunpack.c.l.b16 %v38
  %v240 = vunpack.c.l.b16 %v39
  %v241 = vunpack.c.l.b16 %v40
  %v242 = vunpack.c.l.b16 %v41
  %v243 = vunpack.c.l.b16 %v42
  %v244 = vunpack.c.l.b16 %v43
  %v245 = vunpack.c.l.b16 %v44
  %v246 = vunpack.c.l.b16 %v45
  %v247 = vunpack.c.l.b16 %v46
  %v248 = vunpack.c.l.b16 %v47
  %v249 = vunpack.c.l.b16 %v48
  %v250 = vunpack.c.l.b16 %v49
  %v251 = vunpack.c.l.b16 %v50
  %v252 = vunpack.c.l.b16 %v51
  %v253 = vunpack.c.l.b16 %v52
  %v254 = vunpack.c.l.b16 %v53
  %v255 = vunpack.c.l.b16 %v54
  %v256 = vunpack.c.l.b16 %v55
  %v257 = vunpack.c.l.b16 %v56
  %v258 = vunpack.c.l.b16 %v57
  %v259 = vunpack.c.l.b16 %v58
  %v260 = vunpack.c.l.b16 %v59
  %v261 = vunpack.c.l.b16 %v60
  %v262 = vunpack.c.l.b16 %v61
  %v263 = vunpack.c.l.b16 %v62
  %v264 = vunpack.c.l.b16 %v63
  %v265 = vunpack.c.l.b16 %v64
  %v266 = vunpack.c.l.b16 %v65
  %v267 = vunpack.c.l.b16 %v66
  %v268 = vunpack.c.l.b16 %v67
  %v269 = vunpack.c.l.b16 %v68
  %v270 = vunpack.c.l.b16 %v69
  %v271 = vunpack.c.l.b16 %v70
  %v272 = vunpack.c.l.b16 %v71
  %v273 = vunpack.c.l.b16 %v72
  %v274 = vunpack.c.l.b16 %v73
  %v275 = vunpack.c.l.b16 %v74
  %v276 = vunpack.c.l.b16 %v75
  %v277 = vunpack.c.l.b16 %v76
  %v278 = vunpack.c.l.b16 %v77
  %v279 = vunpack.c.l.b16 %v78
  %v280 = vunpack.c.l.b16 %v79
  %v281 = vunpack.c.l.b16 %v80
  %v282 = vunpack.c.l.b16 %v81
  %v283 = vunpack.c.l.b16 %v82
  %v284 = vunpack.c.l.b16 %v83
  %v285 = vunpack.c.l.b16 %v84
  %v286 = vunpack.c.l.b16 %v85
  %v287 = vunpack.c.l.b16 %v86
  %v288 = vunpack.c.l.b16 %v87
  %v289 = vunpack.c.l.b16 %v88
  %v290 = vunpack.c.l.b16 %v89
  %v291 = vunpack.c.l.b16 %v90
  %v292 = vunpack.c.l.b16 %v91
  %v293 = vunpack.c.l.b16 %v92
  %v294 = vunpack.c.l.b16 %v93
  %v295 = vunpack.c.l.b16 %v94
  %v296 = vunpack.c.l.b16 %v95
  %v297 = vunpack.c.l.b16 %v96
  %v298 = vunpack.c.l.b16 %v97
  %v299 = vunpack.c.l.b16 %v98
  %v300 = vunpack.c.l.b16 %v99
  %v301 = vunpack.c.l.b16 %v100
  %v302 = vunpack.c.l.b16 %v101
  %v303 = vpack.c.b16 %v232, %v231
  %v304 = vpack.c.b16 %v234, %v233
  %v305 = vpack.c.b16 %v236, %v235
  %v306 = vpack.c.b16 %v238, %v237
  %v307 = vpack.c.b16 %v240, %v239
  %v308 = vpack.c.b16 %v242, %v241
  %v309 = vpack.c.b16 %v244, %v243
  %v310 = vpack.c.b16 %v246, %v245
  %v311 = vpack.c.b16 %v248, %v247
  %v312 = vpack.c.b16 %v250, %v249
  %v313 = vpack.c.b16 %v252, %v251
  %v314 = vpack.c.b16 %v254, %v253
  %v315 = vpack.c.b16 %v256, %v255
  %v316 = vpack.c.b16 %v258, %v257
  %v317 = vpack.c.b16 %v260, %v259
  %v318 = vpack.c.b16 %v262, %v261
  %v319 = vpack.c.b16 %v264, %v263
  %v320 = vpack.c.b16 %v266, %v265
  %v321 = vpack.c.b16 %v268, %v267
  %v322 = vpack.c.b16 %v270, %v269
  %v323 = vpack.c.b16 %v272, %v271
  %v324 = vpack.c.b16 %v274, %v273
  %v325 = vpack.c.b16 %v276, %v275
  %v326 = vpack.c.b16 %v278, %v277
  %v327 = vpack.c.b16 %v280, %v279
  %v328 = vpack.c.b16 %v282, %v281
  %v329 = vpack.c.b16 %v284, %v283
  %v330 = vpack.c.b16 %v286, %v285
  %v331 = vpack.c.b16 %v288, %v287
  %v332 = vpack.c.b16 %v290, %v289
  %v333 = vpack.c.b16 %v292, %v291
  %v334 = vpack.c.b16 %v294, %v293
  %v335 = vpack.c.b16 %v296, %v295
  %v336 = vpack.c.b16 %v298, %v297
  %v337 = vpack.c.b16 %v300, %v299
  %v338 = vpack.c.b16 %v302, %v301
  %vm375 = vcmask 523264
  %v377 = vsel %vm375, %v145, 0
  %v380 = vsel %vm375, %v150, 0
  %382 = vmatprep.subr.bf16.mxu0 0
  %383 = vmatpush1.bf16.msra.mxu0 %v303
  %384 = vmatprep.subr.bf16.mxu0 0
  %385 = vmatpush1.bf16.msra.mxu0 %v304
  %386 = vmatprep.subr.bf16.mxu0 0
  %387 = vmatpush1.bf16.msra.mxu0 %v305
  %388 = vmatprep.subr.bf16.mxu0 0
  %389 = vmatpush1.bf16.msra.mxu0 %v306
  %390 = vmatprep.subr.bf16.mxu0 0
  %391 = vmatpush1.bf16.msra.mxu0 %v307
  %392 = vmatprep.subr.bf16.mxu0 0
  %393 = vmatpush1.bf16.msra.mxu0 %v308
  %394 = vmatprep.subr.bf16.mxu0 0
  %395 = vmatpush1.bf16.msra.mxu0 %v309
  %396 = vmatprep.subr.bf16.mxu0 0
  %397 = vmatpush1.bf16.msra.mxu0 %v310
  %398 = vmatprep.subr.bf16.mxu0 0
  %399 = vmatpush1.bf16.msra.mxu0 %v311
  %400 = vmatprep.subr.bf16.mxu0 0
  %401 = vmatpush1.bf16.msra.mxu0 %v312
  %402 = vmatprep.subr.bf16.mxu0 0
  %403 = vmatpush1.bf16.msra.mxu0 %v313
  %404 = vmatprep.subr.bf16.mxu0 0
  %405 = vmatpush1.bf16.msra.mxu0 %v314
  %406 = vmatprep.subr.bf16.mxu0 0
  %407 = vmatpush1.bf16.msra.mxu0 %v315
  %408 = vmatprep.subr.bf16.mxu0 0
  %409 = vmatpush1.bf16.msra.mxu0 %v316
  %410 = vmatprep.subr.bf16.mxu0 0
  %411 = vmatpush1.bf16.msra.mxu0 %v317
  %412 = vmatprep.subr.bf16.mxu0 0
  %413 = vmatpush1.bf16.msra.mxu0 %v318
  %414 = vmatprep.mubr.bf16.mxu0 %v142
  %415 = vmatmul.mubr.bf16.gmra.mrb[0].mxu0 %v141
  %v416 = vpop.f32.mrb[0].mxu0
  %v417 = vadd.f32 %v107, %v416
  %v418 = vpop.f32.mrb[0].mxu0
  %v419 = vpop.f32.mrb[0].mxu0
  %v420 = vadd.f32 %v107, %v419
  %v421 = vpop.f32.mrb[0].mxu0
  %422 = vmatprep.mubr.bf16.mxu0 %v147
  %423 = vmatmul.mubr.bf16.gmra.mrb[0].mxu0 %v146
  %v424 = vpop.f32.mrb[0].mxu0
  %v425 = vadd.f32 %v107, %v424
  %v426 = vpop.f32.mrb[0].mxu0
  %v427 = vpop.f32.mrb[0].mxu0
  %v428 = vadd.f32 %v107, %v427
  %v429 = vpop.f32.mrb[0].mxu0
  %430 = vdwg.mxu0
  %431 = vmatprep.subr.bf16.mxu0 0
  %432 = vmatpush1.bf16.msra.mxu0 %v319
  %433 = vmatprep.subr.bf16.mxu0 0
  %434 = vmatpush1.bf16.msra.mxu0 %v320
  %435 = vmatprep.subr.bf16.mxu0 0
  %436 = vmatpush1.bf16.msra.mxu0 %v321
  %437 = vmatprep.subr.bf16.mxu0 0
  %438 = vmatpush1.bf16.msra.mxu0 %v322
  %439 = vmatprep.subr.bf16.mxu0 0
  %440 = vmatpush1.bf16.msra.mxu0 %v323
  %441 = vmatprep.subr.bf16.mxu0 0
  %442 = vmatpush1.bf16.msra.mxu0 %v324
  %443 = vmatprep.subr.bf16.mxu0 0
  %444 = vmatpush1.bf16.msra.mxu0 %v325
  %445 = vmatprep.subr.bf16.mxu0 0
  %446 = vmatpush1.bf16.msra.mxu0 %v326
  %447 = vmatprep.subr.bf16.mxu0 0
  %448 = vmatpush1.bf16.msra.mxu0 %v327
  %449 = vmatprep.subr.bf16.mxu0 0
  %450 = vmatpush1.bf16.msra.mxu0 %v328
  %451 = vmatprep.subr.bf16.mxu0 0
  %452 = vmatpush1.bf16.msra.mxu0 %v329
  %453 = vmatprep.subr.bf16.mxu0 0
  %454 = vmatpush1.bf16.msra.mxu0 %v330
  %455 = vmatprep.subr.bf16.mxu0 0
  %456 = vmatpush1.bf16.msra.mxu0 %v331
  %457 = vmatprep.subr.bf16.mxu0 0
  %458 = vmatpush1.bf16.msra.mxu0 %v332
  %459 = vmatprep.subr.bf16.mxu0 0
  %460 = vmatpush1.bf16.msra.mxu0 %v333
  %461 = vmatprep.subr.bf16.mxu0 0
  %462 = vmatpush1.bf16.msra.mxu0 %v334
  %463 = vmatprep.mubr.bf16.mxu0 %v144
  %464 = vmatmul.mubr.bf16.gmra.mrb[0].mxu0 %v143
  %v465 = vpop.f32.mrb[0].mxu0
  %v466 = vadd.f32 %v417, %v465
  %v467 = vpop.f32.mrb[0].mxu0
  %v468 = vpop.f32.mrb[0].mxu0
  %v469 = vadd.f32 %v420, %v468
  %v470 = vpop.f32.mrb[0].mxu0
  %471 = vmatprep.mubr.bf16.mxu0 %v149
  %472 = vmatmul.mubr.bf16.gmra.mrb[0].mxu0 %v148
  %v473 = vpop.f32.mrb[0].mxu0
  %v474 = vadd.f32 %v425, %v473
  %v475 = vpop.f32.mrb[0].mxu0
  %v476 = vpop.f32.mrb[0].mxu0
  %v477 = vadd.f32 %v428, %v476
  %v478 = vpop.f32.mrb[0].mxu0
  %479 = vdwg.mxu0
  %480 = vmatprep.subr.bf16.mxu0 0
  %481 = vmatpush1.bf16.msra.mxu0 %v335
  %482 = vmatprep.subr.bf16.mxu0 0
  %483 = vmatpush1.bf16.msra.mxu0 %v336
  %484 = vmatprep.subr.bf16.mxu0 0
  %485 = vmatpush1.bf16.msra.mxu0 %v337
  %486 = vmatprep.subr.bf16.mxu0 0
  %487 = vmatpush1.bf16.msra.mxu0 %v338
  %488 = vmatprep.subr.bf16.mxu0 0
  %489 = vmatpush1.bf16.msra.mxu0 0
  %490 = vmatprep.subr.bf16.mxu0 0
  %491 = vmatpush1.bf16.msra.mxu0 0
  %492 = vmatprep.subr.bf16.mxu0 0
  %493 = vmatpush1.bf16.msra.mxu0 0
  %494 = vmatprep.subr.bf16.mxu0 0
  %495 = vmatpush1.bf16.msra.mxu0 0
  %496 = vmatprep.subr.bf16.mxu0 0
  %497 = vmatpush1.bf16.msra.mxu0 0
  %498 = vmatprep.subr.bf16.mxu0 0
  %499 = vmatpush1.bf16.msra.mxu0 0
  %500 = vmatprep.subr.bf16.mxu0 0
  %501 = vmatpush1.bf16.msra.mxu0 0
  %502 = vmatprep.subr.bf16.mxu0 0
  %503 = vmatpush1.bf16.msra.mxu0 0
  %504 = vmatprep.subr.bf16.mxu0 0
  %505 = vmatpush1.bf16.msra.mxu0 0
  %506 = vmatprep.subr.bf16.mxu0 0
  %507 = vmatpush1.bf16.msra.mxu0 0
  %508 = vmatprep.subr.bf16.mxu0 0
  %509 = vmatpush1.bf16.msra.mxu0 0
  %510 = vmatprep.subr.bf16.mxu0 0
  %511 = vmatpush1.bf16.msra.mxu0 0
  %512 = vmatprep.mubr.bf16.mxu0 0
  %513 = vmatmul.mubr.bf16.gmra.mrb[0].mxu0 %v377
  %v514 = vpop.f32.mrb[0].mxu0
  %v515 = vadd.f32 %v466, %v514
  %v516 = vpop.f32.mrb[0].mxu0
  %v517 = vpop.f32.mrb[0].mxu0
  %v518 = vadd.f32 %v469, %v517
  %v519 = vpop.f32.mrb[0].mxu0
  %520 = vmatprep.mubr.bf16.mxu0 0
  %521 = vmatmul.mubr.bf16.gmra.mrb[0].mxu0 %v380
  %v522 = vpop.f32.mrb[0].mxu0
  %v523 = vadd.f32 %v474, %v522
  %v524 = vpop.f32.mrb[0].mxu0
  %v525 = vpop.f32.mrb[0].mxu0
  %v526 = vadd.f32 %v477, %v525
  %v527 = vpop.f32.mrb[0].mxu0
  %528 = vdwg.mxu0
  %v529 = vld [vmem:[%s3] sm:$0xf]
  %v530 = vld [vmem:[%s3 + $0x4] sm:$0xf]
  %v531 = vld [vmem:[%s3 + $0x8] sm:$0xf]
  %v532 = vld [vmem:[%s3 + $0xc] sm:$0xf]
  %v533 = vunpack.c.l.bf16 %v529
  %v534 = vunpack.c.l.bf16 %v530
  %v535 = vunpack.c.l.bf16 %v531
  %v536 = vunpack.c.l.bf16 %v532
  %v537 = vadd.f32 %v515, %v533
  %v538 = vadd.f32 %v518, %v534
  %v539 = vadd.f32 %v523, %v535
  %v540 = vadd.f32 %v526, %v536
  %v541 = vmax.f32 %v537, 0.0
  %v542 = vmax.f32 %v538, 0.0
  %v543 = vmax.f32 %v539, 0.0
  %v544 = vmax.f32 %v540, 0.0
  %v545 = vpack.c.bf16 %v542, %v541
  %v546 = vpack.c.bf16 %v544, %v543
  %v549 = vunpack.c.l.b16 %v545
  %v550 = vunpack.c.h.b16 %v545
  %v551 = vunpack.c.l.b16 %v546
  %v552 = vunpack.c.h.b16 %v546
  %v553 = vpack.c.b16 %v549, %v549
  %v554 = vpack.c.b16 %v550, %v550
  %v555 = vpack.c.b16 %v551, %v551
  %v556 = vpack.c.b16 %v552, %v552
  %vm561 = vcmask 519168
  %562 = vst.msk [vmem:[%s4] sm:$0xf] %vm561, %v553
  %563 = vst.msk [vmem:[%s4 + $0x4] sm:$0xf] %vm561, %v554
  %564 = vst.msk [vmem:[%s4 + $0x8] sm:$0xf] %vm561, %v555
  %565 = vst.msk [vmem:[%s4 + $0xc] sm:$0xf] %vm561, %v556
  // Predicated region
  $region18: #{resnet_forward.33} parent=0 // pred_check
    _
  $region19: #{resnet_forward.33} parent=0 // pred_check_branch
    %567 = sbr.rel (0) target = $region21
  $region20: #{resnet_forward.33} parent=0 // pred_region
    _
  $region21: #{resnet_forward.33} parent=0 // pred_fallthru
    _
  // Predicated region
  $region22: #{resnet_forward.33} parent=0 // pred_check
    _
  $region23: #{resnet_forward.33} parent=0 // pred_check_branch
    %569 = sbr.rel (0) target = $region25
  $region24: #{resnet_forward.33} parent=0 // pred_region
    _
  $region25: #{resnet_forward.33} parent=0 // pred_fallthru
    _

// kernel: resnet_forward.37
$region0: #{resnet_forward.37}
  #allocation0 [shape = 'u32[]', space=smem, size = 0x4, offset = 0x4, fixed_abs, tag = 'smem constant byte address 0x4 - core index']
  #allocation1 [shape = 'u32[144,128]{1,0:T(1,128)}', space=vmem, size = 0x12000, scoped, tag = 'internal scratch']
  %s0 = inlined_call_operand.vmem [shape: bf16[32,576], index: 0, kind: input, shape index: {}]
  %s1 = inlined_call_operand.vmem [shape: bf16[576,64], index: 1, kind: input, shape index: {}]
  %s2 = inlined_call_operand.vmem [shape: f32[1,64], index: 2, kind: input, shape index: {}]
  %s3 = inlined_call_operand.vmem [shape: bf16[32,64], index: 3, kind: input, shape index: {}]
  %s4 = inlined_call_operand.vmem [shape: f32[2,32], index: 4, kind: input, shape index: {}]
  %s5 = inlined_call_operand.vmem [shape: f32[64,10], index: 5, kind: input, shape index: {}]
  %s6 = inlined_call_operand.vmem [shape: f32[1,10], index: 6, kind: input, shape index: {}]
  %s7 = inlined_call_operand.hbm [shape: f32[2,10], index: 7, kind: output, shape index: {}]
  %s8 = sld [smem:[#allocation0]]
  $region38: #{resnet_forward.37} parent=0
    _
  %s10 = ssub.s32 1, %s8
  %s11 = scalar_select 0, %s10, %s8
  $region1: #{resnet_forward.37} parent=0
    #allocation2 [shape = 'u8[1024]{0}', space=vmem, size = 0x400, scoped, tag = 'output window, operand 0, single buffered']
    #allocation3 [shape = 's32[1]{0}', space=sflag, size = 0x4, scoped, tag = 'scoped memory for resnet_forward.37']
    %12 = vsyncpa [#allocation3], 0
    // Predicated region
    $region2: #{resnet_forward.37} parent=1 // pred_check
      _
    $region3: #{resnet_forward.37} parent=1 // pred_check_branch
      %14 = sbr.rel (0) target = $region5
    $region4: #{resnet_forward.37} parent=1 // pred_region
      _
    $region5: #{resnet_forward.37} parent=1 // pred_fallthru
      _
    // Predicated region
    $region6: #{resnet_forward.37} parent=1 // pred_check
      _
    $region7: #{resnet_forward.37} parent=1 // pred_check_branch
      %16 = sbr.rel (0) target = $region9
    $region8: #{resnet_forward.37} parent=1 // pred_region
      _
    $region9: #{resnet_forward.37} parent=1 // pred_fallthru
      _
    // Predicated region
    $region10: #{resnet_forward.37} parent=1 // pred_check
      _
    $region11: #{resnet_forward.37} parent=1 // pred_check_branch
      %18 = sbr.rel (0) target = $region13
    $region12: #{resnet_forward.37} parent=1 // pred_region
      _
    $region13: #{resnet_forward.37} parent=1 // pred_fallthru
      _
    // Predicated region
    $region14: #{resnet_forward.37} parent=1 // pred_check
      _
    $region15: #{resnet_forward.37} parent=1 // pred_check_branch
      %20 = sbr.rel (0) target = $region17
    $region16: #{resnet_forward.37} parent=1 // pred_region
      _
    $region17: #{resnet_forward.37} parent=1 // pred_fallthru
      _
    // Predicated region
    $region18: #{resnet_forward.37} parent=1 // pred_check
      _
    $region19: #{resnet_forward.37} parent=1 // pred_check_branch
      %22 = sbr.rel (0) target = $region21
    $region20: #{resnet_forward.37} parent=1 // pred_region
      _
    $region21: #{resnet_forward.37} parent=1 // pred_fallthru
      _
    // Predicated region
    $region22: #{resnet_forward.37} parent=1 // pred_check
      _
    $region23: #{resnet_forward.37} parent=1 // pred_check_branch
      %24 = sbr.rel (0) target = $region25
    $region24: #{resnet_forward.37} parent=1 // pred_region
      _
    $region25: #{resnet_forward.37} parent=1 // pred_fallthru
      _
    // Predicated region
    $region26: #{resnet_forward.37} parent=1 // pred_check
      _
    $region27: #{resnet_forward.37} parent=1 // pred_check_branch
      %26 = sbr.rel (0) target = $region29
    $region28: #{resnet_forward.37} parent=1 // pred_region
      _
    $region29: #{resnet_forward.37} parent=1 // pred_fallthru
      _
    %v28 = vld [vmem:[%s0] sm:$0xff]
    %v29 = vld [vmem:[%s0 + $0x8] sm:$0xff]
    %v30 = vld [vmem:[%s0 + $0x10] sm:$0xf]
    %v31 = vld [vmem:[%s0 + $0x14] sm:$0xff]
    %v32 = vld [vmem:[%s0 + $0x1c] sm:$0xff]
    %v33 = vld [vmem:[%s0 + $0x24] sm:$0xf]
    %v34 = vld [vmem:[%s0 + $0x28] sm:$0xff]
    %v35 = vld [vmem:[%s0 + $0x30] sm:$0xff]
    %v36 = vld [vmem:[%s0 + $0x38] sm:$0xf]
    %v37 = vld [vmem:[%s0 + $0x3c] sm:$0xff]
    %v38 = vld [vmem:[%s0 + $0x44] sm:$0xff]
    %v39 = vld [vmem:[%s0 + $0x4c] sm:$0xf]
    %v40 = vld [vmem:[%s1] sm:$0xf]
    %v41 = vld [vmem:[%s1 + $0x4] sm:$0xf]
    %v42 = vld [vmem:[%s1 + $0x8] sm:$0xf]
    %v43 = vld [vmem:[%s1 + $0xc] sm:$0xf]
    %v44 = vld [vmem:[%s1 + $0x10] sm:$0xf]
    %v45 = vld [vmem:[%s1 + $0x14] sm:$0xf]
    %v46 = vld [vmem:[%s1 + $0x18] sm:$0xf]
    %v47 = vld [vmem:[%s1 + $0x1c] sm:$0xf]
    %v48 = vld [vmem:[%s1 + $0x20] sm:$0xf]
    %v49 = vld [vmem:[%s1 + $0x24] sm:$0xf]
    %v50 = vld [vmem:[%s1 + $0x28] sm:$0xf]
    %v51 = vld [vmem:[%s1 + $0x2c] sm:$0xf]
    %v52 = vld [vmem:[%s1 + $0x30] sm:$0xf]
    %v53 = vld [vmem:[%s1 + $0x34] sm:$0xf]
    %v54 = vld [vmem:[%s1 + $0x38] sm:$0xf]
    %v55 = vld [vmem:[%s1 + $0x3c] sm:$0xf]
    %v56 = vld [vmem:[%s1 + $0x40] sm:$0xf]
    %v57 = vld [vmem:[%s1 + $0x44] sm:$0xf]
    %v58 = vld [vmem:[%s1 + $0x48] sm:$0xf]
    %v59 = vld [vmem:[%s1 + $0x4c] sm:$0xf]
    %v60 = vld [vmem:[%s1 + $0x50] sm:$0xf]
    %v61 = vld [vmem:[%s1 + $0x54] sm:$0xf]
    %v62 = vld [vmem:[%s1 + $0x58] sm:$0xf]
    %v63 = vld [vmem:[%s1 + $0x5c] sm:$0xf]
    %v64 = vld [vmem:[%s1 + $0x60] sm:$0xf]
    %v65 = vld [vmem:[%s1 + $0x64] sm:$0xf]
    %v66 = vld [vmem:[%s1 + $0x68] sm:$0xf]
    %v67 = vld [vmem:[%s1 + $0x6c] sm:$0xf]
    %v68 = vld [vmem:[%s1 + $0x70] sm:$0xf]
    %v69 = vld [vmem:[%s1 + $0x74] sm:$0xf]
    %v70 = vld [vmem:[%s1 + $0x78] sm:$0xf]
    %v71 = vld [vmem:[%s1 + $0x7c] sm:$0xf]
    %v72 = vld [vmem:[%s1 + $0x80] sm:$0xf]
    %v73 = vld [vmem:[%s1 + $0x84] sm:$0xf]
    %v74 = vld [vmem:[%s1 + $0x88] sm:$0xf]
    %v75 = vld [vmem:[%s1 + $0x8c] sm:$0xf]
    %v76 = vld [vmem:[%s1 + $0x90] sm:$0xf]
    %v77 = vld [vmem:[%s1 + $0x94] sm:$0xf]
    %v78 = vld [vmem:[%s1 + $0x98] sm:$0xf]
    %v79 = vld [vmem:[%s1 + $0x9c] sm:$0xf]
    %v80 = vld [vmem:[%s1 + $0xa0] sm:$0xf]
    %v81 = vld [vmem:[%s1 + $0xa4] sm:$0xf]
    %v82 = vld [vmem:[%s1 + $0xa8] sm:$0xf]
    %v83 = vld [vmem:[%s1 + $0xac] sm:$0xf]
    %v84 = vld [vmem:[%s1 + $0xb0] sm:$0xf]
    %v85 = vld [vmem:[%s1 + $0xb4] sm:$0xf]
    %v86 = vld [vmem:[%s1 + $0xb8] sm:$0xf]
    %v87 = vld [vmem:[%s1 + $0xbc] sm:$0xf]
    %v88 = vld [vmem:[%s1 + $0xc0] sm:$0xf]
    %v89 = vld [vmem:[%s1 + $0xc4] sm:$0xf]
    %v90 = vld [vmem:[%s1 + $0xc8] sm:$0xf]
    %v91 = vld [vmem:[%s1 + $0xcc] sm:$0xf]
    %v92 = vld [vmem:[%s1 + $0xd0] sm:$0xf]
    %v93 = vld [vmem:[%s1 + $0xd4] sm:$0xf]
    %v94 = vld [vmem:[%s1 + $0xd8] sm:$0xf]
    %v95 = vld [vmem:[%s1 + $0xdc] sm:$0xf]
    %v96 = vld [vmem:[%s1 + $0xe0] sm:$0xf]
    %v97 = vld [vmem:[%s1 + $0xe4] sm:$0xf]
    %v98 = vld [vmem:[%s1 + $0xe8] sm:$0xf]
    %v99 = vld [vmem:[%s1 + $0xec] sm:$0xf]
    %v100 = vld [vmem:[%s1 + $0xf0] sm:$0xf]
    %v101 = vld [vmem:[%s1 + $0xf4] sm:$0xf]
    %v102 = vld [vmem:[%s1 + $0xf8] sm:$0xf]
    %v103 = vld [vmem:[%s1 + $0xfc] sm:$0xf]
    %v104 = vld [vmem:[%s1 + $0x100] sm:$0xf]
    %v105 = vld [vmem:[%s1 + $0x104] sm:$0xf]
    %v106 = vld [vmem:[%s1 + $0x108] sm:$0xf]
    %v107 = vld [vmem:[%s1 + $0x10c] sm:$0xf]
    %v108 = vld [vmem:[%s1 + $0x110] sm:$0xf]
    %v109 = vld [vmem:[%s1 + $0x114] sm:$0xf]
    %v110 = vld [vmem:[%s1 + $0x118] sm:$0xf]
    %v111 = vld [vmem:[%s1 + $0x11c] sm:$0xf]
    %v112 = vld [vmem:[%s2] sm:$0x1]
    %v114 = vlaneseq
    %v115 = vshrl.u32 %v114, 7
    %v116 = vsub.s32 0, %v115
    %v117 = vrot.slane %v112, %v116
    %v131 = vunpack.c.l.b16 %v28
    %v132 = vunpack.c.h.b16 %v28
    %v133 = vunpack.c.l.b16 %v29
    %v134 = vunpack.c.h.b16 %v29
    %v135 = vunpack.c.l.b16 %v30
    %v136 = vunpack.c.l.b16 %v31
    %v137 = vunpack.c.h.b16 %v31
    %v138 = vunpack.c.l.b16 %v32
    %v139 = vunpack.c.h.b16 %v32
    %v140 = vunpack.c.l.b16 %v33
    %v141 = vunpack.c.l.b16 %v34
    %v142 = vunpack.c.h.b16 %v34
    %v143 = vunpack.c.l.b16 %v35
    %v144 = vunpack.c.h.b16 %v35
    %v145 = vunpack.c.l.b16 %v36
    %v146 = vunpack.c.l.b16 %v37
    %v147 = vunpack.c.h.b16 %v37
    %v148 = vunpack.c.l.b16 %v38
    %v149 = vunpack.c.h.b16 %v38
    %v150 = vunpack.c.l.b16 %v39
    %v151 = vpack.c.b16 %v136, %v131
    %v152 = vpack.c.b16 %v137, %v132
    %v153 = vpack.c.b16 %v138, %v133
    %v154 = vpack.c.b16 %v139, %v134
    %v155 = vpack.c.b16 %v140, %v135
    %v156 = vpack.c.b16 %v146, %v141
    %v157 = vpack.c.b16 %v147, %v142
    %v158 = vpack.c.b16 %v148, %v143
    %v159 = vpack.c.b16 %v149, %v144
    %v160 = vpack.c.b16 %v150, %v145
    %v241 = vunpack.c.l.b16 %v40
    %v242 = vunpack.c.l.b16 %v41
    %v243 = vunpack.c.l.b16 %v42
    %v244 = vunpack.c.l.b16 %v43
    %v245 = vunpack.c.l.b16 %v44
    %v246 = vunpack.c.l.b16 %v45
    %v247 = vunpack.c.l.b16 %v46
    %v248 = vunpack.c.l.b16 %v47
    %v249 = vunpack.c.l.b16 %v48
    %v250 = vunpack.c.l.b16 %v49
    %v251 = vunpack.c.l.b16 %v50
    %v252 = vunpack.c.l.b16 %v51
    %v253 = vunpack.c.l.b16 %v52
    %v254 = vunpack.c.l.b16 %v53
    %v255 = vunpack.c.l.b16 %v54
    %v256 = vunpack.c.l.b16 %v55
    %v257 = vunpack.c.l.b16 %v56
    %v258 = vunpack.c.l.b16 %v57
    %v259 = vunpack.c.l.b16 %v58
    %v260 = vunpack.c.l.b16 %v59
    %v261 = vunpack.c.l.b16 %v60
    %v262 = vunpack.c.l.b16 %v61
    %v263 = vunpack.c.l.b16 %v62
    %v264 = vunpack.c.l.b16 %v63
    %v265 = vunpack.c.l.b16 %v64
    %v266 = vunpack.c.l.b16 %v65
    %v267 = vunpack.c.l.b16 %v66
    %v268 = vunpack.c.l.b16 %v67
    %v269 = vunpack.c.l.b16 %v68
    %v270 = vunpack.c.l.b16 %v69
    %v271 = vunpack.c.l.b16 %v70
    %v272 = vunpack.c.l.b16 %v71
    %v273 = vunpack.c.l.b16 %v72
    %v274 = vunpack.c.l.b16 %v73
    %v275 = vunpack.c.l.b16 %v74
    %v276 = vunpack.c.l.b16 %v75
    %v277 = vunpack.c.l.b16 %v76
    %v278 = vunpack.c.l.b16 %v77
    %v279 = vunpack.c.l.b16 %v78
    %v280 = vunpack.c.l.b16 %v79
    %v281 = vunpack.c.l.b16 %v80
    %v282 = vunpack.c.l.b16 %v81
    %v283 = vunpack.c.l.b16 %v82
    %v284 = vunpack.c.l.b16 %v83
    %v285 = vunpack.c.l.b16 %v84
    %v286 = vunpack.c.l.b16 %v85
    %v287 = vunpack.c.l.b16 %v86
    %v288 = vunpack.c.l.b16 %v87
    %v289 = vunpack.c.l.b16 %v88
    %v290 = vunpack.c.l.b16 %v89
    %v291 = vunpack.c.l.b16 %v90
    %v292 = vunpack.c.l.b16 %v91
    %v293 = vunpack.c.l.b16 %v92
    %v294 = vunpack.c.l.b16 %v93
    %v295 = vunpack.c.l.b16 %v94
    %v296 = vunpack.c.l.b16 %v95
    %v297 = vunpack.c.l.b16 %v96
    %v298 = vunpack.c.l.b16 %v97
    %v299 = vunpack.c.l.b16 %v98
    %v300 = vunpack.c.l.b16 %v99
    %v301 = vunpack.c.l.b16 %v100
    %v302 = vunpack.c.l.b16 %v101
    %v303 = vunpack.c.l.b16 %v102
    %v304 = vunpack.c.l.b16 %v103
    %v305 = vunpack.c.l.b16 %v104
    %v306 = vunpack.c.l.b16 %v105
    %v307 = vunpack.c.l.b16 %v106
    %v308 = vunpack.c.l.b16 %v107
    %v309 = vunpack.c.l.b16 %v108
    %v310 = vunpack.c.l.b16 %v109
    %v311 = vunpack.c.l.b16 %v110
    %v312 = vunpack.c.l.b16 %v111
    %v313 = vpack.c.b16 %v242, %v241
    %v314 = vpack.c.b16 %v244, %v243
    %v315 = vpack.c.b16 %v246, %v245
    %v316 = vpack.c.b16 %v248, %v247
    %v317 = vpack.c.b16 %v250, %v249
    %v318 = vpack.c.b16 %v252, %v251
    %v319 = vpack.c.b16 %v254, %v253
    %v320 = vpack.c.b16 %v256, %v255
    %v321 = vpack.c.b16 %v258, %v257
    %v322 = vpack.c.b16 %v260, %v259
    %v323 = vpack.c.b16 %v262, %v261
    %v324 = vpack.c.b16 %v264, %v263
    %v325 = vpack.c.b16 %v266, %v265
    %v326 = vpack.c.b16 %v268, %v267
    %v327 = vpack.c.b16 %v270, %v269
    %v328 = vpack.c.b16 %v272, %v271
    %v329 = vpack.c.b16 %v274, %v273
    %v330 = vpack.c.b16 %v276, %v275
    %v331 = vpack.c.b16 %v278, %v277
    %v332 = vpack.c.b16 %v280, %v279
    %v333 = vpack.c.b16 %v282, %v281
    %v334 = vpack.c.b16 %v284, %v283
    %v335 = vpack.c.b16 %v286, %v285
    %v336 = vpack.c.b16 %v288, %v287
    %v337 = vpack.c.b16 %v290, %v289
    %v338 = vpack.c.b16 %v292, %v291
    %v339 = vpack.c.b16 %v294, %v293
    %v340 = vpack.c.b16 %v296, %v295
    %v341 = vpack.c.b16 %v298, %v297
    %v342 = vpack.c.b16 %v300, %v299
    %v343 = vpack.c.b16 %v302, %v301
    %v344 = vpack.c.b16 %v304, %v303
    %v345 = vpack.c.b16 %v306, %v305
    %v346 = vpack.c.b16 %v308, %v307
    %v347 = vpack.c.b16 %v310, %v309
    %v348 = vpack.c.b16 %v312, %v311
    %vm385 = vcmask 523264
    %v387 = vsel %vm385, %v155, 0
    %v390 = vsel %vm385, %v160, 0
    %392 = vmatprep.subr.bf16.mxu0 0
    %393 = vmatpush1.bf16.msra.mxu0 %v313
    %394 = vmatprep.subr.bf16.mxu0 0
    %395 = vmatpush1.bf16.msra.mxu0 %v314
    %396 = vmatprep.subr.bf16.mxu0 0
    %397 = vmatpush1.bf16.msra.mxu0 %v315
    %398 = vmatprep.subr.bf16.mxu0 0
    %399 = vmatpush1.bf16.msra.mxu0 %v316
    %400 = vmatprep.subr.bf16.mxu0 0
    %401 = vmatpush1.bf16.msra.mxu0 %v317
    %402 = vmatprep.subr.bf16.mxu0 0
    %403 = vmatpush1.bf16.msra.mxu0 %v318
    %404 = vmatprep.subr.bf16.mxu0 0
    %405 = vmatpush1.bf16.msra.mxu0 %v319
    %406 = vmatprep.subr.bf16.mxu0 0
    %407 = vmatpush1.bf16.msra.mxu0 %v320
    %408 = vmatprep.subr.bf16.mxu0 0
    %409 = vmatpush1.bf16.msra.mxu0 %v321
    %410 = vmatprep.subr.bf16.mxu0 0
    %411 = vmatpush1.bf16.msra.mxu0 %v322
    %412 = vmatprep.subr.bf16.mxu0 0
    %413 = vmatpush1.bf16.msra.mxu0 %v323
    %414 = vmatprep.subr.bf16.mxu0 0
    %415 = vmatpush1.bf16.msra.mxu0 %v324
    %416 = vmatprep.subr.bf16.mxu0 0
    %417 = vmatpush1.bf16.msra.mxu0 %v325
    %418 = vmatprep.subr.bf16.mxu0 0
    %419 = vmatpush1.bf16.msra.mxu0 %v326
    %420 = vmatprep.subr.bf16.mxu0 0
    %421 = vmatpush1.bf16.msra.mxu0 %v327
    %422 = vmatprep.subr.bf16.mxu0 0
    %423 = vmatpush1.bf16.msra.mxu0 %v328
    %424 = vmatprep.mubr.bf16.mxu0 %v152
    %425 = vmatmul.mubr.bf16.gmra.mrb[0].mxu0 %v151
    %v426 = vpop.f32.mrb[0].mxu0
    %v427 = vadd.f32 %v117, %v426
    %v428 = vpop.f32.mrb[0].mxu0
    %v429 = vpop.f32.mrb[0].mxu0
    %v430 = vadd.f32 %v117, %v429
    %v431 = vpop.f32.mrb[0].mxu0
    %432 = vmatprep.mubr.bf16.mxu0 %v157
    %433 = vmatmul.mubr.bf16.gmra.mrb[0].mxu0 %v156
    %v434 = vpop.f32.mrb[0].mxu0
    %v435 = vadd.f32 %v117, %v434
    %v436 = vpop.f32.mrb[0].mxu0
    %v437 = vpop.f32.mrb[0].mxu0
    %v438 = vadd.f32 %v117, %v437
    %v439 = vpop.f32.mrb[0].mxu0
    %440 = vdwg.mxu0
    %441 = vmatprep.subr.bf16.mxu0 0
    %442 = vmatpush1.bf16.msra.mxu0 %v329
    %443 = vmatprep.subr.bf16.mxu0 0
    %444 = vmatpush1.bf16.msra.mxu0 %v330
    %445 = vmatprep.subr.bf16.mxu0 0
    %446 = vmatpush1.bf16.msra.mxu0 %v331
    %447 = vmatprep.subr.bf16.mxu0 0
    %448 = vmatpush1.bf16.msra.mxu0 %v332
    %449 = vmatprep.subr.bf16.mxu0 0
    %450 = vmatpush1.bf16.msra.mxu0 %v333
    %451 = vmatprep.subr.bf16.mxu0 0
    %452 = vmatpush1.bf16.msra.mxu0 %v334
    %453 = vmatprep.subr.bf16.mxu0 0
    %454 = vmatpush1.bf16.msra.mxu0 %v335
    %455 = vmatprep.subr.bf16.mxu0 0
    %456 = vmatpush1.bf16.msra.mxu0 %v336
    %457 = vmatprep.subr.bf16.mxu0 0
    %458 = vmatpush1.bf16.msra.mxu0 %v337
    %459 = vmatprep.subr.bf16.mxu0 0
    %460 = vmatpush1.bf16.msra.mxu0 %v338
    %461 = vmatprep.subr.bf16.mxu0 0
    %462 = vmatpush1.bf16.msra.mxu0 %v339
    %463 = vmatprep.subr.bf16.mxu0 0
    %464 = vmatpush1.bf16.msra.mxu0 %v340
    %465 = vmatprep.subr.bf16.mxu0 0
    %466 = vmatpush1.bf16.msra.mxu0 %v341
    %467 = vmatprep.subr.bf16.mxu0 0
    %468 = vmatpush1.bf16.msra.mxu0 %v342
    %469 = vmatprep.subr.bf16.mxu0 0
    %470 = vmatpush1.bf16.msra.mxu0 %v343
    %471 = vmatprep.subr.bf16.mxu0 0
    %472 = vmatpush1.bf16.msra.mxu0 %v344
    %473 = vmatprep.mubr.bf16.mxu0 %v154
    %474 = vmatmul.mubr.bf16.gmra.mrb[0].mxu0 %v153
    %v475 = vpop.f32.mrb[0].mxu0
    %v476 = vadd.f32 %v427, %v475
    %v477 = vpop.f32.mrb[0].mxu0
    %v478 = vpop.f32.mrb[0].mxu0
    %v479 = vadd.f32 %v430, %v478
    %v480 = vpop.f32.mrb[0].mxu0
    %481 = vmatprep.mubr.bf16.mxu0 %v159
    %482 = vmatmul.mubr.bf16.gmra.mrb[0].mxu0 %v158
    %v483 = vpop.f32.mrb[0].mxu0
    %v484 = vadd.f32 %v435, %v483
    %v485 = vpop.f32.mrb[0].mxu0
    %v486 = vpop.f32.mrb[0].mxu0
    %v487 = vadd.f32 %v438, %v486
    %v488 = vpop.f32.mrb[0].mxu0
    %489 = vdwg.mxu0
    %490 = vmatprep.subr.bf16.mxu0 0
    %491 = vmatpush1.bf16.msra.mxu0 %v345
    %492 = vmatprep.subr.bf16.mxu0 0
    %493 = vmatpush1.bf16.msra.mxu0 %v346
    %494 = vmatprep.subr.bf16.mxu0 0
    %495 = vmatpush1.bf16.msra.mxu0 %v347
    %496 = vmatprep.subr.bf16.mxu0 0
    %497 = vmatpush1.bf16.msra.mxu0 %v348
    %498 = vmatprep.subr.bf16.mxu0 0
    %499 = vmatpush1.bf16.msra.mxu0 0
    %500 = vmatprep.subr.bf16.mxu0 0
    %501 = vmatpush1.bf16.msra.mxu0 0
    %502 = vmatprep.subr.bf16.mxu0 0
    %503 = vmatpush1.bf16.msra.mxu0 0
    %504 = vmatprep.subr.bf16.mxu0 0
    %505 = vmatpush1.bf16.msra.mxu0 0
    %506 = vmatprep.subr.bf16.mxu0 0
    %507 = vmatpush1.bf16.msra.mxu0 0
    %508 = vmatprep.subr.bf16.mxu0 0
    %509 = vmatpush1.bf16.msra.mxu0 0
    %510 = vmatprep.subr.bf16.mxu0 0
    %511 = vmatpush1.bf16.msra.mxu0 0
    %512 = vmatprep.subr.bf16.mxu0 0
    %513 = vmatpush1.bf16.msra.mxu0 0
    %514 = vmatprep.subr.bf16.mxu0 0
    %515 = vmatpush1.bf16.msra.mxu0 0
    %516 = vmatprep.subr.bf16.mxu0 0
    %517 = vmatpush1.bf16.msra.mxu0 0
    %518 = vmatprep.subr.bf16.mxu0 0
    %519 = vmatpush1.bf16.msra.mxu0 0
    %520 = vmatprep.subr.bf16.mxu0 0
    %521 = vmatpush1.bf16.msra.mxu0 0
    %522 = vmatprep.mubr.bf16.mxu0 0
    %523 = vmatmul.mubr.bf16.gmra.mrb[0].mxu0 %v387
    %v524 = vpop.f32.mrb[0].mxu0
    %v525 = vadd.f32 %v476, %v524
    %v526 = vpop.f32.mrb[0].mxu0
    %v527 = vpop.f32.mrb[0].mxu0
    %v528 = vadd.f32 %v479, %v527
    %v529 = vpop.f32.mrb[0].mxu0
    %530 = vmatprep.mubr.bf16.mxu0 0
    %531 = vmatmul.mubr.bf16.gmra.mrb[0].mxu0 %v390
    %v532 = vpop.f32.mrb[0].mxu0
    %v533 = vadd.f32 %v484, %v532
    %v534 = vpop.f32.mrb[0].mxu0
    %v535 = vpop.f32.mrb[0].mxu0
    %v536 = vadd.f32 %v487, %v535
    %v537 = vpop.f32.mrb[0].mxu0
    %538 = vdwg.mxu0
    %v539 = vld [vmem:[%s3] sm:$0xf]
    %v540 = vld [vmem:[%s3 + $0x4] sm:$0xf]
    %v541 = vld [vmem:[%s3 + $0x8] sm:$0xf]
    %v542 = vld [vmem:[%s3 + $0xc] sm:$0xf]
    %v543 = vunpack.c.l.bf16 %v539
    %v544 = vunpack.c.l.bf16 %v540
    %v545 = vunpack.c.l.bf16 %v541
    %v546 = vunpack.c.l.bf16 %v542
    %v547 = vadd.f32 %v525, %v543
    %v548 = vadd.f32 %v528, %v544
    %v549 = vadd.f32 %v533, %v545
    %v550 = vadd.f32 %v536, %v546
    %v551 = vmax.f32 %v547, 0.0
    %v552 = vmax.f32 %v548, 0.0
    %v553 = vmax.f32 %v549, 0.0
    %v554 = vmax.f32 %v550, 0.0
    %v555 = vld [vmem:[%s4] sm:$0x3]
    %vm556 = vcmask 261120
    %v558 = vsel %vm556, %v555, 0
    %560 = vmatprep.subr.mxu0 0.0
    %561 = vmatpush1.msra.mxu0 %v551
    %562 = vmatprep.subr.mxu0 0.0
    %563 = vmatpush1.msra.mxu0 %v552
    %564 = vmatprep.subr.mxu0 0.0
    %565 = vmatpush1.msra.mxu0 %v553
    %566 = vmatprep.subr.mxu0 0.0
    %567 = vmatpush1.msra.mxu0 %v554
    %568 = vmatprep.subr.mxu0 0.0
    %569 = vmatpush1.msra.mxu0 0.0
    %570 = vmatprep.subr.mxu0 0.0
    %571 = vmatpush1.msra.mxu0 0.0
    %572 = vmatprep.subr.mxu0 0.0
    %573 = vmatpush1.msra.mxu0 0.0
    %574 = vmatprep.subr.mxu0 0.0
    %575 = vmatpush1.msra.mxu0 0.0
    %576 = vmatprep.subr.mxu0 0.0
    %577 = vmatpush1.msra.mxu0 0.0
    %578 = vmatprep.subr.mxu0 0.0
    %579 = vmatpush1.msra.mxu0 0.0
    %580 = vmatprep.subr.mxu0 0.0
    %581 = vmatpush1.msra.mxu0 0.0
    %582 = vmatprep.subr.mxu0 0.0
    %583 = vmatpush1.msra.mxu0 0.0
    %584 = vmatprep.subr.mxu0 0.0
    %585 = vmatpush1.msra.mxu0 0.0
    %586 = vmatprep.subr.mxu0 0.0
    %587 = vmatpush1.msra.mxu0 0.0
    %588 = vmatprep.subr.mxu0 0.0
    %589 = vmatpush1.msra.mxu0 0.0
    %590 = vmatprep.subr.mxu0 0.0
    %591 = vmatpush1.msra.mxu0 0.0
    %592 = vmatprep.subr.mxu0 0.0
    %593 = vmatpush1.msra.mxu0 0.0
    %594 = vmatprep.subr.mxu0 0.0
    %595 = vmatpush1.msra.mxu0 0.0
    %596 = vmatprep.subr.mxu0 0.0
    %597 = vmatpush1.msra.mxu0 0.0
    %598 = vmatprep.subr.mxu0 0.0
    %599 = vmatpush1.msra.mxu0 0.0
    %600 = vmatprep.subr.mxu0 0.0
    %601 = vmatpush1.msra.mxu0 0.0
    %602 = vmatprep.subr.mxu0 0.0
    %603 = vmatpush1.msra.mxu0 0.0
    %604 = vmatprep.subr.mxu0 0.0
    %605 = vmatpush1.msra.mxu0 0.0
    %606 = vmatprep.subr.mxu0 0.0
    %607 = vmatpush1.msra.mxu0 0.0
    %608 = vmatprep.subr.mxu0 0.0
    %609 = vmatpush1.msra.mxu0 0.0
    %610 = vmatprep.subr.mxu0 0.0
    %611 = vmatpush1.msra.mxu0 0.0
    %612 = vmatprep.subr.mxu0 0.0
    %613 = vmatpush1.msra.mxu0 0.0
    %614 = vmatprep.subr.mxu0 0.0
    %615 = vmatpush1.msra.mxu0 0.0
    %616 = vmatprep.subr.mxu0 0.0
    %617 = vmatpush1.msra.mxu0 0.0
    %618 = vmatprep.subr.mxu0 0.0
    %619 = vmatpush1.msra.mxu0 0.0
    %620 = vmatprep.subr.mxu0 0.0
    %621 = vmatpush1.msra.mxu0 0.0
    %622 = vmatprep.subr.mxu0 0.0
    %623 = vmatpush1.msra.mxu0 0.0
    %624 = vmatprep.mubr.f32.mxu0 0.0
    %625 = vmatmul.mubr.f32.gmra.mrb[0].mxu0 %v558
    %v626 = vpop.f32.mrb[0].mxu0
    %v627 = vadd.f32 0.0, %v626
    %v628 = vpop.f32.mrb[0].mxu0
    %629 = vdwg.mxu0
    %v630 = vld [vmem:[%s5] sm:$0xff]
    %v631 = vld [vmem:[%s5 + $0x8] sm:$0xff]
    %v632 = vld [vmem:[%s5 + $0x10] sm:$0xff]
    %v633 = vld [vmem:[%s5 + $0x18] sm:$0xff]
    %v634 = vld [vmem:[%s5 + $0x20] sm:$0xff]
    %v635 = vld [vmem:[%s5 + $0x28] sm:$0xff]
    %v636 = vld [vmem:[%s5 + $0x30] sm:$0xff]
    %v637 = vld [vmem:[%s5 + $0x38] sm:$0xff]
    %v638 = vld [vmem:[%s6] sm:$0x1]
    %v640 = vlaneseq
    %v641 = vshrl.u32 %v640, 7
    %v642 = vsub.s32 0, %v641
    %v643 = vrot.slane %v638, %v642
    %v646 = vsel %vm385, %v627, 0
    %648 = vmatprep.subr.mxu0 0.0
    %649 = vmatpush1.msra.mxu0 %v630
    %650 = vmatprep.subr.mxu0 0.0
    %651 = vmatpush1.msra.mxu0 %v631
    %652 = vmatprep.subr.mxu0 0.0
    %653 = vmatpush1.msra.mxu0 %v632
    %654 = vmatprep.subr.mxu0 0.0
    %655 = vmatpush1.msra.mxu0 %v633
    %656 = vmatprep.subr.mxu0 0.0
    %657 = vmatpush1.msra.mxu0 %v634
    %658 = vmatprep.subr.mxu0 0.0
    %659 = vmatpush1.msra.mxu0 %v635
    %660 = vmatprep.subr.mxu0 0.0
    %661 = vmatpush1.msra.mxu0 %v636
    %662 = vmatprep.subr.mxu0 0.0
    %663 = vmatpush1.msra.mxu0 %v637
    %664 = vmatprep.subr.mxu0 0.0
    %665 = vmatpush1.msra.mxu0 0.0
    %666 = vmatprep.subr.mxu0 0.0
    %667 = vmatpush1.msra.mxu0 0.0
    %668 = vmatprep.subr.mxu0 0.0
    %669 = vmatpush1.msra.mxu0 0.0
    %670 = vmatprep.subr.mxu0 0.0
    %671 = vmatpush1.msra.mxu0 0.0
    %672 = vmatprep.subr.mxu0 0.0
    %673 = vmatpush1.msra.mxu0 0.0
    %674 = vmatprep.subr.mxu0 0.0
    %675 = vmatpush1.msra.mxu0 0.0
    %676 = vmatprep.subr.mxu0 0.0
    %677 = vmatpush1.msra.mxu0 0.0
    %678 = vmatprep.subr.mxu0 0.0
    %679 = vmatpush1.msra.mxu0 0.0
    %680 = vmatprep.subr.mxu0 0.0
    %681 = vmatpush1.msra.mxu0 0.0
    %682 = vmatprep.subr.mxu0 0.0
    %683 = vmatpush1.msra.mxu0 0.0
    %684 = vmatprep.subr.mxu0 0.0
    %685 = vmatpush1.msra.mxu0 0.0
    %686 = vmatprep.subr.mxu0 0.0
    %687 = vmatpush1.msra.mxu0 0.0
    %688 = vmatprep.subr.mxu0 0.0
    %689 = vmatpush1.msra.mxu0 0.0
    %690 = vmatprep.subr.mxu0 0.0
    %691 = vmatpush1.msra.mxu0 0.0
    %692 = vmatprep.subr.mxu0 0.0
    %693 = vmatpush1.msra.mxu0 0.0
    %694 = vmatprep.subr.mxu0 0.0
    %695 = vmatpush1.msra.mxu0 0.0
    %696 = vmatprep.subr.mxu0 0.0
    %697 = vmatpush1.msra.mxu0 0.0
    %698 = vmatprep.subr.mxu0 0.0
    %699 = vmatpush1.msra.mxu0 0.0
    %700 = vmatprep.subr.mxu0 0.0
    %701 = vmatpush1.msra.mxu0 0.0
    %702 = vmatprep.subr.mxu0 0.0
    %703 = vmatpush1.msra.mxu0 0.0
    %704 = vmatprep.subr.mxu0 0.0
    %705 = vmatpush1.msra.mxu0 0.0
    %706 = vmatprep.subr.mxu0 0.0
    %707 = vmatpush1.msra.mxu0 0.0
    %708 = vmatprep.subr.mxu0 0.0
    %709 = vmatpush1.msra.mxu0 0.0
    %710 = vmatprep.subr.mxu0 0.0
    %711 = vmatpush1.msra.mxu0 0.0
    %712 = vmatprep.mubr.f32.mxu0 0.0
    %713 = vmatmul.mubr.f32.gmra.mrb[0].mxu0 %v646
    %v714 = vpop.f32.mrb[0].mxu0
    %v715 = vadd.f32 %v643, %v714
    %v716 = vpop.f32.mrb[0].mxu0
    %717 = vdwg.mxu0
    %vm718 = vcmask 74752
    %719 = vst.msk [vmem:[#allocation2] sm:$0x3] %vm718, %v715
    // Predicated region
    $region30: #{resnet_forward.37} parent=1 // pred_check
      _
    $region31: #{resnet_forward.37} parent=1 // pred_check_branch
      %721 = sbr.rel (0) target = $region33
    $region32: #{resnet_forward.37} parent=1 // pred_region
      %s723 = ssub.s32 32, 32
      %724 = vsyncadd [#allocation3], %s723
      %s726 = sshll.u32 [#allocation2], 4
      %s727 = int_to_ptr.vmem [resolvable:$true] %s726
      %729 = dma.vmem_to_hbm [thread:$0]  %s727, 32, %s7, [#allocation3]
    $region33: #{resnet_forward.37} parent=1 // pred_fallthru
      _
    // Predicated region
    $region34: #{resnet_forward.37} parent=1 // pred_check
      _
    $region35: #{resnet_forward.37} parent=1 // pred_check_branch
      %731 = sbr.rel (0) target = $region37
    $region36: #{resnet_forward.37} parent=1 // pred_region
      %732 = dma.done [#allocation3], 32
    $region37: #{resnet_forward.37} parent=1 // pred_fallthru
      _
    %733 = vsyncpa [#allocation3], 1

</llo_original>
